<compile_context>
chip_gen: v5e
topology: v5e:2x2
jax: 0.10.0
libtpu: 0.0.40
codegen_flags: <defaults>
</compile_context>

<pallas_src>
import functools

import jax
import jax.numpy as jnp
from jax.experimental import pallas as pl
from jax.experimental.pallas import tpu as pltpu


# ----------------------------------------------------------------------------
# Fused kernel: all maxiters proximal-gradient iterations for one batch element
# ----------------------------------------------------------------------------
def _seis_proxgd_kernel(step_ref, ztab_ref, tapm_ref, aty_ref, x0_ref,
                        w1z_ref, w1a_ref, b1_ref, w2_ref, b2_ref, w3_ref,
                        b3_ref, out_ref, *, C, F, H, L, maxiters):
    step = step_ref[0]                       # 0.1 * sigmoid(eta) (SMEM scalar)

    def shifted(v, s):
        # p[:, i] = v[:, i + s] (circular roll; out-of-range lanes are zeroed
        # downstream by the tap masks / zero band coefficients).  s is static.
        if s == 0:
            return v
        return pltpu.roll(v, (-s) % L, axis=1)

    def conv3x3(x, cin, w_ref, acc):
        # 3x3 conv = 9 accumulating (Cout,cin)@(cin,L) MXU matmuls on rolled
        # register-resident tiles (no im2col scratch round-trip).
        for t in range(9):
            dh, dw = t // 3 - 1, t % 3 - 1
            s = dw * H + dh                  # source lane offset (H-fast flat)
            p = shifted(x, s)
            if s != 0:
                p = p * tapm_ref[t, 0:cin, :]
            acc = acc + jnp.dot(w_ref[t], p,
                                preferred_element_type=jnp.float32)
        return acc

    aty = aty_ref[0]                                  # (C, L)  A^T y, flat
    saty = step * aty                                 # hoisted: + step*A^T y
    b1v = jnp.broadcast_to(b1_ref[...], (F, L))       # hoisted bias broadcasts
    b2v = jnp.broadcast_to(b2_ref[...], (F, L))
    b3v = jnp.broadcast_to(b3_ref[...], (C, L))
    # conv-1 contribution of the loop-invariant conditioning channels (A^T y),
    # hoisted out of the iteration loop (includes the conv-1 bias).
    cond = conv3x3(aty, C, w1a_ref, b1v)              # (F, L)

    x = x0_ref[0]                                     # (C, L)
    # TODO(synk): for maxiters > ~4 switch to lax.fori_loop to bound live
    # ranges / code size; small static trip count here -> full unroll.
    for _ in range(maxiters):
        # forward_module: z = (I - step*AtA) x + step*A^T y, applied directly
        # along H via the banded decomposition (row r holds diagonal
        # d = r-(H-1) of I - step*AtA expanded per destination lane; invalid
        # source rows carry zero coefficients, so no extra masking is needed).
        z = saty
        for r in range(2 * H - 1):
            z = z + ztab_ref[r] * shifted(x, r - (H - 1))
        # DnCNN:  x = z - net(concat([z, A^T y], channel))
        h1 = jnp.maximum(conv3x3(z, C, w1z_ref, cond), 0.0)
        h2 = jnp.maximum(conv3x3(h1, F, w2_ref, b2v), 0.0)
        x = z - conv3x3(h2, F, w3_ref, b3v)
    out_ref[0] = x


# ----------------------------------------------------------------------------
# Wrapper
# ----------------------------------------------------------------------------
def seis_proxgd_forward(xk, y, A, eta, params, maxiters):
    B, C, H, W = xk.shape
    L = H * W
    F = params["w2t"].shape[0]
    R = max(C, F)
    f32 = jnp.float32

    A = A.astype(f32)
    step = (0.1 * jax.nn.sigmoid(eta.astype(f32))).reshape(1)
    step_s = step[0]

    # Measurement-operator precomputation (tiny, once per call): gramian
    # matrix and the loop-invariant back-projection A^T y.
    AtA = A.T @ A                                            # (H, H)
    aty = jnp.einsum('mh,bcmw->bchw', A, y.astype(f32))      # (B, C, H, W)

    # Internal layout: images flattened lane-dense with H fastest,
    # lane index i = w*H + h  (L = W*H is a multiple of 128).
    x0_flat = xk.astype(f32).transpose(0, 1, 3, 2).reshape(B, C, L)
    aty_flat = aty.transpose(0, 1, 3, 2).reshape(B, C, L)

    # Banded table for (I - step*AtA) applied along H:
    #   ztab[r, :, w*H + h] = (I - step*AtA)[h, h + d],  d = r - (H-1),
    # zero where h + d is out of range.  Shape (2H-1, C, L): O(H*L), replaces
    # the old O(L^2) kron(AtA, I_W) operator.
    T = jnp.eye(H, dtype=f32) - step_s * AtA
    idx = jnp.arange(L, dtype=jnp.int32)
    hh = idx % H
    ww = idx // H
    d = jnp.arange(-(H - 1), H, dtype=jnp.int32)[:, None]    # (2H-1, 1)
    src = hh[None, :] + d                                     # (2H-1, L)
    valid = (src >= 0) & (src < H)
    ztab = jnp.where(valid, T[hh[None, :], jnp.clip(src, 0, H - 1)],
                     jnp.zeros((), f32))
    ztab = jnp.broadcast_to(ztab[:, None, :], (2 * H - 1, C, L))

    # Per-tap boundary masks (destinations whose source (h+dh, w+dw) is out of
    # range are zeroed), pre-broadcast to max(C, F) rows (hoisted broadcasts).
    tapm = []
    for t in range(9):
        dh, dw = t // 3 - 1, t % 3 - 1
        m = ((hh + dh >= 0) & (hh + dh < H) &
             (ww + dw >= 0) & (ww + dw < W)).astype(f32)
        tapm.append(m)
    tapm = jnp.broadcast_to(jnp.stack(tapm)[:, None, :], (9, R, L))

    # Conv weights in per-tap (9, Cout, Cin) layout; conv-1 split into its
    # z-channel part and its loop-invariant A^T-y-channel part.
    w1 = params["w1t"].astype(f32).transpose(1, 2, 0, 3).reshape(9, F, 2 * C)
    w1z, w1a = w1[..., :C], w1[..., C:]
    w2 = params["w2t"].astype(f32).transpose(1, 2, 0, 3).reshape(9, F, F)
    w3 = params["w3t"].astype(f32).transpose(1, 2, 0, 3).reshape(9, C, F)
    b1 = params["b1"].astype(f32).reshape(F, 1)
    b2 = params["b2"].astype(f32).reshape(F, 1)
    b3 = params["b3"].astype(f32).reshape(C, 1)

    const3 = lambda b: (0, 0, 0)
    const2 = lambda b: (0, 0)
    per_batch = lambda b: (b, 0, 0)
    kern = functools.partial(_seis_proxgd_kernel, C=C, F=F, H=H, L=L,
                             maxiters=maxiters)
    out = pl.pallas_call(
        kern,
        out_shape=jax.ShapeDtypeStruct((B, C, L), f32),
        grid=(B,),
        in_specs=[
            pl.BlockSpec(memory_space=pltpu.MemorySpace.SMEM),   # step scalar
            pl.BlockSpec((2 * H - 1, C, L), const3),             # gramian band
            pl.BlockSpec((9, R, L), const3),                     # tap masks
            pl.BlockSpec((1, C, L), per_batch),                  # A^T y
            pl.BlockSpec((1, C, L), per_batch),                  # xk0
            pl.BlockSpec((9, F, C), const3),                     # w1 (z part)
            pl.BlockSpec((9, F, C), const3),                     # w1 (A^T y part)
            pl.BlockSpec((F, 1), const2),                        # b1
            pl.BlockSpec((9, F, F), const3),                     # w2
            pl.BlockSpec((F, 1), const2),                        # b2
            pl.BlockSpec((9, C, F), const3),                     # w3
            pl.BlockSpec((C, 1), const2),                        # b3
        ],
        out_specs=pl.BlockSpec((1, C, L), per_batch),
        compiler_params=pltpu.CompilerParams(
            dimension_semantics=("parallel",)),                  # v7x: 2 TCs
    )(step, ztab, tapm, aty_flat, x0_flat, w1z, w1a, b1, w2, b2, w3, b3)
    return out.reshape(B, C, W, H).transpose(0, 1, 3, 2)


# ----------------------------------------------------------------------------
# Pure-JAX reference (straightforward NCHW path) used only for validation
# ----------------------------------------------------------------------------
def _conv3x3_ref(x, wt, b):
    # x: (B, Cin, H, W); wt: (Cout, 3, 3, Cin); b: (Cout,)
    Hh, Ww = x.shape[2], x.shape[3]
    xp = jnp.pad(x, ((0, 0), (0, 0), (1, 1), (1, 1)))
    out = jnp.zeros((x.shape[0], wt.shape[0], Hh, Ww), jnp.float32)
    for dh in range(3):
        for dw in range(3):
            patch = xp[:, :, dh:dh + Hh, dw:dw + Ww]
            out = out + jnp.einsum('oi,bihw->bohw', wt[:, dh, dw, :], patch)
    return out + b[None, :, None, None]


def reference_forward(xk, y, A, eta, params, maxiters):
    step = 0.1 * jax.nn.sigmoid(eta)[0]
    AtA = A.T @ A
    aty = jnp.einsum('mh,bcmw->bchw', A, y)
    for _ in range(maxiters):
        grad = jnp.einsum('hk,bckw->bchw', AtA, xk) - aty
        z = xk - step * grad
        h0 = jnp.concatenate([z, aty], axis=1)
        h1 = jnp.maximum(_conv3x3_ref(h0, params['w1t'], params['b1']), 0.0)
        h2 = jnp.maximum(_conv3x3_ref(h1, params['w2t'], params['b2']), 0.0)
        n = _conv3x3_ref(h2, params['w3t'], params['b3'])
        xk = z - n
    return xk


# ----------------------------------------------------------------------------
# Main
# ----------------------------------------------------------------------------
if __name__ == "__main__":
    B, C, H, W = 2, 4, 16, 16      # image / model space (NCHW at the boundary)
    M = 16                         # measurement rows along H
    F = 8                          # DnCNN feature channels
    MAXITERS = 3                   # args.maxiters
    ETA0 = 1.0                     # args.eta

    key = jax.random.PRNGKey(0)
    ks = jax.random.split(key, 10)

    A = jax.random.normal(ks[0], (M, H), jnp.float32) / jnp.sqrt(float(H))
    eta = jnp.ones((1,), jnp.float32) * ETA0
    params = {
        "w1t": jax.random.normal(ks[1], (F, 3, 3, 2 * C), jnp.float32) * 0.1,
        "b1": jax.random.normal(ks[6], (F,), jnp.float32) * 0.05,
        "w2t": jax.random.normal(ks[2], (F, 3, 3, F), jnp.float32) * 0.1,
        "b2": jax.random.normal(ks[7], (F,), jnp.float32) * 0.05,
        "w3t": jax.random.normal(ks[3], (C, 3, 3, F), jnp.float32) * 0.1,
        "b3": jax.random.normal(ks[8], (C,), jnp.float32) * 0.05,
    }

    # Inputs: ground-truth model, measurements y = A x_true, initial iterate xk.
    x_true = jax.random.normal(ks[4], (B, C, H, W), jnp.float32)
    y = jnp.einsum("mh,bchw->bcmw", A, x_true)       # (B, C, M, W)
    xk0 = jax.random.normal(ks[5], (B, C, H, W), jnp.float32)

    fwd = jax.jit(functools.partial(seis_proxgd_forward, maxiters=MAXITERS))
    out = jax.block_until_ready(fwd(xk0, y, A, eta, params))

    ref_fn = jax.jit(functools.partial(reference_forward, maxiters=MAXITERS))
    ref = jax.block_until_ready(ref_fn(xk0, y, A, eta, params))

    assert out.shape == (B, C, H, W) and out.dtype == jnp.float32
    assert bool(jnp.all(jnp.isfinite(out)))
    assert bool(jnp.allclose(out, ref, rtol=2e-3, atol=2e-3)), \
        float(jnp.max(jnp.abs(out - ref)))
    print("KERNEL_OK")
</pallas_src>

<mosaic_0001>
module attributes {stable_mosaic.version = 11 : i64} {
  func.func @_seis_proxgd_kernel(%arg0: i32, %arg1: memref<1xf32, #tpu.memory_space<smem>>, %arg2: memref<31x4x256xf32, #tpu.memory_space<vmem>>, %arg3: memref<9x8x256xf32, #tpu.memory_space<vmem>>, %arg4: memref<1x4x256xf32, #tpu.memory_space<vmem>>, %arg5: memref<1x4x256xf32, #tpu.memory_space<vmem>>, %arg6: memref<9x8x4xf32, #tpu.memory_space<vmem>>, %arg7: memref<9x8x4xf32, #tpu.memory_space<vmem>>, %arg8: memref<8x1xf32, #tpu.memory_space<vmem>>, %arg9: memref<9x8x8xf32, #tpu.memory_space<vmem>>, %arg10: memref<8x1xf32, #tpu.memory_space<vmem>>, %arg11: memref<9x4x8xf32, #tpu.memory_space<vmem>>, %arg12: memref<4x1xf32, #tpu.memory_space<vmem>>, %arg13: memref<1x4x256xf32, #tpu.memory_space<vmem>>) attributes {dimension_semantics = [#tpu.dimension_semantics<parallel>], iteration_bounds = array<i64: 2>, scalar_prefetch = 0 : i64, scratch_operands = 0 : i64, tpu.core_type = #tpu.core_type<tc>, window_params = [{transform_indices = @transform_0, window_bounds = array<i64: 1>}, {pipeline_mode = #tpu.pipeline_mode<synchronous>, transform_indices = @transform_1, window_bounds = array<i64: 31, 4, 256>}, {pipeline_mode = #tpu.pipeline_mode<synchronous>, transform_indices = @transform_2, window_bounds = array<i64: 9, 8, 256>}, {transform_indices = @transform_3, window_bounds = array<i64: 1, 4, 256>}, {transform_indices = @transform_4, window_bounds = array<i64: 1, 4, 256>}, {pipeline_mode = #tpu.pipeline_mode<synchronous>, transform_indices = @transform_5, window_bounds = array<i64: 9, 8, 4>}, {pipeline_mode = #tpu.pipeline_mode<synchronous>, transform_indices = @transform_6, window_bounds = array<i64: 9, 8, 4>}, {pipeline_mode = #tpu.pipeline_mode<synchronous>, transform_indices = @transform_7, window_bounds = array<i64: 8, 1>}, {pipeline_mode = #tpu.pipeline_mode<synchronous>, transform_indices = @transform_8, window_bounds = array<i64: 9, 8, 8>}, {pipeline_mode = #tpu.pipeline_mode<synchronous>, transform_indices = @transform_9, window_bounds = array<i64: 8, 1>}, {pipeline_mode = #tpu.pipeline_mode<synchronous>, transform_indices = @transform_10, window_bounds = array<i64: 9, 4, 8>}, {pipeline_mode = #tpu.pipeline_mode<synchronous>, transform_indices = @transform_11, window_bounds = array<i64: 4, 1>}, {transform_indices = @transform_12, window_bounds = array<i64: 1, 4, 256>}]} {
    %c0 = arith.constant 0 : index
    %0 = memref.load %arg1[%c0] : memref<1xf32, #tpu.memory_space<smem>>
    %c0_0 = arith.constant 0 : index
    %c0_1 = arith.constant 0 : index
    %c0_2 = arith.constant 0 : index
    %1 = vector.load %arg4[%c0_0, %c0_1, %c0_2] : memref<1x4x256xf32, #tpu.memory_space<vmem>>, vector<1x4x256xf32>
    %2 = vector.shape_cast %1 : vector<1x4x256xf32> to vector<4x256xf32>
    %3 = vector.broadcast %0 : f32 to vector<4x256xf32>
    %4 = arith.mulf %3, %2 : vector<4x256xf32>
    %c0_3 = arith.constant 0 : index
    %c0_4 = arith.constant 0 : index
    %5 = vector.load %arg8[%c0_3, %c0_4] : memref<8x1xf32, #tpu.memory_space<vmem>>, vector<8x1xf32>
    %6 = vector.shape_cast %5 : vector<8x1xf32> to vector<8x1xf32>
    %7 = vector.broadcast %6 : vector<8x1xf32> to vector<8x256xf32>
    %c0_5 = arith.constant 0 : index
    %c0_6 = arith.constant 0 : index
    %8 = vector.load %arg10[%c0_5, %c0_6] : memref<8x1xf32, #tpu.memory_space<vmem>>, vector<8x1xf32>
    %9 = vector.shape_cast %8 : vector<8x1xf32> to vector<8x1xf32>
    %10 = vector.broadcast %9 : vector<8x1xf32> to vector<8x256xf32>
    %c0_7 = arith.constant 0 : index
    %c0_8 = arith.constant 0 : index
    %11 = vector.load %arg12[%c0_7, %c0_8] : memref<4x1xf32, #tpu.memory_space<vmem>>, vector<4x1xf32>
    %12 = vector.shape_cast %11 : vector<4x1xf32> to vector<4x1xf32>
    %13 = vector.broadcast %12 : vector<4x1xf32> to vector<4x256xf32>
    %c17_i32 = arith.constant 17 : i32
    %14 = tpu.dynamic_rotate %2 by %c17_i32 dim 1 : vector<4x256xf32>, i32 -> vector<4x256xf32>
    %c0_9 = arith.constant 0 : index
    %c0_10 = arith.constant 0 : index
    %c0_11 = arith.constant 0 : index
    %15 = vector.load %arg3[%c0_9, %c0_10, %c0_11] : memref<9x8x256xf32, #tpu.memory_space<vmem>>, vector<1x4x256xf32>
    %16 = vector.shape_cast %15 : vector<1x4x256xf32> to vector<4x256xf32>
    %17 = arith.mulf %14, %16 : vector<4x256xf32>
    %c0_12 = arith.constant 0 : index
    %c0_13 = arith.constant 0 : index
    %c0_14 = arith.constant 0 : index
    %18 = vector.load %arg7[%c0_12, %c0_13, %c0_14] : memref<9x8x4xf32, #tpu.memory_space<vmem>>, vector<1x8x4xf32>
    %19 = vector.shape_cast %18 : vector<1x8x4xf32> to vector<8x4xf32>
    %cst = arith.constant dense<0.000000e+00> : vector<8x256xf32>
    %20 = tpu.matmul %19, %17, %cst {dimension_numbers = #tpu.dot_dimension_numbers<[1], [0], [0], [1], [0, 0, 1, 1], [], []>} : vector<8x4xf32>, vector<4x256xf32>, vector<8x256xf32> -> vector<8x256xf32>
    %21 = arith.addf %7, %20 : vector<8x256xf32>
    %c1_i32 = arith.constant 1 : i32
    %22 = tpu.dynamic_rotate %2 by %c1_i32 dim 1 : vector<4x256xf32>, i32 -> vector<4x256xf32>
    %c1 = arith.constant 1 : index
    %c0_15 = arith.constant 0 : index
    %c0_16 = arith.constant 0 : index
    %23 = vector.load %arg3[%c1, %c0_15, %c0_16] : memref<9x8x256xf32, #tpu.memory_space<vmem>>, vector<1x4x256xf32>
    %24 = vector.shape_cast %23 : vector<1x4x256xf32> to vector<4x256xf32>
    %25 = arith.mulf %22, %24 : vector<4x256xf32>
    %c1_17 = arith.constant 1 : index
    %c0_18 = arith.constant 0 : index
    %c0_19 = arith.constant 0 : index
    %26 = vector.load %arg7[%c1_17, %c0_18, %c0_19] : memref<9x8x4xf32, #tpu.memory_space<vmem>>, vector<1x8x4xf32>
    %27 = vector.shape_cast %26 : vector<1x8x4xf32> to vector<8x4xf32>
    %cst_20 = arith.constant dense<0.000000e+00> : vector<8x256xf32>
    %28 = tpu.matmul %27, %25, %cst_20 {dimension_numbers = #tpu.dot_dimension_numbers<[1], [0], [0], [1], [0, 0, 1, 1], [], []>} : vector<8x4xf32>, vector<4x256xf32>, vector<8x256xf32> -> vector<8x256xf32>
    %29 = arith.addf %21, %28 : vector<8x256xf32>
    %c241_i32 = arith.constant 241 : i32
    %30 = tpu.dynamic_rotate %2 by %c241_i32 dim 1 : vector<4x256xf32>, i32 -> vector<4x256xf32>
    %c2 = arith.constant 2 : index
    %c0_21 = arith.constant 0 : index
    %c0_22 = arith.constant 0 : index
    %31 = vector.load %arg3[%c2, %c0_21, %c0_22] : memref<9x8x256xf32, #tpu.memory_space<vmem>>, vector<1x4x256xf32>
    %32 = vector.shape_cast %31 : vector<1x4x256xf32> to vector<4x256xf32>
    %33 = arith.mulf %30, %32 : vector<4x256xf32>
    %c2_23 = arith.constant 2 : index
    %c0_24 = arith.constant 0 : index
    %c0_25 = arith.constant 0 : index
    %34 = vector.load %arg7[%c2_23, %c0_24, %c0_25] : memref<9x8x4xf32, #tpu.memory_space<vmem>>, vector<1x8x4xf32>
    %35 = vector.shape_cast %34 : vector<1x8x4xf32> to vector<8x4xf32>
    %cst_26 = arith.constant dense<0.000000e+00> : vector<8x256xf32>
    %36 = tpu.matmul %35, %33, %cst_26 {dimension_numbers = #tpu.dot_dimension_numbers<[1], [0], [0], [1], [0, 0, 1, 1], [], []>} : vector<8x4xf32>, vector<4x256xf32>, vector<8x256xf32> -> vector<8x256xf32>
    %37 = arith.addf %29, %36 : vector<8x256xf32>
    %c16_i32 = arith.constant 16 : i32
    %38 = tpu.dynamic_rotate %2 by %c16_i32 dim 1 : vector<4x256xf32>, i32 -> vector<4x256xf32>
    %c3 = arith.constant 3 : index
    %c0_27 = arith.constant 0 : index
    %c0_28 = arith.constant 0 : index
    %39 = vector.load %arg3[%c3, %c0_27, %c0_28] : memref<9x8x256xf32, #tpu.memory_space<vmem>>, vector<1x4x256xf32>
    %40 = vector.shape_cast %39 : vector<1x4x256xf32> to vector<4x256xf32>
    %41 = arith.mulf %38, %40 : vector<4x256xf32>
    %c3_29 = arith.constant 3 : index
    %c0_30 = arith.constant 0 : index
    %c0_31 = arith.constant 0 : index
    %42 = vector.load %arg7[%c3_29, %c0_30, %c0_31] : memref<9x8x4xf32, #tpu.memory_space<vmem>>, vector<1x8x4xf32>
    %43 = vector.shape_cast %42 : vector<1x8x4xf32> to vector<8x4xf32>
    %cst_32 = arith.constant dense<0.000000e+00> : vector<8x256xf32>
    %44 = tpu.matmul %43, %41, %cst_32 {dimension_numbers = #tpu.dot_dimension_numbers<[1], [0], [0], [1], [0, 0, 1, 1], [], []>} : vector<8x4xf32>, vector<4x256xf32>, vector<8x256xf32> -> vector<8x256xf32>
    %45 = arith.addf %37, %44 : vector<8x256xf32>
    %c4 = arith.constant 4 : index
    %c0_33 = arith.constant 0 : index
    %c0_34 = arith.constant 0 : index
    %46 = vector.load %arg7[%c4, %c0_33, %c0_34] : memref<9x8x4xf32, #tpu.memory_space<vmem>>, vector<1x8x4xf32>
    %47 = vector.shape_cast %46 : vector<1x8x4xf32> to vector<8x4xf32>
    %cst_35 = arith.constant dense<0.000000e+00> : vector<8x256xf32>
    %48 = tpu.matmul %47, %2, %cst_35 {dimension_numbers = #tpu.dot_dimension_numbers<[1], [0], [0], [1], [0, 0, 1, 1], [], []>} : vector<8x4xf32>, vector<4x256xf32>, vector<8x256xf32> -> vector<8x256xf32>
    %49 = arith.addf %45, %48 : vector<8x256xf32>
    %c240_i32 = arith.constant 240 : i32
    %50 = tpu.dynamic_rotate %2 by %c240_i32 dim 1 : vector<4x256xf32>, i32 -> vector<4x256xf32>
    %c5 = arith.constant 5 : index
    %c0_36 = arith.constant 0 : index
    %c0_37 = arith.constant 0 : index
    %51 = vector.load %arg3[%c5, %c0_36, %c0_37] : memref<9x8x256xf32, #tpu.memory_space<vmem>>, vector<1x4x256xf32>
    %52 = vector.shape_cast %51 : vector<1x4x256xf32> to vector<4x256xf32>
    %53 = arith.mulf %50, %52 : vector<4x256xf32>
    %c5_38 = arith.constant 5 : index
    %c0_39 = arith.constant 0 : index
    %c0_40 = arith.constant 0 : index
    %54 = vector.load %arg7[%c5_38, %c0_39, %c0_40] : memref<9x8x4xf32, #tpu.memory_space<vmem>>, vector<1x8x4xf32>
    %55 = vector.shape_cast %54 : vector<1x8x4xf32> to vector<8x4xf32>
    %cst_41 = arith.constant dense<0.000000e+00> : vector<8x256xf32>
    %56 = tpu.matmul %55, %53, %cst_41 {dimension_numbers = #tpu.dot_dimension_numbers<[1], [0], [0], [1], [0, 0, 1, 1], [], []>} : vector<8x4xf32>, vector<4x256xf32>, vector<8x256xf32> -> vector<8x256xf32>
    %57 = arith.addf %49, %56 : vector<8x256xf32>
    %c15_i32 = arith.constant 15 : i32
    %58 = tpu.dynamic_rotate %2 by %c15_i32 dim 1 : vector<4x256xf32>, i32 -> vector<4x256xf32>
    %c6 = arith.constant 6 : index
    %c0_42 = arith.constant 0 : index
    %c0_43 = arith.constant 0 : index
    %59 = vector.load %arg3[%c6, %c0_42, %c0_43] : memref<9x8x256xf32, #tpu.memory_space<vmem>>, vector<1x4x256xf32>
    %60 = vector.shape_cast %59 : vector<1x4x256xf32> to vector<4x256xf32>
    %61 = arith.mulf %58, %60 : vector<4x256xf32>
    %c6_44 = arith.constant 6 : index
    %c0_45 = arith.constant 0 : index
    %c0_46 = arith.constant 0 : index
    %62 = vector.load %arg7[%c6_44, %c0_45, %c0_46] : memref<9x8x4xf32, #tpu.memory_space<vmem>>, vector<1x8x4xf32>
    %63 = vector.shape_cast %62 : vector<1x8x4xf32> to vector<8x4xf32>
    %cst_47 = arith.constant dense<0.000000e+00> : vector<8x256xf32>
    %64 = tpu.matmul %63, %61, %cst_47 {dimension_numbers = #tpu.dot_dimension_numbers<[1], [0], [0], [1], [0, 0, 1, 1], [], []>} : vector<8x4xf32>, vector<4x256xf32>, vector<8x256xf32> -> vector<8x256xf32>
    %65 = arith.addf %57, %64 : vector<8x256xf32>
    %c255_i32 = arith.constant 255 : i32
    %66 = tpu.dynamic_rotate %2 by %c255_i32 dim 1 : vector<4x256xf32>, i32 -> vector<4x256xf32>
    %c7 = arith.constant 7 : index
    %c0_48 = arith.constant 0 : index
    %c0_49 = arith.constant 0 : index
    %67 = vector.load %arg3[%c7, %c0_48, %c0_49] : memref<9x8x256xf32, #tpu.memory_space<vmem>>, vector<1x4x256xf32>
    %68 = vector.shape_cast %67 : vector<1x4x256xf32> to vector<4x256xf32>
    %69 = arith.mulf %66, %68 : vector<4x256xf32>
    %c7_50 = arith.constant 7 : index
    %c0_51 = arith.constant 0 : index
    %c0_52 = arith.constant 0 : index
    %70 = vector.load %arg7[%c7_50, %c0_51, %c0_52] : memref<9x8x4xf32, #tpu.memory_space<vmem>>, vector<1x8x4xf32>
    %71 = vector.shape_cast %70 : vector<1x8x4xf32> to vector<8x4xf32>
    %cst_53 = arith.constant dense<0.000000e+00> : vector<8x256xf32>
    %72 = tpu.matmul %71, %69, %cst_53 {dimension_numbers = #tpu.dot_dimension_numbers<[1], [0], [0], [1], [0, 0, 1, 1], [], []>} : vector<8x4xf32>, vector<4x256xf32>, vector<8x256xf32> -> vector<8x256xf32>
    %73 = arith.addf %65, %72 : vector<8x256xf32>
    %c239_i32 = arith.constant 239 : i32
    %74 = tpu.dynamic_rotate %2 by %c239_i32 dim 1 : vector<4x256xf32>, i32 -> vector<4x256xf32>
    %c8 = arith.constant 8 : index
    %c0_54 = arith.constant 0 : index
    %c0_55 = arith.constant 0 : index
    %75 = vector.load %arg3[%c8, %c0_54, %c0_55] : memref<9x8x256xf32, #tpu.memory_space<vmem>>, vector<1x4x256xf32>
    %76 = vector.shape_cast %75 : vector<1x4x256xf32> to vector<4x256xf32>
    %77 = arith.mulf %74, %76 : vector<4x256xf32>
    %c8_56 = arith.constant 8 : index
    %c0_57 = arith.constant 0 : index
    %c0_58 = arith.constant 0 : index
    %78 = vector.load %arg7[%c8_56, %c0_57, %c0_58] : memref<9x8x4xf32, #tpu.memory_space<vmem>>, vector<1x8x4xf32>
    %79 = vector.shape_cast %78 : vector<1x8x4xf32> to vector<8x4xf32>
    %cst_59 = arith.constant dense<0.000000e+00> : vector<8x256xf32>
    %80 = tpu.matmul %79, %77, %cst_59 {dimension_numbers = #tpu.dot_dimension_numbers<[1], [0], [0], [1], [0, 0, 1, 1], [], []>} : vector<8x4xf32>, vector<4x256xf32>, vector<8x256xf32> -> vector<8x256xf32>
    %81 = arith.addf %73, %80 : vector<8x256xf32>
    %c0_60 = arith.constant 0 : index
    %c0_61 = arith.constant 0 : index
    %c0_62 = arith.constant 0 : index
    %82 = vector.load %arg5[%c0_60, %c0_61, %c0_62] : memref<1x4x256xf32, #tpu.memory_space<vmem>>, vector<1x4x256xf32>
    %83 = vector.shape_cast %82 : vector<1x4x256xf32> to vector<4x256xf32>
    %c0_63 = arith.constant 0 : index
    %c0_64 = arith.constant 0 : index
    %c0_65 = arith.constant 0 : index
    %84 = vector.load %arg2[%c0_63, %c0_64, %c0_65] : memref<31x4x256xf32, #tpu.memory_space<vmem>>, vector<1x4x256xf32>
    %85 = vector.shape_cast %84 : vector<1x4x256xf32> to vector<4x256xf32>
    %c15_i32_66 = arith.constant 15 : i32
    %86 = tpu.dynamic_rotate %83 by %c15_i32_66 dim 1 : vector<4x256xf32>, i32 -> vector<4x256xf32>
    %87 = arith.mulf %85, %86 : vector<4x256xf32>
    %88 = arith.addf %4, %87 : vector<4x256xf32>
    %c1_67 = arith.constant 1 : index
    %c0_68 = arith.constant 0 : index
    %c0_69 = arith.constant 0 : index
    %89 = vector.load %arg2[%c1_67, %c0_68, %c0_69] : memref<31x4x256xf32, #tpu.memory_space<vmem>>, vector<1x4x256xf32>
    %90 = vector.shape_cast %89 : vector<1x4x256xf32> to vector<4x256xf32>
    %c14_i32 = arith.constant 14 : i32
    %91 = tpu.dynamic_rotate %83 by %c14_i32 dim 1 : vector<4x256xf32>, i32 -> vector<4x256xf32>
    %92 = arith.mulf %90, %91 : vector<4x256xf32>
    %93 = arith.addf %88, %92 : vector<4x256xf32>
    %c2_70 = arith.constant 2 : index
    %c0_71 = arith.constant 0 : index
    %c0_72 = arith.constant 0 : index
    %94 = vector.load %arg2[%c2_70, %c0_71, %c0_72] : memref<31x4x256xf32, #tpu.memory_space<vmem>>, vector<1x4x256xf32>
    %95 = vector.shape_cast %94 : vector<1x4x256xf32> to vector<4x256xf32>
    %c13_i32 = arith.constant 13 : i32
    %96 = tpu.dynamic_rotate %83 by %c13_i32 dim 1 : vector<4x256xf32>, i32 -> vector<4x256xf32>
    %97 = arith.mulf %95, %96 : vector<4x256xf32>
    %98 = arith.addf %93, %97 : vector<4x256xf32>
    %c3_73 = arith.constant 3 : index
    %c0_74 = arith.constant 0 : index
    %c0_75 = arith.constant 0 : index
    %99 = vector.load %arg2[%c3_73, %c0_74, %c0_75] : memref<31x4x256xf32, #tpu.memory_space<vmem>>, vector<1x4x256xf32>
    %100 = vector.shape_cast %99 : vector<1x4x256xf32> to vector<4x256xf32>
    %c12_i32 = arith.constant 12 : i32
    %101 = tpu.dynamic_rotate %83 by %c12_i32 dim 1 : vector<4x256xf32>, i32 -> vector<4x256xf32>
    %102 = arith.mulf %100, %101 : vector<4x256xf32>
    %103 = arith.addf %98, %102 : vector<4x256xf32>
    %c4_76 = arith.constant 4 : index
    %c0_77 = arith.constant 0 : index
    %c0_78 = arith.constant 0 : index
    %104 = vector.load %arg2[%c4_76, %c0_77, %c0_78] : memref<31x4x256xf32, #tpu.memory_space<vmem>>, vector<1x4x256xf32>
    %105 = vector.shape_cast %104 : vector<1x4x256xf32> to vector<4x256xf32>
    %c11_i32 = arith.constant 11 : i32
    %106 = tpu.dynamic_rotate %83 by %c11_i32 dim 1 : vector<4x256xf32>, i32 -> vector<4x256xf32>
    %107 = arith.mulf %105, %106 : vector<4x256xf32>
    %108 = arith.addf %103, %107 : vector<4x256xf32>
    %c5_79 = arith.constant 5 : index
    %c0_80 = arith.constant 0 : index
    %c0_81 = arith.constant 0 : index
    %109 = vector.load %arg2[%c5_79, %c0_80, %c0_81] : memref<31x4x256xf32, #tpu.memory_space<vmem>>, vector<1x4x256xf32>
    %110 = vector.shape_cast %109 : vector<1x4x256xf32> to vector<4x256xf32>
    %c10_i32 = arith.constant 10 : i32
    %111 = tpu.dynamic_rotate %83 by %c10_i32 dim 1 : vector<4x256xf32>, i32 -> vector<4x256xf32>
    %112 = arith.mulf %110, %111 : vector<4x256xf32>
    %113 = arith.addf %108, %112 : vector<4x256xf32>
    %c6_82 = arith.constant 6 : index
    %c0_83 = arith.constant 0 : index
    %c0_84 = arith.constant 0 : index
    %114 = vector.load %arg2[%c6_82, %c0_83, %c0_84] : memref<31x4x256xf32, #tpu.memory_space<vmem>>, vector<1x4x256xf32>
    %115 = vector.shape_cast %114 : vector<1x4x256xf32> to vector<4x256xf32>
    %c9_i32 = arith.constant 9 : i32
    %116 = tpu.dynamic_rotate %83 by %c9_i32 dim 1 : vector<4x256xf32>, i32 -> vector<4x256xf32>
    %117 = arith.mulf %115, %116 : vector<4x256xf32>
    %118 = arith.addf %113, %117 : vector<4x256xf32>
    %c7_85 = arith.constant 7 : index
    %c0_86 = arith.constant 0 : index
    %c0_87 = arith.constant 0 : index
    %119 = vector.load %arg2[%c7_85, %c0_86, %c0_87] : memref<31x4x256xf32, #tpu.memory_space<vmem>>, vector<1x4x256xf32>
    %120 = vector.shape_cast %119 : vector<1x4x256xf32> to vector<4x256xf32>
    %c8_i32 = arith.constant 8 : i32
    %121 = tpu.dynamic_rotate %83 by %c8_i32 dim 1 : vector<4x256xf32>, i32 -> vector<4x256xf32>
    %122 = arith.mulf %120, %121 : vector<4x256xf32>
    %123 = arith.addf %118, %122 : vector<4x256xf32>
    %c8_88 = arith.constant 8 : index
    %c0_89 = arith.constant 0 : index
    %c0_90 = arith.constant 0 : index
    %124 = vector.load %arg2[%c8_88, %c0_89, %c0_90] : memref<31x4x256xf32, #tpu.memory_space<vmem>>, vector<1x4x256xf32>
    %125 = vector.shape_cast %124 : vector<1x4x256xf32> to vector<4x256xf32>
    %c7_i32 = arith.constant 7 : i32
    %126 = tpu.dynamic_rotate %83 by %c7_i32 dim 1 : vector<4x256xf32>, i32 -> vector<4x256xf32>
    %127 = arith.mulf %125, %126 : vector<4x256xf32>
    %128 = arith.addf %123, %127 : vector<4x256xf32>
    %c9 = arith.constant 9 : index
    %c0_91 = arith.constant 0 : index
    %c0_92 = arith.constant 0 : index
    %129 = vector.load %arg2[%c9, %c0_91, %c0_92] : memref<31x4x256xf32, #tpu.memory_space<vmem>>, vector<1x4x256xf32>
    %130 = vector.shape_cast %129 : vector<1x4x256xf32> to vector<4x256xf32>
    %c6_i32 = arith.constant 6 : i32
    %131 = tpu.dynamic_rotate %83 by %c6_i32 dim 1 : vector<4x256xf32>, i32 -> vector<4x256xf32>
    %132 = arith.mulf %130, %131 : vector<4x256xf32>
    %133 = arith.addf %128, %132 : vector<4x256xf32>
    %c10 = arith.constant 10 : index
    %c0_93 = arith.constant 0 : index
    %c0_94 = arith.constant 0 : index
    %134 = vector.load %arg2[%c10, %c0_93, %c0_94] : memref<31x4x256xf32, #tpu.memory_space<vmem>>, vector<1x4x256xf32>
    %135 = vector.shape_cast %134 : vector<1x4x256xf32> to vector<4x256xf32>
    %c5_i32 = arith.constant 5 : i32
    %136 = tpu.dynamic_rotate %83 by %c5_i32 dim 1 : vector<4x256xf32>, i32 -> vector<4x256xf32>
    %137 = arith.mulf %135, %136 : vector<4x256xf32>
    %138 = arith.addf %133, %137 : vector<4x256xf32>
    %c11 = arith.constant 11 : index
    %c0_95 = arith.constant 0 : index
    %c0_96 = arith.constant 0 : index
    %139 = vector.load %arg2[%c11, %c0_95, %c0_96] : memref<31x4x256xf32, #tpu.memory_space<vmem>>, vector<1x4x256xf32>
    %140 = vector.shape_cast %139 : vector<1x4x256xf32> to vector<4x256xf32>
    %c4_i32 = arith.constant 4 : i32
    %141 = tpu.dynamic_rotate %83 by %c4_i32 dim 1 : vector<4x256xf32>, i32 -> vector<4x256xf32>
    %142 = arith.mulf %140, %141 : vector<4x256xf32>
    %143 = arith.addf %138, %142 : vector<4x256xf32>
    %c12 = arith.constant 12 : index
    %c0_97 = arith.constant 0 : index
    %c0_98 = arith.constant 0 : index
    %144 = vector.load %arg2[%c12, %c0_97, %c0_98] : memref<31x4x256xf32, #tpu.memory_space<vmem>>, vector<1x4x256xf32>
    %145 = vector.shape_cast %144 : vector<1x4x256xf32> to vector<4x256xf32>
    %c3_i32 = arith.constant 3 : i32
    %146 = tpu.dynamic_rotate %83 by %c3_i32 dim 1 : vector<4x256xf32>, i32 -> vector<4x256xf32>
    %147 = arith.mulf %145, %146 : vector<4x256xf32>
    %148 = arith.addf %143, %147 : vector<4x256xf32>
    %c13 = arith.constant 13 : index
    %c0_99 = arith.constant 0 : index
    %c0_100 = arith.constant 0 : index
    %149 = vector.load %arg2[%c13, %c0_99, %c0_100] : memref<31x4x256xf32, #tpu.memory_space<vmem>>, vector<1x4x256xf32>
    %150 = vector.shape_cast %149 : vector<1x4x256xf32> to vector<4x256xf32>
    %c2_i32 = arith.constant 2 : i32
    %151 = tpu.dynamic_rotate %83 by %c2_i32 dim 1 : vector<4x256xf32>, i32 -> vector<4x256xf32>
    %152 = arith.mulf %150, %151 : vector<4x256xf32>
    %153 = arith.addf %148, %152 : vector<4x256xf32>
    %c14 = arith.constant 14 : index
    %c0_101 = arith.constant 0 : index
    %c0_102 = arith.constant 0 : index
    %154 = vector.load %arg2[%c14, %c0_101, %c0_102] : memref<31x4x256xf32, #tpu.memory_space<vmem>>, vector<1x4x256xf32>
    %155 = vector.shape_cast %154 : vector<1x4x256xf32> to vector<4x256xf32>
    %c1_i32_103 = arith.constant 1 : i32
    %156 = tpu.dynamic_rotate %83 by %c1_i32_103 dim 1 : vector<4x256xf32>, i32 -> vector<4x256xf32>
    %157 = arith.mulf %155, %156 : vector<4x256xf32>
    %158 = arith.addf %153, %157 : vector<4x256xf32>
    %c15 = arith.constant 15 : index
    %c0_104 = arith.constant 0 : index
    %c0_105 = arith.constant 0 : index
    %159 = vector.load %arg2[%c15, %c0_104, %c0_105] : memref<31x4x256xf32, #tpu.memory_space<vmem>>, vector<1x4x256xf32>
    %160 = vector.shape_cast %159 : vector<1x4x256xf32> to vector<4x256xf32>
    %161 = arith.mulf %160, %83 : vector<4x256xf32>
    %162 = arith.addf %158, %161 : vector<4x256xf32>
    %c16 = arith.constant 16 : index
    %c0_106 = arith.constant 0 : index
    %c0_107 = arith.constant 0 : index
    %163 = vector.load %arg2[%c16, %c0_106, %c0_107] : memref<31x4x256xf32, #tpu.memory_space<vmem>>, vector<1x4x256xf32>
    %164 = vector.shape_cast %163 : vector<1x4x256xf32> to vector<4x256xf32>
    %c255_i32_108 = arith.constant 255 : i32
    %165 = tpu.dynamic_rotate %83 by %c255_i32_108 dim 1 : vector<4x256xf32>, i32 -> vector<4x256xf32>
    %166 = arith.mulf %164, %165 : vector<4x256xf32>
    %167 = arith.addf %162, %166 : vector<4x256xf32>
    %c17 = arith.constant 17 : index
    %c0_109 = arith.constant 0 : index
    %c0_110 = arith.constant 0 : index
    %168 = vector.load %arg2[%c17, %c0_109, %c0_110] : memref<31x4x256xf32, #tpu.memory_space<vmem>>, vector<1x4x256xf32>
    %169 = vector.shape_cast %168 : vector<1x4x256xf32> to vector<4x256xf32>
    %c254_i32 = arith.constant 254 : i32
    %170 = tpu.dynamic_rotate %83 by %c254_i32 dim 1 : vector<4x256xf32>, i32 -> vector<4x256xf32>
    %171 = arith.mulf %169, %170 : vector<4x256xf32>
    %172 = arith.addf %167, %171 : vector<4x256xf32>
    %c18 = arith.constant 18 : index
    %c0_111 = arith.constant 0 : index
    %c0_112 = arith.constant 0 : index
    %173 = vector.load %arg2[%c18, %c0_111, %c0_112] : memref<31x4x256xf32, #tpu.memory_space<vmem>>, vector<1x4x256xf32>
    %174 = vector.shape_cast %173 : vector<1x4x256xf32> to vector<4x256xf32>
    %c253_i32 = arith.constant 253 : i32
    %175 = tpu.dynamic_rotate %83 by %c253_i32 dim 1 : vector<4x256xf32>, i32 -> vector<4x256xf32>
    %176 = arith.mulf %174, %175 : vector<4x256xf32>
    %177 = arith.addf %172, %176 : vector<4x256xf32>
    %c19 = arith.constant 19 : index
    %c0_113 = arith.constant 0 : index
    %c0_114 = arith.constant 0 : index
    %178 = vector.load %arg2[%c19, %c0_113, %c0_114] : memref<31x4x256xf32, #tpu.memory_space<vmem>>, vector<1x4x256xf32>
    %179 = vector.shape_cast %178 : vector<1x4x256xf32> to vector<4x256xf32>
    %c252_i32 = arith.constant 252 : i32
    %180 = tpu.dynamic_rotate %83 by %c252_i32 dim 1 : vector<4x256xf32>, i32 -> vector<4x256xf32>
    %181 = arith.mulf %179, %180 : vector<4x256xf32>
    %182 = arith.addf %177, %181 : vector<4x256xf32>
    %c20 = arith.constant 20 : index
    %c0_115 = arith.constant 0 : index
    %c0_116 = arith.constant 0 : index
    %183 = vector.load %arg2[%c20, %c0_115, %c0_116] : memref<31x4x256xf32, #tpu.memory_space<vmem>>, vector<1x4x256xf32>
    %184 = vector.shape_cast %183 : vector<1x4x256xf32> to vector<4x256xf32>
    %c251_i32 = arith.constant 251 : i32
    %185 = tpu.dynamic_rotate %83 by %c251_i32 dim 1 : vector<4x256xf32>, i32 -> vector<4x256xf32>
    %186 = arith.mulf %184, %185 : vector<4x256xf32>
    %187 = arith.addf %182, %186 : vector<4x256xf32>
    %c21 = arith.constant 21 : index
    %c0_117 = arith.constant 0 : index
    %c0_118 = arith.constant 0 : index
    %188 = vector.load %arg2[%c21, %c0_117, %c0_118] : memref<31x4x256xf32, #tpu.memory_space<vmem>>, vector<1x4x256xf32>
    %189 = vector.shape_cast %188 : vector<1x4x256xf32> to vector<4x256xf32>
    %c250_i32 = arith.constant 250 : i32
    %190 = tpu.dynamic_rotate %83 by %c250_i32 dim 1 : vector<4x256xf32>, i32 -> vector<4x256xf32>
    %191 = arith.mulf %189, %190 : vector<4x256xf32>
    %192 = arith.addf %187, %191 : vector<4x256xf32>
    %c22 = arith.constant 22 : index
    %c0_119 = arith.constant 0 : index
    %c0_120 = arith.constant 0 : index
    %193 = vector.load %arg2[%c22, %c0_119, %c0_120] : memref<31x4x256xf32, #tpu.memory_space<vmem>>, vector<1x4x256xf32>
    %194 = vector.shape_cast %193 : vector<1x4x256xf32> to vector<4x256xf32>
    %c249_i32 = arith.constant 249 : i32
    %195 = tpu.dynamic_rotate %83 by %c249_i32 dim 1 : vector<4x256xf32>, i32 -> vector<4x256xf32>
    %196 = arith.mulf %194, %195 : vector<4x256xf32>
    %197 = arith.addf %192, %196 : vector<4x256xf32>
    %c23 = arith.constant 23 : index
    %c0_121 = arith.constant 0 : index
    %c0_122 = arith.constant 0 : index
    %198 = vector.load %arg2[%c23, %c0_121, %c0_122] : memref<31x4x256xf32, #tpu.memory_space<vmem>>, vector<1x4x256xf32>
    %199 = vector.shape_cast %198 : vector<1x4x256xf32> to vector<4x256xf32>
    %c248_i32 = arith.constant 248 : i32
    %200 = tpu.dynamic_rotate %83 by %c248_i32 dim 1 : vector<4x256xf32>, i32 -> vector<4x256xf32>
    %201 = arith.mulf %199, %200 : vector<4x256xf32>
    %202 = arith.addf %197, %201 : vector<4x256xf32>
    %c24 = arith.constant 24 : index
    %c0_123 = arith.constant 0 : index
    %c0_124 = arith.constant 0 : index
    %203 = vector.load %arg2[%c24, %c0_123, %c0_124] : memref<31x4x256xf32, #tpu.memory_space<vmem>>, vector<1x4x256xf32>
    %204 = vector.shape_cast %203 : vector<1x4x256xf32> to vector<4x256xf32>
    %c247_i32 = arith.constant 247 : i32
    %205 = tpu.dynamic_rotate %83 by %c247_i32 dim 1 : vector<4x256xf32>, i32 -> vector<4x256xf32>
    %206 = arith.mulf %204, %205 : vector<4x256xf32>
    %207 = arith.addf %202, %206 : vector<4x256xf32>
    %c25 = arith.constant 25 : index
    %c0_125 = arith.constant 0 : index
    %c0_126 = arith.constant 0 : index
    %208 = vector.load %arg2[%c25, %c0_125, %c0_126] : memref<31x4x256xf32, #tpu.memory_space<vmem>>, vector<1x4x256xf32>
    %209 = vector.shape_cast %208 : vector<1x4x256xf32> to vector<4x256xf32>
    %c246_i32 = arith.constant 246 : i32
    %210 = tpu.dynamic_rotate %83 by %c246_i32 dim 1 : vector<4x256xf32>, i32 -> vector<4x256xf32>
    %211 = arith.mulf %209, %210 : vector<4x256xf32>
    %212 = arith.addf %207, %211 : vector<4x256xf32>
    %c26 = arith.constant 26 : index
    %c0_127 = arith.constant 0 : index
    %c0_128 = arith.constant 0 : index
    %213 = vector.load %arg2[%c26, %c0_127, %c0_128] : memref<31x4x256xf32, #tpu.memory_space<vmem>>, vector<1x4x256xf32>
    %214 = vector.shape_cast %213 : vector<1x4x256xf32> to vector<4x256xf32>
    %c245_i32 = arith.constant 245 : i32
    %215 = tpu.dynamic_rotate %83 by %c245_i32 dim 1 : vector<4x256xf32>, i32 -> vector<4x256xf32>
    %216 = arith.mulf %214, %215 : vector<4x256xf32>
    %217 = arith.addf %212, %216 : vector<4x256xf32>
    %c27 = arith.constant 27 : index
    %c0_129 = arith.constant 0 : index
    %c0_130 = arith.constant 0 : index
    %218 = vector.load %arg2[%c27, %c0_129, %c0_130] : memref<31x4x256xf32, #tpu.memory_space<vmem>>, vector<1x4x256xf32>
    %219 = vector.shape_cast %218 : vector<1x4x256xf32> to vector<4x256xf32>
    %c244_i32 = arith.constant 244 : i32
    %220 = tpu.dynamic_rotate %83 by %c244_i32 dim 1 : vector<4x256xf32>, i32 -> vector<4x256xf32>
    %221 = arith.mulf %219, %220 : vector<4x256xf32>
    %222 = arith.addf %217, %221 : vector<4x256xf32>
    %c28 = arith.constant 28 : index
    %c0_131 = arith.constant 0 : index
    %c0_132 = arith.constant 0 : index
    %223 = vector.load %arg2[%c28, %c0_131, %c0_132] : memref<31x4x256xf32, #tpu.memory_space<vmem>>, vector<1x4x256xf32>
    %224 = vector.shape_cast %223 : vector<1x4x256xf32> to vector<4x256xf32>
    %c243_i32 = arith.constant 243 : i32
    %225 = tpu.dynamic_rotate %83 by %c243_i32 dim 1 : vector<4x256xf32>, i32 -> vector<4x256xf32>
    %226 = arith.mulf %224, %225 : vector<4x256xf32>
    %227 = arith.addf %222, %226 : vector<4x256xf32>
    %c29 = arith.constant 29 : index
    %c0_133 = arith.constant 0 : index
    %c0_134 = arith.constant 0 : index
    %228 = vector.load %arg2[%c29, %c0_133, %c0_134] : memref<31x4x256xf32, #tpu.memory_space<vmem>>, vector<1x4x256xf32>
    %229 = vector.shape_cast %228 : vector<1x4x256xf32> to vector<4x256xf32>
    %c242_i32 = arith.constant 242 : i32
    %230 = tpu.dynamic_rotate %83 by %c242_i32 dim 1 : vector<4x256xf32>, i32 -> vector<4x256xf32>
    %231 = arith.mulf %229, %230 : vector<4x256xf32>
    %232 = arith.addf %227, %231 : vector<4x256xf32>
    %c30 = arith.constant 30 : index
    %c0_135 = arith.constant 0 : index
    %c0_136 = arith.constant 0 : index
    %233 = vector.load %arg2[%c30, %c0_135, %c0_136] : memref<31x4x256xf32, #tpu.memory_space<vmem>>, vector<1x4x256xf32>
    %234 = vector.shape_cast %233 : vector<1x4x256xf32> to vector<4x256xf32>
    %c241_i32_137 = arith.constant 241 : i32
    %235 = tpu.dynamic_rotate %83 by %c241_i32_137 dim 1 : vector<4x256xf32>, i32 -> vector<4x256xf32>
    %236 = arith.mulf %234, %235 : vector<4x256xf32>
    %237 = arith.addf %232, %236 : vector<4x256xf32>
    %c17_i32_138 = arith.constant 17 : i32
    %238 = tpu.dynamic_rotate %237 by %c17_i32_138 dim 1 : vector<4x256xf32>, i32 -> vector<4x256xf32>
    %c0_139 = arith.constant 0 : index
    %c0_140 = arith.constant 0 : index
    %c0_141 = arith.constant 0 : index
    %239 = vector.load %arg3[%c0_139, %c0_140, %c0_141] : memref<9x8x256xf32, #tpu.memory_space<vmem>>, vector<1x4x256xf32>
    %240 = vector.shape_cast %239 : vector<1x4x256xf32> to vector<4x256xf32>
    %241 = arith.mulf %238, %240 : vector<4x256xf32>
    %c0_142 = arith.constant 0 : index
    %c0_143 = arith.constant 0 : index
    %c0_144 = arith.constant 0 : index
    %242 = vector.load %arg6[%c0_142, %c0_143, %c0_144] : memref<9x8x4xf32, #tpu.memory_space<vmem>>, vector<1x8x4xf32>
    %243 = vector.shape_cast %242 : vector<1x8x4xf32> to vector<8x4xf32>
    %cst_145 = arith.constant dense<0.000000e+00> : vector<8x256xf32>
    %244 = tpu.matmul %243, %241, %cst_145 {dimension_numbers = #tpu.dot_dimension_numbers<[1], [0], [0], [1], [0, 0, 1, 1], [], []>} : vector<8x4xf32>, vector<4x256xf32>, vector<8x256xf32> -> vector<8x256xf32>
    %245 = arith.addf %81, %244 : vector<8x256xf32>
    %c1_i32_146 = arith.constant 1 : i32
    %246 = tpu.dynamic_rotate %237 by %c1_i32_146 dim 1 : vector<4x256xf32>, i32 -> vector<4x256xf32>
    %c1_147 = arith.constant 1 : index
    %c0_148 = arith.constant 0 : index
    %c0_149 = arith.constant 0 : index
    %247 = vector.load %arg3[%c1_147, %c0_148, %c0_149] : memref<9x8x256xf32, #tpu.memory_space<vmem>>, vector<1x4x256xf32>
    %248 = vector.shape_cast %247 : vector<1x4x256xf32> to vector<4x256xf32>
    %249 = arith.mulf %246, %248 : vector<4x256xf32>
    %c1_150 = arith.constant 1 : index
    %c0_151 = arith.constant 0 : index
    %c0_152 = arith.constant 0 : index
    %250 = vector.load %arg6[%c1_150, %c0_151, %c0_152] : memref<9x8x4xf32, #tpu.memory_space<vmem>>, vector<1x8x4xf32>
    %251 = vector.shape_cast %250 : vector<1x8x4xf32> to vector<8x4xf32>
    %cst_153 = arith.constant dense<0.000000e+00> : vector<8x256xf32>
    %252 = tpu.matmul %251, %249, %cst_153 {dimension_numbers = #tpu.dot_dimension_numbers<[1], [0], [0], [1], [0, 0, 1, 1], [], []>} : vector<8x4xf32>, vector<4x256xf32>, vector<8x256xf32> -> vector<8x256xf32>
    %253 = arith.addf %245, %252 : vector<8x256xf32>
    %c241_i32_154 = arith.constant 241 : i32
    %254 = tpu.dynamic_rotate %237 by %c241_i32_154 dim 1 : vector<4x256xf32>, i32 -> vector<4x256xf32>
    %c2_155 = arith.constant 2 : index
    %c0_156 = arith.constant 0 : index
    %c0_157 = arith.constant 0 : index
    %255 = vector.load %arg3[%c2_155, %c0_156, %c0_157] : memref<9x8x256xf32, #tpu.memory_space<vmem>>, vector<1x4x256xf32>
    %256 = vector.shape_cast %255 : vector<1x4x256xf32> to vector<4x256xf32>
    %257 = arith.mulf %254, %256 : vector<4x256xf32>
    %c2_158 = arith.constant 2 : index
    %c0_159 = arith.constant 0 : index
    %c0_160 = arith.constant 0 : index
    %258 = vector.load %arg6[%c2_158, %c0_159, %c0_160] : memref<9x8x4xf32, #tpu.memory_space<vmem>>, vector<1x8x4xf32>
    %259 = vector.shape_cast %258 : vector<1x8x4xf32> to vector<8x4xf32>
    %cst_161 = arith.constant dense<0.000000e+00> : vector<8x256xf32>
    %260 = tpu.matmul %259, %257, %cst_161 {dimension_numbers = #tpu.dot_dimension_numbers<[1], [0], [0], [1], [0, 0, 1, 1], [], []>} : vector<8x4xf32>, vector<4x256xf32>, vector<8x256xf32> -> vector<8x256xf32>
    %261 = arith.addf %253, %260 : vector<8x256xf32>
    %c16_i32_162 = arith.constant 16 : i32
    %262 = tpu.dynamic_rotate %237 by %c16_i32_162 dim 1 : vector<4x256xf32>, i32 -> vector<4x256xf32>
    %c3_163 = arith.constant 3 : index
    %c0_164 = arith.constant 0 : index
    %c0_165 = arith.constant 0 : index
    %263 = vector.load %arg3[%c3_163, %c0_164, %c0_165] : memref<9x8x256xf32, #tpu.memory_space<vmem>>, vector<1x4x256xf32>
    %264 = vector.shape_cast %263 : vector<1x4x256xf32> to vector<4x256xf32>
    %265 = arith.mulf %262, %264 : vector<4x256xf32>
    %c3_166 = arith.constant 3 : index
    %c0_167 = arith.constant 0 : index
    %c0_168 = arith.constant 0 : index
    %266 = vector.load %arg6[%c3_166, %c0_167, %c0_168] : memref<9x8x4xf32, #tpu.memory_space<vmem>>, vector<1x8x4xf32>
    %267 = vector.shape_cast %266 : vector<1x8x4xf32> to vector<8x4xf32>
    %cst_169 = arith.constant dense<0.000000e+00> : vector<8x256xf32>
    %268 = tpu.matmul %267, %265, %cst_169 {dimension_numbers = #tpu.dot_dimension_numbers<[1], [0], [0], [1], [0, 0, 1, 1], [], []>} : vector<8x4xf32>, vector<4x256xf32>, vector<8x256xf32> -> vector<8x256xf32>
    %269 = arith.addf %261, %268 : vector<8x256xf32>
    %c4_170 = arith.constant 4 : index
    %c0_171 = arith.constant 0 : index
    %c0_172 = arith.constant 0 : index
    %270 = vector.load %arg6[%c4_170, %c0_171, %c0_172] : memref<9x8x4xf32, #tpu.memory_space<vmem>>, vector<1x8x4xf32>
    %271 = vector.shape_cast %270 : vector<1x8x4xf32> to vector<8x4xf32>
    %cst_173 = arith.constant dense<0.000000e+00> : vector<8x256xf32>
    %272 = tpu.matmul %271, %237, %cst_173 {dimension_numbers = #tpu.dot_dimension_numbers<[1], [0], [0], [1], [0, 0, 1, 1], [], []>} : vector<8x4xf32>, vector<4x256xf32>, vector<8x256xf32> -> vector<8x256xf32>
    %273 = arith.addf %269, %272 : vector<8x256xf32>
    %c240_i32_174 = arith.constant 240 : i32
    %274 = tpu.dynamic_rotate %237 by %c240_i32_174 dim 1 : vector<4x256xf32>, i32 -> vector<4x256xf32>
    %c5_175 = arith.constant 5 : index
    %c0_176 = arith.constant 0 : index
    %c0_177 = arith.constant 0 : index
    %275 = vector.load %arg3[%c5_175, %c0_176, %c0_177] : memref<9x8x256xf32, #tpu.memory_space<vmem>>, vector<1x4x256xf32>
    %276 = vector.shape_cast %275 : vector<1x4x256xf32> to vector<4x256xf32>
    %277 = arith.mulf %274, %276 : vector<4x256xf32>
    %c5_178 = arith.constant 5 : index
    %c0_179 = arith.constant 0 : index
    %c0_180 = arith.constant 0 : index
    %278 = vector.load %arg6[%c5_178, %c0_179, %c0_180] : memref<9x8x4xf32, #tpu.memory_space<vmem>>, vector<1x8x4xf32>
    %279 = vector.shape_cast %278 : vector<1x8x4xf32> to vector<8x4xf32>
    %cst_181 = arith.constant dense<0.000000e+00> : vector<8x256xf32>
    %280 = tpu.matmul %279, %277, %cst_181 {dimension_numbers = #tpu.dot_dimension_numbers<[1], [0], [0], [1], [0, 0, 1, 1], [], []>} : vector<8x4xf32>, vector<4x256xf32>, vector<8x256xf32> -> vector<8x256xf32>
    %281 = arith.addf %273, %280 : vector<8x256xf32>
    %c15_i32_182 = arith.constant 15 : i32
    %282 = tpu.dynamic_rotate %237 by %c15_i32_182 dim 1 : vector<4x256xf32>, i32 -> vector<4x256xf32>
    %c6_183 = arith.constant 6 : index
    %c0_184 = arith.constant 0 : index
    %c0_185 = arith.constant 0 : index
    %283 = vector.load %arg3[%c6_183, %c0_184, %c0_185] : memref<9x8x256xf32, #tpu.memory_space<vmem>>, vector<1x4x256xf32>
    %284 = vector.shape_cast %283 : vector<1x4x256xf32> to vector<4x256xf32>
    %285 = arith.mulf %282, %284 : vector<4x256xf32>
    %c6_186 = arith.constant 6 : index
    %c0_187 = arith.constant 0 : index
    %c0_188 = arith.constant 0 : index
    %286 = vector.load %arg6[%c6_186, %c0_187, %c0_188] : memref<9x8x4xf32, #tpu.memory_space<vmem>>, vector<1x8x4xf32>
    %287 = vector.shape_cast %286 : vector<1x8x4xf32> to vector<8x4xf32>
    %cst_189 = arith.constant dense<0.000000e+00> : vector<8x256xf32>
    %288 = tpu.matmul %287, %285, %cst_189 {dimension_numbers = #tpu.dot_dimension_numbers<[1], [0], [0], [1], [0, 0, 1, 1], [], []>} : vector<8x4xf32>, vector<4x256xf32>, vector<8x256xf32> -> vector<8x256xf32>
    %289 = arith.addf %281, %288 : vector<8x256xf32>
    %c255_i32_190 = arith.constant 255 : i32
    %290 = tpu.dynamic_rotate %237 by %c255_i32_190 dim 1 : vector<4x256xf32>, i32 -> vector<4x256xf32>
    %c7_191 = arith.constant 7 : index
    %c0_192 = arith.constant 0 : index
    %c0_193 = arith.constant 0 : index
    %291 = vector.load %arg3[%c7_191, %c0_192, %c0_193] : memref<9x8x256xf32, #tpu.memory_space<vmem>>, vector<1x4x256xf32>
    %292 = vector.shape_cast %291 : vector<1x4x256xf32> to vector<4x256xf32>
    %293 = arith.mulf %290, %292 : vector<4x256xf32>
    %c7_194 = arith.constant 7 : index
    %c0_195 = arith.constant 0 : index
    %c0_196 = arith.constant 0 : index
    %294 = vector.load %arg6[%c7_194, %c0_195, %c0_196] : memref<9x8x4xf32, #tpu.memory_space<vmem>>, vector<1x8x4xf32>
    %295 = vector.shape_cast %294 : vector<1x8x4xf32> to vector<8x4xf32>
    %cst_197 = arith.constant dense<0.000000e+00> : vector<8x256xf32>
    %296 = tpu.matmul %295, %293, %cst_197 {dimension_numbers = #tpu.dot_dimension_numbers<[1], [0], [0], [1], [0, 0, 1, 1], [], []>} : vector<8x4xf32>, vector<4x256xf32>, vector<8x256xf32> -> vector<8x256xf32>
    %297 = arith.addf %289, %296 : vector<8x256xf32>
    %c239_i32_198 = arith.constant 239 : i32
    %298 = tpu.dynamic_rotate %237 by %c239_i32_198 dim 1 : vector<4x256xf32>, i32 -> vector<4x256xf32>
    %c8_199 = arith.constant 8 : index
    %c0_200 = arith.constant 0 : index
    %c0_201 = arith.constant 0 : index
    %299 = vector.load %arg3[%c8_199, %c0_200, %c0_201] : memref<9x8x256xf32, #tpu.memory_space<vmem>>, vector<1x4x256xf32>
    %300 = vector.shape_cast %299 : vector<1x4x256xf32> to vector<4x256xf32>
    %301 = arith.mulf %298, %300 : vector<4x256xf32>
    %c8_202 = arith.constant 8 : index
    %c0_203 = arith.constant 0 : index
    %c0_204 = arith.constant 0 : index
    %302 = vector.load %arg6[%c8_202, %c0_203, %c0_204] : memref<9x8x4xf32, #tpu.memory_space<vmem>>, vector<1x8x4xf32>
    %303 = vector.shape_cast %302 : vector<1x8x4xf32> to vector<8x4xf32>
    %cst_205 = arith.constant dense<0.000000e+00> : vector<8x256xf32>
    %304 = tpu.matmul %303, %301, %cst_205 {dimension_numbers = #tpu.dot_dimension_numbers<[1], [0], [0], [1], [0, 0, 1, 1], [], []>} : vector<8x4xf32>, vector<4x256xf32>, vector<8x256xf32> -> vector<8x256xf32>
    %305 = arith.addf %297, %304 : vector<8x256xf32>
    %cst_206 = arith.constant 0.000000e+00 : f32
    %306 = vector.broadcast %cst_206 : f32 to vector<8x256xf32>
    %307 = arith.maximumf %305, %306 : vector<8x256xf32>
    %c17_i32_207 = arith.constant 17 : i32
    %308 = tpu.dynamic_rotate %307 by %c17_i32_207 dim 1 : vector<8x256xf32>, i32 -> vector<8x256xf32>
    %c0_208 = arith.constant 0 : index
    %c0_209 = arith.constant 0 : index
    %c0_210 = arith.constant 0 : index
    %309 = vector.load %arg3[%c0_208, %c0_209, %c0_210] : memref<9x8x256xf32, #tpu.memory_space<vmem>>, vector<1x8x256xf32>
    %310 = vector.shape_cast %309 : vector<1x8x256xf32> to vector<8x256xf32>
    %311 = arith.mulf %308, %310 : vector<8x256xf32>
    %c0_211 = arith.constant 0 : index
    %c0_212 = arith.constant 0 : index
    %c0_213 = arith.constant 0 : index
    %312 = vector.load %arg9[%c0_211, %c0_212, %c0_213] : memref<9x8x8xf32, #tpu.memory_space<vmem>>, vector<1x8x8xf32>
    %313 = vector.shape_cast %312 : vector<1x8x8xf32> to vector<8x8xf32>
    %cst_214 = arith.constant dense<0.000000e+00> : vector<8x256xf32>
    %314 = tpu.matmul %313, %311, %cst_214 {dimension_numbers = #tpu.dot_dimension_numbers<[1], [0], [0], [1], [0, 0, 1, 1], [], []>} : vector<8x8xf32>, vector<8x256xf32>, vector<8x256xf32> -> vector<8x256xf32>
    %315 = arith.addf %10, %314 : vector<8x256xf32>
    %c1_i32_215 = arith.constant 1 : i32
    %316 = tpu.dynamic_rotate %307 by %c1_i32_215 dim 1 : vector<8x256xf32>, i32 -> vector<8x256xf32>
    %c1_216 = arith.constant 1 : index
    %c0_217 = arith.constant 0 : index
    %c0_218 = arith.constant 0 : index
    %317 = vector.load %arg3[%c1_216, %c0_217, %c0_218] : memref<9x8x256xf32, #tpu.memory_space<vmem>>, vector<1x8x256xf32>
    %318 = vector.shape_cast %317 : vector<1x8x256xf32> to vector<8x256xf32>
    %319 = arith.mulf %316, %318 : vector<8x256xf32>
    %c1_219 = arith.constant 1 : index
    %c0_220 = arith.constant 0 : index
    %c0_221 = arith.constant 0 : index
    %320 = vector.load %arg9[%c1_219, %c0_220, %c0_221] : memref<9x8x8xf32, #tpu.memory_space<vmem>>, vector<1x8x8xf32>
    %321 = vector.shape_cast %320 : vector<1x8x8xf32> to vector<8x8xf32>
    %cst_222 = arith.constant dense<0.000000e+00> : vector<8x256xf32>
    %322 = tpu.matmul %321, %319, %cst_222 {dimension_numbers = #tpu.dot_dimension_numbers<[1], [0], [0], [1], [0, 0, 1, 1], [], []>} : vector<8x8xf32>, vector<8x256xf32>, vector<8x256xf32> -> vector<8x256xf32>
    %323 = arith.addf %315, %322 : vector<8x256xf32>
    %c241_i32_223 = arith.constant 241 : i32
    %324 = tpu.dynamic_rotate %307 by %c241_i32_223 dim 1 : vector<8x256xf32>, i32 -> vector<8x256xf32>
    %c2_224 = arith.constant 2 : index
    %c0_225 = arith.constant 0 : index
    %c0_226 = arith.constant 0 : index
    %325 = vector.load %arg3[%c2_224, %c0_225, %c0_226] : memref<9x8x256xf32, #tpu.memory_space<vmem>>, vector<1x8x256xf32>
    %326 = vector.shape_cast %325 : vector<1x8x256xf32> to vector<8x256xf32>
    %327 = arith.mulf %324, %326 : vector<8x256xf32>
    %c2_227 = arith.constant 2 : index
    %c0_228 = arith.constant 0 : index
    %c0_229 = arith.constant 0 : index
    %328 = vector.load %arg9[%c2_227, %c0_228, %c0_229] : memref<9x8x8xf32, #tpu.memory_space<vmem>>, vector<1x8x8xf32>
    %329 = vector.shape_cast %328 : vector<1x8x8xf32> to vector<8x8xf32>
    %cst_230 = arith.constant dense<0.000000e+00> : vector<8x256xf32>
    %330 = tpu.matmul %329, %327, %cst_230 {dimension_numbers = #tpu.dot_dimension_numbers<[1], [0], [0], [1], [0, 0, 1, 1], [], []>} : vector<8x8xf32>, vector<8x256xf32>, vector<8x256xf32> -> vector<8x256xf32>
    %331 = arith.addf %323, %330 : vector<8x256xf32>
    %c16_i32_231 = arith.constant 16 : i32
    %332 = tpu.dynamic_rotate %307 by %c16_i32_231 dim 1 : vector<8x256xf32>, i32 -> vector<8x256xf32>
    %c3_232 = arith.constant 3 : index
    %c0_233 = arith.constant 0 : index
    %c0_234 = arith.constant 0 : index
    %333 = vector.load %arg3[%c3_232, %c0_233, %c0_234] : memref<9x8x256xf32, #tpu.memory_space<vmem>>, vector<1x8x256xf32>
    %334 = vector.shape_cast %333 : vector<1x8x256xf32> to vector<8x256xf32>
    %335 = arith.mulf %332, %334 : vector<8x256xf32>
    %c3_235 = arith.constant 3 : index
    %c0_236 = arith.constant 0 : index
    %c0_237 = arith.constant 0 : index
    %336 = vector.load %arg9[%c3_235, %c0_236, %c0_237] : memref<9x8x8xf32, #tpu.memory_space<vmem>>, vector<1x8x8xf32>
    %337 = vector.shape_cast %336 : vector<1x8x8xf32> to vector<8x8xf32>
    %cst_238 = arith.constant dense<0.000000e+00> : vector<8x256xf32>
    %338 = tpu.matmul %337, %335, %cst_238 {dimension_numbers = #tpu.dot_dimension_numbers<[1], [0], [0], [1], [0, 0, 1, 1], [], []>} : vector<8x8xf32>, vector<8x256xf32>, vector<8x256xf32> -> vector<8x256xf32>
    %339 = arith.addf %331, %338 : vector<8x256xf32>
    %c4_239 = arith.constant 4 : index
    %c0_240 = arith.constant 0 : index
    %c0_241 = arith.constant 0 : index
    %340 = vector.load %arg9[%c4_239, %c0_240, %c0_241] : memref<9x8x8xf32, #tpu.memory_space<vmem>>, vector<1x8x8xf32>
    %341 = vector.shape_cast %340 : vector<1x8x8xf32> to vector<8x8xf32>
    %cst_242 = arith.constant dense<0.000000e+00> : vector<8x256xf32>
    %342 = tpu.matmul %341, %307, %cst_242 {dimension_numbers = #tpu.dot_dimension_numbers<[1], [0], [0], [1], [0, 0, 1, 1], [], []>} : vector<8x8xf32>, vector<8x256xf32>, vector<8x256xf32> -> vector<8x256xf32>
    %343 = arith.addf %339, %342 : vector<8x256xf32>
    %c240_i32_243 = arith.constant 240 : i32
    %344 = tpu.dynamic_rotate %307 by %c240_i32_243 dim 1 : vector<8x256xf32>, i32 -> vector<8x256xf32>
    %c5_244 = arith.constant 5 : index
    %c0_245 = arith.constant 0 : index
    %c0_246 = arith.constant 0 : index
    %345 = vector.load %arg3[%c5_244, %c0_245, %c0_246] : memref<9x8x256xf32, #tpu.memory_space<vmem>>, vector<1x8x256xf32>
    %346 = vector.shape_cast %345 : vector<1x8x256xf32> to vector<8x256xf32>
    %347 = arith.mulf %344, %346 : vector<8x256xf32>
    %c5_247 = arith.constant 5 : index
    %c0_248 = arith.constant 0 : index
    %c0_249 = arith.constant 0 : index
    %348 = vector.load %arg9[%c5_247, %c0_248, %c0_249] : memref<9x8x8xf32, #tpu.memory_space<vmem>>, vector<1x8x8xf32>
    %349 = vector.shape_cast %348 : vector<1x8x8xf32> to vector<8x8xf32>
    %cst_250 = arith.constant dense<0.000000e+00> : vector<8x256xf32>
    %350 = tpu.matmul %349, %347, %cst_250 {dimension_numbers = #tpu.dot_dimension_numbers<[1], [0], [0], [1], [0, 0, 1, 1], [], []>} : vector<8x8xf32>, vector<8x256xf32>, vector<8x256xf32> -> vector<8x256xf32>
    %351 = arith.addf %343, %350 : vector<8x256xf32>
    %c15_i32_251 = arith.constant 15 : i32
    %352 = tpu.dynamic_rotate %307 by %c15_i32_251 dim 1 : vector<8x256xf32>, i32 -> vector<8x256xf32>
    %c6_252 = arith.constant 6 : index
    %c0_253 = arith.constant 0 : index
    %c0_254 = arith.constant 0 : index
    %353 = vector.load %arg3[%c6_252, %c0_253, %c0_254] : memref<9x8x256xf32, #tpu.memory_space<vmem>>, vector<1x8x256xf32>
    %354 = vector.shape_cast %353 : vector<1x8x256xf32> to vector<8x256xf32>
    %355 = arith.mulf %352, %354 : vector<8x256xf32>
    %c6_255 = arith.constant 6 : index
    %c0_256 = arith.constant 0 : index
    %c0_257 = arith.constant 0 : index
    %356 = vector.load %arg9[%c6_255, %c0_256, %c0_257] : memref<9x8x8xf32, #tpu.memory_space<vmem>>, vector<1x8x8xf32>
    %357 = vector.shape_cast %356 : vector<1x8x8xf32> to vector<8x8xf32>
    %cst_258 = arith.constant dense<0.000000e+00> : vector<8x256xf32>
    %358 = tpu.matmul %357, %355, %cst_258 {dimension_numbers = #tpu.dot_dimension_numbers<[1], [0], [0], [1], [0, 0, 1, 1], [], []>} : vector<8x8xf32>, vector<8x256xf32>, vector<8x256xf32> -> vector<8x256xf32>
    %359 = arith.addf %351, %358 : vector<8x256xf32>
    %c255_i32_259 = arith.constant 255 : i32
    %360 = tpu.dynamic_rotate %307 by %c255_i32_259 dim 1 : vector<8x256xf32>, i32 -> vector<8x256xf32>
    %c7_260 = arith.constant 7 : index
    %c0_261 = arith.constant 0 : index
    %c0_262 = arith.constant 0 : index
    %361 = vector.load %arg3[%c7_260, %c0_261, %c0_262] : memref<9x8x256xf32, #tpu.memory_space<vmem>>, vector<1x8x256xf32>
    %362 = vector.shape_cast %361 : vector<1x8x256xf32> to vector<8x256xf32>
    %363 = arith.mulf %360, %362 : vector<8x256xf32>
    %c7_263 = arith.constant 7 : index
    %c0_264 = arith.constant 0 : index
    %c0_265 = arith.constant 0 : index
    %364 = vector.load %arg9[%c7_263, %c0_264, %c0_265] : memref<9x8x8xf32, #tpu.memory_space<vmem>>, vector<1x8x8xf32>
    %365 = vector.shape_cast %364 : vector<1x8x8xf32> to vector<8x8xf32>
    %cst_266 = arith.constant dense<0.000000e+00> : vector<8x256xf32>
    %366 = tpu.matmul %365, %363, %cst_266 {dimension_numbers = #tpu.dot_dimension_numbers<[1], [0], [0], [1], [0, 0, 1, 1], [], []>} : vector<8x8xf32>, vector<8x256xf32>, vector<8x256xf32> -> vector<8x256xf32>
    %367 = arith.addf %359, %366 : vector<8x256xf32>
    %c239_i32_267 = arith.constant 239 : i32
    %368 = tpu.dynamic_rotate %307 by %c239_i32_267 dim 1 : vector<8x256xf32>, i32 -> vector<8x256xf32>
    %c8_268 = arith.constant 8 : index
    %c0_269 = arith.constant 0 : index
    %c0_270 = arith.constant 0 : index
    %369 = vector.load %arg3[%c8_268, %c0_269, %c0_270] : memref<9x8x256xf32, #tpu.memory_space<vmem>>, vector<1x8x256xf32>
    %370 = vector.shape_cast %369 : vector<1x8x256xf32> to vector<8x256xf32>
    %371 = arith.mulf %368, %370 : vector<8x256xf32>
    %c8_271 = arith.constant 8 : index
    %c0_272 = arith.constant 0 : index
    %c0_273 = arith.constant 0 : index
    %372 = vector.load %arg9[%c8_271, %c0_272, %c0_273] : memref<9x8x8xf32, #tpu.memory_space<vmem>>, vector<1x8x8xf32>
    %373 = vector.shape_cast %372 : vector<1x8x8xf32> to vector<8x8xf32>
    %cst_274 = arith.constant dense<0.000000e+00> : vector<8x256xf32>
    %374 = tpu.matmul %373, %371, %cst_274 {dimension_numbers = #tpu.dot_dimension_numbers<[1], [0], [0], [1], [0, 0, 1, 1], [], []>} : vector<8x8xf32>, vector<8x256xf32>, vector<8x256xf32> -> vector<8x256xf32>
    %375 = arith.addf %367, %374 : vector<8x256xf32>
    %cst_275 = arith.constant 0.000000e+00 : f32
    %376 = vector.broadcast %cst_275 : f32 to vector<8x256xf32>
    %377 = arith.maximumf %375, %376 : vector<8x256xf32>
    %c17_i32_276 = arith.constant 17 : i32
    %378 = tpu.dynamic_rotate %377 by %c17_i32_276 dim 1 : vector<8x256xf32>, i32 -> vector<8x256xf32>
    %c0_277 = arith.constant 0 : index
    %c0_278 = arith.constant 0 : index
    %c0_279 = arith.constant 0 : index
    %379 = vector.load %arg3[%c0_277, %c0_278, %c0_279] : memref<9x8x256xf32, #tpu.memory_space<vmem>>, vector<1x8x256xf32>
    %380 = vector.shape_cast %379 : vector<1x8x256xf32> to vector<8x256xf32>
    %381 = arith.mulf %378, %380 : vector<8x256xf32>
    %c0_280 = arith.constant 0 : index
    %c0_281 = arith.constant 0 : index
    %c0_282 = arith.constant 0 : index
    %382 = vector.load %arg11[%c0_280, %c0_281, %c0_282] : memref<9x4x8xf32, #tpu.memory_space<vmem>>, vector<1x4x8xf32>
    %383 = vector.shape_cast %382 : vector<1x4x8xf32> to vector<4x8xf32>
    %cst_283 = arith.constant dense<0.000000e+00> : vector<4x256xf32>
    %384 = tpu.matmul %383, %381, %cst_283 {dimension_numbers = #tpu.dot_dimension_numbers<[1], [0], [0], [1], [0, 0, 1, 1], [], []>} : vector<4x8xf32>, vector<8x256xf32>, vector<4x256xf32> -> vector<4x256xf32>
    %385 = arith.addf %13, %384 : vector<4x256xf32>
    %c1_i32_284 = arith.constant 1 : i32
    %386 = tpu.dynamic_rotate %377 by %c1_i32_284 dim 1 : vector<8x256xf32>, i32 -> vector<8x256xf32>
    %c1_285 = arith.constant 1 : index
    %c0_286 = arith.constant 0 : index
    %c0_287 = arith.constant 0 : index
    %387 = vector.load %arg3[%c1_285, %c0_286, %c0_287] : memref<9x8x256xf32, #tpu.memory_space<vmem>>, vector<1x8x256xf32>
    %388 = vector.shape_cast %387 : vector<1x8x256xf32> to vector<8x256xf32>
    %389 = arith.mulf %386, %388 : vector<8x256xf32>
    %c1_288 = arith.constant 1 : index
    %c0_289 = arith.constant 0 : index
    %c0_290 = arith.constant 0 : index
    %390 = vector.load %arg11[%c1_288, %c0_289, %c0_290] : memref<9x4x8xf32, #tpu.memory_space<vmem>>, vector<1x4x8xf32>
    %391 = vector.shape_cast %390 : vector<1x4x8xf32> to vector<4x8xf32>
    %cst_291 = arith.constant dense<0.000000e+00> : vector<4x256xf32>
    %392 = tpu.matmul %391, %389, %cst_291 {dimension_numbers = #tpu.dot_dimension_numbers<[1], [0], [0], [1], [0, 0, 1, 1], [], []>} : vector<4x8xf32>, vector<8x256xf32>, vector<4x256xf32> -> vector<4x256xf32>
    %393 = arith.addf %385, %392 : vector<4x256xf32>
    %c241_i32_292 = arith.constant 241 : i32
    %394 = tpu.dynamic_rotate %377 by %c241_i32_292 dim 1 : vector<8x256xf32>, i32 -> vector<8x256xf32>
    %c2_293 = arith.constant 2 : index
    %c0_294 = arith.constant 0 : index
    %c0_295 = arith.constant 0 : index
    %395 = vector.load %arg3[%c2_293, %c0_294, %c0_295] : memref<9x8x256xf32, #tpu.memory_space<vmem>>, vector<1x8x256xf32>
    %396 = vector.shape_cast %395 : vector<1x8x256xf32> to vector<8x256xf32>
    %397 = arith.mulf %394, %396 : vector<8x256xf32>
    %c2_296 = arith.constant 2 : index
    %c0_297 = arith.constant 0 : index
    %c0_298 = arith.constant 0 : index
    %398 = vector.load %arg11[%c2_296, %c0_297, %c0_298] : memref<9x4x8xf32, #tpu.memory_space<vmem>>, vector<1x4x8xf32>
    %399 = vector.shape_cast %398 : vector<1x4x8xf32> to vector<4x8xf32>
    %cst_299 = arith.constant dense<0.000000e+00> : vector<4x256xf32>
    %400 = tpu.matmul %399, %397, %cst_299 {dimension_numbers = #tpu.dot_dimension_numbers<[1], [0], [0], [1], [0, 0, 1, 1], [], []>} : vector<4x8xf32>, vector<8x256xf32>, vector<4x256xf32> -> vector<4x256xf32>
    %401 = arith.addf %393, %400 : vector<4x256xf32>
    %c16_i32_300 = arith.constant 16 : i32
    %402 = tpu.dynamic_rotate %377 by %c16_i32_300 dim 1 : vector<8x256xf32>, i32 -> vector<8x256xf32>
    %c3_301 = arith.constant 3 : index
    %c0_302 = arith.constant 0 : index
    %c0_303 = arith.constant 0 : index
    %403 = vector.load %arg3[%c3_301, %c0_302, %c0_303] : memref<9x8x256xf32, #tpu.memory_space<vmem>>, vector<1x8x256xf32>
    %404 = vector.shape_cast %403 : vector<1x8x256xf32> to vector<8x256xf32>
    %405 = arith.mulf %402, %404 : vector<8x256xf32>
    %c3_304 = arith.constant 3 : index
    %c0_305 = arith.constant 0 : index
    %c0_306 = arith.constant 0 : index
    %406 = vector.load %arg11[%c3_304, %c0_305, %c0_306] : memref<9x4x8xf32, #tpu.memory_space<vmem>>, vector<1x4x8xf32>
    %407 = vector.shape_cast %406 : vector<1x4x8xf32> to vector<4x8xf32>
    %cst_307 = arith.constant dense<0.000000e+00> : vector<4x256xf32>
    %408 = tpu.matmul %407, %405, %cst_307 {dimension_numbers = #tpu.dot_dimension_numbers<[1], [0], [0], [1], [0, 0, 1, 1], [], []>} : vector<4x8xf32>, vector<8x256xf32>, vector<4x256xf32> -> vector<4x256xf32>
    %409 = arith.addf %401, %408 : vector<4x256xf32>
    %c4_308 = arith.constant 4 : index
    %c0_309 = arith.constant 0 : index
    %c0_310 = arith.constant 0 : index
    %410 = vector.load %arg11[%c4_308, %c0_309, %c0_310] : memref<9x4x8xf32, #tpu.memory_space<vmem>>, vector<1x4x8xf32>
    %411 = vector.shape_cast %410 : vector<1x4x8xf32> to vector<4x8xf32>
    %cst_311 = arith.constant dense<0.000000e+00> : vector<4x256xf32>
    %412 = tpu.matmul %411, %377, %cst_311 {dimension_numbers = #tpu.dot_dimension_numbers<[1], [0], [0], [1], [0, 0, 1, 1], [], []>} : vector<4x8xf32>, vector<8x256xf32>, vector<4x256xf32> -> vector<4x256xf32>
    %413 = arith.addf %409, %412 : vector<4x256xf32>
    %c240_i32_312 = arith.constant 240 : i32
    %414 = tpu.dynamic_rotate %377 by %c240_i32_312 dim 1 : vector<8x256xf32>, i32 -> vector<8x256xf32>
    %c5_313 = arith.constant 5 : index
    %c0_314 = arith.constant 0 : index
    %c0_315 = arith.constant 0 : index
    %415 = vector.load %arg3[%c5_313, %c0_314, %c0_315] : memref<9x8x256xf32, #tpu.memory_space<vmem>>, vector<1x8x256xf32>
    %416 = vector.shape_cast %415 : vector<1x8x256xf32> to vector<8x256xf32>
    %417 = arith.mulf %414, %416 : vector<8x256xf32>
    %c5_316 = arith.constant 5 : index
    %c0_317 = arith.constant 0 : index
    %c0_318 = arith.constant 0 : index
    %418 = vector.load %arg11[%c5_316, %c0_317, %c0_318] : memref<9x4x8xf32, #tpu.memory_space<vmem>>, vector<1x4x8xf32>
    %419 = vector.shape_cast %418 : vector<1x4x8xf32> to vector<4x8xf32>
    %cst_319 = arith.constant dense<0.000000e+00> : vector<4x256xf32>
    %420 = tpu.matmul %419, %417, %cst_319 {dimension_numbers = #tpu.dot_dimension_numbers<[1], [0], [0], [1], [0, 0, 1, 1], [], []>} : vector<4x8xf32>, vector<8x256xf32>, vector<4x256xf32> -> vector<4x256xf32>
    %421 = arith.addf %413, %420 : vector<4x256xf32>
    %c15_i32_320 = arith.constant 15 : i32
    %422 = tpu.dynamic_rotate %377 by %c15_i32_320 dim 1 : vector<8x256xf32>, i32 -> vector<8x256xf32>
    %c6_321 = arith.constant 6 : index
    %c0_322 = arith.constant 0 : index
    %c0_323 = arith.constant 0 : index
    %423 = vector.load %arg3[%c6_321, %c0_322, %c0_323] : memref<9x8x256xf32, #tpu.memory_space<vmem>>, vector<1x8x256xf32>
    %424 = vector.shape_cast %423 : vector<1x8x256xf32> to vector<8x256xf32>
    %425 = arith.mulf %422, %424 : vector<8x256xf32>
    %c6_324 = arith.constant 6 : index
    %c0_325 = arith.constant 0 : index
    %c0_326 = arith.constant 0 : index
    %426 = vector.load %arg11[%c6_324, %c0_325, %c0_326] : memref<9x4x8xf32, #tpu.memory_space<vmem>>, vector<1x4x8xf32>
    %427 = vector.shape_cast %426 : vector<1x4x8xf32> to vector<4x8xf32>
    %cst_327 = arith.constant dense<0.000000e+00> : vector<4x256xf32>
    %428 = tpu.matmul %427, %425, %cst_327 {dimension_numbers = #tpu.dot_dimension_numbers<[1], [0], [0], [1], [0, 0, 1, 1], [], []>} : vector<4x8xf32>, vector<8x256xf32>, vector<4x256xf32> -> vector<4x256xf32>
    %429 = arith.addf %421, %428 : vector<4x256xf32>
    %c255_i32_328 = arith.constant 255 : i32
    %430 = tpu.dynamic_rotate %377 by %c255_i32_328 dim 1 : vector<8x256xf32>, i32 -> vector<8x256xf32>
    %c7_329 = arith.constant 7 : index
    %c0_330 = arith.constant 0 : index
    %c0_331 = arith.constant 0 : index
    %431 = vector.load %arg3[%c7_329, %c0_330, %c0_331] : memref<9x8x256xf32, #tpu.memory_space<vmem>>, vector<1x8x256xf32>
    %432 = vector.shape_cast %431 : vector<1x8x256xf32> to vector<8x256xf32>
    %433 = arith.mulf %430, %432 : vector<8x256xf32>
    %c7_332 = arith.constant 7 : index
    %c0_333 = arith.constant 0 : index
    %c0_334 = arith.constant 0 : index
    %434 = vector.load %arg11[%c7_332, %c0_333, %c0_334] : memref<9x4x8xf32, #tpu.memory_space<vmem>>, vector<1x4x8xf32>
    %435 = vector.shape_cast %434 : vector<1x4x8xf32> to vector<4x8xf32>
    %cst_335 = arith.constant dense<0.000000e+00> : vector<4x256xf32>
    %436 = tpu.matmul %435, %433, %cst_335 {dimension_numbers = #tpu.dot_dimension_numbers<[1], [0], [0], [1], [0, 0, 1, 1], [], []>} : vector<4x8xf32>, vector<8x256xf32>, vector<4x256xf32> -> vector<4x256xf32>
    %437 = arith.addf %429, %436 : vector<4x256xf32>
    %c239_i32_336 = arith.constant 239 : i32
    %438 = tpu.dynamic_rotate %377 by %c239_i32_336 dim 1 : vector<8x256xf32>, i32 -> vector<8x256xf32>
    %c8_337 = arith.constant 8 : index
    %c0_338 = arith.constant 0 : index
    %c0_339 = arith.constant 0 : index
    %439 = vector.load %arg3[%c8_337, %c0_338, %c0_339] : memref<9x8x256xf32, #tpu.memory_space<vmem>>, vector<1x8x256xf32>
    %440 = vector.shape_cast %439 : vector<1x8x256xf32> to vector<8x256xf32>
    %441 = arith.mulf %438, %440 : vector<8x256xf32>
    %c8_340 = arith.constant 8 : index
    %c0_341 = arith.constant 0 : index
    %c0_342 = arith.constant 0 : index
    %442 = vector.load %arg11[%c8_340, %c0_341, %c0_342] : memref<9x4x8xf32, #tpu.memory_space<vmem>>, vector<1x4x8xf32>
    %443 = vector.shape_cast %442 : vector<1x4x8xf32> to vector<4x8xf32>
    %cst_343 = arith.constant dense<0.000000e+00> : vector<4x256xf32>
    %444 = tpu.matmul %443, %441, %cst_343 {dimension_numbers = #tpu.dot_dimension_numbers<[1], [0], [0], [1], [0, 0, 1, 1], [], []>} : vector<4x8xf32>, vector<8x256xf32>, vector<4x256xf32> -> vector<4x256xf32>
    %445 = arith.addf %437, %444 : vector<4x256xf32>
    %446 = arith.subf %237, %445 : vector<4x256xf32>
    %c0_344 = arith.constant 0 : index
    %c0_345 = arith.constant 0 : index
    %c0_346 = arith.constant 0 : index
    %447 = vector.load %arg2[%c0_344, %c0_345, %c0_346] : memref<31x4x256xf32, #tpu.memory_space<vmem>>, vector<1x4x256xf32>
    %448 = vector.shape_cast %447 : vector<1x4x256xf32> to vector<4x256xf32>
    %c15_i32_347 = arith.constant 15 : i32
    %449 = tpu.dynamic_rotate %446 by %c15_i32_347 dim 1 : vector<4x256xf32>, i32 -> vector<4x256xf32>
    %450 = arith.mulf %448, %449 : vector<4x256xf32>
    %451 = arith.addf %4, %450 : vector<4x256xf32>
    %c1_348 = arith.constant 1 : index
    %c0_349 = arith.constant 0 : index
    %c0_350 = arith.constant 0 : index
    %452 = vector.load %arg2[%c1_348, %c0_349, %c0_350] : memref<31x4x256xf32, #tpu.memory_space<vmem>>, vector<1x4x256xf32>
    %453 = vector.shape_cast %452 : vector<1x4x256xf32> to vector<4x256xf32>
    %c14_i32_351 = arith.constant 14 : i32
    %454 = tpu.dynamic_rotate %446 by %c14_i32_351 dim 1 : vector<4x256xf32>, i32 -> vector<4x256xf32>
    %455 = arith.mulf %453, %454 : vector<4x256xf32>
    %456 = arith.addf %451, %455 : vector<4x256xf32>
    %c2_352 = arith.constant 2 : index
    %c0_353 = arith.constant 0 : index
    %c0_354 = arith.constant 0 : index
    %457 = vector.load %arg2[%c2_352, %c0_353, %c0_354] : memref<31x4x256xf32, #tpu.memory_space<vmem>>, vector<1x4x256xf32>
    %458 = vector.shape_cast %457 : vector<1x4x256xf32> to vector<4x256xf32>
    %c13_i32_355 = arith.constant 13 : i32
    %459 = tpu.dynamic_rotate %446 by %c13_i32_355 dim 1 : vector<4x256xf32>, i32 -> vector<4x256xf32>
    %460 = arith.mulf %458, %459 : vector<4x256xf32>
    %461 = arith.addf %456, %460 : vector<4x256xf32>
    %c3_356 = arith.constant 3 : index
    %c0_357 = arith.constant 0 : index
    %c0_358 = arith.constant 0 : index
    %462 = vector.load %arg2[%c3_356, %c0_357, %c0_358] : memref<31x4x256xf32, #tpu.memory_space<vmem>>, vector<1x4x256xf32>
    %463 = vector.shape_cast %462 : vector<1x4x256xf32> to vector<4x256xf32>
    %c12_i32_359 = arith.constant 12 : i32
    %464 = tpu.dynamic_rotate %446 by %c12_i32_359 dim 1 : vector<4x256xf32>, i32 -> vector<4x256xf32>
    %465 = arith.mulf %463, %464 : vector<4x256xf32>
    %466 = arith.addf %461, %465 : vector<4x256xf32>
    %c4_360 = arith.constant 4 : index
    %c0_361 = arith.constant 0 : index
    %c0_362 = arith.constant 0 : index
    %467 = vector.load %arg2[%c4_360, %c0_361, %c0_362] : memref<31x4x256xf32, #tpu.memory_space<vmem>>, vector<1x4x256xf32>
    %468 = vector.shape_cast %467 : vector<1x4x256xf32> to vector<4x256xf32>
    %c11_i32_363 = arith.constant 11 : i32
    %469 = tpu.dynamic_rotate %446 by %c11_i32_363 dim 1 : vector<4x256xf32>, i32 -> vector<4x256xf32>
    %470 = arith.mulf %468, %469 : vector<4x256xf32>
    %471 = arith.addf %466, %470 : vector<4x256xf32>
    %c5_364 = arith.constant 5 : index
    %c0_365 = arith.constant 0 : index
    %c0_366 = arith.constant 0 : index
    %472 = vector.load %arg2[%c5_364, %c0_365, %c0_366] : memref<31x4x256xf32, #tpu.memory_space<vmem>>, vector<1x4x256xf32>
    %473 = vector.shape_cast %472 : vector<1x4x256xf32> to vector<4x256xf32>
    %c10_i32_367 = arith.constant 10 : i32
    %474 = tpu.dynamic_rotate %446 by %c10_i32_367 dim 1 : vector<4x256xf32>, i32 -> vector<4x256xf32>
    %475 = arith.mulf %473, %474 : vector<4x256xf32>
    %476 = arith.addf %471, %475 : vector<4x256xf32>
    %c6_368 = arith.constant 6 : index
    %c0_369 = arith.constant 0 : index
    %c0_370 = arith.constant 0 : index
    %477 = vector.load %arg2[%c6_368, %c0_369, %c0_370] : memref<31x4x256xf32, #tpu.memory_space<vmem>>, vector<1x4x256xf32>
    %478 = vector.shape_cast %477 : vector<1x4x256xf32> to vector<4x256xf32>
    %c9_i32_371 = arith.constant 9 : i32
    %479 = tpu.dynamic_rotate %446 by %c9_i32_371 dim 1 : vector<4x256xf32>, i32 -> vector<4x256xf32>
    %480 = arith.mulf %478, %479 : vector<4x256xf32>
    %481 = arith.addf %476, %480 : vector<4x256xf32>
    %c7_372 = arith.constant 7 : index
    %c0_373 = arith.constant 0 : index
    %c0_374 = arith.constant 0 : index
    %482 = vector.load %arg2[%c7_372, %c0_373, %c0_374] : memref<31x4x256xf32, #tpu.memory_space<vmem>>, vector<1x4x256xf32>
    %483 = vector.shape_cast %482 : vector<1x4x256xf32> to vector<4x256xf32>
    %c8_i32_375 = arith.constant 8 : i32
    %484 = tpu.dynamic_rotate %446 by %c8_i32_375 dim 1 : vector<4x256xf32>, i32 -> vector<4x256xf32>
    %485 = arith.mulf %483, %484 : vector<4x256xf32>
    %486 = arith.addf %481, %485 : vector<4x256xf32>
    %c8_376 = arith.constant 8 : index
    %c0_377 = arith.constant 0 : index
    %c0_378 = arith.constant 0 : index
    %487 = vector.load %arg2[%c8_376, %c0_377, %c0_378] : memref<31x4x256xf32, #tpu.memory_space<vmem>>, vector<1x4x256xf32>
    %488 = vector.shape_cast %487 : vector<1x4x256xf32> to vector<4x256xf32>
    %c7_i32_379 = arith.constant 7 : i32
    %489 = tpu.dynamic_rotate %446 by %c7_i32_379 dim 1 : vector<4x256xf32>, i32 -> vector<4x256xf32>
    %490 = arith.mulf %488, %489 : vector<4x256xf32>
    %491 = arith.addf %486, %490 : vector<4x256xf32>
    %c9_380 = arith.constant 9 : index
    %c0_381 = arith.constant 0 : index
    %c0_382 = arith.constant 0 : index
    %492 = vector.load %arg2[%c9_380, %c0_381, %c0_382] : memref<31x4x256xf32, #tpu.memory_space<vmem>>, vector<1x4x256xf32>
    %493 = vector.shape_cast %492 : vector<1x4x256xf32> to vector<4x256xf32>
    %c6_i32_383 = arith.constant 6 : i32
    %494 = tpu.dynamic_rotate %446 by %c6_i32_383 dim 1 : vector<4x256xf32>, i32 -> vector<4x256xf32>
    %495 = arith.mulf %493, %494 : vector<4x256xf32>
    %496 = arith.addf %491, %495 : vector<4x256xf32>
    %c10_384 = arith.constant 10 : index
    %c0_385 = arith.constant 0 : index
    %c0_386 = arith.constant 0 : index
    %497 = vector.load %arg2[%c10_384, %c0_385, %c0_386] : memref<31x4x256xf32, #tpu.memory_space<vmem>>, vector<1x4x256xf32>
    %498 = vector.shape_cast %497 : vector<1x4x256xf32> to vector<4x256xf32>
    %c5_i32_387 = arith.constant 5 : i32
    %499 = tpu.dynamic_rotate %446 by %c5_i32_387 dim 1 : vector<4x256xf32>, i32 -> vector<4x256xf32>
    %500 = arith.mulf %498, %499 : vector<4x256xf32>
    %501 = arith.addf %496, %500 : vector<4x256xf32>
    %c11_388 = arith.constant 11 : index
    %c0_389 = arith.constant 0 : index
    %c0_390 = arith.constant 0 : index
    %502 = vector.load %arg2[%c11_388, %c0_389, %c0_390] : memref<31x4x256xf32, #tpu.memory_space<vmem>>, vector<1x4x256xf32>
    %503 = vector.shape_cast %502 : vector<1x4x256xf32> to vector<4x256xf32>
    %c4_i32_391 = arith.constant 4 : i32
    %504 = tpu.dynamic_rotate %446 by %c4_i32_391 dim 1 : vector<4x256xf32>, i32 -> vector<4x256xf32>
    %505 = arith.mulf %503, %504 : vector<4x256xf32>
    %506 = arith.addf %501, %505 : vector<4x256xf32>
    %c12_392 = arith.constant 12 : index
    %c0_393 = arith.constant 0 : index
    %c0_394 = arith.constant 0 : index
    %507 = vector.load %arg2[%c12_392, %c0_393, %c0_394] : memref<31x4x256xf32, #tpu.memory_space<vmem>>, vector<1x4x256xf32>
    %508 = vector.shape_cast %507 : vector<1x4x256xf32> to vector<4x256xf32>
    %c3_i32_395 = arith.constant 3 : i32
    %509 = tpu.dynamic_rotate %446 by %c3_i32_395 dim 1 : vector<4x256xf32>, i32 -> vector<4x256xf32>
    %510 = arith.mulf %508, %509 : vector<4x256xf32>
    %511 = arith.addf %506, %510 : vector<4x256xf32>
    %c13_396 = arith.constant 13 : index
    %c0_397 = arith.constant 0 : index
    %c0_398 = arith.constant 0 : index
    %512 = vector.load %arg2[%c13_396, %c0_397, %c0_398] : memref<31x4x256xf32, #tpu.memory_space<vmem>>, vector<1x4x256xf32>
    %513 = vector.shape_cast %512 : vector<1x4x256xf32> to vector<4x256xf32>
    %c2_i32_399 = arith.constant 2 : i32
    %514 = tpu.dynamic_rotate %446 by %c2_i32_399 dim 1 : vector<4x256xf32>, i32 -> vector<4x256xf32>
    %515 = arith.mulf %513, %514 : vector<4x256xf32>
    %516 = arith.addf %511, %515 : vector<4x256xf32>
    %c14_400 = arith.constant 14 : index
    %c0_401 = arith.constant 0 : index
    %c0_402 = arith.constant 0 : index
    %517 = vector.load %arg2[%c14_400, %c0_401, %c0_402] : memref<31x4x256xf32, #tpu.memory_space<vmem>>, vector<1x4x256xf32>
    %518 = vector.shape_cast %517 : vector<1x4x256xf32> to vector<4x256xf32>
    %c1_i32_403 = arith.constant 1 : i32
    %519 = tpu.dynamic_rotate %446 by %c1_i32_403 dim 1 : vector<4x256xf32>, i32 -> vector<4x256xf32>
    %520 = arith.mulf %518, %519 : vector<4x256xf32>
    %521 = arith.addf %516, %520 : vector<4x256xf32>
    %c15_404 = arith.constant 15 : index
    %c0_405 = arith.constant 0 : index
    %c0_406 = arith.constant 0 : index
    %522 = vector.load %arg2[%c15_404, %c0_405, %c0_406] : memref<31x4x256xf32, #tpu.memory_space<vmem>>, vector<1x4x256xf32>
    %523 = vector.shape_cast %522 : vector<1x4x256xf32> to vector<4x256xf32>
    %524 = arith.mulf %523, %446 : vector<4x256xf32>
    %525 = arith.addf %521, %524 : vector<4x256xf32>
    %c16_407 = arith.constant 16 : index
    %c0_408 = arith.constant 0 : index
    %c0_409 = arith.constant 0 : index
    %526 = vector.load %arg2[%c16_407, %c0_408, %c0_409] : memref<31x4x256xf32, #tpu.memory_space<vmem>>, vector<1x4x256xf32>
    %527 = vector.shape_cast %526 : vector<1x4x256xf32> to vector<4x256xf32>
    %c255_i32_410 = arith.constant 255 : i32
    %528 = tpu.dynamic_rotate %446 by %c255_i32_410 dim 1 : vector<4x256xf32>, i32 -> vector<4x256xf32>
    %529 = arith.mulf %527, %528 : vector<4x256xf32>
    %530 = arith.addf %525, %529 : vector<4x256xf32>
    %c17_411 = arith.constant 17 : index
    %c0_412 = arith.constant 0 : index
    %c0_413 = arith.constant 0 : index
    %531 = vector.load %arg2[%c17_411, %c0_412, %c0_413] : memref<31x4x256xf32, #tpu.memory_space<vmem>>, vector<1x4x256xf32>
    %532 = vector.shape_cast %531 : vector<1x4x256xf32> to vector<4x256xf32>
    %c254_i32_414 = arith.constant 254 : i32
    %533 = tpu.dynamic_rotate %446 by %c254_i32_414 dim 1 : vector<4x256xf32>, i32 -> vector<4x256xf32>
    %534 = arith.mulf %532, %533 : vector<4x256xf32>
    %535 = arith.addf %530, %534 : vector<4x256xf32>
    %c18_415 = arith.constant 18 : index
    %c0_416 = arith.constant 0 : index
    %c0_417 = arith.constant 0 : index
    %536 = vector.load %arg2[%c18_415, %c0_416, %c0_417] : memref<31x4x256xf32, #tpu.memory_space<vmem>>, vector<1x4x256xf32>
    %537 = vector.shape_cast %536 : vector<1x4x256xf32> to vector<4x256xf32>
    %c253_i32_418 = arith.constant 253 : i32
    %538 = tpu.dynamic_rotate %446 by %c253_i32_418 dim 1 : vector<4x256xf32>, i32 -> vector<4x256xf32>
    %539 = arith.mulf %537, %538 : vector<4x256xf32>
    %540 = arith.addf %535, %539 : vector<4x256xf32>
    %c19_419 = arith.constant 19 : index
    %c0_420 = arith.constant 0 : index
    %c0_421 = arith.constant 0 : index
    %541 = vector.load %arg2[%c19_419, %c0_420, %c0_421] : memref<31x4x256xf32, #tpu.memory_space<vmem>>, vector<1x4x256xf32>
    %542 = vector.shape_cast %541 : vector<1x4x256xf32> to vector<4x256xf32>
    %c252_i32_422 = arith.constant 252 : i32
    %543 = tpu.dynamic_rotate %446 by %c252_i32_422 dim 1 : vector<4x256xf32>, i32 -> vector<4x256xf32>
    %544 = arith.mulf %542, %543 : vector<4x256xf32>
    %545 = arith.addf %540, %544 : vector<4x256xf32>
    %c20_423 = arith.constant 20 : index
    %c0_424 = arith.constant 0 : index
    %c0_425 = arith.constant 0 : index
    %546 = vector.load %arg2[%c20_423, %c0_424, %c0_425] : memref<31x4x256xf32, #tpu.memory_space<vmem>>, vector<1x4x256xf32>
    %547 = vector.shape_cast %546 : vector<1x4x256xf32> to vector<4x256xf32>
    %c251_i32_426 = arith.constant 251 : i32
    %548 = tpu.dynamic_rotate %446 by %c251_i32_426 dim 1 : vector<4x256xf32>, i32 -> vector<4x256xf32>
    %549 = arith.mulf %547, %548 : vector<4x256xf32>
    %550 = arith.addf %545, %549 : vector<4x256xf32>
    %c21_427 = arith.constant 21 : index
    %c0_428 = arith.constant 0 : index
    %c0_429 = arith.constant 0 : index
    %551 = vector.load %arg2[%c21_427, %c0_428, %c0_429] : memref<31x4x256xf32, #tpu.memory_space<vmem>>, vector<1x4x256xf32>
    %552 = vector.shape_cast %551 : vector<1x4x256xf32> to vector<4x256xf32>
    %c250_i32_430 = arith.constant 250 : i32
    %553 = tpu.dynamic_rotate %446 by %c250_i32_430 dim 1 : vector<4x256xf32>, i32 -> vector<4x256xf32>
    %554 = arith.mulf %552, %553 : vector<4x256xf32>
    %555 = arith.addf %550, %554 : vector<4x256xf32>
    %c22_431 = arith.constant 22 : index
    %c0_432 = arith.constant 0 : index
    %c0_433 = arith.constant 0 : index
    %556 = vector.load %arg2[%c22_431, %c0_432, %c0_433] : memref<31x4x256xf32, #tpu.memory_space<vmem>>, vector<1x4x256xf32>
    %557 = vector.shape_cast %556 : vector<1x4x256xf32> to vector<4x256xf32>
    %c249_i32_434 = arith.constant 249 : i32
    %558 = tpu.dynamic_rotate %446 by %c249_i32_434 dim 1 : vector<4x256xf32>, i32 -> vector<4x256xf32>
    %559 = arith.mulf %557, %558 : vector<4x256xf32>
    %560 = arith.addf %555, %559 : vector<4x256xf32>
    %c23_435 = arith.constant 23 : index
    %c0_436 = arith.constant 0 : index
    %c0_437 = arith.constant 0 : index
    %561 = vector.load %arg2[%c23_435, %c0_436, %c0_437] : memref<31x4x256xf32, #tpu.memory_space<vmem>>, vector<1x4x256xf32>
    %562 = vector.shape_cast %561 : vector<1x4x256xf32> to vector<4x256xf32>
    %c248_i32_438 = arith.constant 248 : i32
    %563 = tpu.dynamic_rotate %446 by %c248_i32_438 dim 1 : vector<4x256xf32>, i32 -> vector<4x256xf32>
    %564 = arith.mulf %562, %563 : vector<4x256xf32>
    %565 = arith.addf %560, %564 : vector<4x256xf32>
    %c24_439 = arith.constant 24 : index
    %c0_440 = arith.constant 0 : index
    %c0_441 = arith.constant 0 : index
    %566 = vector.load %arg2[%c24_439, %c0_440, %c0_441] : memref<31x4x256xf32, #tpu.memory_space<vmem>>, vector<1x4x256xf32>
    %567 = vector.shape_cast %566 : vector<1x4x256xf32> to vector<4x256xf32>
    %c247_i32_442 = arith.constant 247 : i32
    %568 = tpu.dynamic_rotate %446 by %c247_i32_442 dim 1 : vector<4x256xf32>, i32 -> vector<4x256xf32>
    %569 = arith.mulf %567, %568 : vector<4x256xf32>
    %570 = arith.addf %565, %569 : vector<4x256xf32>
    %c25_443 = arith.constant 25 : index
    %c0_444 = arith.constant 0 : index
    %c0_445 = arith.constant 0 : index
    %571 = vector.load %arg2[%c25_443, %c0_444, %c0_445] : memref<31x4x256xf32, #tpu.memory_space<vmem>>, vector<1x4x256xf32>
    %572 = vector.shape_cast %571 : vector<1x4x256xf32> to vector<4x256xf32>
    %c246_i32_446 = arith.constant 246 : i32
    %573 = tpu.dynamic_rotate %446 by %c246_i32_446 dim 1 : vector<4x256xf32>, i32 -> vector<4x256xf32>
    %574 = arith.mulf %572, %573 : vector<4x256xf32>
    %575 = arith.addf %570, %574 : vector<4x256xf32>
    %c26_447 = arith.constant 26 : index
    %c0_448 = arith.constant 0 : index
    %c0_449 = arith.constant 0 : index
    %576 = vector.load %arg2[%c26_447, %c0_448, %c0_449] : memref<31x4x256xf32, #tpu.memory_space<vmem>>, vector<1x4x256xf32>
    %577 = vector.shape_cast %576 : vector<1x4x256xf32> to vector<4x256xf32>
    %c245_i32_450 = arith.constant 245 : i32
    %578 = tpu.dynamic_rotate %446 by %c245_i32_450 dim 1 : vector<4x256xf32>, i32 -> vector<4x256xf32>
    %579 = arith.mulf %577, %578 : vector<4x256xf32>
    %580 = arith.addf %575, %579 : vector<4x256xf32>
    %c27_451 = arith.constant 27 : index
    %c0_452 = arith.constant 0 : index
    %c0_453 = arith.constant 0 : index
    %581 = vector.load %arg2[%c27_451, %c0_452, %c0_453] : memref<31x4x256xf32, #tpu.memory_space<vmem>>, vector<1x4x256xf32>
    %582 = vector.shape_cast %581 : vector<1x4x256xf32> to vector<4x256xf32>
    %c244_i32_454 = arith.constant 244 : i32
    %583 = tpu.dynamic_rotate %446 by %c244_i32_454 dim 1 : vector<4x256xf32>, i32 -> vector<4x256xf32>
    %584 = arith.mulf %582, %583 : vector<4x256xf32>
    %585 = arith.addf %580, %584 : vector<4x256xf32>
    %c28_455 = arith.constant 28 : index
    %c0_456 = arith.constant 0 : index
    %c0_457 = arith.constant 0 : index
    %586 = vector.load %arg2[%c28_455, %c0_456, %c0_457] : memref<31x4x256xf32, #tpu.memory_space<vmem>>, vector<1x4x256xf32>
    %587 = vector.shape_cast %586 : vector<1x4x256xf32> to vector<4x256xf32>
    %c243_i32_458 = arith.constant 243 : i32
    %588 = tpu.dynamic_rotate %446 by %c243_i32_458 dim 1 : vector<4x256xf32>, i32 -> vector<4x256xf32>
    %589 = arith.mulf %587, %588 : vector<4x256xf32>
    %590 = arith.addf %585, %589 : vector<4x256xf32>
    %c29_459 = arith.constant 29 : index
    %c0_460 = arith.constant 0 : index
    %c0_461 = arith.constant 0 : index
    %591 = vector.load %arg2[%c29_459, %c0_460, %c0_461] : memref<31x4x256xf32, #tpu.memory_space<vmem>>, vector<1x4x256xf32>
    %592 = vector.shape_cast %591 : vector<1x4x256xf32> to vector<4x256xf32>
    %c242_i32_462 = arith.constant 242 : i32
    %593 = tpu.dynamic_rotate %446 by %c242_i32_462 dim 1 : vector<4x256xf32>, i32 -> vector<4x256xf32>
    %594 = arith.mulf %592, %593 : vector<4x256xf32>
    %595 = arith.addf %590, %594 : vector<4x256xf32>
    %c30_463 = arith.constant 30 : index
    %c0_464 = arith.constant 0 : index
    %c0_465 = arith.constant 0 : index
    %596 = vector.load %arg2[%c30_463, %c0_464, %c0_465] : memref<31x4x256xf32, #tpu.memory_space<vmem>>, vector<1x4x256xf32>
    %597 = vector.shape_cast %596 : vector<1x4x256xf32> to vector<4x256xf32>
    %c241_i32_466 = arith.constant 241 : i32
    %598 = tpu.dynamic_rotate %446 by %c241_i32_466 dim 1 : vector<4x256xf32>, i32 -> vector<4x256xf32>
    %599 = arith.mulf %597, %598 : vector<4x256xf32>
    %600 = arith.addf %595, %599 : vector<4x256xf32>
    %c17_i32_467 = arith.constant 17 : i32
    %601 = tpu.dynamic_rotate %600 by %c17_i32_467 dim 1 : vector<4x256xf32>, i32 -> vector<4x256xf32>
    %c0_468 = arith.constant 0 : index
    %c0_469 = arith.constant 0 : index
    %c0_470 = arith.constant 0 : index
    %602 = vector.load %arg3[%c0_468, %c0_469, %c0_470] : memref<9x8x256xf32, #tpu.memory_space<vmem>>, vector<1x4x256xf32>
    %603 = vector.shape_cast %602 : vector<1x4x256xf32> to vector<4x256xf32>
    %604 = arith.mulf %601, %603 : vector<4x256xf32>
    %c0_471 = arith.constant 0 : index
    %c0_472 = arith.constant 0 : index
    %c0_473 = arith.constant 0 : index
    %605 = vector.load %arg6[%c0_471, %c0_472, %c0_473] : memref<9x8x4xf32, #tpu.memory_space<vmem>>, vector<1x8x4xf32>
    %606 = vector.shape_cast %605 : vector<1x8x4xf32> to vector<8x4xf32>
    %cst_474 = arith.constant dense<0.000000e+00> : vector<8x256xf32>
    %607 = tpu.matmul %606, %604, %cst_474 {dimension_numbers = #tpu.dot_dimension_numbers<[1], [0], [0], [1], [0, 0, 1, 1], [], []>} : vector<8x4xf32>, vector<4x256xf32>, vector<8x256xf32> -> vector<8x256xf32>
    %608 = arith.addf %81, %607 : vector<8x256xf32>
    %c1_i32_475 = arith.constant 1 : i32
    %609 = tpu.dynamic_rotate %600 by %c1_i32_475 dim 1 : vector<4x256xf32>, i32 -> vector<4x256xf32>
    %c1_476 = arith.constant 1 : index
    %c0_477 = arith.constant 0 : index
    %c0_478 = arith.constant 0 : index
    %610 = vector.load %arg3[%c1_476, %c0_477, %c0_478] : memref<9x8x256xf32, #tpu.memory_space<vmem>>, vector<1x4x256xf32>
    %611 = vector.shape_cast %610 : vector<1x4x256xf32> to vector<4x256xf32>
    %612 = arith.mulf %609, %611 : vector<4x256xf32>
    %c1_479 = arith.constant 1 : index
    %c0_480 = arith.constant 0 : index
    %c0_481 = arith.constant 0 : index
    %613 = vector.load %arg6[%c1_479, %c0_480, %c0_481] : memref<9x8x4xf32, #tpu.memory_space<vmem>>, vector<1x8x4xf32>
    %614 = vector.shape_cast %613 : vector<1x8x4xf32> to vector<8x4xf32>
    %cst_482 = arith.constant dense<0.000000e+00> : vector<8x256xf32>
    %615 = tpu.matmul %614, %612, %cst_482 {dimension_numbers = #tpu.dot_dimension_numbers<[1], [0], [0], [1], [0, 0, 1, 1], [], []>} : vector<8x4xf32>, vector<4x256xf32>, vector<8x256xf32> -> vector<8x256xf32>
    %616 = arith.addf %608, %615 : vector<8x256xf32>
    %c241_i32_483 = arith.constant 241 : i32
    %617 = tpu.dynamic_rotate %600 by %c241_i32_483 dim 1 : vector<4x256xf32>, i32 -> vector<4x256xf32>
    %c2_484 = arith.constant 2 : index
    %c0_485 = arith.constant 0 : index
    %c0_486 = arith.constant 0 : index
    %618 = vector.load %arg3[%c2_484, %c0_485, %c0_486] : memref<9x8x256xf32, #tpu.memory_space<vmem>>, vector<1x4x256xf32>
    %619 = vector.shape_cast %618 : vector<1x4x256xf32> to vector<4x256xf32>
    %620 = arith.mulf %617, %619 : vector<4x256xf32>
    %c2_487 = arith.constant 2 : index
    %c0_488 = arith.constant 0 : index
    %c0_489 = arith.constant 0 : index
    %621 = vector.load %arg6[%c2_487, %c0_488, %c0_489] : memref<9x8x4xf32, #tpu.memory_space<vmem>>, vector<1x8x4xf32>
    %622 = vector.shape_cast %621 : vector<1x8x4xf32> to vector<8x4xf32>
    %cst_490 = arith.constant dense<0.000000e+00> : vector<8x256xf32>
    %623 = tpu.matmul %622, %620, %cst_490 {dimension_numbers = #tpu.dot_dimension_numbers<[1], [0], [0], [1], [0, 0, 1, 1], [], []>} : vector<8x4xf32>, vector<4x256xf32>, vector<8x256xf32> -> vector<8x256xf32>
    %624 = arith.addf %616, %623 : vector<8x256xf32>
    %c16_i32_491 = arith.constant 16 : i32
    %625 = tpu.dynamic_rotate %600 by %c16_i32_491 dim 1 : vector<4x256xf32>, i32 -> vector<4x256xf32>
    %c3_492 = arith.constant 3 : index
    %c0_493 = arith.constant 0 : index
    %c0_494 = arith.constant 0 : index
    %626 = vector.load %arg3[%c3_492, %c0_493, %c0_494] : memref<9x8x256xf32, #tpu.memory_space<vmem>>, vector<1x4x256xf32>
    %627 = vector.shape_cast %626 : vector<1x4x256xf32> to vector<4x256xf32>
    %628 = arith.mulf %625, %627 : vector<4x256xf32>
    %c3_495 = arith.constant 3 : index
    %c0_496 = arith.constant 0 : index
    %c0_497 = arith.constant 0 : index
    %629 = vector.load %arg6[%c3_495, %c0_496, %c0_497] : memref<9x8x4xf32, #tpu.memory_space<vmem>>, vector<1x8x4xf32>
    %630 = vector.shape_cast %629 : vector<1x8x4xf32> to vector<8x4xf32>
    %cst_498 = arith.constant dense<0.000000e+00> : vector<8x256xf32>
    %631 = tpu.matmul %630, %628, %cst_498 {dimension_numbers = #tpu.dot_dimension_numbers<[1], [0], [0], [1], [0, 0, 1, 1], [], []>} : vector<8x4xf32>, vector<4x256xf32>, vector<8x256xf32> -> vector<8x256xf32>
    %632 = arith.addf %624, %631 : vector<8x256xf32>
    %c4_499 = arith.constant 4 : index
    %c0_500 = arith.constant 0 : index
    %c0_501 = arith.constant 0 : index
    %633 = vector.load %arg6[%c4_499, %c0_500, %c0_501] : memref<9x8x4xf32, #tpu.memory_space<vmem>>, vector<1x8x4xf32>
    %634 = vector.shape_cast %633 : vector<1x8x4xf32> to vector<8x4xf32>
    %cst_502 = arith.constant dense<0.000000e+00> : vector<8x256xf32>
    %635 = tpu.matmul %634, %600, %cst_502 {dimension_numbers = #tpu.dot_dimension_numbers<[1], [0], [0], [1], [0, 0, 1, 1], [], []>} : vector<8x4xf32>, vector<4x256xf32>, vector<8x256xf32> -> vector<8x256xf32>
    %636 = arith.addf %632, %635 : vector<8x256xf32>
    %c240_i32_503 = arith.constant 240 : i32
    %637 = tpu.dynamic_rotate %600 by %c240_i32_503 dim 1 : vector<4x256xf32>, i32 -> vector<4x256xf32>
    %c5_504 = arith.constant 5 : index
    %c0_505 = arith.constant 0 : index
    %c0_506 = arith.constant 0 : index
    %638 = vector.load %arg3[%c5_504, %c0_505, %c0_506] : memref<9x8x256xf32, #tpu.memory_space<vmem>>, vector<1x4x256xf32>
    %639 = vector.shape_cast %638 : vector<1x4x256xf32> to vector<4x256xf32>
    %640 = arith.mulf %637, %639 : vector<4x256xf32>
    %c5_507 = arith.constant 5 : index
    %c0_508 = arith.constant 0 : index
    %c0_509 = arith.constant 0 : index
    %641 = vector.load %arg6[%c5_507, %c0_508, %c0_509] : memref<9x8x4xf32, #tpu.memory_space<vmem>>, vector<1x8x4xf32>
    %642 = vector.shape_cast %641 : vector<1x8x4xf32> to vector<8x4xf32>
    %cst_510 = arith.constant dense<0.000000e+00> : vector<8x256xf32>
    %643 = tpu.matmul %642, %640, %cst_510 {dimension_numbers = #tpu.dot_dimension_numbers<[1], [0], [0], [1], [0, 0, 1, 1], [], []>} : vector<8x4xf32>, vector<4x256xf32>, vector<8x256xf32> -> vector<8x256xf32>
    %644 = arith.addf %636, %643 : vector<8x256xf32>
    %c15_i32_511 = arith.constant 15 : i32
    %645 = tpu.dynamic_rotate %600 by %c15_i32_511 dim 1 : vector<4x256xf32>, i32 -> vector<4x256xf32>
    %c6_512 = arith.constant 6 : index
    %c0_513 = arith.constant 0 : index
    %c0_514 = arith.constant 0 : index
    %646 = vector.load %arg3[%c6_512, %c0_513, %c0_514] : memref<9x8x256xf32, #tpu.memory_space<vmem>>, vector<1x4x256xf32>
    %647 = vector.shape_cast %646 : vector<1x4x256xf32> to vector<4x256xf32>
    %648 = arith.mulf %645, %647 : vector<4x256xf32>
    %c6_515 = arith.constant 6 : index
    %c0_516 = arith.constant 0 : index
    %c0_517 = arith.constant 0 : index
    %649 = vector.load %arg6[%c6_515, %c0_516, %c0_517] : memref<9x8x4xf32, #tpu.memory_space<vmem>>, vector<1x8x4xf32>
    %650 = vector.shape_cast %649 : vector<1x8x4xf32> to vector<8x4xf32>
    %cst_518 = arith.constant dense<0.000000e+00> : vector<8x256xf32>
    %651 = tpu.matmul %650, %648, %cst_518 {dimension_numbers = #tpu.dot_dimension_numbers<[1], [0], [0], [1], [0, 0, 1, 1], [], []>} : vector<8x4xf32>, vector<4x256xf32>, vector<8x256xf32> -> vector<8x256xf32>
    %652 = arith.addf %644, %651 : vector<8x256xf32>
    %c255_i32_519 = arith.constant 255 : i32
    %653 = tpu.dynamic_rotate %600 by %c255_i32_519 dim 1 : vector<4x256xf32>, i32 -> vector<4x256xf32>
    %c7_520 = arith.constant 7 : index
    %c0_521 = arith.constant 0 : index
    %c0_522 = arith.constant 0 : index
    %654 = vector.load %arg3[%c7_520, %c0_521, %c0_522] : memref<9x8x256xf32, #tpu.memory_space<vmem>>, vector<1x4x256xf32>
    %655 = vector.shape_cast %654 : vector<1x4x256xf32> to vector<4x256xf32>
    %656 = arith.mulf %653, %655 : vector<4x256xf32>
    %c7_523 = arith.constant 7 : index
    %c0_524 = arith.constant 0 : index
    %c0_525 = arith.constant 0 : index
    %657 = vector.load %arg6[%c7_523, %c0_524, %c0_525] : memref<9x8x4xf32, #tpu.memory_space<vmem>>, vector<1x8x4xf32>
    %658 = vector.shape_cast %657 : vector<1x8x4xf32> to vector<8x4xf32>
    %cst_526 = arith.constant dense<0.000000e+00> : vector<8x256xf32>
    %659 = tpu.matmul %658, %656, %cst_526 {dimension_numbers = #tpu.dot_dimension_numbers<[1], [0], [0], [1], [0, 0, 1, 1], [], []>} : vector<8x4xf32>, vector<4x256xf32>, vector<8x256xf32> -> vector<8x256xf32>
    %660 = arith.addf %652, %659 : vector<8x256xf32>
    %c239_i32_527 = arith.constant 239 : i32
    %661 = tpu.dynamic_rotate %600 by %c239_i32_527 dim 1 : vector<4x256xf32>, i32 -> vector<4x256xf32>
    %c8_528 = arith.constant 8 : index
    %c0_529 = arith.constant 0 : index
    %c0_530 = arith.constant 0 : index
    %662 = vector.load %arg3[%c8_528, %c0_529, %c0_530] : memref<9x8x256xf32, #tpu.memory_space<vmem>>, vector<1x4x256xf32>
    %663 = vector.shape_cast %662 : vector<1x4x256xf32> to vector<4x256xf32>
    %664 = arith.mulf %661, %663 : vector<4x256xf32>
    %c8_531 = arith.constant 8 : index
    %c0_532 = arith.constant 0 : index
    %c0_533 = arith.constant 0 : index
    %665 = vector.load %arg6[%c8_531, %c0_532, %c0_533] : memref<9x8x4xf32, #tpu.memory_space<vmem>>, vector<1x8x4xf32>
    %666 = vector.shape_cast %665 : vector<1x8x4xf32> to vector<8x4xf32>
    %cst_534 = arith.constant dense<0.000000e+00> : vector<8x256xf32>
    %667 = tpu.matmul %666, %664, %cst_534 {dimension_numbers = #tpu.dot_dimension_numbers<[1], [0], [0], [1], [0, 0, 1, 1], [], []>} : vector<8x4xf32>, vector<4x256xf32>, vector<8x256xf32> -> vector<8x256xf32>
    %668 = arith.addf %660, %667 : vector<8x256xf32>
    %cst_535 = arith.constant 0.000000e+00 : f32
    %669 = vector.broadcast %cst_535 : f32 to vector<8x256xf32>
    %670 = arith.maximumf %668, %669 : vector<8x256xf32>
    %c17_i32_536 = arith.constant 17 : i32
    %671 = tpu.dynamic_rotate %670 by %c17_i32_536 dim 1 : vector<8x256xf32>, i32 -> vector<8x256xf32>
    %c0_537 = arith.constant 0 : index
    %c0_538 = arith.constant 0 : index
    %c0_539 = arith.constant 0 : index
    %672 = vector.load %arg3[%c0_537, %c0_538, %c0_539] : memref<9x8x256xf32, #tpu.memory_space<vmem>>, vector<1x8x256xf32>
    %673 = vector.shape_cast %672 : vector<1x8x256xf32> to vector<8x256xf32>
    %674 = arith.mulf %671, %673 : vector<8x256xf32>
    %c0_540 = arith.constant 0 : index
    %c0_541 = arith.constant 0 : index
    %c0_542 = arith.constant 0 : index
    %675 = vector.load %arg9[%c0_540, %c0_541, %c0_542] : memref<9x8x8xf32, #tpu.memory_space<vmem>>, vector<1x8x8xf32>
    %676 = vector.shape_cast %675 : vector<1x8x8xf32> to vector<8x8xf32>
    %cst_543 = arith.constant dense<0.000000e+00> : vector<8x256xf32>
    %677 = tpu.matmul %676, %674, %cst_543 {dimension_numbers = #tpu.dot_dimension_numbers<[1], [0], [0], [1], [0, 0, 1, 1], [], []>} : vector<8x8xf32>, vector<8x256xf32>, vector<8x256xf32> -> vector<8x256xf32>
    %678 = arith.addf %10, %677 : vector<8x256xf32>
    %c1_i32_544 = arith.constant 1 : i32
    %679 = tpu.dynamic_rotate %670 by %c1_i32_544 dim 1 : vector<8x256xf32>, i32 -> vector<8x256xf32>
    %c1_545 = arith.constant 1 : index
    %c0_546 = arith.constant 0 : index
    %c0_547 = arith.constant 0 : index
    %680 = vector.load %arg3[%c1_545, %c0_546, %c0_547] : memref<9x8x256xf32, #tpu.memory_space<vmem>>, vector<1x8x256xf32>
    %681 = vector.shape_cast %680 : vector<1x8x256xf32> to vector<8x256xf32>
    %682 = arith.mulf %679, %681 : vector<8x256xf32>
    %c1_548 = arith.constant 1 : index
    %c0_549 = arith.constant 0 : index
    %c0_550 = arith.constant 0 : index
    %683 = vector.load %arg9[%c1_548, %c0_549, %c0_550] : memref<9x8x8xf32, #tpu.memory_space<vmem>>, vector<1x8x8xf32>
    %684 = vector.shape_cast %683 : vector<1x8x8xf32> to vector<8x8xf32>
    %cst_551 = arith.constant dense<0.000000e+00> : vector<8x256xf32>
    %685 = tpu.matmul %684, %682, %cst_551 {dimension_numbers = #tpu.dot_dimension_numbers<[1], [0], [0], [1], [0, 0, 1, 1], [], []>} : vector<8x8xf32>, vector<8x256xf32>, vector<8x256xf32> -> vector<8x256xf32>
    %686 = arith.addf %678, %685 : vector<8x256xf32>
    %c241_i32_552 = arith.constant 241 : i32
    %687 = tpu.dynamic_rotate %670 by %c241_i32_552 dim 1 : vector<8x256xf32>, i32 -> vector<8x256xf32>
    %c2_553 = arith.constant 2 : index
    %c0_554 = arith.constant 0 : index
    %c0_555 = arith.constant 0 : index
    %688 = vector.load %arg3[%c2_553, %c0_554, %c0_555] : memref<9x8x256xf32, #tpu.memory_space<vmem>>, vector<1x8x256xf32>
    %689 = vector.shape_cast %688 : vector<1x8x256xf32> to vector<8x256xf32>
    %690 = arith.mulf %687, %689 : vector<8x256xf32>
    %c2_556 = arith.constant 2 : index
    %c0_557 = arith.constant 0 : index
    %c0_558 = arith.constant 0 : index
    %691 = vector.load %arg9[%c2_556, %c0_557, %c0_558] : memref<9x8x8xf32, #tpu.memory_space<vmem>>, vector<1x8x8xf32>
    %692 = vector.shape_cast %691 : vector<1x8x8xf32> to vector<8x8xf32>
    %cst_559 = arith.constant dense<0.000000e+00> : vector<8x256xf32>
    %693 = tpu.matmul %692, %690, %cst_559 {dimension_numbers = #tpu.dot_dimension_numbers<[1], [0], [0], [1], [0, 0, 1, 1], [], []>} : vector<8x8xf32>, vector<8x256xf32>, vector<8x256xf32> -> vector<8x256xf32>
    %694 = arith.addf %686, %693 : vector<8x256xf32>
    %c16_i32_560 = arith.constant 16 : i32
    %695 = tpu.dynamic_rotate %670 by %c16_i32_560 dim 1 : vector<8x256xf32>, i32 -> vector<8x256xf32>
    %c3_561 = arith.constant 3 : index
    %c0_562 = arith.constant 0 : index
    %c0_563 = arith.constant 0 : index
    %696 = vector.load %arg3[%c3_561, %c0_562, %c0_563] : memref<9x8x256xf32, #tpu.memory_space<vmem>>, vector<1x8x256xf32>
    %697 = vector.shape_cast %696 : vector<1x8x256xf32> to vector<8x256xf32>
    %698 = arith.mulf %695, %697 : vector<8x256xf32>
    %c3_564 = arith.constant 3 : index
    %c0_565 = arith.constant 0 : index
    %c0_566 = arith.constant 0 : index
    %699 = vector.load %arg9[%c3_564, %c0_565, %c0_566] : memref<9x8x8xf32, #tpu.memory_space<vmem>>, vector<1x8x8xf32>
    %700 = vector.shape_cast %699 : vector<1x8x8xf32> to vector<8x8xf32>
    %cst_567 = arith.constant dense<0.000000e+00> : vector<8x256xf32>
    %701 = tpu.matmul %700, %698, %cst_567 {dimension_numbers = #tpu.dot_dimension_numbers<[1], [0], [0], [1], [0, 0, 1, 1], [], []>} : vector<8x8xf32>, vector<8x256xf32>, vector<8x256xf32> -> vector<8x256xf32>
    %702 = arith.addf %694, %701 : vector<8x256xf32>
    %c4_568 = arith.constant 4 : index
    %c0_569 = arith.constant 0 : index
    %c0_570 = arith.constant 0 : index
    %703 = vector.load %arg9[%c4_568, %c0_569, %c0_570] : memref<9x8x8xf32, #tpu.memory_space<vmem>>, vector<1x8x8xf32>
    %704 = vector.shape_cast %703 : vector<1x8x8xf32> to vector<8x8xf32>
    %cst_571 = arith.constant dense<0.000000e+00> : vector<8x256xf32>
    %705 = tpu.matmul %704, %670, %cst_571 {dimension_numbers = #tpu.dot_dimension_numbers<[1], [0], [0], [1], [0, 0, 1, 1], [], []>} : vector<8x8xf32>, vector<8x256xf32>, vector<8x256xf32> -> vector<8x256xf32>
    %706 = arith.addf %702, %705 : vector<8x256xf32>
    %c240_i32_572 = arith.constant 240 : i32
    %707 = tpu.dynamic_rotate %670 by %c240_i32_572 dim 1 : vector<8x256xf32>, i32 -> vector<8x256xf32>
    %c5_573 = arith.constant 5 : index
    %c0_574 = arith.constant 0 : index
    %c0_575 = arith.constant 0 : index
    %708 = vector.load %arg3[%c5_573, %c0_574, %c0_575] : memref<9x8x256xf32, #tpu.memory_space<vmem>>, vector<1x8x256xf32>
    %709 = vector.shape_cast %708 : vector<1x8x256xf32> to vector<8x256xf32>
    %710 = arith.mulf %707, %709 : vector<8x256xf32>
    %c5_576 = arith.constant 5 : index
    %c0_577 = arith.constant 0 : index
    %c0_578 = arith.constant 0 : index
    %711 = vector.load %arg9[%c5_576, %c0_577, %c0_578] : memref<9x8x8xf32, #tpu.memory_space<vmem>>, vector<1x8x8xf32>
    %712 = vector.shape_cast %711 : vector<1x8x8xf32> to vector<8x8xf32>
    %cst_579 = arith.constant dense<0.000000e+00> : vector<8x256xf32>
    %713 = tpu.matmul %712, %710, %cst_579 {dimension_numbers = #tpu.dot_dimension_numbers<[1], [0], [0], [1], [0, 0, 1, 1], [], []>} : vector<8x8xf32>, vector<8x256xf32>, vector<8x256xf32> -> vector<8x256xf32>
    %714 = arith.addf %706, %713 : vector<8x256xf32>
    %c15_i32_580 = arith.constant 15 : i32
    %715 = tpu.dynamic_rotate %670 by %c15_i32_580 dim 1 : vector<8x256xf32>, i32 -> vector<8x256xf32>
    %c6_581 = arith.constant 6 : index
    %c0_582 = arith.constant 0 : index
    %c0_583 = arith.constant 0 : index
    %716 = vector.load %arg3[%c6_581, %c0_582, %c0_583] : memref<9x8x256xf32, #tpu.memory_space<vmem>>, vector<1x8x256xf32>
    %717 = vector.shape_cast %716 : vector<1x8x256xf32> to vector<8x256xf32>
    %718 = arith.mulf %715, %717 : vector<8x256xf32>
    %c6_584 = arith.constant 6 : index
    %c0_585 = arith.constant 0 : index
    %c0_586 = arith.constant 0 : index
    %719 = vector.load %arg9[%c6_584, %c0_585, %c0_586] : memref<9x8x8xf32, #tpu.memory_space<vmem>>, vector<1x8x8xf32>
    %720 = vector.shape_cast %719 : vector<1x8x8xf32> to vector<8x8xf32>
    %cst_587 = arith.constant dense<0.000000e+00> : vector<8x256xf32>
    %721 = tpu.matmul %720, %718, %cst_587 {dimension_numbers = #tpu.dot_dimension_numbers<[1], [0], [0], [1], [0, 0, 1, 1], [], []>} : vector<8x8xf32>, vector<8x256xf32>, vector<8x256xf32> -> vector<8x256xf32>
    %722 = arith.addf %714, %721 : vector<8x256xf32>
    %c255_i32_588 = arith.constant 255 : i32
    %723 = tpu.dynamic_rotate %670 by %c255_i32_588 dim 1 : vector<8x256xf32>, i32 -> vector<8x256xf32>
    %c7_589 = arith.constant 7 : index
    %c0_590 = arith.constant 0 : index
    %c0_591 = arith.constant 0 : index
    %724 = vector.load %arg3[%c7_589, %c0_590, %c0_591] : memref<9x8x256xf32, #tpu.memory_space<vmem>>, vector<1x8x256xf32>
    %725 = vector.shape_cast %724 : vector<1x8x256xf32> to vector<8x256xf32>
    %726 = arith.mulf %723, %725 : vector<8x256xf32>
    %c7_592 = arith.constant 7 : index
    %c0_593 = arith.constant 0 : index
    %c0_594 = arith.constant 0 : index
    %727 = vector.load %arg9[%c7_592, %c0_593, %c0_594] : memref<9x8x8xf32, #tpu.memory_space<vmem>>, vector<1x8x8xf32>
    %728 = vector.shape_cast %727 : vector<1x8x8xf32> to vector<8x8xf32>
    %cst_595 = arith.constant dense<0.000000e+00> : vector<8x256xf32>
    %729 = tpu.matmul %728, %726, %cst_595 {dimension_numbers = #tpu.dot_dimension_numbers<[1], [0], [0], [1], [0, 0, 1, 1], [], []>} : vector<8x8xf32>, vector<8x256xf32>, vector<8x256xf32> -> vector<8x256xf32>
    %730 = arith.addf %722, %729 : vector<8x256xf32>
    %c239_i32_596 = arith.constant 239 : i32
    %731 = tpu.dynamic_rotate %670 by %c239_i32_596 dim 1 : vector<8x256xf32>, i32 -> vector<8x256xf32>
    %c8_597 = arith.constant 8 : index
    %c0_598 = arith.constant 0 : index
    %c0_599 = arith.constant 0 : index
    %732 = vector.load %arg3[%c8_597, %c0_598, %c0_599] : memref<9x8x256xf32, #tpu.memory_space<vmem>>, vector<1x8x256xf32>
    %733 = vector.shape_cast %732 : vector<1x8x256xf32> to vector<8x256xf32>
    %734 = arith.mulf %731, %733 : vector<8x256xf32>
    %c8_600 = arith.constant 8 : index
    %c0_601 = arith.constant 0 : index
    %c0_602 = arith.constant 0 : index
    %735 = vector.load %arg9[%c8_600, %c0_601, %c0_602] : memref<9x8x8xf32, #tpu.memory_space<vmem>>, vector<1x8x8xf32>
    %736 = vector.shape_cast %735 : vector<1x8x8xf32> to vector<8x8xf32>
    %cst_603 = arith.constant dense<0.000000e+00> : vector<8x256xf32>
    %737 = tpu.matmul %736, %734, %cst_603 {dimension_numbers = #tpu.dot_dimension_numbers<[1], [0], [0], [1], [0, 0, 1, 1], [], []>} : vector<8x8xf32>, vector<8x256xf32>, vector<8x256xf32> -> vector<8x256xf32>
    %738 = arith.addf %730, %737 : vector<8x256xf32>
    %cst_604 = arith.constant 0.000000e+00 : f32
    %739 = vector.broadcast %cst_604 : f32 to vector<8x256xf32>
    %740 = arith.maximumf %738, %739 : vector<8x256xf32>
    %c17_i32_605 = arith.constant 17 : i32
    %741 = tpu.dynamic_rotate %740 by %c17_i32_605 dim 1 : vector<8x256xf32>, i32 -> vector<8x256xf32>
    %c0_606 = arith.constant 0 : index
    %c0_607 = arith.constant 0 : index
    %c0_608 = arith.constant 0 : index
    %742 = vector.load %arg3[%c0_606, %c0_607, %c0_608] : memref<9x8x256xf32, #tpu.memory_space<vmem>>, vector<1x8x256xf32>
    %743 = vector.shape_cast %742 : vector<1x8x256xf32> to vector<8x256xf32>
    %744 = arith.mulf %741, %743 : vector<8x256xf32>
    %c0_609 = arith.constant 0 : index
    %c0_610 = arith.constant 0 : index
    %c0_611 = arith.constant 0 : index
    %745 = vector.load %arg11[%c0_609, %c0_610, %c0_611] : memref<9x4x8xf32, #tpu.memory_space<vmem>>, vector<1x4x8xf32>
    %746 = vector.shape_cast %745 : vector<1x4x8xf32> to vector<4x8xf32>
    %cst_612 = arith.constant dense<0.000000e+00> : vector<4x256xf32>
    %747 = tpu.matmul %746, %744, %cst_612 {dimension_numbers = #tpu.dot_dimension_numbers<[1], [0], [0], [1], [0, 0, 1, 1], [], []>} : vector<4x8xf32>, vector<8x256xf32>, vector<4x256xf32> -> vector<4x256xf32>
    %748 = arith.addf %13, %747 : vector<4x256xf32>
    %c1_i32_613 = arith.constant 1 : i32
    %749 = tpu.dynamic_rotate %740 by %c1_i32_613 dim 1 : vector<8x256xf32>, i32 -> vector<8x256xf32>
    %c1_614 = arith.constant 1 : index
    %c0_615 = arith.constant 0 : index
    %c0_616 = arith.constant 0 : index
    %750 = vector.load %arg3[%c1_614, %c0_615, %c0_616] : memref<9x8x256xf32, #tpu.memory_space<vmem>>, vector<1x8x256xf32>
    %751 = vector.shape_cast %750 : vector<1x8x256xf32> to vector<8x256xf32>
    %752 = arith.mulf %749, %751 : vector<8x256xf32>
    %c1_617 = arith.constant 1 : index
    %c0_618 = arith.constant 0 : index
    %c0_619 = arith.constant 0 : index
    %753 = vector.load %arg11[%c1_617, %c0_618, %c0_619] : memref<9x4x8xf32, #tpu.memory_space<vmem>>, vector<1x4x8xf32>
    %754 = vector.shape_cast %753 : vector<1x4x8xf32> to vector<4x8xf32>
    %cst_620 = arith.constant dense<0.000000e+00> : vector<4x256xf32>
    %755 = tpu.matmul %754, %752, %cst_620 {dimension_numbers = #tpu.dot_dimension_numbers<[1], [0], [0], [1], [0, 0, 1, 1], [], []>} : vector<4x8xf32>, vector<8x256xf32>, vector<4x256xf32> -> vector<4x256xf32>
    %756 = arith.addf %748, %755 : vector<4x256xf32>
    %c241_i32_621 = arith.constant 241 : i32
    %757 = tpu.dynamic_rotate %740 by %c241_i32_621 dim 1 : vector<8x256xf32>, i32 -> vector<8x256xf32>
    %c2_622 = arith.constant 2 : index
    %c0_623 = arith.constant 0 : index
    %c0_624 = arith.constant 0 : index
    %758 = vector.load %arg3[%c2_622, %c0_623, %c0_624] : memref<9x8x256xf32, #tpu.memory_space<vmem>>, vector<1x8x256xf32>
    %759 = vector.shape_cast %758 : vector<1x8x256xf32> to vector<8x256xf32>
    %760 = arith.mulf %757, %759 : vector<8x256xf32>
    %c2_625 = arith.constant 2 : index
    %c0_626 = arith.constant 0 : index
    %c0_627 = arith.constant 0 : index
    %761 = vector.load %arg11[%c2_625, %c0_626, %c0_627] : memref<9x4x8xf32, #tpu.memory_space<vmem>>, vector<1x4x8xf32>
    %762 = vector.shape_cast %761 : vector<1x4x8xf32> to vector<4x8xf32>
    %cst_628 = arith.constant dense<0.000000e+00> : vector<4x256xf32>
    %763 = tpu.matmul %762, %760, %cst_628 {dimension_numbers = #tpu.dot_dimension_numbers<[1], [0], [0], [1], [0, 0, 1, 1], [], []>} : vector<4x8xf32>, vector<8x256xf32>, vector<4x256xf32> -> vector<4x256xf32>
    %764 = arith.addf %756, %763 : vector<4x256xf32>
    %c16_i32_629 = arith.constant 16 : i32
    %765 = tpu.dynamic_rotate %740 by %c16_i32_629 dim 1 : vector<8x256xf32>, i32 -> vector<8x256xf32>
    %c3_630 = arith.constant 3 : index
    %c0_631 = arith.constant 0 : index
    %c0_632 = arith.constant 0 : index
    %766 = vector.load %arg3[%c3_630, %c0_631, %c0_632] : memref<9x8x256xf32, #tpu.memory_space<vmem>>, vector<1x8x256xf32>
    %767 = vector.shape_cast %766 : vector<1x8x256xf32> to vector<8x256xf32>
    %768 = arith.mulf %765, %767 : vector<8x256xf32>
    %c3_633 = arith.constant 3 : index
    %c0_634 = arith.constant 0 : index
    %c0_635 = arith.constant 0 : index
    %769 = vector.load %arg11[%c3_633, %c0_634, %c0_635] : memref<9x4x8xf32, #tpu.memory_space<vmem>>, vector<1x4x8xf32>
    %770 = vector.shape_cast %769 : vector<1x4x8xf32> to vector<4x8xf32>
    %cst_636 = arith.constant dense<0.000000e+00> : vector<4x256xf32>
    %771 = tpu.matmul %770, %768, %cst_636 {dimension_numbers = #tpu.dot_dimension_numbers<[1], [0], [0], [1], [0, 0, 1, 1], [], []>} : vector<4x8xf32>, vector<8x256xf32>, vector<4x256xf32> -> vector<4x256xf32>
    %772 = arith.addf %764, %771 : vector<4x256xf32>
    %c4_637 = arith.constant 4 : index
    %c0_638 = arith.constant 0 : index
    %c0_639 = arith.constant 0 : index
    %773 = vector.load %arg11[%c4_637, %c0_638, %c0_639] : memref<9x4x8xf32, #tpu.memory_space<vmem>>, vector<1x4x8xf32>
    %774 = vector.shape_cast %773 : vector<1x4x8xf32> to vector<4x8xf32>
    %cst_640 = arith.constant dense<0.000000e+00> : vector<4x256xf32>
    %775 = tpu.matmul %774, %740, %cst_640 {dimension_numbers = #tpu.dot_dimension_numbers<[1], [0], [0], [1], [0, 0, 1, 1], [], []>} : vector<4x8xf32>, vector<8x256xf32>, vector<4x256xf32> -> vector<4x256xf32>
    %776 = arith.addf %772, %775 : vector<4x256xf32>
    %c240_i32_641 = arith.constant 240 : i32
    %777 = tpu.dynamic_rotate %740 by %c240_i32_641 dim 1 : vector<8x256xf32>, i32 -> vector<8x256xf32>
    %c5_642 = arith.constant 5 : index
    %c0_643 = arith.constant 0 : index
    %c0_644 = arith.constant 0 : index
    %778 = vector.load %arg3[%c5_642, %c0_643, %c0_644] : memref<9x8x256xf32, #tpu.memory_space<vmem>>, vector<1x8x256xf32>
    %779 = vector.shape_cast %778 : vector<1x8x256xf32> to vector<8x256xf32>
    %780 = arith.mulf %777, %779 : vector<8x256xf32>
    %c5_645 = arith.constant 5 : index
    %c0_646 = arith.constant 0 : index
    %c0_647 = arith.constant 0 : index
    %781 = vector.load %arg11[%c5_645, %c0_646, %c0_647] : memref<9x4x8xf32, #tpu.memory_space<vmem>>, vector<1x4x8xf32>
    %782 = vector.shape_cast %781 : vector<1x4x8xf32> to vector<4x8xf32>
    %cst_648 = arith.constant dense<0.000000e+00> : vector<4x256xf32>
    %783 = tpu.matmul %782, %780, %cst_648 {dimension_numbers = #tpu.dot_dimension_numbers<[1], [0], [0], [1], [0, 0, 1, 1], [], []>} : vector<4x8xf32>, vector<8x256xf32>, vector<4x256xf32> -> vector<4x256xf32>
    %784 = arith.addf %776, %783 : vector<4x256xf32>
    %c15_i32_649 = arith.constant 15 : i32
    %785 = tpu.dynamic_rotate %740 by %c15_i32_649 dim 1 : vector<8x256xf32>, i32 -> vector<8x256xf32>
    %c6_650 = arith.constant 6 : index
    %c0_651 = arith.constant 0 : index
    %c0_652 = arith.constant 0 : index
    %786 = vector.load %arg3[%c6_650, %c0_651, %c0_652] : memref<9x8x256xf32, #tpu.memory_space<vmem>>, vector<1x8x256xf32>
    %787 = vector.shape_cast %786 : vector<1x8x256xf32> to vector<8x256xf32>
    %788 = arith.mulf %785, %787 : vector<8x256xf32>
    %c6_653 = arith.constant 6 : index
    %c0_654 = arith.constant 0 : index
    %c0_655 = arith.constant 0 : index
    %789 = vector.load %arg11[%c6_653, %c0_654, %c0_655] : memref<9x4x8xf32, #tpu.memory_space<vmem>>, vector<1x4x8xf32>
    %790 = vector.shape_cast %789 : vector<1x4x8xf32> to vector<4x8xf32>
    %cst_656 = arith.constant dense<0.000000e+00> : vector<4x256xf32>
    %791 = tpu.matmul %790, %788, %cst_656 {dimension_numbers = #tpu.dot_dimension_numbers<[1], [0], [0], [1], [0, 0, 1, 1], [], []>} : vector<4x8xf32>, vector<8x256xf32>, vector<4x256xf32> -> vector<4x256xf32>
    %792 = arith.addf %784, %791 : vector<4x256xf32>
    %c255_i32_657 = arith.constant 255 : i32
    %793 = tpu.dynamic_rotate %740 by %c255_i32_657 dim 1 : vector<8x256xf32>, i32 -> vector<8x256xf32>
    %c7_658 = arith.constant 7 : index
    %c0_659 = arith.constant 0 : index
    %c0_660 = arith.constant 0 : index
    %794 = vector.load %arg3[%c7_658, %c0_659, %c0_660] : memref<9x8x256xf32, #tpu.memory_space<vmem>>, vector<1x8x256xf32>
    %795 = vector.shape_cast %794 : vector<1x8x256xf32> to vector<8x256xf32>
    %796 = arith.mulf %793, %795 : vector<8x256xf32>
    %c7_661 = arith.constant 7 : index
    %c0_662 = arith.constant 0 : index
    %c0_663 = arith.constant 0 : index
    %797 = vector.load %arg11[%c7_661, %c0_662, %c0_663] : memref<9x4x8xf32, #tpu.memory_space<vmem>>, vector<1x4x8xf32>
    %798 = vector.shape_cast %797 : vector<1x4x8xf32> to vector<4x8xf32>
    %cst_664 = arith.constant dense<0.000000e+00> : vector<4x256xf32>
    %799 = tpu.matmul %798, %796, %cst_664 {dimension_numbers = #tpu.dot_dimension_numbers<[1], [0], [0], [1], [0, 0, 1, 1], [], []>} : vector<4x8xf32>, vector<8x256xf32>, vector<4x256xf32> -> vector<4x256xf32>
    %800 = arith.addf %792, %799 : vector<4x256xf32>
    %c239_i32_665 = arith.constant 239 : i32
    %801 = tpu.dynamic_rotate %740 by %c239_i32_665 dim 1 : vector<8x256xf32>, i32 -> vector<8x256xf32>
    %c8_666 = arith.constant 8 : index
    %c0_667 = arith.constant 0 : index
    %c0_668 = arith.constant 0 : index
    %802 = vector.load %arg3[%c8_666, %c0_667, %c0_668] : memref<9x8x256xf32, #tpu.memory_space<vmem>>, vector<1x8x256xf32>
    %803 = vector.shape_cast %802 : vector<1x8x256xf32> to vector<8x256xf32>
    %804 = arith.mulf %801, %803 : vector<8x256xf32>
    %c8_669 = arith.constant 8 : index
    %c0_670 = arith.constant 0 : index
    %c0_671 = arith.constant 0 : index
    %805 = vector.load %arg11[%c8_669, %c0_670, %c0_671] : memref<9x4x8xf32, #tpu.memory_space<vmem>>, vector<1x4x8xf32>
    %806 = vector.shape_cast %805 : vector<1x4x8xf32> to vector<4x8xf32>
    %cst_672 = arith.constant dense<0.000000e+00> : vector<4x256xf32>
    %807 = tpu.matmul %806, %804, %cst_672 {dimension_numbers = #tpu.dot_dimension_numbers<[1], [0], [0], [1], [0, 0, 1, 1], [], []>} : vector<4x8xf32>, vector<8x256xf32>, vector<4x256xf32> -> vector<4x256xf32>
    %808 = arith.addf %800, %807 : vector<4x256xf32>
    %809 = arith.subf %600, %808 : vector<4x256xf32>
    %c0_673 = arith.constant 0 : index
    %c0_674 = arith.constant 0 : index
    %c0_675 = arith.constant 0 : index
    %810 = vector.load %arg2[%c0_673, %c0_674, %c0_675] : memref<31x4x256xf32, #tpu.memory_space<vmem>>, vector<1x4x256xf32>
    %811 = vector.shape_cast %810 : vector<1x4x256xf32> to vector<4x256xf32>
    %c15_i32_676 = arith.constant 15 : i32
    %812 = tpu.dynamic_rotate %809 by %c15_i32_676 dim 1 : vector<4x256xf32>, i32 -> vector<4x256xf32>
    %813 = arith.mulf %811, %812 : vector<4x256xf32>
    %814 = arith.addf %4, %813 : vector<4x256xf32>
    %c1_677 = arith.constant 1 : index
    %c0_678 = arith.constant 0 : index
    %c0_679 = arith.constant 0 : index
    %815 = vector.load %arg2[%c1_677, %c0_678, %c0_679] : memref<31x4x256xf32, #tpu.memory_space<vmem>>, vector<1x4x256xf32>
    %816 = vector.shape_cast %815 : vector<1x4x256xf32> to vector<4x256xf32>
    %c14_i32_680 = arith.constant 14 : i32
    %817 = tpu.dynamic_rotate %809 by %c14_i32_680 dim 1 : vector<4x256xf32>, i32 -> vector<4x256xf32>
    %818 = arith.mulf %816, %817 : vector<4x256xf32>
    %819 = arith.addf %814, %818 : vector<4x256xf32>
    %c2_681 = arith.constant 2 : index
    %c0_682 = arith.constant 0 : index
    %c0_683 = arith.constant 0 : index
    %820 = vector.load %arg2[%c2_681, %c0_682, %c0_683] : memref<31x4x256xf32, #tpu.memory_space<vmem>>, vector<1x4x256xf32>
    %821 = vector.shape_cast %820 : vector<1x4x256xf32> to vector<4x256xf32>
    %c13_i32_684 = arith.constant 13 : i32
    %822 = tpu.dynamic_rotate %809 by %c13_i32_684 dim 1 : vector<4x256xf32>, i32 -> vector<4x256xf32>
    %823 = arith.mulf %821, %822 : vector<4x256xf32>
    %824 = arith.addf %819, %823 : vector<4x256xf32>
    %c3_685 = arith.constant 3 : index
    %c0_686 = arith.constant 0 : index
    %c0_687 = arith.constant 0 : index
    %825 = vector.load %arg2[%c3_685, %c0_686, %c0_687] : memref<31x4x256xf32, #tpu.memory_space<vmem>>, vector<1x4x256xf32>
    %826 = vector.shape_cast %825 : vector<1x4x256xf32> to vector<4x256xf32>
    %c12_i32_688 = arith.constant 12 : i32
    %827 = tpu.dynamic_rotate %809 by %c12_i32_688 dim 1 : vector<4x256xf32>, i32 -> vector<4x256xf32>
    %828 = arith.mulf %826, %827 : vector<4x256xf32>
    %829 = arith.addf %824, %828 : vector<4x256xf32>
    %c4_689 = arith.constant 4 : index
    %c0_690 = arith.constant 0 : index
    %c0_691 = arith.constant 0 : index
    %830 = vector.load %arg2[%c4_689, %c0_690, %c0_691] : memref<31x4x256xf32, #tpu.memory_space<vmem>>, vector<1x4x256xf32>
    %831 = vector.shape_cast %830 : vector<1x4x256xf32> to vector<4x256xf32>
    %c11_i32_692 = arith.constant 11 : i32
    %832 = tpu.dynamic_rotate %809 by %c11_i32_692 dim 1 : vector<4x256xf32>, i32 -> vector<4x256xf32>
    %833 = arith.mulf %831, %832 : vector<4x256xf32>
    %834 = arith.addf %829, %833 : vector<4x256xf32>
    %c5_693 = arith.constant 5 : index
    %c0_694 = arith.constant 0 : index
    %c0_695 = arith.constant 0 : index
    %835 = vector.load %arg2[%c5_693, %c0_694, %c0_695] : memref<31x4x256xf32, #tpu.memory_space<vmem>>, vector<1x4x256xf32>
    %836 = vector.shape_cast %835 : vector<1x4x256xf32> to vector<4x256xf32>
    %c10_i32_696 = arith.constant 10 : i32
    %837 = tpu.dynamic_rotate %809 by %c10_i32_696 dim 1 : vector<4x256xf32>, i32 -> vector<4x256xf32>
    %838 = arith.mulf %836, %837 : vector<4x256xf32>
    %839 = arith.addf %834, %838 : vector<4x256xf32>
    %c6_697 = arith.constant 6 : index
    %c0_698 = arith.constant 0 : index
    %c0_699 = arith.constant 0 : index
    %840 = vector.load %arg2[%c6_697, %c0_698, %c0_699] : memref<31x4x256xf32, #tpu.memory_space<vmem>>, vector<1x4x256xf32>
    %841 = vector.shape_cast %840 : vector<1x4x256xf32> to vector<4x256xf32>
    %c9_i32_700 = arith.constant 9 : i32
    %842 = tpu.dynamic_rotate %809 by %c9_i32_700 dim 1 : vector<4x256xf32>, i32 -> vector<4x256xf32>
    %843 = arith.mulf %841, %842 : vector<4x256xf32>
    %844 = arith.addf %839, %843 : vector<4x256xf32>
    %c7_701 = arith.constant 7 : index
    %c0_702 = arith.constant 0 : index
    %c0_703 = arith.constant 0 : index
    %845 = vector.load %arg2[%c7_701, %c0_702, %c0_703] : memref<31x4x256xf32, #tpu.memory_space<vmem>>, vector<1x4x256xf32>
    %846 = vector.shape_cast %845 : vector<1x4x256xf32> to vector<4x256xf32>
    %c8_i32_704 = arith.constant 8 : i32
    %847 = tpu.dynamic_rotate %809 by %c8_i32_704 dim 1 : vector<4x256xf32>, i32 -> vector<4x256xf32>
    %848 = arith.mulf %846, %847 : vector<4x256xf32>
    %849 = arith.addf %844, %848 : vector<4x256xf32>
    %c8_705 = arith.constant 8 : index
    %c0_706 = arith.constant 0 : index
    %c0_707 = arith.constant 0 : index
    %850 = vector.load %arg2[%c8_705, %c0_706, %c0_707] : memref<31x4x256xf32, #tpu.memory_space<vmem>>, vector<1x4x256xf32>
    %851 = vector.shape_cast %850 : vector<1x4x256xf32> to vector<4x256xf32>
    %c7_i32_708 = arith.constant 7 : i32
    %852 = tpu.dynamic_rotate %809 by %c7_i32_708 dim 1 : vector<4x256xf32>, i32 -> vector<4x256xf32>
    %853 = arith.mulf %851, %852 : vector<4x256xf32>
    %854 = arith.addf %849, %853 : vector<4x256xf32>
    %c9_709 = arith.constant 9 : index
    %c0_710 = arith.constant 0 : index
    %c0_711 = arith.constant 0 : index
    %855 = vector.load %arg2[%c9_709, %c0_710, %c0_711] : memref<31x4x256xf32, #tpu.memory_space<vmem>>, vector<1x4x256xf32>
    %856 = vector.shape_cast %855 : vector<1x4x256xf32> to vector<4x256xf32>
    %c6_i32_712 = arith.constant 6 : i32
    %857 = tpu.dynamic_rotate %809 by %c6_i32_712 dim 1 : vector<4x256xf32>, i32 -> vector<4x256xf32>
    %858 = arith.mulf %856, %857 : vector<4x256xf32>
    %859 = arith.addf %854, %858 : vector<4x256xf32>
    %c10_713 = arith.constant 10 : index
    %c0_714 = arith.constant 0 : index
    %c0_715 = arith.constant 0 : index
    %860 = vector.load %arg2[%c10_713, %c0_714, %c0_715] : memref<31x4x256xf32, #tpu.memory_space<vmem>>, vector<1x4x256xf32>
    %861 = vector.shape_cast %860 : vector<1x4x256xf32> to vector<4x256xf32>
    %c5_i32_716 = arith.constant 5 : i32
    %862 = tpu.dynamic_rotate %809 by %c5_i32_716 dim 1 : vector<4x256xf32>, i32 -> vector<4x256xf32>
    %863 = arith.mulf %861, %862 : vector<4x256xf32>
    %864 = arith.addf %859, %863 : vector<4x256xf32>
    %c11_717 = arith.constant 11 : index
    %c0_718 = arith.constant 0 : index
    %c0_719 = arith.constant 0 : index
    %865 = vector.load %arg2[%c11_717, %c0_718, %c0_719] : memref<31x4x256xf32, #tpu.memory_space<vmem>>, vector<1x4x256xf32>
    %866 = vector.shape_cast %865 : vector<1x4x256xf32> to vector<4x256xf32>
    %c4_i32_720 = arith.constant 4 : i32
    %867 = tpu.dynamic_rotate %809 by %c4_i32_720 dim 1 : vector<4x256xf32>, i32 -> vector<4x256xf32>
    %868 = arith.mulf %866, %867 : vector<4x256xf32>
    %869 = arith.addf %864, %868 : vector<4x256xf32>
    %c12_721 = arith.constant 12 : index
    %c0_722 = arith.constant 0 : index
    %c0_723 = arith.constant 0 : index
    %870 = vector.load %arg2[%c12_721, %c0_722, %c0_723] : memref<31x4x256xf32, #tpu.memory_space<vmem>>, vector<1x4x256xf32>
    %871 = vector.shape_cast %870 : vector<1x4x256xf32> to vector<4x256xf32>
    %c3_i32_724 = arith.constant 3 : i32
    %872 = tpu.dynamic_rotate %809 by %c3_i32_724 dim 1 : vector<4x256xf32>, i32 -> vector<4x256xf32>
    %873 = arith.mulf %871, %872 : vector<4x256xf32>
    %874 = arith.addf %869, %873 : vector<4x256xf32>
    %c13_725 = arith.constant 13 : index
    %c0_726 = arith.constant 0 : index
    %c0_727 = arith.constant 0 : index
    %875 = vector.load %arg2[%c13_725, %c0_726, %c0_727] : memref<31x4x256xf32, #tpu.memory_space<vmem>>, vector<1x4x256xf32>
    %876 = vector.shape_cast %875 : vector<1x4x256xf32> to vector<4x256xf32>
    %c2_i32_728 = arith.constant 2 : i32
    %877 = tpu.dynamic_rotate %809 by %c2_i32_728 dim 1 : vector<4x256xf32>, i32 -> vector<4x256xf32>
    %878 = arith.mulf %876, %877 : vector<4x256xf32>
    %879 = arith.addf %874, %878 : vector<4x256xf32>
    %c14_729 = arith.constant 14 : index
    %c0_730 = arith.constant 0 : index
    %c0_731 = arith.constant 0 : index
    %880 = vector.load %arg2[%c14_729, %c0_730, %c0_731] : memref<31x4x256xf32, #tpu.memory_space<vmem>>, vector<1x4x256xf32>
    %881 = vector.shape_cast %880 : vector<1x4x256xf32> to vector<4x256xf32>
    %c1_i32_732 = arith.constant 1 : i32
    %882 = tpu.dynamic_rotate %809 by %c1_i32_732 dim 1 : vector<4x256xf32>, i32 -> vector<4x256xf32>
    %883 = arith.mulf %881, %882 : vector<4x256xf32>
    %884 = arith.addf %879, %883 : vector<4x256xf32>
    %c15_733 = arith.constant 15 : index
    %c0_734 = arith.constant 0 : index
    %c0_735 = arith.constant 0 : index
    %885 = vector.load %arg2[%c15_733, %c0_734, %c0_735] : memref<31x4x256xf32, #tpu.memory_space<vmem>>, vector<1x4x256xf32>
    %886 = vector.shape_cast %885 : vector<1x4x256xf32> to vector<4x256xf32>
    %887 = arith.mulf %886, %809 : vector<4x256xf32>
    %888 = arith.addf %884, %887 : vector<4x256xf32>
    %c16_736 = arith.constant 16 : index
    %c0_737 = arith.constant 0 : index
    %c0_738 = arith.constant 0 : index
    %889 = vector.load %arg2[%c16_736, %c0_737, %c0_738] : memref<31x4x256xf32, #tpu.memory_space<vmem>>, vector<1x4x256xf32>
    %890 = vector.shape_cast %889 : vector<1x4x256xf32> to vector<4x256xf32>
    %c255_i32_739 = arith.constant 255 : i32
    %891 = tpu.dynamic_rotate %809 by %c255_i32_739 dim 1 : vector<4x256xf32>, i32 -> vector<4x256xf32>
    %892 = arith.mulf %890, %891 : vector<4x256xf32>
    %893 = arith.addf %888, %892 : vector<4x256xf32>
    %c17_740 = arith.constant 17 : index
    %c0_741 = arith.constant 0 : index
    %c0_742 = arith.constant 0 : index
    %894 = vector.load %arg2[%c17_740, %c0_741, %c0_742] : memref<31x4x256xf32, #tpu.memory_space<vmem>>, vector<1x4x256xf32>
    %895 = vector.shape_cast %894 : vector<1x4x256xf32> to vector<4x256xf32>
    %c254_i32_743 = arith.constant 254 : i32
    %896 = tpu.dynamic_rotate %809 by %c254_i32_743 dim 1 : vector<4x256xf32>, i32 -> vector<4x256xf32>
    %897 = arith.mulf %895, %896 : vector<4x256xf32>
    %898 = arith.addf %893, %897 : vector<4x256xf32>
    %c18_744 = arith.constant 18 : index
    %c0_745 = arith.constant 0 : index
    %c0_746 = arith.constant 0 : index
    %899 = vector.load %arg2[%c18_744, %c0_745, %c0_746] : memref<31x4x256xf32, #tpu.memory_space<vmem>>, vector<1x4x256xf32>
    %900 = vector.shape_cast %899 : vector<1x4x256xf32> to vector<4x256xf32>
    %c253_i32_747 = arith.constant 253 : i32
    %901 = tpu.dynamic_rotate %809 by %c253_i32_747 dim 1 : vector<4x256xf32>, i32 -> vector<4x256xf32>
    %902 = arith.mulf %900, %901 : vector<4x256xf32>
    %903 = arith.addf %898, %902 : vector<4x256xf32>
    %c19_748 = arith.constant 19 : index
    %c0_749 = arith.constant 0 : index
    %c0_750 = arith.constant 0 : index
    %904 = vector.load %arg2[%c19_748, %c0_749, %c0_750] : memref<31x4x256xf32, #tpu.memory_space<vmem>>, vector<1x4x256xf32>
    %905 = vector.shape_cast %904 : vector<1x4x256xf32> to vector<4x256xf32>
    %c252_i32_751 = arith.constant 252 : i32
    %906 = tpu.dynamic_rotate %809 by %c252_i32_751 dim 1 : vector<4x256xf32>, i32 -> vector<4x256xf32>
    %907 = arith.mulf %905, %906 : vector<4x256xf32>
    %908 = arith.addf %903, %907 : vector<4x256xf32>
    %c20_752 = arith.constant 20 : index
    %c0_753 = arith.constant 0 : index
    %c0_754 = arith.constant 0 : index
    %909 = vector.load %arg2[%c20_752, %c0_753, %c0_754] : memref<31x4x256xf32, #tpu.memory_space<vmem>>, vector<1x4x256xf32>
    %910 = vector.shape_cast %909 : vector<1x4x256xf32> to vector<4x256xf32>
    %c251_i32_755 = arith.constant 251 : i32
    %911 = tpu.dynamic_rotate %809 by %c251_i32_755 dim 1 : vector<4x256xf32>, i32 -> vector<4x256xf32>
    %912 = arith.mulf %910, %911 : vector<4x256xf32>
    %913 = arith.addf %908, %912 : vector<4x256xf32>
    %c21_756 = arith.constant 21 : index
    %c0_757 = arith.constant 0 : index
    %c0_758 = arith.constant 0 : index
    %914 = vector.load %arg2[%c21_756, %c0_757, %c0_758] : memref<31x4x256xf32, #tpu.memory_space<vmem>>, vector<1x4x256xf32>
    %915 = vector.shape_cast %914 : vector<1x4x256xf32> to vector<4x256xf32>
    %c250_i32_759 = arith.constant 250 : i32
    %916 = tpu.dynamic_rotate %809 by %c250_i32_759 dim 1 : vector<4x256xf32>, i32 -> vector<4x256xf32>
    %917 = arith.mulf %915, %916 : vector<4x256xf32>
    %918 = arith.addf %913, %917 : vector<4x256xf32>
    %c22_760 = arith.constant 22 : index
    %c0_761 = arith.constant 0 : index
    %c0_762 = arith.constant 0 : index
    %919 = vector.load %arg2[%c22_760, %c0_761, %c0_762] : memref<31x4x256xf32, #tpu.memory_space<vmem>>, vector<1x4x256xf32>
    %920 = vector.shape_cast %919 : vector<1x4x256xf32> to vector<4x256xf32>
    %c249_i32_763 = arith.constant 249 : i32
    %921 = tpu.dynamic_rotate %809 by %c249_i32_763 dim 1 : vector<4x256xf32>, i32 -> vector<4x256xf32>
    %922 = arith.mulf %920, %921 : vector<4x256xf32>
    %923 = arith.addf %918, %922 : vector<4x256xf32>
    %c23_764 = arith.constant 23 : index
    %c0_765 = arith.constant 0 : index
    %c0_766 = arith.constant 0 : index
    %924 = vector.load %arg2[%c23_764, %c0_765, %c0_766] : memref<31x4x256xf32, #tpu.memory_space<vmem>>, vector<1x4x256xf32>
    %925 = vector.shape_cast %924 : vector<1x4x256xf32> to vector<4x256xf32>
    %c248_i32_767 = arith.constant 248 : i32
    %926 = tpu.dynamic_rotate %809 by %c248_i32_767 dim 1 : vector<4x256xf32>, i32 -> vector<4x256xf32>
    %927 = arith.mulf %925, %926 : vector<4x256xf32>
    %928 = arith.addf %923, %927 : vector<4x256xf32>
    %c24_768 = arith.constant 24 : index
    %c0_769 = arith.constant 0 : index
    %c0_770 = arith.constant 0 : index
    %929 = vector.load %arg2[%c24_768, %c0_769, %c0_770] : memref<31x4x256xf32, #tpu.memory_space<vmem>>, vector<1x4x256xf32>
    %930 = vector.shape_cast %929 : vector<1x4x256xf32> to vector<4x256xf32>
    %c247_i32_771 = arith.constant 247 : i32
    %931 = tpu.dynamic_rotate %809 by %c247_i32_771 dim 1 : vector<4x256xf32>, i32 -> vector<4x256xf32>
    %932 = arith.mulf %930, %931 : vector<4x256xf32>
    %933 = arith.addf %928, %932 : vector<4x256xf32>
    %c25_772 = arith.constant 25 : index
    %c0_773 = arith.constant 0 : index
    %c0_774 = arith.constant 0 : index
    %934 = vector.load %arg2[%c25_772, %c0_773, %c0_774] : memref<31x4x256xf32, #tpu.memory_space<vmem>>, vector<1x4x256xf32>
    %935 = vector.shape_cast %934 : vector<1x4x256xf32> to vector<4x256xf32>
    %c246_i32_775 = arith.constant 246 : i32
    %936 = tpu.dynamic_rotate %809 by %c246_i32_775 dim 1 : vector<4x256xf32>, i32 -> vector<4x256xf32>
    %937 = arith.mulf %935, %936 : vector<4x256xf32>
    %938 = arith.addf %933, %937 : vector<4x256xf32>
    %c26_776 = arith.constant 26 : index
    %c0_777 = arith.constant 0 : index
    %c0_778 = arith.constant 0 : index
    %939 = vector.load %arg2[%c26_776, %c0_777, %c0_778] : memref<31x4x256xf32, #tpu.memory_space<vmem>>, vector<1x4x256xf32>
    %940 = vector.shape_cast %939 : vector<1x4x256xf32> to vector<4x256xf32>
    %c245_i32_779 = arith.constant 245 : i32
    %941 = tpu.dynamic_rotate %809 by %c245_i32_779 dim 1 : vector<4x256xf32>, i32 -> vector<4x256xf32>
    %942 = arith.mulf %940, %941 : vector<4x256xf32>
    %943 = arith.addf %938, %942 : vector<4x256xf32>
    %c27_780 = arith.constant 27 : index
    %c0_781 = arith.constant 0 : index
    %c0_782 = arith.constant 0 : index
    %944 = vector.load %arg2[%c27_780, %c0_781, %c0_782] : memref<31x4x256xf32, #tpu.memory_space<vmem>>, vector<1x4x256xf32>
    %945 = vector.shape_cast %944 : vector<1x4x256xf32> to vector<4x256xf32>
    %c244_i32_783 = arith.constant 244 : i32
    %946 = tpu.dynamic_rotate %809 by %c244_i32_783 dim 1 : vector<4x256xf32>, i32 -> vector<4x256xf32>
    %947 = arith.mulf %945, %946 : vector<4x256xf32>
    %948 = arith.addf %943, %947 : vector<4x256xf32>
    %c28_784 = arith.constant 28 : index
    %c0_785 = arith.constant 0 : index
    %c0_786 = arith.constant 0 : index
    %949 = vector.load %arg2[%c28_784, %c0_785, %c0_786] : memref<31x4x256xf32, #tpu.memory_space<vmem>>, vector<1x4x256xf32>
    %950 = vector.shape_cast %949 : vector<1x4x256xf32> to vector<4x256xf32>
    %c243_i32_787 = arith.constant 243 : i32
    %951 = tpu.dynamic_rotate %809 by %c243_i32_787 dim 1 : vector<4x256xf32>, i32 -> vector<4x256xf32>
    %952 = arith.mulf %950, %951 : vector<4x256xf32>
    %953 = arith.addf %948, %952 : vector<4x256xf32>
    %c29_788 = arith.constant 29 : index
    %c0_789 = arith.constant 0 : index
    %c0_790 = arith.constant 0 : index
    %954 = vector.load %arg2[%c29_788, %c0_789, %c0_790] : memref<31x4x256xf32, #tpu.memory_space<vmem>>, vector<1x4x256xf32>
    %955 = vector.shape_cast %954 : vector<1x4x256xf32> to vector<4x256xf32>
    %c242_i32_791 = arith.constant 242 : i32
    %956 = tpu.dynamic_rotate %809 by %c242_i32_791 dim 1 : vector<4x256xf32>, i32 -> vector<4x256xf32>
    %957 = arith.mulf %955, %956 : vector<4x256xf32>
    %958 = arith.addf %953, %957 : vector<4x256xf32>
    %c30_792 = arith.constant 30 : index
    %c0_793 = arith.constant 0 : index
    %c0_794 = arith.constant 0 : index
    %959 = vector.load %arg2[%c30_792, %c0_793, %c0_794] : memref<31x4x256xf32, #tpu.memory_space<vmem>>, vector<1x4x256xf32>
    %960 = vector.shape_cast %959 : vector<1x4x256xf32> to vector<4x256xf32>
    %c241_i32_795 = arith.constant 241 : i32
    %961 = tpu.dynamic_rotate %809 by %c241_i32_795 dim 1 : vector<4x256xf32>, i32 -> vector<4x256xf32>
    %962 = arith.mulf %960, %961 : vector<4x256xf32>
    %963 = arith.addf %958, %962 : vector<4x256xf32>
    %c17_i32_796 = arith.constant 17 : i32
    %964 = tpu.dynamic_rotate %963 by %c17_i32_796 dim 1 : vector<4x256xf32>, i32 -> vector<4x256xf32>
    %c0_797 = arith.constant 0 : index
    %c0_798 = arith.constant 0 : index
    %c0_799 = arith.constant 0 : index
    %965 = vector.load %arg3[%c0_797, %c0_798, %c0_799] : memref<9x8x256xf32, #tpu.memory_space<vmem>>, vector<1x4x256xf32>
    %966 = vector.shape_cast %965 : vector<1x4x256xf32> to vector<4x256xf32>
    %967 = arith.mulf %964, %966 : vector<4x256xf32>
    %c0_800 = arith.constant 0 : index
    %c0_801 = arith.constant 0 : index
    %c0_802 = arith.constant 0 : index
    %968 = vector.load %arg6[%c0_800, %c0_801, %c0_802] : memref<9x8x4xf32, #tpu.memory_space<vmem>>, vector<1x8x4xf32>
    %969 = vector.shape_cast %968 : vector<1x8x4xf32> to vector<8x4xf32>
    %cst_803 = arith.constant dense<0.000000e+00> : vector<8x256xf32>
    %970 = tpu.matmul %969, %967, %cst_803 {dimension_numbers = #tpu.dot_dimension_numbers<[1], [0], [0], [1], [0, 0, 1, 1], [], []>} : vector<8x4xf32>, vector<4x256xf32>, vector<8x256xf32> -> vector<8x256xf32>
    %971 = arith.addf %81, %970 : vector<8x256xf32>
    %c1_i32_804 = arith.constant 1 : i32
    %972 = tpu.dynamic_rotate %963 by %c1_i32_804 dim 1 : vector<4x256xf32>, i32 -> vector<4x256xf32>
    %c1_805 = arith.constant 1 : index
    %c0_806 = arith.constant 0 : index
    %c0_807 = arith.constant 0 : index
    %973 = vector.load %arg3[%c1_805, %c0_806, %c0_807] : memref<9x8x256xf32, #tpu.memory_space<vmem>>, vector<1x4x256xf32>
    %974 = vector.shape_cast %973 : vector<1x4x256xf32> to vector<4x256xf32>
    %975 = arith.mulf %972, %974 : vector<4x256xf32>
    %c1_808 = arith.constant 1 : index
    %c0_809 = arith.constant 0 : index
    %c0_810 = arith.constant 0 : index
    %976 = vector.load %arg6[%c1_808, %c0_809, %c0_810] : memref<9x8x4xf32, #tpu.memory_space<vmem>>, vector<1x8x4xf32>
    %977 = vector.shape_cast %976 : vector<1x8x4xf32> to vector<8x4xf32>
    %cst_811 = arith.constant dense<0.000000e+00> : vector<8x256xf32>
    %978 = tpu.matmul %977, %975, %cst_811 {dimension_numbers = #tpu.dot_dimension_numbers<[1], [0], [0], [1], [0, 0, 1, 1], [], []>} : vector<8x4xf32>, vector<4x256xf32>, vector<8x256xf32> -> vector<8x256xf32>
    %979 = arith.addf %971, %978 : vector<8x256xf32>
    %c241_i32_812 = arith.constant 241 : i32
    %980 = tpu.dynamic_rotate %963 by %c241_i32_812 dim 1 : vector<4x256xf32>, i32 -> vector<4x256xf32>
    %c2_813 = arith.constant 2 : index
    %c0_814 = arith.constant 0 : index
    %c0_815 = arith.constant 0 : index
    %981 = vector.load %arg3[%c2_813, %c0_814, %c0_815] : memref<9x8x256xf32, #tpu.memory_space<vmem>>, vector<1x4x256xf32>
    %982 = vector.shape_cast %981 : vector<1x4x256xf32> to vector<4x256xf32>
    %983 = arith.mulf %980, %982 : vector<4x256xf32>
    %c2_816 = arith.constant 2 : index
    %c0_817 = arith.constant 0 : index
    %c0_818 = arith.constant 0 : index
    %984 = vector.load %arg6[%c2_816, %c0_817, %c0_818] : memref<9x8x4xf32, #tpu.memory_space<vmem>>, vector<1x8x4xf32>
    %985 = vector.shape_cast %984 : vector<1x8x4xf32> to vector<8x4xf32>
    %cst_819 = arith.constant dense<0.000000e+00> : vector<8x256xf32>
    %986 = tpu.matmul %985, %983, %cst_819 {dimension_numbers = #tpu.dot_dimension_numbers<[1], [0], [0], [1], [0, 0, 1, 1], [], []>} : vector<8x4xf32>, vector<4x256xf32>, vector<8x256xf32> -> vector<8x256xf32>
    %987 = arith.addf %979, %986 : vector<8x256xf32>
    %c16_i32_820 = arith.constant 16 : i32
    %988 = tpu.dynamic_rotate %963 by %c16_i32_820 dim 1 : vector<4x256xf32>, i32 -> vector<4x256xf32>
    %c3_821 = arith.constant 3 : index
    %c0_822 = arith.constant 0 : index
    %c0_823 = arith.constant 0 : index
    %989 = vector.load %arg3[%c3_821, %c0_822, %c0_823] : memref<9x8x256xf32, #tpu.memory_space<vmem>>, vector<1x4x256xf32>
    %990 = vector.shape_cast %989 : vector<1x4x256xf32> to vector<4x256xf32>
    %991 = arith.mulf %988, %990 : vector<4x256xf32>
    %c3_824 = arith.constant 3 : index
    %c0_825 = arith.constant 0 : index
    %c0_826 = arith.constant 0 : index
    %992 = vector.load %arg6[%c3_824, %c0_825, %c0_826] : memref<9x8x4xf32, #tpu.memory_space<vmem>>, vector<1x8x4xf32>
    %993 = vector.shape_cast %992 : vector<1x8x4xf32> to vector<8x4xf32>
    %cst_827 = arith.constant dense<0.000000e+00> : vector<8x256xf32>
    %994 = tpu.matmul %993, %991, %cst_827 {dimension_numbers = #tpu.dot_dimension_numbers<[1], [0], [0], [1], [0, 0, 1, 1], [], []>} : vector<8x4xf32>, vector<4x256xf32>, vector<8x256xf32> -> vector<8x256xf32>
    %995 = arith.addf %987, %994 : vector<8x256xf32>
    %c4_828 = arith.constant 4 : index
    %c0_829 = arith.constant 0 : index
    %c0_830 = arith.constant 0 : index
    %996 = vector.load %arg6[%c4_828, %c0_829, %c0_830] : memref<9x8x4xf32, #tpu.memory_space<vmem>>, vector<1x8x4xf32>
    %997 = vector.shape_cast %996 : vector<1x8x4xf32> to vector<8x4xf32>
    %cst_831 = arith.constant dense<0.000000e+00> : vector<8x256xf32>
    %998 = tpu.matmul %997, %963, %cst_831 {dimension_numbers = #tpu.dot_dimension_numbers<[1], [0], [0], [1], [0, 0, 1, 1], [], []>} : vector<8x4xf32>, vector<4x256xf32>, vector<8x256xf32> -> vector<8x256xf32>
    %999 = arith.addf %995, %998 : vector<8x256xf32>
    %c240_i32_832 = arith.constant 240 : i32
    %1000 = tpu.dynamic_rotate %963 by %c240_i32_832 dim 1 : vector<4x256xf32>, i32 -> vector<4x256xf32>
    %c5_833 = arith.constant 5 : index
    %c0_834 = arith.constant 0 : index
    %c0_835 = arith.constant 0 : index
    %1001 = vector.load %arg3[%c5_833, %c0_834, %c0_835] : memref<9x8x256xf32, #tpu.memory_space<vmem>>, vector<1x4x256xf32>
    %1002 = vector.shape_cast %1001 : vector<1x4x256xf32> to vector<4x256xf32>
    %1003 = arith.mulf %1000, %1002 : vector<4x256xf32>
    %c5_836 = arith.constant 5 : index
    %c0_837 = arith.constant 0 : index
    %c0_838 = arith.constant 0 : index
    %1004 = vector.load %arg6[%c5_836, %c0_837, %c0_838] : memref<9x8x4xf32, #tpu.memory_space<vmem>>, vector<1x8x4xf32>
    %1005 = vector.shape_cast %1004 : vector<1x8x4xf32> to vector<8x4xf32>
    %cst_839 = arith.constant dense<0.000000e+00> : vector<8x256xf32>
    %1006 = tpu.matmul %1005, %1003, %cst_839 {dimension_numbers = #tpu.dot_dimension_numbers<[1], [0], [0], [1], [0, 0, 1, 1], [], []>} : vector<8x4xf32>, vector<4x256xf32>, vector<8x256xf32> -> vector<8x256xf32>
    %1007 = arith.addf %999, %1006 : vector<8x256xf32>
    %c15_i32_840 = arith.constant 15 : i32
    %1008 = tpu.dynamic_rotate %963 by %c15_i32_840 dim 1 : vector<4x256xf32>, i32 -> vector<4x256xf32>
    %c6_841 = arith.constant 6 : index
    %c0_842 = arith.constant 0 : index
    %c0_843 = arith.constant 0 : index
    %1009 = vector.load %arg3[%c6_841, %c0_842, %c0_843] : memref<9x8x256xf32, #tpu.memory_space<vmem>>, vector<1x4x256xf32>
    %1010 = vector.shape_cast %1009 : vector<1x4x256xf32> to vector<4x256xf32>
    %1011 = arith.mulf %1008, %1010 : vector<4x256xf32>
    %c6_844 = arith.constant 6 : index
    %c0_845 = arith.constant 0 : index
    %c0_846 = arith.constant 0 : index
    %1012 = vector.load %arg6[%c6_844, %c0_845, %c0_846] : memref<9x8x4xf32, #tpu.memory_space<vmem>>, vector<1x8x4xf32>
    %1013 = vector.shape_cast %1012 : vector<1x8x4xf32> to vector<8x4xf32>
    %cst_847 = arith.constant dense<0.000000e+00> : vector<8x256xf32>
    %1014 = tpu.matmul %1013, %1011, %cst_847 {dimension_numbers = #tpu.dot_dimension_numbers<[1], [0], [0], [1], [0, 0, 1, 1], [], []>} : vector<8x4xf32>, vector<4x256xf32>, vector<8x256xf32> -> vector<8x256xf32>
    %1015 = arith.addf %1007, %1014 : vector<8x256xf32>
    %c255_i32_848 = arith.constant 255 : i32
    %1016 = tpu.dynamic_rotate %963 by %c255_i32_848 dim 1 : vector<4x256xf32>, i32 -> vector<4x256xf32>
    %c7_849 = arith.constant 7 : index
    %c0_850 = arith.constant 0 : index
    %c0_851 = arith.constant 0 : index
    %1017 = vector.load %arg3[%c7_849, %c0_850, %c0_851] : memref<9x8x256xf32, #tpu.memory_space<vmem>>, vector<1x4x256xf32>
    %1018 = vector.shape_cast %1017 : vector<1x4x256xf32> to vector<4x256xf32>
    %1019 = arith.mulf %1016, %1018 : vector<4x256xf32>
    %c7_852 = arith.constant 7 : index
    %c0_853 = arith.constant 0 : index
    %c0_854 = arith.constant 0 : index
    %1020 = vector.load %arg6[%c7_852, %c0_853, %c0_854] : memref<9x8x4xf32, #tpu.memory_space<vmem>>, vector<1x8x4xf32>
    %1021 = vector.shape_cast %1020 : vector<1x8x4xf32> to vector<8x4xf32>
    %cst_855 = arith.constant dense<0.000000e+00> : vector<8x256xf32>
    %1022 = tpu.matmul %1021, %1019, %cst_855 {dimension_numbers = #tpu.dot_dimension_numbers<[1], [0], [0], [1], [0, 0, 1, 1], [], []>} : vector<8x4xf32>, vector<4x256xf32>, vector<8x256xf32> -> vector<8x256xf32>
    %1023 = arith.addf %1015, %1022 : vector<8x256xf32>
    %c239_i32_856 = arith.constant 239 : i32
    %1024 = tpu.dynamic_rotate %963 by %c239_i32_856 dim 1 : vector<4x256xf32>, i32 -> vector<4x256xf32>
    %c8_857 = arith.constant 8 : index
    %c0_858 = arith.constant 0 : index
    %c0_859 = arith.constant 0 : index
    %1025 = vector.load %arg3[%c8_857, %c0_858, %c0_859] : memref<9x8x256xf32, #tpu.memory_space<vmem>>, vector<1x4x256xf32>
    %1026 = vector.shape_cast %1025 : vector<1x4x256xf32> to vector<4x256xf32>
    %1027 = arith.mulf %1024, %1026 : vector<4x256xf32>
    %c8_860 = arith.constant 8 : index
    %c0_861 = arith.constant 0 : index
    %c0_862 = arith.constant 0 : index
    %1028 = vector.load %arg6[%c8_860, %c0_861, %c0_862] : memref<9x8x4xf32, #tpu.memory_space<vmem>>, vector<1x8x4xf32>
    %1029 = vector.shape_cast %1028 : vector<1x8x4xf32> to vector<8x4xf32>
    %cst_863 = arith.constant dense<0.000000e+00> : vector<8x256xf32>
    %1030 = tpu.matmul %1029, %1027, %cst_863 {dimension_numbers = #tpu.dot_dimension_numbers<[1], [0], [0], [1], [0, 0, 1, 1], [], []>} : vector<8x4xf32>, vector<4x256xf32>, vector<8x256xf32> -> vector<8x256xf32>
    %1031 = arith.addf %1023, %1030 : vector<8x256xf32>
    %cst_864 = arith.constant 0.000000e+00 : f32
    %1032 = vector.broadcast %cst_864 : f32 to vector<8x256xf32>
    %1033 = arith.maximumf %1031, %1032 : vector<8x256xf32>
    %c17_i32_865 = arith.constant 17 : i32
    %1034 = tpu.dynamic_rotate %1033 by %c17_i32_865 dim 1 : vector<8x256xf32>, i32 -> vector<8x256xf32>
    %c0_866 = arith.constant 0 : index
    %c0_867 = arith.constant 0 : index
    %c0_868 = arith.constant 0 : index
    %1035 = vector.load %arg3[%c0_866, %c0_867, %c0_868] : memref<9x8x256xf32, #tpu.memory_space<vmem>>, vector<1x8x256xf32>
    %1036 = vector.shape_cast %1035 : vector<1x8x256xf32> to vector<8x256xf32>
    %1037 = arith.mulf %1034, %1036 : vector<8x256xf32>
    %c0_869 = arith.constant 0 : index
    %c0_870 = arith.constant 0 : index
    %c0_871 = arith.constant 0 : index
    %1038 = vector.load %arg9[%c0_869, %c0_870, %c0_871] : memref<9x8x8xf32, #tpu.memory_space<vmem>>, vector<1x8x8xf32>
    %1039 = vector.shape_cast %1038 : vector<1x8x8xf32> to vector<8x8xf32>
    %cst_872 = arith.constant dense<0.000000e+00> : vector<8x256xf32>
    %1040 = tpu.matmul %1039, %1037, %cst_872 {dimension_numbers = #tpu.dot_dimension_numbers<[1], [0], [0], [1], [0, 0, 1, 1], [], []>} : vector<8x8xf32>, vector<8x256xf32>, vector<8x256xf32> -> vector<8x256xf32>
    %1041 = arith.addf %10, %1040 : vector<8x256xf32>
    %c1_i32_873 = arith.constant 1 : i32
    %1042 = tpu.dynamic_rotate %1033 by %c1_i32_873 dim 1 : vector<8x256xf32>, i32 -> vector<8x256xf32>
    %c1_874 = arith.constant 1 : index
    %c0_875 = arith.constant 0 : index
    %c0_876 = arith.constant 0 : index
    %1043 = vector.load %arg3[%c1_874, %c0_875, %c0_876] : memref<9x8x256xf32, #tpu.memory_space<vmem>>, vector<1x8x256xf32>
    %1044 = vector.shape_cast %1043 : vector<1x8x256xf32> to vector<8x256xf32>
    %1045 = arith.mulf %1042, %1044 : vector<8x256xf32>
    %c1_877 = arith.constant 1 : index
    %c0_878 = arith.constant 0 : index
    %c0_879 = arith.constant 0 : index
    %1046 = vector.load %arg9[%c1_877, %c0_878, %c0_879] : memref<9x8x8xf32, #tpu.memory_space<vmem>>, vector<1x8x8xf32>
    %1047 = vector.shape_cast %1046 : vector<1x8x8xf32> to vector<8x8xf32>
    %cst_880 = arith.constant dense<0.000000e+00> : vector<8x256xf32>
    %1048 = tpu.matmul %1047, %1045, %cst_880 {dimension_numbers = #tpu.dot_dimension_numbers<[1], [0], [0], [1], [0, 0, 1, 1], [], []>} : vector<8x8xf32>, vector<8x256xf32>, vector<8x256xf32> -> vector<8x256xf32>
    %1049 = arith.addf %1041, %1048 : vector<8x256xf32>
    %c241_i32_881 = arith.constant 241 : i32
    %1050 = tpu.dynamic_rotate %1033 by %c241_i32_881 dim 1 : vector<8x256xf32>, i32 -> vector<8x256xf32>
    %c2_882 = arith.constant 2 : index
    %c0_883 = arith.constant 0 : index
    %c0_884 = arith.constant 0 : index
    %1051 = vector.load %arg3[%c2_882, %c0_883, %c0_884] : memref<9x8x256xf32, #tpu.memory_space<vmem>>, vector<1x8x256xf32>
    %1052 = vector.shape_cast %1051 : vector<1x8x256xf32> to vector<8x256xf32>
    %1053 = arith.mulf %1050, %1052 : vector<8x256xf32>
    %c2_885 = arith.constant 2 : index
    %c0_886 = arith.constant 0 : index
    %c0_887 = arith.constant 0 : index
    %1054 = vector.load %arg9[%c2_885, %c0_886, %c0_887] : memref<9x8x8xf32, #tpu.memory_space<vmem>>, vector<1x8x8xf32>
    %1055 = vector.shape_cast %1054 : vector<1x8x8xf32> to vector<8x8xf32>
    %cst_888 = arith.constant dense<0.000000e+00> : vector<8x256xf32>
    %1056 = tpu.matmul %1055, %1053, %cst_888 {dimension_numbers = #tpu.dot_dimension_numbers<[1], [0], [0], [1], [0, 0, 1, 1], [], []>} : vector<8x8xf32>, vector<8x256xf32>, vector<8x256xf32> -> vector<8x256xf32>
    %1057 = arith.addf %1049, %1056 : vector<8x256xf32>
    %c16_i32_889 = arith.constant 16 : i32
    %1058 = tpu.dynamic_rotate %1033 by %c16_i32_889 dim 1 : vector<8x256xf32>, i32 -> vector<8x256xf32>
    %c3_890 = arith.constant 3 : index
    %c0_891 = arith.constant 0 : index
    %c0_892 = arith.constant 0 : index
    %1059 = vector.load %arg3[%c3_890, %c0_891, %c0_892] : memref<9x8x256xf32, #tpu.memory_space<vmem>>, vector<1x8x256xf32>
    %1060 = vector.shape_cast %1059 : vector<1x8x256xf32> to vector<8x256xf32>
    %1061 = arith.mulf %1058, %1060 : vector<8x256xf32>
    %c3_893 = arith.constant 3 : index
    %c0_894 = arith.constant 0 : index
    %c0_895 = arith.constant 0 : index
    %1062 = vector.load %arg9[%c3_893, %c0_894, %c0_895] : memref<9x8x8xf32, #tpu.memory_space<vmem>>, vector<1x8x8xf32>
    %1063 = vector.shape_cast %1062 : vector<1x8x8xf32> to vector<8x8xf32>
    %cst_896 = arith.constant dense<0.000000e+00> : vector<8x256xf32>
    %1064 = tpu.matmul %1063, %1061, %cst_896 {dimension_numbers = #tpu.dot_dimension_numbers<[1], [0], [0], [1], [0, 0, 1, 1], [], []>} : vector<8x8xf32>, vector<8x256xf32>, vector<8x256xf32> -> vector<8x256xf32>
    %1065 = arith.addf %1057, %1064 : vector<8x256xf32>
    %c4_897 = arith.constant 4 : index
    %c0_898 = arith.constant 0 : index
    %c0_899 = arith.constant 0 : index
    %1066 = vector.load %arg9[%c4_897, %c0_898, %c0_899] : memref<9x8x8xf32, #tpu.memory_space<vmem>>, vector<1x8x8xf32>
    %1067 = vector.shape_cast %1066 : vector<1x8x8xf32> to vector<8x8xf32>
    %cst_900 = arith.constant dense<0.000000e+00> : vector<8x256xf32>
    %1068 = tpu.matmul %1067, %1033, %cst_900 {dimension_numbers = #tpu.dot_dimension_numbers<[1], [0], [0], [1], [0, 0, 1, 1], [], []>} : vector<8x8xf32>, vector<8x256xf32>, vector<8x256xf32> -> vector<8x256xf32>
    %1069 = arith.addf %1065, %1068 : vector<8x256xf32>
    %c240_i32_901 = arith.constant 240 : i32
    %1070 = tpu.dynamic_rotate %1033 by %c240_i32_901 dim 1 : vector<8x256xf32>, i32 -> vector<8x256xf32>
    %c5_902 = arith.constant 5 : index
    %c0_903 = arith.constant 0 : index
    %c0_904 = arith.constant 0 : index
    %1071 = vector.load %arg3[%c5_902, %c0_903, %c0_904] : memref<9x8x256xf32, #tpu.memory_space<vmem>>, vector<1x8x256xf32>
    %1072 = vector.shape_cast %1071 : vector<1x8x256xf32> to vector<8x256xf32>
    %1073 = arith.mulf %1070, %1072 : vector<8x256xf32>
    %c5_905 = arith.constant 5 : index
    %c0_906 = arith.constant 0 : index
    %c0_907 = arith.constant 0 : index
    %1074 = vector.load %arg9[%c5_905, %c0_906, %c0_907] : memref<9x8x8xf32, #tpu.memory_space<vmem>>, vector<1x8x8xf32>
    %1075 = vector.shape_cast %1074 : vector<1x8x8xf32> to vector<8x8xf32>
    %cst_908 = arith.constant dense<0.000000e+00> : vector<8x256xf32>
    %1076 = tpu.matmul %1075, %1073, %cst_908 {dimension_numbers = #tpu.dot_dimension_numbers<[1], [0], [0], [1], [0, 0, 1, 1], [], []>} : vector<8x8xf32>, vector<8x256xf32>, vector<8x256xf32> -> vector<8x256xf32>
    %1077 = arith.addf %1069, %1076 : vector<8x256xf32>
    %c15_i32_909 = arith.constant 15 : i32
    %1078 = tpu.dynamic_rotate %1033 by %c15_i32_909 dim 1 : vector<8x256xf32>, i32 -> vector<8x256xf32>
    %c6_910 = arith.constant 6 : index
    %c0_911 = arith.constant 0 : index
    %c0_912 = arith.constant 0 : index
    %1079 = vector.load %arg3[%c6_910, %c0_911, %c0_912] : memref<9x8x256xf32, #tpu.memory_space<vmem>>, vector<1x8x256xf32>
    %1080 = vector.shape_cast %1079 : vector<1x8x256xf32> to vector<8x256xf32>
    %1081 = arith.mulf %1078, %1080 : vector<8x256xf32>
    %c6_913 = arith.constant 6 : index
    %c0_914 = arith.constant 0 : index
    %c0_915 = arith.constant 0 : index
    %1082 = vector.load %arg9[%c6_913, %c0_914, %c0_915] : memref<9x8x8xf32, #tpu.memory_space<vmem>>, vector<1x8x8xf32>
    %1083 = vector.shape_cast %1082 : vector<1x8x8xf32> to vector<8x8xf32>
    %cst_916 = arith.constant dense<0.000000e+00> : vector<8x256xf32>
    %1084 = tpu.matmul %1083, %1081, %cst_916 {dimension_numbers = #tpu.dot_dimension_numbers<[1], [0], [0], [1], [0, 0, 1, 1], [], []>} : vector<8x8xf32>, vector<8x256xf32>, vector<8x256xf32> -> vector<8x256xf32>
    %1085 = arith.addf %1077, %1084 : vector<8x256xf32>
    %c255_i32_917 = arith.constant 255 : i32
    %1086 = tpu.dynamic_rotate %1033 by %c255_i32_917 dim 1 : vector<8x256xf32>, i32 -> vector<8x256xf32>
    %c7_918 = arith.constant 7 : index
    %c0_919 = arith.constant 0 : index
    %c0_920 = arith.constant 0 : index
    %1087 = vector.load %arg3[%c7_918, %c0_919, %c0_920] : memref<9x8x256xf32, #tpu.memory_space<vmem>>, vector<1x8x256xf32>
    %1088 = vector.shape_cast %1087 : vector<1x8x256xf32> to vector<8x256xf32>
    %1089 = arith.mulf %1086, %1088 : vector<8x256xf32>
    %c7_921 = arith.constant 7 : index
    %c0_922 = arith.constant 0 : index
    %c0_923 = arith.constant 0 : index
    %1090 = vector.load %arg9[%c7_921, %c0_922, %c0_923] : memref<9x8x8xf32, #tpu.memory_space<vmem>>, vector<1x8x8xf32>
    %1091 = vector.shape_cast %1090 : vector<1x8x8xf32> to vector<8x8xf32>
    %cst_924 = arith.constant dense<0.000000e+00> : vector<8x256xf32>
    %1092 = tpu.matmul %1091, %1089, %cst_924 {dimension_numbers = #tpu.dot_dimension_numbers<[1], [0], [0], [1], [0, 0, 1, 1], [], []>} : vector<8x8xf32>, vector<8x256xf32>, vector<8x256xf32> -> vector<8x256xf32>
    %1093 = arith.addf %1085, %1092 : vector<8x256xf32>
    %c239_i32_925 = arith.constant 239 : i32
    %1094 = tpu.dynamic_rotate %1033 by %c239_i32_925 dim 1 : vector<8x256xf32>, i32 -> vector<8x256xf32>
    %c8_926 = arith.constant 8 : index
    %c0_927 = arith.constant 0 : index
    %c0_928 = arith.constant 0 : index
    %1095 = vector.load %arg3[%c8_926, %c0_927, %c0_928] : memref<9x8x256xf32, #tpu.memory_space<vmem>>, vector<1x8x256xf32>
    %1096 = vector.shape_cast %1095 : vector<1x8x256xf32> to vector<8x256xf32>
    %1097 = arith.mulf %1094, %1096 : vector<8x256xf32>
    %c8_929 = arith.constant 8 : index
    %c0_930 = arith.constant 0 : index
    %c0_931 = arith.constant 0 : index
    %1098 = vector.load %arg9[%c8_929, %c0_930, %c0_931] : memref<9x8x8xf32, #tpu.memory_space<vmem>>, vector<1x8x8xf32>
    %1099 = vector.shape_cast %1098 : vector<1x8x8xf32> to vector<8x8xf32>
    %cst_932 = arith.constant dense<0.000000e+00> : vector<8x256xf32>
    %1100 = tpu.matmul %1099, %1097, %cst_932 {dimension_numbers = #tpu.dot_dimension_numbers<[1], [0], [0], [1], [0, 0, 1, 1], [], []>} : vector<8x8xf32>, vector<8x256xf32>, vector<8x256xf32> -> vector<8x256xf32>
    %1101 = arith.addf %1093, %1100 : vector<8x256xf32>
    %cst_933 = arith.constant 0.000000e+00 : f32
    %1102 = vector.broadcast %cst_933 : f32 to vector<8x256xf32>
    %1103 = arith.maximumf %1101, %1102 : vector<8x256xf32>
    %c17_i32_934 = arith.constant 17 : i32
    %1104 = tpu.dynamic_rotate %1103 by %c17_i32_934 dim 1 : vector<8x256xf32>, i32 -> vector<8x256xf32>
    %c0_935 = arith.constant 0 : index
    %c0_936 = arith.constant 0 : index
    %c0_937 = arith.constant 0 : index
    %1105 = vector.load %arg3[%c0_935, %c0_936, %c0_937] : memref<9x8x256xf32, #tpu.memory_space<vmem>>, vector<1x8x256xf32>
    %1106 = vector.shape_cast %1105 : vector<1x8x256xf32> to vector<8x256xf32>
    %1107 = arith.mulf %1104, %1106 : vector<8x256xf32>
    %c0_938 = arith.constant 0 : index
    %c0_939 = arith.constant 0 : index
    %c0_940 = arith.constant 0 : index
    %1108 = vector.load %arg11[%c0_938, %c0_939, %c0_940] : memref<9x4x8xf32, #tpu.memory_space<vmem>>, vector<1x4x8xf32>
    %1109 = vector.shape_cast %1108 : vector<1x4x8xf32> to vector<4x8xf32>
    %cst_941 = arith.constant dense<0.000000e+00> : vector<4x256xf32>
    %1110 = tpu.matmul %1109, %1107, %cst_941 {dimension_numbers = #tpu.dot_dimension_numbers<[1], [0], [0], [1], [0, 0, 1, 1], [], []>} : vector<4x8xf32>, vector<8x256xf32>, vector<4x256xf32> -> vector<4x256xf32>
    %1111 = arith.addf %13, %1110 : vector<4x256xf32>
    %c1_i32_942 = arith.constant 1 : i32
    %1112 = tpu.dynamic_rotate %1103 by %c1_i32_942 dim 1 : vector<8x256xf32>, i32 -> vector<8x256xf32>
    %c1_943 = arith.constant 1 : index
    %c0_944 = arith.constant 0 : index
    %c0_945 = arith.constant 0 : index
    %1113 = vector.load %arg3[%c1_943, %c0_944, %c0_945] : memref<9x8x256xf32, #tpu.memory_space<vmem>>, vector<1x8x256xf32>
    %1114 = vector.shape_cast %1113 : vector<1x8x256xf32> to vector<8x256xf32>
    %1115 = arith.mulf %1112, %1114 : vector<8x256xf32>
    %c1_946 = arith.constant 1 : index
    %c0_947 = arith.constant 0 : index
    %c0_948 = arith.constant 0 : index
    %1116 = vector.load %arg11[%c1_946, %c0_947, %c0_948] : memref<9x4x8xf32, #tpu.memory_space<vmem>>, vector<1x4x8xf32>
    %1117 = vector.shape_cast %1116 : vector<1x4x8xf32> to vector<4x8xf32>
    %cst_949 = arith.constant dense<0.000000e+00> : vector<4x256xf32>
    %1118 = tpu.matmul %1117, %1115, %cst_949 {dimension_numbers = #tpu.dot_dimension_numbers<[1], [0], [0], [1], [0, 0, 1, 1], [], []>} : vector<4x8xf32>, vector<8x256xf32>, vector<4x256xf32> -> vector<4x256xf32>
    %1119 = arith.addf %1111, %1118 : vector<4x256xf32>
    %c241_i32_950 = arith.constant 241 : i32
    %1120 = tpu.dynamic_rotate %1103 by %c241_i32_950 dim 1 : vector<8x256xf32>, i32 -> vector<8x256xf32>
    %c2_951 = arith.constant 2 : index
    %c0_952 = arith.constant 0 : index
    %c0_953 = arith.constant 0 : index
    %1121 = vector.load %arg3[%c2_951, %c0_952, %c0_953] : memref<9x8x256xf32, #tpu.memory_space<vmem>>, vector<1x8x256xf32>
    %1122 = vector.shape_cast %1121 : vector<1x8x256xf32> to vector<8x256xf32>
    %1123 = arith.mulf %1120, %1122 : vector<8x256xf32>
    %c2_954 = arith.constant 2 : index
    %c0_955 = arith.constant 0 : index
    %c0_956 = arith.constant 0 : index
    %1124 = vector.load %arg11[%c2_954, %c0_955, %c0_956] : memref<9x4x8xf32, #tpu.memory_space<vmem>>, vector<1x4x8xf32>
    %1125 = vector.shape_cast %1124 : vector<1x4x8xf32> to vector<4x8xf32>
    %cst_957 = arith.constant dense<0.000000e+00> : vector<4x256xf32>
    %1126 = tpu.matmul %1125, %1123, %cst_957 {dimension_numbers = #tpu.dot_dimension_numbers<[1], [0], [0], [1], [0, 0, 1, 1], [], []>} : vector<4x8xf32>, vector<8x256xf32>, vector<4x256xf32> -> vector<4x256xf32>
    %1127 = arith.addf %1119, %1126 : vector<4x256xf32>
    %c16_i32_958 = arith.constant 16 : i32
    %1128 = tpu.dynamic_rotate %1103 by %c16_i32_958 dim 1 : vector<8x256xf32>, i32 -> vector<8x256xf32>
    %c3_959 = arith.constant 3 : index
    %c0_960 = arith.constant 0 : index
    %c0_961 = arith.constant 0 : index
    %1129 = vector.load %arg3[%c3_959, %c0_960, %c0_961] : memref<9x8x256xf32, #tpu.memory_space<vmem>>, vector<1x8x256xf32>
    %1130 = vector.shape_cast %1129 : vector<1x8x256xf32> to vector<8x256xf32>
    %1131 = arith.mulf %1128, %1130 : vector<8x256xf32>
    %c3_962 = arith.constant 3 : index
    %c0_963 = arith.constant 0 : index
    %c0_964 = arith.constant 0 : index
    %1132 = vector.load %arg11[%c3_962, %c0_963, %c0_964] : memref<9x4x8xf32, #tpu.memory_space<vmem>>, vector<1x4x8xf32>
    %1133 = vector.shape_cast %1132 : vector<1x4x8xf32> to vector<4x8xf32>
    %cst_965 = arith.constant dense<0.000000e+00> : vector<4x256xf32>
    %1134 = tpu.matmul %1133, %1131, %cst_965 {dimension_numbers = #tpu.dot_dimension_numbers<[1], [0], [0], [1], [0, 0, 1, 1], [], []>} : vector<4x8xf32>, vector<8x256xf32>, vector<4x256xf32> -> vector<4x256xf32>
    %1135 = arith.addf %1127, %1134 : vector<4x256xf32>
    %c4_966 = arith.constant 4 : index
    %c0_967 = arith.constant 0 : index
    %c0_968 = arith.constant 0 : index
    %1136 = vector.load %arg11[%c4_966, %c0_967, %c0_968] : memref<9x4x8xf32, #tpu.memory_space<vmem>>, vector<1x4x8xf32>
    %1137 = vector.shape_cast %1136 : vector<1x4x8xf32> to vector<4x8xf32>
    %cst_969 = arith.constant dense<0.000000e+00> : vector<4x256xf32>
    %1138 = tpu.matmul %1137, %1103, %cst_969 {dimension_numbers = #tpu.dot_dimension_numbers<[1], [0], [0], [1], [0, 0, 1, 1], [], []>} : vector<4x8xf32>, vector<8x256xf32>, vector<4x256xf32> -> vector<4x256xf32>
    %1139 = arith.addf %1135, %1138 : vector<4x256xf32>
    %c240_i32_970 = arith.constant 240 : i32
    %1140 = tpu.dynamic_rotate %1103 by %c240_i32_970 dim 1 : vector<8x256xf32>, i32 -> vector<8x256xf32>
    %c5_971 = arith.constant 5 : index
    %c0_972 = arith.constant 0 : index
    %c0_973 = arith.constant 0 : index
    %1141 = vector.load %arg3[%c5_971, %c0_972, %c0_973] : memref<9x8x256xf32, #tpu.memory_space<vmem>>, vector<1x8x256xf32>
    %1142 = vector.shape_cast %1141 : vector<1x8x256xf32> to vector<8x256xf32>
    %1143 = arith.mulf %1140, %1142 : vector<8x256xf32>
    %c5_974 = arith.constant 5 : index
    %c0_975 = arith.constant 0 : index
    %c0_976 = arith.constant 0 : index
    %1144 = vector.load %arg11[%c5_974, %c0_975, %c0_976] : memref<9x4x8xf32, #tpu.memory_space<vmem>>, vector<1x4x8xf32>
    %1145 = vector.shape_cast %1144 : vector<1x4x8xf32> to vector<4x8xf32>
    %cst_977 = arith.constant dense<0.000000e+00> : vector<4x256xf32>
    %1146 = tpu.matmul %1145, %1143, %cst_977 {dimension_numbers = #tpu.dot_dimension_numbers<[1], [0], [0], [1], [0, 0, 1, 1], [], []>} : vector<4x8xf32>, vector<8x256xf32>, vector<4x256xf32> -> vector<4x256xf32>
    %1147 = arith.addf %1139, %1146 : vector<4x256xf32>
    %c15_i32_978 = arith.constant 15 : i32
    %1148 = tpu.dynamic_rotate %1103 by %c15_i32_978 dim 1 : vector<8x256xf32>, i32 -> vector<8x256xf32>
    %c6_979 = arith.constant 6 : index
    %c0_980 = arith.constant 0 : index
    %c0_981 = arith.constant 0 : index
    %1149 = vector.load %arg3[%c6_979, %c0_980, %c0_981] : memref<9x8x256xf32, #tpu.memory_space<vmem>>, vector<1x8x256xf32>
    %1150 = vector.shape_cast %1149 : vector<1x8x256xf32> to vector<8x256xf32>
    %1151 = arith.mulf %1148, %1150 : vector<8x256xf32>
    %c6_982 = arith.constant 6 : index
    %c0_983 = arith.constant 0 : index
    %c0_984 = arith.constant 0 : index
    %1152 = vector.load %arg11[%c6_982, %c0_983, %c0_984] : memref<9x4x8xf32, #tpu.memory_space<vmem>>, vector<1x4x8xf32>
    %1153 = vector.shape_cast %1152 : vector<1x4x8xf32> to vector<4x8xf32>
    %cst_985 = arith.constant dense<0.000000e+00> : vector<4x256xf32>
    %1154 = tpu.matmul %1153, %1151, %cst_985 {dimension_numbers = #tpu.dot_dimension_numbers<[1], [0], [0], [1], [0, 0, 1, 1], [], []>} : vector<4x8xf32>, vector<8x256xf32>, vector<4x256xf32> -> vector<4x256xf32>
    %1155 = arith.addf %1147, %1154 : vector<4x256xf32>
    %c255_i32_986 = arith.constant 255 : i32
    %1156 = tpu.dynamic_rotate %1103 by %c255_i32_986 dim 1 : vector<8x256xf32>, i32 -> vector<8x256xf32>
    %c7_987 = arith.constant 7 : index
    %c0_988 = arith.constant 0 : index
    %c0_989 = arith.constant 0 : index
    %1157 = vector.load %arg3[%c7_987, %c0_988, %c0_989] : memref<9x8x256xf32, #tpu.memory_space<vmem>>, vector<1x8x256xf32>
    %1158 = vector.shape_cast %1157 : vector<1x8x256xf32> to vector<8x256xf32>
    %1159 = arith.mulf %1156, %1158 : vector<8x256xf32>
    %c7_990 = arith.constant 7 : index
    %c0_991 = arith.constant 0 : index
    %c0_992 = arith.constant 0 : index
    %1160 = vector.load %arg11[%c7_990, %c0_991, %c0_992] : memref<9x4x8xf32, #tpu.memory_space<vmem>>, vector<1x4x8xf32>
    %1161 = vector.shape_cast %1160 : vector<1x4x8xf32> to vector<4x8xf32>
    %cst_993 = arith.constant dense<0.000000e+00> : vector<4x256xf32>
    %1162 = tpu.matmul %1161, %1159, %cst_993 {dimension_numbers = #tpu.dot_dimension_numbers<[1], [0], [0], [1], [0, 0, 1, 1], [], []>} : vector<4x8xf32>, vector<8x256xf32>, vector<4x256xf32> -> vector<4x256xf32>
    %1163 = arith.addf %1155, %1162 : vector<4x256xf32>
    %c239_i32_994 = arith.constant 239 : i32
    %1164 = tpu.dynamic_rotate %1103 by %c239_i32_994 dim 1 : vector<8x256xf32>, i32 -> vector<8x256xf32>
    %c8_995 = arith.constant 8 : index
    %c0_996 = arith.constant 0 : index
    %c0_997 = arith.constant 0 : index
    %1165 = vector.load %arg3[%c8_995, %c0_996, %c0_997] : memref<9x8x256xf32, #tpu.memory_space<vmem>>, vector<1x8x256xf32>
    %1166 = vector.shape_cast %1165 : vector<1x8x256xf32> to vector<8x256xf32>
    %1167 = arith.mulf %1164, %1166 : vector<8x256xf32>
    %c8_998 = arith.constant 8 : index
    %c0_999 = arith.constant 0 : index
    %c0_1000 = arith.constant 0 : index
    %1168 = vector.load %arg11[%c8_998, %c0_999, %c0_1000] : memref<9x4x8xf32, #tpu.memory_space<vmem>>, vector<1x4x8xf32>
    %1169 = vector.shape_cast %1168 : vector<1x4x8xf32> to vector<4x8xf32>
    %cst_1001 = arith.constant dense<0.000000e+00> : vector<4x256xf32>
    %1170 = tpu.matmul %1169, %1167, %cst_1001 {dimension_numbers = #tpu.dot_dimension_numbers<[1], [0], [0], [1], [0, 0, 1, 1], [], []>} : vector<4x8xf32>, vector<8x256xf32>, vector<4x256xf32> -> vector<4x256xf32>
    %1171 = arith.addf %1163, %1170 : vector<4x256xf32>
    %1172 = arith.subf %963, %1171 : vector<4x256xf32>
    %c0_1002 = arith.constant 0 : index
    %c0_1003 = arith.constant 0 : index
    %c0_1004 = arith.constant 0 : index
    %1173 = vector.load %arg13[%c0_1002, %c0_1003, %c0_1004] : memref<1x4x256xf32, #tpu.memory_space<vmem>>, vector<1x4x256xf32>
    %1174 = vector.shape_cast %1173 : vector<1x4x256xf32> to vector<4x256xf32>
    %1175 = vector.shape_cast %1172 : vector<4x256xf32> to vector<1x4x256xf32>
    tpu.vector_store %arg13[%c0_1002, %c0_1003, %c0_1004], %1175 {strides = array<i32>} : memref<1x4x256xf32, #tpu.memory_space<vmem>>, vector<1x4x256xf32>,
    return
  }
  func.func @transform_0(%arg0: i32) -> i32 {
    %c0_i32 = arith.constant 0 : i32
    %c0_i32_0 = arith.constant 0 : i32
    return %c0_i32 : i32
  }
  func.func @transform_1(%arg0: i32) -> (i32, i32, i32) {
    %c0_i32 = arith.constant 0 : i32
    %c0_i32_0 = arith.constant 0 : i32
    %c0_i32_1 = arith.constant 0 : i32
    %c0_i32_2 = arith.constant 0 : i32
    return %c0_i32, %c0_i32_0, %c0_i32_1 : i32, i32, i32
  }
  func.func @transform_2(%arg0: i32) -> (i32, i32, i32) {
    %c0_i32 = arith.constant 0 : i32
    %c0_i32_0 = arith.constant 0 : i32
    %c0_i32_1 = arith.constant 0 : i32
    %c0_i32_2 = arith.constant 0 : i32
    return %c0_i32, %c0_i32_0, %c0_i32_1 : i32, i32, i32
  }
  func.func @transform_3(%arg0: i32) -> (i32, i32, i32) {
    %c0_i32 = arith.constant 0 : i32
    %c0_i32_0 = arith.constant 0 : i32
    %c0_i32_1 = arith.constant 0 : i32
    return %arg0, %c0_i32, %c0_i32_0 : i32, i32, i32
  }
  func.func @transform_4(%arg0: i32) -> (i32, i32, i32) {
    %c0_i32 = arith.constant 0 : i32
    %c0_i32_0 = arith.constant 0 : i32
    %c0_i32_1 = arith.constant 0 : i32
    return %arg0, %c0_i32, %c0_i32_0 : i32, i32, i32
  }
  func.func @transform_5(%arg0: i32) -> (i32, i32, i32) {
    %c0_i32 = arith.constant 0 : i32
    %c0_i32_0 = arith.constant 0 : i32
    %c0_i32_1 = arith.constant 0 : i32
    %c0_i32_2 = arith.constant 0 : i32
    return %c0_i32, %c0_i32_0, %c0_i32_1 : i32, i32, i32
  }
  func.func @transform_6(%arg0: i32) -> (i32, i32, i32) {
    %c0_i32 = arith.constant 0 : i32
    %c0_i32_0 = arith.constant 0 : i32
    %c0_i32_1 = arith.constant 0 : i32
    %c0_i32_2 = arith.constant 0 : i32
    return %c0_i32, %c0_i32_0, %c0_i32_1 : i32, i32, i32
  }
  func.func @transform_7(%arg0: i32) -> (i32, i32) {
    %c0_i32 = arith.constant 0 : i32
    %c0_i32_0 = arith.constant 0 : i32
    %c0_i32_1 = arith.constant 0 : i32
    return %c0_i32, %c0_i32_0 : i32, i32
  }
  func.func @transform_8(%arg0: i32) -> (i32, i32, i32) {
    %c0_i32 = arith.constant 0 : i32
    %c0_i32_0 = arith.constant 0 : i32
    %c0_i32_1 = arith.constant 0 : i32
    %c0_i32_2 = arith.constant 0 : i32
    return %c0_i32, %c0_i32_0, %c0_i32_1 : i32, i32, i32
  }
  func.func @transform_9(%arg0: i32) -> (i32, i32) {
    %c0_i32 = arith.constant 0 : i32
    %c0_i32_0 = arith.constant 0 : i32
    %c0_i32_1 = arith.constant 0 : i32
    return %c0_i32, %c0_i32_0 : i32, i32
  }
  func.func @transform_10(%arg0: i32) -> (i32, i32, i32) {
    %c0_i32 = arith.constant 0 : i32
    %c0_i32_0 = arith.constant 0 : i32
    %c0_i32_1 = arith.constant 0 : i32
    %c0_i32_2 = arith.constant 0 : i32
    return %c0_i32, %c0_i32_0, %c0_i32_1 : i32, i32, i32
  }
  func.func @transform_11(%arg0: i32) -> (i32, i32) {
    %c0_i32 = arith.constant 0 : i32
    %c0_i32_0 = arith.constant 0 : i32
    %c0_i32_1 = arith.constant 0 : i32
    return %c0_i32, %c0_i32_0 : i32, i32
  }
  func.func @transform_12(%arg0: i32) -> (i32, i32, i32) {
    %c0_i32 = arith.constant 0 : i32
    %c0_i32_0 = arith.constant 0 : i32
    %c0_i32_1 = arith.constant 0 : i32
    return %arg0, %c0_i32, %c0_i32_0 : i32, i32, i32
  }
}

</mosaic_0001>

<llo_original>
// kernel: seis_proxgd_forward.1
$region0: #{seis_proxgd_forward.1}
  #allocation0 [shape = 'u32[]', space=smem, size = 0x4, offset = 0x4, fixed_abs, tag = 'smem constant byte address 0x4 - core index']
  #allocation1 [shape = 'u32[72,128]{1,0:T(1,128)}', space=vmem, size = 0x9000, scoped, tag = 'internal scratch']
  #allocation2 [shape = 'f32[1]{0:T(128)S(6)}', space=smem, size = 0x200, scoped, tag = 'scoped memory for seis_proxgd_forward.1']
  %s0 = inlined_call_operand.<no memory space> [shape: f32[1], index: 0, kind: input, shape index: {}]
  %s1 = inlined_call_operand.vmem [shape: f32[31,4,256], index: 1, kind: input, shape index: {}]
  %s2 = inlined_call_operand.vmem [shape: f32[9,8,256], index: 2, kind: input, shape index: {}]
  %s3 = inlined_call_operand.vmem [shape: f32[2,4,256], index: 3, kind: input, shape index: {}]
  %s4 = inlined_call_operand.vmem [shape: f32[2,4,256], index: 4, kind: input, shape index: {}]
  %s5 = inlined_call_operand.vmem [shape: f32[9,8,4], index: 5, kind: input, shape index: {}]
  %s6 = inlined_call_operand.vmem [shape: f32[9,8,4], index: 6, kind: input, shape index: {}]
  %s7 = inlined_call_operand.vmem [shape: f32[8,1], index: 7, kind: input, shape index: {}]
  %s8 = inlined_call_operand.vmem [shape: f32[9,8,8], index: 8, kind: input, shape index: {}]
  %s9 = inlined_call_operand.vmem [shape: f32[8,1], index: 9, kind: input, shape index: {}]
  %s10 = inlined_call_operand.vmem [shape: f32[9,4,8], index: 10, kind: input, shape index: {}]
  %s11 = inlined_call_operand.vmem [shape: f32[4,1], index: 11, kind: input, shape index: {}]
  %s12 = inlined_call_operand.vmem [shape: f32[2,4,256], index: 12, kind: output, shape index: {}]
  %s13 = sld [smem:[#allocation0]]
  $region81: #{seis_proxgd_forward.1} parent=0
    _
  %s15 = ssub.s32 1, %s13
  %s16 = scalar_select 0, %s15, %s13
  %17 = sst [smem:[#allocation2]] %s0
  loop: start=0, step=1, limit=4
  $region2: #{seis_proxgd_forward.1} parent=0 // loop_pre_header
    _
  $region3: #{seis_proxgd_forward.1} parent=0 // loop_header
    %s19 = sphi 0, %s23
    %p20 = scmp.ge.s32.totalorder %s19, 4
    %s27 = sphi 0, %s27
    %s29 = sphi 0, %s27
    %s30 = sphi 0, %s29
    %s44 = sphi 0, %s30
    %s48 = sphi 0, %s48
    %s50 = sphi 0, %s48
    %s51 = sphi 0, %s50
    %s65 = sphi 0, %s51
    %s69 = sphi 0, %s69
    %s71 = sphi 0, %s69
    %s72 = sphi 0, %s71
    %s86 = sphi 0, %s72
    %s92 = sphi 0, %s94
    %s95 = sphi 0, %s92
    %s96 = sphi 0, %s95
    %s112 = sphi 0, %s96
    %s118 = sphi 0, %s120
    %s121 = sphi 0, %s118
    %s122 = sphi 0, %s121
    %s138 = sphi 0, %s122
    %s142 = sphi 0, %s142
    %s144 = sphi 0, %s142
    %s145 = sphi 0, %s144
    %s159 = sphi 0, %s145
    %s163 = sphi 0, %s163
    %s165 = sphi 0, %s163
    %s166 = sphi 0, %s165
    %s180 = sphi 0, %s166
    %s184 = sphi 0, %s184
    %s186 = sphi 0, %s184
    %s187 = sphi 0, %s186
    %s201 = sphi 0, %s187
    %s205 = sphi 0, %s205
    %s207 = sphi 0, %s205
    %s208 = sphi 0, %s207
    %s222 = sphi 0, %s208
    %s226 = sphi 0, %s226
    %s228 = sphi 0, %s226
    %s229 = sphi 0, %s228
    %s243 = sphi 0, %s229
    %s247 = sphi 0, %s247
    %s249 = sphi 0, %s247
    %s250 = sphi 0, %s249
    %s264 = sphi 0, %s250
    %s268 = sphi 0, %s268
    %s270 = sphi 0, %s268
    %s271 = sphi 0, %s270
    %s285 = sphi 0, %s271
    %s291 = sphi 0, %s293
    %s294 = sphi 0, %s291
    %s295 = sphi 0, %s294
    %s311 = sphi 0, %s295
  $region4: #{seis_proxgd_forward.1} parent=0 // loop_header_branch
    %22 = sbr.rel (%p20) target = $region8
  $region5: #{seis_proxgd_forward.1} parent=0 // loop_body
    %s24 = ssub.s32 %s19, 1
    %s25 = ssub.s32 %s19, 2
    %s26 = sadd.s32 %s19, 1
    %s28 = sadd.s32 %s27, 1
    %p31 = scmp.eq.s32.totalorder %s19, 1
    %p32 = scmp.ne.s32.totalorder %s27, %s29
    %p33 = scmp.eq.s32.totalorder %s19, 0
    %p34 = por %p32, %p33
    %p35 = scmp.ne.s32.totalorder %s27, %s29
    %p36 = scmp.eq.s32.totalorder %s24, 1
    %p37 = por %p35, %p36
    %p38 = scmp.ne.s32.totalorder %s29, %s30
    %p39 = scmp.eq.s32.totalorder %s24, 0
    %p40 = por %p38, %p39
    %p41 = scmp.ne.s32.totalorder %s29, %s30
    %p42 = scmp.eq.s32.totalorder %s25, 1
    %p43 = por %p41, %p42
    %p45 = scmp.ne.s32.totalorder %s30, %s44
    %p46 = scmp.eq.s32.totalorder %s25, 0
    %p47 = por %p45, %p46
    %s49 = sadd.s32 %s48, 1
    %p52 = scmp.eq.s32.totalorder %s19, 1
    %p53 = scmp.ne.s32.totalorder %s48, %s50
    %p54 = scmp.eq.s32.totalorder %s19, 0
    %p55 = por %p53, %p54
    %p56 = scmp.ne.s32.totalorder %s48, %s50
    %p57 = scmp.eq.s32.totalorder %s24, 1
    %p58 = por %p56, %p57
    %p59 = scmp.ne.s32.totalorder %s50, %s51
    %p60 = scmp.eq.s32.totalorder %s24, 0
    %p61 = por %p59, %p60
    %p62 = scmp.ne.s32.totalorder %s50, %s51
    %p63 = scmp.eq.s32.totalorder %s25, 1
    %p64 = por %p62, %p63
    %p66 = scmp.ne.s32.totalorder %s51, %s65
    %p67 = scmp.eq.s32.totalorder %s25, 0
    %p68 = por %p66, %p67
    %s70 = sadd.s32 %s69, 1
    %p73 = scmp.eq.s32.totalorder %s19, 1
    %p74 = scmp.ne.s32.totalorder %s69, %s71
    %p75 = scmp.eq.s32.totalorder %s19, 0
    %p76 = por %p74, %p75
    %p77 = scmp.ne.s32.totalorder %s69, %s71
    %p78 = scmp.eq.s32.totalorder %s24, 1
    %p79 = por %p77, %p78
    %p80 = scmp.ne.s32.totalorder %s71, %s72
    %p81 = scmp.eq.s32.totalorder %s24, 0
    %p82 = por %p80, %p81
    %p83 = scmp.ne.s32.totalorder %s71, %s72
    %p84 = scmp.eq.s32.totalorder %s25, 1
    %p85 = por %p83, %p84
    %p87 = scmp.ne.s32.totalorder %s72, %s86
    %p88 = scmp.eq.s32.totalorder %s25, 0
    %p89 = por %p87, %p88
    %s90 = ssub.s32 %s19, %s26
    %p91 = scmp.eq.s32.totalorder %s90, 0
    %s93 = sadd.s32 %s92, 1
    %s94 = scalar_select %p91, %s92, %s93
    %p97 = pneg %p91
    %p98 = scmp.eq.s32.totalorder %s19, 1
    %p99 = por %p97, %p98
    %p100 = scmp.ne.s32.totalorder %s92, %s95
    %p101 = scmp.eq.s32.totalorder %s19, 0
    %p102 = por %p100, %p101
    %p103 = scmp.ne.s32.totalorder %s92, %s95
    %p104 = scmp.eq.s32.totalorder %s24, 1
    %p105 = por %p103, %p104
    %p106 = scmp.ne.s32.totalorder %s95, %s96
    %p107 = scmp.eq.s32.totalorder %s24, 0
    %p108 = por %p106, %p107
    %p109 = scmp.ne.s32.totalorder %s95, %s96
    %p110 = scmp.eq.s32.totalorder %s25, 1
    %p111 = por %p109, %p110
    %p113 = scmp.ne.s32.totalorder %s96, %s112
    %p114 = scmp.eq.s32.totalorder %s25, 0
    %p115 = por %p113, %p114
    %s116 = ssub.s32 %s19, %s26
    %p117 = scmp.eq.s32.totalorder %s116, 0
    %s119 = sadd.s32 %s118, 1
    %s120 = scalar_select %p117, %s118, %s119
    %p123 = pneg %p117
    %p124 = scmp.eq.s32.totalorder %s19, 1
    %p125 = por %p123, %p124
    %p126 = scmp.ne.s32.totalorder %s118, %s121
    %p127 = scmp.eq.s32.totalorder %s19, 0
    %p128 = por %p126, %p127
    %p129 = scmp.ne.s32.totalorder %s118, %s121
    %p130 = scmp.eq.s32.totalorder %s24, 1
    %p131 = por %p129, %p130
    %p132 = scmp.ne.s32.totalorder %s121, %s122
    %p133 = scmp.eq.s32.totalorder %s24, 0
    %p134 = por %p132, %p133
    %p135 = scmp.ne.s32.totalorder %s121, %s122
    %p136 = scmp.eq.s32.totalorder %s25, 1
    %p137 = por %p135, %p136
    %p139 = scmp.ne.s32.totalorder %s122, %s138
    %p140 = scmp.eq.s32.totalorder %s25, 0
    %p141 = por %p139, %p140
    %s143 = sadd.s32 %s142, 1
    %p146 = scmp.eq.s32.totalorder %s19, 1
    %p147 = scmp.ne.s32.totalorder %s142, %s144
    %p148 = scmp.eq.s32.totalorder %s19, 0
    %p149 = por %p147, %p148
    %p150 = scmp.ne.s32.totalorder %s142, %s144
    %p151 = scmp.eq.s32.totalorder %s24, 1
    %p152 = por %p150, %p151
    %p153 = scmp.ne.s32.totalorder %s144, %s145
    %p154 = scmp.eq.s32.totalorder %s24, 0
    %p155 = por %p153, %p154
    %p156 = scmp.ne.s32.totalorder %s144, %s145
    %p157 = scmp.eq.s32.totalorder %s25, 1
    %p158 = por %p156, %p157
    %p160 = scmp.ne.s32.totalorder %s145, %s159
    %p161 = scmp.eq.s32.totalorder %s25, 0
    %p162 = por %p160, %p161
    %s164 = sadd.s32 %s163, 1
    %p167 = scmp.eq.s32.totalorder %s19, 1
    %p168 = scmp.ne.s32.totalorder %s163, %s165
    %p169 = scmp.eq.s32.totalorder %s19, 0
    %p170 = por %p168, %p169
    %p171 = scmp.ne.s32.totalorder %s163, %s165
    %p172 = scmp.eq.s32.totalorder %s24, 1
    %p173 = por %p171, %p172
    %p174 = scmp.ne.s32.totalorder %s165, %s166
    %p175 = scmp.eq.s32.totalorder %s24, 0
    %p176 = por %p174, %p175
    %p177 = scmp.ne.s32.totalorder %s165, %s166
    %p178 = scmp.eq.s32.totalorder %s25, 1
    %p179 = por %p177, %p178
    %p181 = scmp.ne.s32.totalorder %s166, %s180
    %p182 = scmp.eq.s32.totalorder %s25, 0
    %p183 = por %p181, %p182
    %s185 = sadd.s32 %s184, 1
    %p188 = scmp.eq.s32.totalorder %s19, 1
    %p189 = scmp.ne.s32.totalorder %s184, %s186
    %p190 = scmp.eq.s32.totalorder %s19, 0
    %p191 = por %p189, %p190
    %p192 = scmp.ne.s32.totalorder %s184, %s186
    %p193 = scmp.eq.s32.totalorder %s24, 1
    %p194 = por %p192, %p193
    %p195 = scmp.ne.s32.totalorder %s186, %s187
    %p196 = scmp.eq.s32.totalorder %s24, 0
    %p197 = por %p195, %p196
    %p198 = scmp.ne.s32.totalorder %s186, %s187
    %p199 = scmp.eq.s32.totalorder %s25, 1
    %p200 = por %p198, %p199
    %p202 = scmp.ne.s32.totalorder %s187, %s201
    %p203 = scmp.eq.s32.totalorder %s25, 0
    %p204 = por %p202, %p203
    %s206 = sadd.s32 %s205, 1
    %p209 = scmp.eq.s32.totalorder %s19, 1
    %p210 = scmp.ne.s32.totalorder %s205, %s207
    %p211 = scmp.eq.s32.totalorder %s19, 0
    %p212 = por %p210, %p211
    %p213 = scmp.ne.s32.totalorder %s205, %s207
    %p214 = scmp.eq.s32.totalorder %s24, 1
    %p215 = por %p213, %p214
    %p216 = scmp.ne.s32.totalorder %s207, %s208
    %p217 = scmp.eq.s32.totalorder %s24, 0
    %p218 = por %p216, %p217
    %p219 = scmp.ne.s32.totalorder %s207, %s208
    %p220 = scmp.eq.s32.totalorder %s25, 1
    %p221 = por %p219, %p220
    %p223 = scmp.ne.s32.totalorder %s208, %s222
    %p224 = scmp.eq.s32.totalorder %s25, 0
    %p225 = por %p223, %p224
    %s227 = sadd.s32 %s226, 1
    %p230 = scmp.eq.s32.totalorder %s19, 1
    %p231 = scmp.ne.s32.totalorder %s226, %s228
    %p232 = scmp.eq.s32.totalorder %s19, 0
    %p233 = por %p231, %p232
    %p234 = scmp.ne.s32.totalorder %s226, %s228
    %p235 = scmp.eq.s32.totalorder %s24, 1
    %p236 = por %p234, %p235
    %p237 = scmp.ne.s32.totalorder %s228, %s229
    %p238 = scmp.eq.s32.totalorder %s24, 0
    %p239 = por %p237, %p238
    %p240 = scmp.ne.s32.totalorder %s228, %s229
    %p241 = scmp.eq.s32.totalorder %s25, 1
    %p242 = por %p240, %p241
    %p244 = scmp.ne.s32.totalorder %s229, %s243
    %p245 = scmp.eq.s32.totalorder %s25, 0
    %p246 = por %p244, %p245
    %s248 = sadd.s32 %s247, 1
    %p251 = scmp.eq.s32.totalorder %s19, 1
    %p252 = scmp.ne.s32.totalorder %s247, %s249
    %p253 = scmp.eq.s32.totalorder %s19, 0
    %p254 = por %p252, %p253
    %p255 = scmp.ne.s32.totalorder %s247, %s249
    %p256 = scmp.eq.s32.totalorder %s24, 1
    %p257 = por %p255, %p256
    %p258 = scmp.ne.s32.totalorder %s249, %s250
    %p259 = scmp.eq.s32.totalorder %s24, 0
    %p260 = por %p258, %p259
    %p261 = scmp.ne.s32.totalorder %s249, %s250
    %p262 = scmp.eq.s32.totalorder %s25, 1
    %p263 = por %p261, %p262
    %p265 = scmp.ne.s32.totalorder %s250, %s264
    %p266 = scmp.eq.s32.totalorder %s25, 0
    %p267 = por %p265, %p266
    %s269 = sadd.s32 %s268, 1
    %p272 = scmp.eq.s32.totalorder %s19, 1
    %p273 = scmp.ne.s32.totalorder %s268, %s270
    %p274 = scmp.eq.s32.totalorder %s19, 0
    %p275 = por %p273, %p274
    %p276 = scmp.ne.s32.totalorder %s268, %s270
    %p277 = scmp.eq.s32.totalorder %s24, 1
    %p278 = por %p276, %p277
    %p279 = scmp.ne.s32.totalorder %s270, %s271
    %p280 = scmp.eq.s32.totalorder %s24, 0
    %p281 = por %p279, %p280
    %p282 = scmp.ne.s32.totalorder %s270, %s271
    %p283 = scmp.eq.s32.totalorder %s25, 1
    %p284 = por %p282, %p283
    %p286 = scmp.ne.s32.totalorder %s271, %s285
    %p287 = scmp.eq.s32.totalorder %s25, 0
    %p288 = por %p286, %p287
    %s289 = ssub.s32 %s19, %s26
    %p290 = scmp.eq.s32.totalorder %s289, 0
    %s292 = sadd.s32 %s291, 1
    %s293 = scalar_select %p290, %s291, %s292
    %p296 = pneg %p290
    %p297 = scmp.eq.s32.totalorder %s19, 1
    %p298 = por %p296, %p297
    %p299 = scmp.ne.s32.totalorder %s291, %s294
    %p300 = scmp.eq.s32.totalorder %s19, 0
    %p301 = por %p299, %p300
    %p302 = scmp.ne.s32.totalorder %s291, %s294
    %p303 = scmp.eq.s32.totalorder %s24, 1
    %p304 = por %p302, %p303
    %p305 = scmp.ne.s32.totalorder %s294, %s295
    %p306 = scmp.eq.s32.totalorder %s24, 0
    %p307 = por %p305, %p306
    %p308 = scmp.ne.s32.totalorder %s294, %s295
    %p309 = scmp.eq.s32.totalorder %s25, 1
    %p310 = por %p308, %p309
    %p312 = scmp.ne.s32.totalorder %s295, %s311
    %p313 = scmp.eq.s32.totalorder %s25, 0
    %p314 = por %p312, %p313
    %p315 = scmp.le.s32.totalorder 1, %s19
    %p316 = scmp.lt.s32.totalorder %s19, 3
    %p317 = pnand %p315, %p316
    %p318 = pneg %p317
    // Predicated region
    $region9: #{seis_proxgd_forward.1} parent=5 // pred_check
      _
    $region10: #{seis_proxgd_forward.1} parent=5 // pred_check_branch
      %320 = sbr.rel (%p317) target = $region12
    $region11: #{seis_proxgd_forward.1} parent=5 // pred_region
      %s321 = ssub.s32 %s19, 1
      // Predicated region
      $region13: #{seis_proxgd_forward.1} parent=11 // pred_check
        %p322 = pneg %p40
      $region14: #{seis_proxgd_forward.1} parent=11 // pred_check_branch
        %324 = sbr.rel (%p322) target = $region16
      $region15: #{seis_proxgd_forward.1} parent=11 // pred_region
        _
      $region16: #{seis_proxgd_forward.1} parent=11 // pred_fallthru
        _
      // Predicated region
      $region17: #{seis_proxgd_forward.1} parent=11 // pred_check
        %p325 = pneg %p61
      $region18: #{seis_proxgd_forward.1} parent=11 // pred_check_branch
        %327 = sbr.rel (%p325) target = $region20
      $region19: #{seis_proxgd_forward.1} parent=11 // pred_region
        _
      $region20: #{seis_proxgd_forward.1} parent=11 // pred_fallthru
        _
      // Predicated region
      $region21: #{seis_proxgd_forward.1} parent=11 // pred_check
        %p328 = pneg %p82
      $region22: #{seis_proxgd_forward.1} parent=11 // pred_check_branch
        %330 = sbr.rel (%p328) target = $region24
      $region23: #{seis_proxgd_forward.1} parent=11 // pred_region
        _
      $region24: #{seis_proxgd_forward.1} parent=11 // pred_fallthru
        _
      // Predicated region
      $region25: #{seis_proxgd_forward.1} parent=11 // pred_check
        %p331 = pneg %p155
      $region26: #{seis_proxgd_forward.1} parent=11 // pred_check_branch
        %333 = sbr.rel (%p331) target = $region28
      $region27: #{seis_proxgd_forward.1} parent=11 // pred_region
        _
      $region28: #{seis_proxgd_forward.1} parent=11 // pred_fallthru
        _
      // Predicated region
      $region29: #{seis_proxgd_forward.1} parent=11 // pred_check
        %p334 = pneg %p176
      $region30: #{seis_proxgd_forward.1} parent=11 // pred_check_branch
        %336 = sbr.rel (%p334) target = $region32
      $region31: #{seis_proxgd_forward.1} parent=11 // pred_region
        _
      $region32: #{seis_proxgd_forward.1} parent=11 // pred_fallthru
        _
      // Predicated region
      $region33: #{seis_proxgd_forward.1} parent=11 // pred_check
        %p337 = pneg %p197
      $region34: #{seis_proxgd_forward.1} parent=11 // pred_check_branch
        %339 = sbr.rel (%p337) target = $region36
      $region35: #{seis_proxgd_forward.1} parent=11 // pred_region
        _
      $region36: #{seis_proxgd_forward.1} parent=11 // pred_fallthru
        _
      // Predicated region
      $region37: #{seis_proxgd_forward.1} parent=11 // pred_check
        %p340 = pneg %p218
      $region38: #{seis_proxgd_forward.1} parent=11 // pred_check_branch
        %342 = sbr.rel (%p340) target = $region40
      $region39: #{seis_proxgd_forward.1} parent=11 // pred_region
        _
      $region40: #{seis_proxgd_forward.1} parent=11 // pred_fallthru
        _
      // Predicated region
      $region41: #{seis_proxgd_forward.1} parent=11 // pred_check
        %p343 = pneg %p239
      $region42: #{seis_proxgd_forward.1} parent=11 // pred_check_branch
        %345 = sbr.rel (%p343) target = $region44
      $region43: #{seis_proxgd_forward.1} parent=11 // pred_region
        _
      $region44: #{seis_proxgd_forward.1} parent=11 // pred_fallthru
        _
      // Predicated region
      $region45: #{seis_proxgd_forward.1} parent=11 // pred_check
        %p346 = pneg %p260
      $region46: #{seis_proxgd_forward.1} parent=11 // pred_check_branch
        %348 = sbr.rel (%p346) target = $region48
      $region47: #{seis_proxgd_forward.1} parent=11 // pred_region
        _
      $region48: #{seis_proxgd_forward.1} parent=11 // pred_fallthru
        _
      // Predicated region
      $region49: #{seis_proxgd_forward.1} parent=11 // pred_check
        %p349 = pneg %p281
      $region50: #{seis_proxgd_forward.1} parent=11 // pred_check_branch
        %351 = sbr.rel (%p349) target = $region52
      $region51: #{seis_proxgd_forward.1} parent=11 // pred_region
        _
      $region52: #{seis_proxgd_forward.1} parent=11 // pred_fallthru
        _
    $region12: #{seis_proxgd_forward.1} parent=5 // pred_fallthru
      _
    %p352 = scmp.lt.s32.totalorder %s19, 2
    // Predicated region
    $region53: #{seis_proxgd_forward.1} parent=5 // pred_check
      %p353 = pneg %p352
    $region54: #{seis_proxgd_forward.1} parent=5 // pred_check_branch
      %355 = sbr.rel (%p353) target = $region56
    $region55: #{seis_proxgd_forward.1} parent=5 // pred_region
      // Predicated region
      $region57: #{seis_proxgd_forward.1} parent=55 // pred_check
        %p356 = pneg %p102
      $region58: #{seis_proxgd_forward.1} parent=55 // pred_check_branch
        %358 = sbr.rel (%p356) target = $region60
      $region59: #{seis_proxgd_forward.1} parent=55 // pred_region
        %p359 = scmp.lt.s32.totalorder %s19, 1
        %s360 = scalar_select %p359, %s19, 1
        %s361 = smul.addr %s360, 2
        %s362 = smul.addr %s361, 4
        %s363 = scalar_lea.vmem %s3, %s362
      $region60: #{seis_proxgd_forward.1} parent=55 // pred_fallthru
        _
      // Predicated region
      $region61: #{seis_proxgd_forward.1} parent=55 // pred_check
        %p364 = pneg %p128
      $region62: #{seis_proxgd_forward.1} parent=55 // pred_check_branch
        %366 = sbr.rel (%p364) target = $region64
      $region63: #{seis_proxgd_forward.1} parent=55 // pred_region
        %p367 = scmp.lt.s32.totalorder %s19, 1
        %s368 = scalar_select %p367, %s19, 1
        %s369 = smul.addr %s368, 2
        %s370 = smul.addr %s369, 4
        %s371 = scalar_lea.vmem %s4, %s370
      $region64: #{seis_proxgd_forward.1} parent=55 // pred_fallthru
        _
    $region56: #{seis_proxgd_forward.1} parent=5 // pred_fallthru
      _
    %p372 = scmp.le.s32.totalorder 1, %s19
    %p373 = scmp.lt.s32.totalorder %s19, 3
    %p374 = pnand %p372, %p373
    %p375 = pneg %p374
    // Predicated region
    $region65: #{seis_proxgd_forward.1} parent=5 // pred_check
      _
    $region66: #{seis_proxgd_forward.1} parent=5 // pred_check_branch
      %377 = sbr.rel (%p374) target = $region68
    $region67: #{seis_proxgd_forward.1} parent=5 // pred_region
      %s378 = ssub.s32 %s19, 1
      %p379 = pneg %p40
      %p380 = pneg %p37
      %p381 = pneg %p61
      %p382 = pneg %p58
      %p383 = pneg %p82
      %p384 = pneg %p79
      %p385 = scmp.lt.s32.totalorder %s24, 1
      %s386 = scalar_select %p385, %s24, 1
      %s387 = smul.addr %s386, 2
      %s388 = smul.addr %s387, 4
      %s389 = scalar_lea.vmem %s3, %s388
      %p390 = pneg %p108
      %p391 = pneg %p105
      %p392 = scmp.lt.s32.totalorder %s24, 1
      %s393 = scalar_select %p392, %s24, 1
      %s394 = smul.addr %s393, 2
      %s395 = smul.addr %s394, 4
      %s396 = scalar_lea.vmem %s4, %s395
      %p397 = pneg %p134
      %p398 = pneg %p131
      %p399 = pneg %p155
      %p400 = pneg %p152
      %p401 = pneg %p176
      %p402 = pneg %p173
      %p403 = pneg %p197
      %p404 = pneg %p194
      %p405 = pneg %p218
      %p406 = pneg %p215
      %p407 = pneg %p239
      %p408 = pneg %p236
      %p409 = pneg %p260
      %p410 = pneg %p257
      %p411 = pneg %p281
      %p412 = pneg %p278
      %p413 = pneg %p307
      %p414 = pneg %p304
      %p415 = scmp.lt.s32.totalorder %s24, 1
      %s416 = scalar_select %p415, %s24, 1
      %s417 = smul.addr %s416, 2
      %s418 = smul.addr %s417, 4
      %s419 = scalar_lea.vmem %s12, %s418
      %p420 = scmp.lt.s32.totalorder %s24, 1
      %s421 = scalar_select %p420, %s24, 1
      %s422 = smul.addr %s421, 2
      %s423 = smul.addr %s422, 4
      %s424 = scalar_lea.vmem %s3, %s423
      %p425 = scmp.lt.s32.totalorder %s24, 1
      %s426 = scalar_select %p425, %s24, 1
      %s427 = smul.addr %s426, 2
      %s428 = smul.addr %s427, 4
      %s429 = scalar_lea.vmem %s4, %s428
      %p430 = scmp.lt.s32.totalorder %s24, 1
      %s431 = scalar_select %p430, %s24, 1
      %s432 = smul.addr %s431, 2
      %s433 = smul.addr %s432, 4
      %s434 = scalar_lea.vmem %s12, %s433
      %s435 = sld [smem:[#allocation2]]
      %v436 = vld [vmem:[%s424] sm:$0xff]
      %v437 = vstv %s435
      %v438 = vmul.f32 %v437, %v436
      %v439 = vld [vmem:[%s7] sm:$0xff]
      %441 = vset.pattern.permute.xlu0 0
      %442 = vperm.xlu0 %441, %v439
      %v443 = vpop.permute.xlu0 %442
      %v445 = vld [vmem:[%s9] sm:$0xff]
      %447 = vset.pattern.permute.xlu0 0
      %448 = vperm.xlu0 %447, %v445
      %v449 = vpop.permute.xlu0 %448
      %v451 = vld [vmem:[%s11] sm:$0xf]
      %453 = vset.pattern.permute.xlu0 0
      %454 = vperm.xlu0 %453, %v451
      %v455 = vpop.permute.xlu0 %454
      %458 = vst [vmem:[#allocation1] ss:$2 sm:$0xff] %v436
      %v459 = vld.sshfl [vmem:[#allocation1] sm:$0xff pattern:$0x75316420]
      %v460 = vld.sshfl [vmem:[#allocation1 + $0x8] sm:$0xff pattern:$0x75316420]
      %463 = vrot.lane.b32.xlu0 %v459, 17
      %v464 = vpop.permute.xlu0 %463
      %465 = vrot.lane.b32.xlu0 %v460, 17
      %v466 = vpop.permute.xlu0 %465
      %v467 = vlaneseq
      %v468 = vand.u32 %v467, 127
      %vm469 = vcmp.lt.s32.totalorder %v468, 17
      %v470 = vsel %vm469, %v464, %v466
      %v471 = vsel %vm469, %v466, %v464
      %v472 = vld [vmem:[%s2] sm:$0xf]
      %v473 = vld [vmem:[%s2 + $0x8] sm:$0xf]
      %v474 = vmul.f32 %v471, %v472
      %v475 = vmul.f32 %v470, %v473
      %v476 = vld [vmem:[%s6] sm:$0xff]
      %vm477 = vcmask 31744
      %v479 = vsel %vm477, %v476, 0
      %vm481 = vcmask 1043456
      %v483 = vsel %vm481, %v474, 0
      %v486 = vsel %vm481, %v475, 0
      %488 = vmatpush.msra.mxu0 0.0
      %489 = vmatpush.msra.mxu0 0.0
      %490 = vmatpush.msra.mxu0 0.0
      %491 = vmatpush.msra.mxu0 0.0
      %492 = vmatpush.msra.mxu0 0.0
      %493 = vmatpush.msra.mxu0 0.0
      %494 = vmatpush.msra.mxu0 0.0
      %495 = vmatpush.msra.mxu0 0.0
      %496 = vmatpush.msra.mxu0 0.0
      %497 = vmatpush.msra.mxu0 0.0
      %498 = vmatpush.msra.mxu0 0.0
      %499 = vmatpush.msra.mxu0 0.0
      %500 = vmatpush.msra.mxu0 0.0
      %501 = vmatpush.msra.mxu0 0.0
      %502 = vmatpush.msra.mxu0 0.0
      %503 = vmatpush.msra.mxu0 %v483
      %504 = vmatmul.f32.gmra.mxu0 %v479
      %v505 = vpop.f32.mrf.mxu0
      %v506 = vadd.f32 0.0, %v505
      %507 = vdwg.mxu0
      %508 = vmatpush.msra.mxu0 0.0
      %509 = vmatpush.msra.mxu0 0.0
      %510 = vmatpush.msra.mxu0 0.0
      %511 = vmatpush.msra.mxu0 0.0
      %512 = vmatpush.msra.mxu0 0.0
      %513 = vmatpush.msra.mxu0 0.0
      %514 = vmatpush.msra.mxu0 0.0
      %515 = vmatpush.msra.mxu0 0.0
      %516 = vmatpush.msra.mxu0 0.0
      %517 = vmatpush.msra.mxu0 0.0
      %518 = vmatpush.msra.mxu0 0.0
      %519 = vmatpush.msra.mxu0 0.0
      %520 = vmatpush.msra.mxu0 0.0
      %521 = vmatpush.msra.mxu0 0.0
      %522 = vmatpush.msra.mxu0 0.0
      %523 = vmatpush.msra.mxu0 %v486
      %524 = vmatmul.f32.gmra.mxu0 %v479
      %v525 = vpop.f32.mrf.mxu0
      %v526 = vadd.f32 0.0, %v525
      %527 = vdwg.mxu0
      %v528 = vadd.f32 %v443, %v506
      %v529 = vadd.f32 %v443, %v526
      %530 = vst [vmem:[#allocation1] ss:$2 sm:$0xff] %v436
      %v531 = vld.sshfl [vmem:[#allocation1] sm:$0xff pattern:$0x75316420]
      %v532 = vld.sshfl [vmem:[#allocation1 + $0x8] sm:$0xff pattern:$0x75316420]
      %535 = vrot.lane.b32.xlu0 %v531, 1
      %v536 = vpop.permute.xlu0 %535
      %537 = vrot.lane.b32.xlu0 %v532, 1
      %v538 = vpop.permute.xlu0 %537
      %vm539 = vcmp.lt.s32.totalorder %v468, 1
      %v540 = vsel %vm539, %v536, %v538
      %v541 = vsel %vm539, %v538, %v536
      %s542 = scalar_lea.vmem %s2, 16
      %v543 = vld [vmem:[%s542] sm:$0xf]
      %v544 = vld [vmem:[%s542 + $0x8] sm:$0xf]
      %v545 = vmul.f32 %v541, %v543
      %v546 = vmul.f32 %v540, %v544
      %s547 = scalar_lea.vmem %s6, 8
      %v548 = vld [vmem:[%s547] sm:$0xff]
      %v550 = vsel %vm477, %v548, 0
      %v553 = vsel %vm481, %v545, 0
      %v556 = vsel %vm481, %v546, 0
      %558 = vmatpush.msra.mxu0 0.0
      %559 = vmatpush.msra.mxu0 0.0
      %560 = vmatpush.msra.mxu0 0.0
      %561 = vmatpush.msra.mxu0 0.0
      %562 = vmatpush.msra.mxu0 0.0
      %563 = vmatpush.msra.mxu0 0.0
      %564 = vmatpush.msra.mxu0 0.0
      %565 = vmatpush.msra.mxu0 0.0
      %566 = vmatpush.msra.mxu0 0.0
      %567 = vmatpush.msra.mxu0 0.0
      %568 = vmatpush.msra.mxu0 0.0
      %569 = vmatpush.msra.mxu0 0.0
      %570 = vmatpush.msra.mxu0 0.0
      %571 = vmatpush.msra.mxu0 0.0
      %572 = vmatpush.msra.mxu0 0.0
      %573 = vmatpush.msra.mxu0 %v553
      %574 = vmatmul.f32.gmra.mxu0 %v550
      %v575 = vpop.f32.mrf.mxu0
      %v576 = vadd.f32 0.0, %v575
      %577 = vdwg.mxu0
      %578 = vmatpush.msra.mxu0 0.0
      %579 = vmatpush.msra.mxu0 0.0
      %580 = vmatpush.msra.mxu0 0.0
      %581 = vmatpush.msra.mxu0 0.0
      %582 = vmatpush.msra.mxu0 0.0
      %583 = vmatpush.msra.mxu0 0.0
      %584 = vmatpush.msra.mxu0 0.0
      %585 = vmatpush.msra.mxu0 0.0
      %586 = vmatpush.msra.mxu0 0.0
      %587 = vmatpush.msra.mxu0 0.0
      %588 = vmatpush.msra.mxu0 0.0
      %589 = vmatpush.msra.mxu0 0.0
      %590 = vmatpush.msra.mxu0 0.0
      %591 = vmatpush.msra.mxu0 0.0
      %592 = vmatpush.msra.mxu0 0.0
      %593 = vmatpush.msra.mxu0 %v556
      %594 = vmatmul.f32.gmra.mxu0 %v550
      %v595 = vpop.f32.mrf.mxu0
      %v596 = vadd.f32 0.0, %v595
      %597 = vdwg.mxu0
      %v598 = vadd.f32 %v528, %v576
      %v599 = vadd.f32 %v529, %v596
      %600 = vst [vmem:[#allocation1] ss:$2 sm:$0xff] %v436
      %v601 = vld.sshfl [vmem:[#allocation1] sm:$0xff pattern:$0x75316420]
      %v602 = vld.sshfl [vmem:[#allocation1 + $0x8] sm:$0xff pattern:$0x75316420]
      %605 = vrot.lane.b32.xlu0 %v601, 113
      %v606 = vpop.permute.xlu0 %605
      %607 = vrot.lane.b32.xlu0 %v602, 113
      %v608 = vpop.permute.xlu0 %607
      %vm609 = vcmp.lt.s32.totalorder %v468, 113
      %v610 = vsel %vm609, %v606, %v608
      %v611 = vsel %vm609, %v608, %v606
      %s612 = scalar_lea.vmem %s2, 32
      %v613 = vld [vmem:[%s612] sm:$0xf]
      %v614 = vld [vmem:[%s612 + $0x8] sm:$0xf]
      %v615 = vmul.f32 %v610, %v613
      %v616 = vmul.f32 %v611, %v614
      %s617 = scalar_lea.vmem %s6, 16
      %v618 = vld [vmem:[%s617] sm:$0xff]
      %v620 = vsel %vm477, %v618, 0
      %v623 = vsel %vm481, %v615, 0
      %v626 = vsel %vm481, %v616, 0
      %628 = vmatpush.msra.mxu0 0.0
      %629 = vmatpush.msra.mxu0 0.0
      %630 = vmatpush.msra.mxu0 0.0
      %631 = vmatpush.msra.mxu0 0.0
      %632 = vmatpush.msra.mxu0 0.0
      %633 = vmatpush.msra.mxu0 0.0
      %634 = vmatpush.msra.mxu0 0.0
      %635 = vmatpush.msra.mxu0 0.0
      %636 = vmatpush.msra.mxu0 0.0
      %637 = vmatpush.msra.mxu0 0.0
      %638 = vmatpush.msra.mxu0 0.0
      %639 = vmatpush.msra.mxu0 0.0
      %640 = vmatpush.msra.mxu0 0.0
      %641 = vmatpush.msra.mxu0 0.0
      %642 = vmatpush.msra.mxu0 0.0
      %643 = vmatpush.msra.mxu0 %v623
      %644 = vmatmul.f32.gmra.mxu0 %v620
      %v645 = vpop.f32.mrf.mxu0
      %v646 = vadd.f32 0.0, %v645
      %647 = vdwg.mxu0
      %648 = vmatpush.msra.mxu0 0.0
      %649 = vmatpush.msra.mxu0 0.0
      %650 = vmatpush.msra.mxu0 0.0
      %651 = vmatpush.msra.mxu0 0.0
      %652 = vmatpush.msra.mxu0 0.0
      %653 = vmatpush.msra.mxu0 0.0
      %654 = vmatpush.msra.mxu0 0.0
      %655 = vmatpush.msra.mxu0 0.0
      %656 = vmatpush.msra.mxu0 0.0
      %657 = vmatpush.msra.mxu0 0.0
      %658 = vmatpush.msra.mxu0 0.0
      %659 = vmatpush.msra.mxu0 0.0
      %660 = vmatpush.msra.mxu0 0.0
      %661 = vmatpush.msra.mxu0 0.0
      %662 = vmatpush.msra.mxu0 0.0
      %663 = vmatpush.msra.mxu0 %v626
      %664 = vmatmul.f32.gmra.mxu0 %v620
      %v665 = vpop.f32.mrf.mxu0
      %v666 = vadd.f32 0.0, %v665
      %667 = vdwg.mxu0
      %v668 = vadd.f32 %v598, %v646
      %v669 = vadd.f32 %v599, %v666
      %670 = vst [vmem:[#allocation1] ss:$2 sm:$0xff] %v436
      %v671 = vld.sshfl [vmem:[#allocation1] sm:$0xff pattern:$0x75316420]
      %v672 = vld.sshfl [vmem:[#allocation1 + $0x8] sm:$0xff pattern:$0x75316420]
      %675 = vrot.lane.b32.xlu0 %v671, 16
      %v676 = vpop.permute.xlu0 %675
      %677 = vrot.lane.b32.xlu0 %v672, 16
      %v678 = vpop.permute.xlu0 %677
      %vm679 = vcmp.lt.s32.totalorder %v468, 16
      %v680 = vsel %vm679, %v676, %v678
      %v681 = vsel %vm679, %v678, %v676
      %s682 = scalar_lea.vmem %s2, 48
      %v683 = vld [vmem:[%s682] sm:$0xf]
      %v684 = vld [vmem:[%s682 + $0x8] sm:$0xf]
      %v685 = vmul.f32 %v681, %v683
      %v686 = vmul.f32 %v680, %v684
      %s687 = scalar_lea.vmem %s6, 24
      %v688 = vld [vmem:[%s687] sm:$0xff]
      %v690 = vsel %vm477, %v688, 0
      %v693 = vsel %vm481, %v685, 0
      %v696 = vsel %vm481, %v686, 0
      %698 = vmatpush.msra.mxu0 0.0
      %699 = vmatpush.msra.mxu0 0.0
      %700 = vmatpush.msra.mxu0 0.0
      %701 = vmatpush.msra.mxu0 0.0
      %702 = vmatpush.msra.mxu0 0.0
      %703 = vmatpush.msra.mxu0 0.0
      %704 = vmatpush.msra.mxu0 0.0
      %705 = vmatpush.msra.mxu0 0.0
      %706 = vmatpush.msra.mxu0 0.0
      %707 = vmatpush.msra.mxu0 0.0
      %708 = vmatpush.msra.mxu0 0.0
      %709 = vmatpush.msra.mxu0 0.0
      %710 = vmatpush.msra.mxu0 0.0
      %711 = vmatpush.msra.mxu0 0.0
      %712 = vmatpush.msra.mxu0 0.0
      %713 = vmatpush.msra.mxu0 %v693
      %714 = vmatmul.f32.gmra.mxu0 %v690
      %v715 = vpop.f32.mrf.mxu0
      %v716 = vadd.f32 0.0, %v715
      %717 = vdwg.mxu0
      %718 = vmatpush.msra.mxu0 0.0
      %719 = vmatpush.msra.mxu0 0.0
      %720 = vmatpush.msra.mxu0 0.0
      %721 = vmatpush.msra.mxu0 0.0
      %722 = vmatpush.msra.mxu0 0.0
      %723 = vmatpush.msra.mxu0 0.0
      %724 = vmatpush.msra.mxu0 0.0
      %725 = vmatpush.msra.mxu0 0.0
      %726 = vmatpush.msra.mxu0 0.0
      %727 = vmatpush.msra.mxu0 0.0
      %728 = vmatpush.msra.mxu0 0.0
      %729 = vmatpush.msra.mxu0 0.0
      %730 = vmatpush.msra.mxu0 0.0
      %731 = vmatpush.msra.mxu0 0.0
      %732 = vmatpush.msra.mxu0 0.0
      %733 = vmatpush.msra.mxu0 %v696
      %734 = vmatmul.f32.gmra.mxu0 %v690
      %v735 = vpop.f32.mrf.mxu0
      %v736 = vadd.f32 0.0, %v735
      %737 = vdwg.mxu0
      %v738 = vadd.f32 %v668, %v716
      %v739 = vadd.f32 %v669, %v736
      %s740 = scalar_lea.vmem %s6, 32
      %v741 = vld [vmem:[%s740] sm:$0xff]
      %742 = vst [vmem:[#allocation1] ss:$2 sm:$0xff] %v436
      %v743 = vld.sshfl [vmem:[#allocation1] sm:$0xff pattern:$0x75316420]
      %v744 = vld.sshfl [vmem:[#allocation1 + $0x8] sm:$0xff pattern:$0x75316420]
      %v746 = vsel %vm477, %v741, 0
      %v748 = vsel %vm481, %v743, 0
      %v750 = vsel %vm481, %v744, 0
      %752 = vmatpush.msra.mxu0 0.0
      %753 = vmatpush.msra.mxu0 0.0
      %754 = vmatpush.msra.mxu0 0.0
      %755 = vmatpush.msra.mxu0 0.0
      %756 = vmatpush.msra.mxu0 0.0
      %757 = vmatpush.msra.mxu0 0.0
      %758 = vmatpush.msra.mxu0 0.0
      %759 = vmatpush.msra.mxu0 0.0
      %760 = vmatpush.msra.mxu0 0.0
      %761 = vmatpush.msra.mxu0 0.0
      %762 = vmatpush.msra.mxu0 0.0
      %763 = vmatpush.msra.mxu0 0.0
      %764 = vmatpush.msra.mxu0 0.0
      %765 = vmatpush.msra.mxu0 0.0
      %766 = vmatpush.msra.mxu0 0.0
      %767 = vmatpush.msra.mxu0 %v748
      %768 = vmatmul.f32.gmra.mxu0 %v746
      %v769 = vpop.f32.mrf.mxu0
      %v770 = vadd.f32 0.0, %v769
      %771 = vdwg.mxu0
      %772 = vmatpush.msra.mxu0 0.0
      %773 = vmatpush.msra.mxu0 0.0
      %774 = vmatpush.msra.mxu0 0.0
      %775 = vmatpush.msra.mxu0 0.0
      %776 = vmatpush.msra.mxu0 0.0
      %777 = vmatpush.msra.mxu0 0.0
      %778 = vmatpush.msra.mxu0 0.0
      %779 = vmatpush.msra.mxu0 0.0
      %780 = vmatpush.msra.mxu0 0.0
      %781 = vmatpush.msra.mxu0 0.0
      %782 = vmatpush.msra.mxu0 0.0
      %783 = vmatpush.msra.mxu0 0.0
      %784 = vmatpush.msra.mxu0 0.0
      %785 = vmatpush.msra.mxu0 0.0
      %786 = vmatpush.msra.mxu0 0.0
      %787 = vmatpush.msra.mxu0 %v750
      %788 = vmatmul.f32.gmra.mxu0 %v746
      %v789 = vpop.f32.mrf.mxu0
      %v790 = vadd.f32 0.0, %v789
      %791 = vdwg.mxu0
      %v792 = vadd.f32 %v738, %v770
      %v793 = vadd.f32 %v739, %v790
      %794 = vst [vmem:[#allocation1] ss:$2 sm:$0xff] %v436
      %v795 = vld.sshfl [vmem:[#allocation1] sm:$0xff pattern:$0x75316420]
      %v796 = vld.sshfl [vmem:[#allocation1 + $0x8] sm:$0xff pattern:$0x75316420]
      %799 = vrot.lane.b32.xlu0 %v795, 112
      %v800 = vpop.permute.xlu0 %799
      %801 = vrot.lane.b32.xlu0 %v796, 112
      %v802 = vpop.permute.xlu0 %801
      %vm803 = vcmp.lt.s32.totalorder %v468, 112
      %v804 = vsel %vm803, %v800, %v802
      %v805 = vsel %vm803, %v802, %v800
      %s806 = scalar_lea.vmem %s2, 80
      %v807 = vld [vmem:[%s806] sm:$0xf]
      %v808 = vld [vmem:[%s806 + $0x8] sm:$0xf]
      %v809 = vmul.f32 %v804, %v807
      %v810 = vmul.f32 %v805, %v808
      %s811 = scalar_lea.vmem %s6, 40
      %v812 = vld [vmem:[%s811] sm:$0xff]
      %v814 = vsel %vm477, %v812, 0
      %v817 = vsel %vm481, %v809, 0
      %v820 = vsel %vm481, %v810, 0
      %822 = vmatpush.msra.mxu0 0.0
      %823 = vmatpush.msra.mxu0 0.0
      %824 = vmatpush.msra.mxu0 0.0
      %825 = vmatpush.msra.mxu0 0.0
      %826 = vmatpush.msra.mxu0 0.0
      %827 = vmatpush.msra.mxu0 0.0
      %828 = vmatpush.msra.mxu0 0.0
      %829 = vmatpush.msra.mxu0 0.0
      %830 = vmatpush.msra.mxu0 0.0
      %831 = vmatpush.msra.mxu0 0.0
      %832 = vmatpush.msra.mxu0 0.0
      %833 = vmatpush.msra.mxu0 0.0
      %834 = vmatpush.msra.mxu0 0.0
      %835 = vmatpush.msra.mxu0 0.0
      %836 = vmatpush.msra.mxu0 0.0
      %837 = vmatpush.msra.mxu0 %v817
      %838 = vmatmul.f32.gmra.mxu0 %v814
      %v839 = vpop.f32.mrf.mxu0
      %v840 = vadd.f32 0.0, %v839
      %841 = vdwg.mxu0
      %842 = vmatpush.msra.mxu0 0.0
      %843 = vmatpush.msra.mxu0 0.0
      %844 = vmatpush.msra.mxu0 0.0
      %845 = vmatpush.msra.mxu0 0.0
      %846 = vmatpush.msra.mxu0 0.0
      %847 = vmatpush.msra.mxu0 0.0
      %848 = vmatpush.msra.mxu0 0.0
      %849 = vmatpush.msra.mxu0 0.0
      %850 = vmatpush.msra.mxu0 0.0
      %851 = vmatpush.msra.mxu0 0.0
      %852 = vmatpush.msra.mxu0 0.0
      %853 = vmatpush.msra.mxu0 0.0
      %854 = vmatpush.msra.mxu0 0.0
      %855 = vmatpush.msra.mxu0 0.0
      %856 = vmatpush.msra.mxu0 0.0
      %857 = vmatpush.msra.mxu0 %v820
      %858 = vmatmul.f32.gmra.mxu0 %v814
      %v859 = vpop.f32.mrf.mxu0
      %v860 = vadd.f32 0.0, %v859
      %861 = vdwg.mxu0
      %v862 = vadd.f32 %v792, %v840
      %v863 = vadd.f32 %v793, %v860
      %864 = vst [vmem:[#allocation1] ss:$2 sm:$0xff] %v436
      %v865 = vld.sshfl [vmem:[#allocation1] sm:$0xff pattern:$0x75316420]
      %v866 = vld.sshfl [vmem:[#allocation1 + $0x8] sm:$0xff pattern:$0x75316420]
      %869 = vrot.lane.b32.xlu0 %v865, 15
      %v870 = vpop.permute.xlu0 %869
      %871 = vrot.lane.b32.xlu0 %v866, 15
      %v872 = vpop.permute.xlu0 %871
      %vm873 = vcmp.lt.s32.totalorder %v468, 15
      %v874 = vsel %vm873, %v870, %v872
      %v875 = vsel %vm873, %v872, %v870
      %s876 = scalar_lea.vmem %s2, 96
      %v877 = vld [vmem:[%s876] sm:$0xf]
      %v878 = vld [vmem:[%s876 + $0x8] sm:$0xf]
      %v879 = vmul.f32 %v875, %v877
      %v880 = vmul.f32 %v874, %v878
      %s881 = scalar_lea.vmem %s6, 48
      %v882 = vld [vmem:[%s881] sm:$0xff]
      %v884 = vsel %vm477, %v882, 0
      %v887 = vsel %vm481, %v879, 0
      %v890 = vsel %vm481, %v880, 0
      %892 = vmatpush.msra.mxu0 0.0
      %893 = vmatpush.msra.mxu0 0.0
      %894 = vmatpush.msra.mxu0 0.0
      %895 = vmatpush.msra.mxu0 0.0
      %896 = vmatpush.msra.mxu0 0.0
      %897 = vmatpush.msra.mxu0 0.0
      %898 = vmatpush.msra.mxu0 0.0
      %899 = vmatpush.msra.mxu0 0.0
      %900 = vmatpush.msra.mxu0 0.0
      %901 = vmatpush.msra.mxu0 0.0
      %902 = vmatpush.msra.mxu0 0.0
      %903 = vmatpush.msra.mxu0 0.0
      %904 = vmatpush.msra.mxu0 0.0
      %905 = vmatpush.msra.mxu0 0.0
      %906 = vmatpush.msra.mxu0 0.0
      %907 = vmatpush.msra.mxu0 %v887
      %908 = vmatmul.f32.gmra.mxu0 %v884
      %v909 = vpop.f32.mrf.mxu0
      %v910 = vadd.f32 0.0, %v909
      %911 = vdwg.mxu0
      %912 = vmatpush.msra.mxu0 0.0
      %913 = vmatpush.msra.mxu0 0.0
      %914 = vmatpush.msra.mxu0 0.0
      %915 = vmatpush.msra.mxu0 0.0
      %916 = vmatpush.msra.mxu0 0.0
      %917 = vmatpush.msra.mxu0 0.0
      %918 = vmatpush.msra.mxu0 0.0
      %919 = vmatpush.msra.mxu0 0.0
      %920 = vmatpush.msra.mxu0 0.0
      %921 = vmatpush.msra.mxu0 0.0
      %922 = vmatpush.msra.mxu0 0.0
      %923 = vmatpush.msra.mxu0 0.0
      %924 = vmatpush.msra.mxu0 0.0
      %925 = vmatpush.msra.mxu0 0.0
      %926 = vmatpush.msra.mxu0 0.0
      %927 = vmatpush.msra.mxu0 %v890
      %928 = vmatmul.f32.gmra.mxu0 %v884
      %v929 = vpop.f32.mrf.mxu0
      %v930 = vadd.f32 0.0, %v929
      %931 = vdwg.mxu0
      %v932 = vadd.f32 %v862, %v910
      %v933 = vadd.f32 %v863, %v930
      %934 = vst [vmem:[#allocation1] ss:$2 sm:$0xff] %v436
      %v935 = vld.sshfl [vmem:[#allocation1] sm:$0xff pattern:$0x75316420]
      %v936 = vld.sshfl [vmem:[#allocation1 + $0x8] sm:$0xff pattern:$0x75316420]
      %939 = vrot.lane.b32.xlu0 %v935, 127
      %v940 = vpop.permute.xlu0 %939
      %941 = vrot.lane.b32.xlu0 %v936, 127
      %v942 = vpop.permute.xlu0 %941
      %vm943 = vcmp.lt.s32.totalorder %v468, 127
      %v944 = vsel %vm943, %v940, %v942
      %v945 = vsel %vm943, %v942, %v940
      %s946 = scalar_lea.vmem %s2, 112
      %v947 = vld [vmem:[%s946] sm:$0xf]
      %v948 = vld [vmem:[%s946 + $0x8] sm:$0xf]
      %v949 = vmul.f32 %v944, %v947
      %v950 = vmul.f32 %v945, %v948
      %s951 = scalar_lea.vmem %s6, 56
      %v952 = vld [vmem:[%s951] sm:$0xff]
      %v954 = vsel %vm477, %v952, 0
      %v957 = vsel %vm481, %v949, 0
      %v960 = vsel %vm481, %v950, 0
      %962 = vmatpush.msra.mxu0 0.0
      %963 = vmatpush.msra.mxu0 0.0
      %964 = vmatpush.msra.mxu0 0.0
      %965 = vmatpush.msra.mxu0 0.0
      %966 = vmatpush.msra.mxu0 0.0
      %967 = vmatpush.msra.mxu0 0.0
      %968 = vmatpush.msra.mxu0 0.0
      %969 = vmatpush.msra.mxu0 0.0
      %970 = vmatpush.msra.mxu0 0.0
      %971 = vmatpush.msra.mxu0 0.0
      %972 = vmatpush.msra.mxu0 0.0
      %973 = vmatpush.msra.mxu0 0.0
      %974 = vmatpush.msra.mxu0 0.0
      %975 = vmatpush.msra.mxu0 0.0
      %976 = vmatpush.msra.mxu0 0.0
      %977 = vmatpush.msra.mxu0 %v957
      %978 = vmatmul.f32.gmra.mxu0 %v954
      %v979 = vpop.f32.mrf.mxu0
      %v980 = vadd.f32 0.0, %v979
      %981 = vdwg.mxu0
      %982 = vmatpush.msra.mxu0 0.0
      %983 = vmatpush.msra.mxu0 0.0
      %984 = vmatpush.msra.mxu0 0.0
      %985 = vmatpush.msra.mxu0 0.0
      %986 = vmatpush.msra.mxu0 0.0
      %987 = vmatpush.msra.mxu0 0.0
      %988 = vmatpush.msra.mxu0 0.0
      %989 = vmatpush.msra.mxu0 0.0
      %990 = vmatpush.msra.mxu0 0.0
      %991 = vmatpush.msra.mxu0 0.0
      %992 = vmatpush.msra.mxu0 0.0
      %993 = vmatpush.msra.mxu0 0.0
      %994 = vmatpush.msra.mxu0 0.0
      %995 = vmatpush.msra.mxu0 0.0
      %996 = vmatpush.msra.mxu0 0.0
      %997 = vmatpush.msra.mxu0 %v960
      %998 = vmatmul.f32.gmra.mxu0 %v954
      %v999 = vpop.f32.mrf.mxu0
      %v1000 = vadd.f32 0.0, %v999
      %1001 = vdwg.mxu0
      %v1002 = vadd.f32 %v932, %v980
      %v1003 = vadd.f32 %v933, %v1000
      %1004 = vst [vmem:[#allocation1] ss:$2 sm:$0xff] %v436
      %v1005 = vld.sshfl [vmem:[#allocation1] sm:$0xff pattern:$0x75316420]
      %v1006 = vld.sshfl [vmem:[#allocation1 + $0x8] sm:$0xff pattern:$0x75316420]
      %1009 = vrot.lane.b32.xlu0 %v1005, 111
      %v1010 = vpop.permute.xlu0 %1009
      %1011 = vrot.lane.b32.xlu0 %v1006, 111
      %v1012 = vpop.permute.xlu0 %1011
      %vm1013 = vcmp.lt.s32.totalorder %v468, 111
      %v1014 = vsel %vm1013, %v1010, %v1012
      %v1015 = vsel %vm1013, %v1012, %v1010
      %s1016 = scalar_lea.vmem %s2, 128
      %v1017 = vld [vmem:[%s1016] sm:$0xf]
      %v1018 = vld [vmem:[%s1016 + $0x8] sm:$0xf]
      %v1019 = vmul.f32 %v1014, %v1017
      %v1020 = vmul.f32 %v1015, %v1018
      %s1021 = scalar_lea.vmem %s6, 64
      %v1022 = vld [vmem:[%s1021] sm:$0xff]
      %v1024 = vsel %vm477, %v1022, 0
      %v1027 = vsel %vm481, %v1019, 0
      %v1030 = vsel %vm481, %v1020, 0
      %1032 = vmatpush.msra.mxu0 0.0
      %1033 = vmatpush.msra.mxu0 0.0
      %1034 = vmatpush.msra.mxu0 0.0
      %1035 = vmatpush.msra.mxu0 0.0
      %1036 = vmatpush.msra.mxu0 0.0
      %1037 = vmatpush.msra.mxu0 0.0
      %1038 = vmatpush.msra.mxu0 0.0
      %1039 = vmatpush.msra.mxu0 0.0
      %1040 = vmatpush.msra.mxu0 0.0
      %1041 = vmatpush.msra.mxu0 0.0
      %1042 = vmatpush.msra.mxu0 0.0
      %1043 = vmatpush.msra.mxu0 0.0
      %1044 = vmatpush.msra.mxu0 0.0
      %1045 = vmatpush.msra.mxu0 0.0
      %1046 = vmatpush.msra.mxu0 0.0
      %1047 = vmatpush.msra.mxu0 %v1027
      %1048 = vmatmul.f32.gmra.mxu0 %v1024
      %v1049 = vpop.f32.mrf.mxu0
      %v1050 = vadd.f32 0.0, %v1049
      %1051 = vdwg.mxu0
      %1052 = vmatpush.msra.mxu0 0.0
      %1053 = vmatpush.msra.mxu0 0.0
      %1054 = vmatpush.msra.mxu0 0.0
      %1055 = vmatpush.msra.mxu0 0.0
      %1056 = vmatpush.msra.mxu0 0.0
      %1057 = vmatpush.msra.mxu0 0.0
      %1058 = vmatpush.msra.mxu0 0.0
      %1059 = vmatpush.msra.mxu0 0.0
      %1060 = vmatpush.msra.mxu0 0.0
      %1061 = vmatpush.msra.mxu0 0.0
      %1062 = vmatpush.msra.mxu0 0.0
      %1063 = vmatpush.msra.mxu0 0.0
      %1064 = vmatpush.msra.mxu0 0.0
      %1065 = vmatpush.msra.mxu0 0.0
      %1066 = vmatpush.msra.mxu0 0.0
      %1067 = vmatpush.msra.mxu0 %v1030
      %1068 = vmatmul.f32.gmra.mxu0 %v1024
      %v1069 = vpop.f32.mrf.mxu0
      %v1070 = vadd.f32 0.0, %v1069
      %1071 = vdwg.mxu0
      %v1072 = vadd.f32 %v1002, %v1050
      %v1073 = vadd.f32 %v1003, %v1070
      %v1074 = vld [vmem:[%s429] sm:$0xff]
      %v1075 = vld [vmem:[%s1] sm:$0xff]
      %1077 = vst [vmem:[#allocation1] ss:$2 sm:$0xff] %v1074
      %v1078 = vld.sshfl [vmem:[#allocation1] sm:$0xff pattern:$0x75316420]
      %v1079 = vld.sshfl [vmem:[#allocation1 + $0x8] sm:$0xff pattern:$0x75316420]
      %1082 = vrot.lane.b32.xlu0 %v1078, 15
      %v1083 = vpop.permute.xlu0 %1082
      %1084 = vrot.lane.b32.xlu0 %v1079, 15
      %v1085 = vpop.permute.xlu0 %1084
      %v1086 = vsel %vm873, %v1083, %v1085
      %v1087 = vsel %vm873, %v1085, %v1083
      %v1090 = vrot.slane %v1086, 4
      %v1091 = vsel %vm481, %v1087, %v1090
      %v1093 = vmul.f32 %v1075, %v1091
      %v1094 = vadd.f32 %v438, %v1093
      %s1095 = scalar_lea.vmem %s1, 8
      %v1096 = vld [vmem:[%s1095] sm:$0xff]
      %1097 = vst [vmem:[#allocation1] ss:$2 sm:$0xff] %v1074
      %v1098 = vld.sshfl [vmem:[#allocation1] sm:$0xff pattern:$0x75316420]
      %v1099 = vld.sshfl [vmem:[#allocation1 + $0x8] sm:$0xff pattern:$0x75316420]
      %1102 = vrot.lane.b32.xlu0 %v1098, 14
      %v1103 = vpop.permute.xlu0 %1102
      %1104 = vrot.lane.b32.xlu0 %v1099, 14
      %v1105 = vpop.permute.xlu0 %1104
      %vm1106 = vcmp.lt.s32.totalorder %v468, 14
      %v1107 = vsel %vm1106, %v1103, %v1105
      %v1108 = vsel %vm1106, %v1105, %v1103
      %v1111 = vrot.slane %v1107, 4
      %v1112 = vsel %vm481, %v1108, %v1111
      %v1114 = vmul.f32 %v1096, %v1112
      %v1115 = vadd.f32 %v1094, %v1114
      %s1116 = scalar_lea.vmem %s1, 16
      %v1117 = vld [vmem:[%s1116] sm:$0xff]
      %1118 = vst [vmem:[#allocation1] ss:$2 sm:$0xff] %v1074
      %v1119 = vld.sshfl [vmem:[#allocation1] sm:$0xff pattern:$0x75316420]
      %v1120 = vld.sshfl [vmem:[#allocation1 + $0x8] sm:$0xff pattern:$0x75316420]
      %1123 = vrot.lane.b32.xlu0 %v1119, 13
      %v1124 = vpop.permute.xlu0 %1123
      %1125 = vrot.lane.b32.xlu0 %v1120, 13
      %v1126 = vpop.permute.xlu0 %1125
      %vm1127 = vcmp.lt.s32.totalorder %v468, 13
      %v1128 = vsel %vm1127, %v1124, %v1126
      %v1129 = vsel %vm1127, %v1126, %v1124
      %v1132 = vrot.slane %v1128, 4
      %v1133 = vsel %vm481, %v1129, %v1132
      %v1135 = vmul.f32 %v1117, %v1133
      %v1136 = vadd.f32 %v1115, %v1135
      %s1137 = scalar_lea.vmem %s1, 24
      %v1138 = vld [vmem:[%s1137] sm:$0xff]
      %1139 = vst [vmem:[#allocation1] ss:$2 sm:$0xff] %v1074
      %v1140 = vld.sshfl [vmem:[#allocation1] sm:$0xff pattern:$0x75316420]
      %v1141 = vld.sshfl [vmem:[#allocation1 + $0x8] sm:$0xff pattern:$0x75316420]
      %1144 = vrot.lane.b32.xlu0 %v1140, 12
      %v1145 = vpop.permute.xlu0 %1144
      %1146 = vrot.lane.b32.xlu0 %v1141, 12
      %v1147 = vpop.permute.xlu0 %1146
      %vm1148 = vcmp.lt.s32.totalorder %v468, 12
      %v1149 = vsel %vm1148, %v1145, %v1147
      %v1150 = vsel %vm1148, %v1147, %v1145
      %v1153 = vrot.slane %v1149, 4
      %v1154 = vsel %vm481, %v1150, %v1153
      %v1156 = vmul.f32 %v1138, %v1154
      %v1157 = vadd.f32 %v1136, %v1156
      %s1158 = scalar_lea.vmem %s1, 32
      %v1159 = vld [vmem:[%s1158] sm:$0xff]
      %1160 = vst [vmem:[#allocation1] ss:$2 sm:$0xff] %v1074
      %v1161 = vld.sshfl [vmem:[#allocation1] sm:$0xff pattern:$0x75316420]
      %v1162 = vld.sshfl [vmem:[#allocation1 + $0x8] sm:$0xff pattern:$0x75316420]
      %1165 = vrot.lane.b32.xlu0 %v1161, 11
      %v1166 = vpop.permute.xlu0 %1165
      %1167 = vrot.lane.b32.xlu0 %v1162, 11
      %v1168 = vpop.permute.xlu0 %1167
      %vm1169 = vcmp.lt.s32.totalorder %v468, 11
      %v1170 = vsel %vm1169, %v1166, %v1168
      %v1171 = vsel %vm1169, %v1168, %v1166
      %v1174 = vrot.slane %v1170, 4
      %v1175 = vsel %vm481, %v1171, %v1174
      %v1177 = vmul.f32 %v1159, %v1175
      %v1178 = vadd.f32 %v1157, %v1177
      %s1179 = scalar_lea.vmem %s1, 40
      %v1180 = vld [vmem:[%s1179] sm:$0xff]
      %1181 = vst [vmem:[#allocation1] ss:$2 sm:$0xff] %v1074
      %v1182 = vld.sshfl [vmem:[#allocation1] sm:$0xff pattern:$0x75316420]
      %v1183 = vld.sshfl [vmem:[#allocation1 + $0x8] sm:$0xff pattern:$0x75316420]
      %1186 = vrot.lane.b32.xlu0 %v1182, 10
      %v1187 = vpop.permute.xlu0 %1186
      %1188 = vrot.lane.b32.xlu0 %v1183, 10
      %v1189 = vpop.permute.xlu0 %1188
      %vm1190 = vcmp.lt.s32.totalorder %v468, 10
      %v1191 = vsel %vm1190, %v1187, %v1189
      %v1192 = vsel %vm1190, %v1189, %v1187
      %v1195 = vrot.slane %v1191, 4
      %v1196 = vsel %vm481, %v1192, %v1195
      %v1198 = vmul.f32 %v1180, %v1196
      %v1199 = vadd.f32 %v1178, %v1198
      %s1200 = scalar_lea.vmem %s1, 48
      %v1201 = vld [vmem:[%s1200] sm:$0xff]
      %1202 = vst [vmem:[#allocation1] ss:$2 sm:$0xff] %v1074
      %v1203 = vld.sshfl [vmem:[#allocation1] sm:$0xff pattern:$0x75316420]
      %v1204 = vld.sshfl [vmem:[#allocation1 + $0x8] sm:$0xff pattern:$0x75316420]
      %1207 = vrot.lane.b32.xlu0 %v1203, 9
      %v1208 = vpop.permute.xlu0 %1207
      %1209 = vrot.lane.b32.xlu0 %v1204, 9
      %v1210 = vpop.permute.xlu0 %1209
      %vm1211 = vcmp.lt.s32.totalorder %v468, 9
      %v1212 = vsel %vm1211, %v1208, %v1210
      %v1213 = vsel %vm1211, %v1210, %v1208
      %v1216 = vrot.slane %v1212, 4
      %v1217 = vsel %vm481, %v1213, %v1216
      %v1219 = vmul.f32 %v1201, %v1217
      %v1220 = vadd.f32 %v1199, %v1219
      %s1221 = scalar_lea.vmem %s1, 56
      %v1222 = vld [vmem:[%s1221] sm:$0xff]
      %1223 = vst [vmem:[#allocation1] ss:$2 sm:$0xff] %v1074
      %v1224 = vld.sshfl [vmem:[#allocation1] sm:$0xff pattern:$0x75316420]
      %v1225 = vld.sshfl [vmem:[#allocation1 + $0x8] sm:$0xff pattern:$0x75316420]
      %1228 = vrot.lane.b32.xlu0 %v1224, 8
      %v1229 = vpop.permute.xlu0 %1228
      %1230 = vrot.lane.b32.xlu0 %v1225, 8
      %v1231 = vpop.permute.xlu0 %1230
      %vm1232 = vcmp.lt.s32.totalorder %v468, 8
      %v1233 = vsel %vm1232, %v1229, %v1231
      %v1234 = vsel %vm1232, %v1231, %v1229
      %v1237 = vrot.slane %v1233, 4
      %v1238 = vsel %vm481, %v1234, %v1237
      %v1240 = vmul.f32 %v1222, %v1238
      %v1241 = vadd.f32 %v1220, %v1240
      %s1242 = scalar_lea.vmem %s1, 64
      %v1243 = vld [vmem:[%s1242] sm:$0xff]
      %1244 = vst [vmem:[#allocation1] ss:$2 sm:$0xff] %v1074
      %v1245 = vld.sshfl [vmem:[#allocation1] sm:$0xff pattern:$0x75316420]
      %v1246 = vld.sshfl [vmem:[#allocation1 + $0x8] sm:$0xff pattern:$0x75316420]
      %1249 = vrot.lane.b32.xlu0 %v1245, 7
      %v1250 = vpop.permute.xlu0 %1249
      %1251 = vrot.lane.b32.xlu0 %v1246, 7
      %v1252 = vpop.permute.xlu0 %1251
      %vm1253 = vcmp.lt.s32.totalorder %v468, 7
      %v1254 = vsel %vm1253, %v1250, %v1252
      %v1255 = vsel %vm1253, %v1252, %v1250
      %v1258 = vrot.slane %v1254, 4
      %v1259 = vsel %vm481, %v1255, %v1258
      %v1261 = vmul.f32 %v1243, %v1259
      %v1262 = vadd.f32 %v1241, %v1261
      %s1263 = scalar_lea.vmem %s1, 72
      %v1264 = vld [vmem:[%s1263] sm:$0xff]
      %1265 = vst [vmem:[#allocation1] ss:$2 sm:$0xff] %v1074
      %v1266 = vld.sshfl [vmem:[#allocation1] sm:$0xff pattern:$0x75316420]
      %v1267 = vld.sshfl [vmem:[#allocation1 + $0x8] sm:$0xff pattern:$0x75316420]
      %1270 = vrot.lane.b32.xlu0 %v1266, 6
      %v1271 = vpop.permute.xlu0 %1270
      %1272 = vrot.lane.b32.xlu0 %v1267, 6
      %v1273 = vpop.permute.xlu0 %1272
      %vm1274 = vcmp.lt.s32.totalorder %v468, 6
      %v1275 = vsel %vm1274, %v1271, %v1273
      %v1276 = vsel %vm1274, %v1273, %v1271
      %v1279 = vrot.slane %v1275, 4
      %v1280 = vsel %vm481, %v1276, %v1279
      %v1282 = vmul.f32 %v1264, %v1280
      %v1283 = vadd.f32 %v1262, %v1282
      %s1284 = scalar_lea.vmem %s1, 80
      %v1285 = vld [vmem:[%s1284] sm:$0xff]
      %1286 = vst [vmem:[#allocation1] ss:$2 sm:$0xff] %v1074
      %v1287 = vld.sshfl [vmem:[#allocation1] sm:$0xff pattern:$0x75316420]
      %v1288 = vld.sshfl [vmem:[#allocation1 + $0x8] sm:$0xff pattern:$0x75316420]
      %1291 = vrot.lane.b32.xlu0 %v1287, 5
      %v1292 = vpop.permute.xlu0 %1291
      %1293 = vrot.lane.b32.xlu0 %v1288, 5
      %v1294 = vpop.permute.xlu0 %1293
      %vm1295 = vcmp.lt.s32.totalorder %v468, 5
      %v1296 = vsel %vm1295, %v1292, %v1294
      %v1297 = vsel %vm1295, %v1294, %v1292
      %v1300 = vrot.slane %v1296, 4
      %v1301 = vsel %vm481, %v1297, %v1300
      %v1303 = vmul.f32 %v1285, %v1301
      %v1304 = vadd.f32 %v1283, %v1303
      %s1305 = scalar_lea.vmem %s1, 88
      %v1306 = vld [vmem:[%s1305] sm:$0xff]
      %1307 = vst [vmem:[#allocation1] ss:$2 sm:$0xff] %v1074
      %v1308 = vld.sshfl [vmem:[#allocation1] sm:$0xff pattern:$0x75316420]
      %v1309 = vld.sshfl [vmem:[#allocation1 + $0x8] sm:$0xff pattern:$0x75316420]
      %1312 = vrot.lane.b32.xlu0 %v1308, 4
      %v1313 = vpop.permute.xlu0 %1312
      %1314 = vrot.lane.b32.xlu0 %v1309, 4
      %v1315 = vpop.permute.xlu0 %1314
      %vm1316 = vcmp.lt.s32.totalorder %v468, 4
      %v1317 = vsel %vm1316, %v1313, %v1315
      %v1318 = vsel %vm1316, %v1315, %v1313
      %v1321 = vrot.slane %v1317, 4
      %v1322 = vsel %vm481, %v1318, %v1321
      %v1324 = vmul.f32 %v1306, %v1322
      %v1325 = vadd.f32 %v1304, %v1324
      %s1326 = scalar_lea.vmem %s1, 96
      %v1327 = vld [vmem:[%s1326] sm:$0xff]
      %1328 = vst [vmem:[#allocation1] ss:$2 sm:$0xff] %v1074
      %v1329 = vld.sshfl [vmem:[#allocation1] sm:$0xff pattern:$0x75316420]
      %v1330 = vld.sshfl [vmem:[#allocation1 + $0x8] sm:$0xff pattern:$0x75316420]
      %1333 = vrot.lane.b32.xlu0 %v1329, 3
      %v1334 = vpop.permute.xlu0 %1333
      %1335 = vrot.lane.b32.xlu0 %v1330, 3
      %v1336 = vpop.permute.xlu0 %1335
      %vm1337 = vcmp.lt.s32.totalorder %v468, 3
      %v1338 = vsel %vm1337, %v1334, %v1336
      %v1339 = vsel %vm1337, %v1336, %v1334
      %v1342 = vrot.slane %v1338, 4
      %v1343 = vsel %vm481, %v1339, %v1342
      %v1345 = vmul.f32 %v1327, %v1343
      %v1346 = vadd.f32 %v1325, %v1345
      %s1347 = scalar_lea.vmem %s1, 104
      %v1348 = vld [vmem:[%s1347] sm:$0xff]
      %1349 = vst [vmem:[#allocation1] ss:$2 sm:$0xff] %v1074
      %v1350 = vld.sshfl [vmem:[#allocation1] sm:$0xff pattern:$0x75316420]
      %v1351 = vld.sshfl [vmem:[#allocation1 + $0x8] sm:$0xff pattern:$0x75316420]
      %1354 = vrot.lane.b32.xlu0 %v1350, 2
      %v1355 = vpop.permute.xlu0 %1354
      %1356 = vrot.lane.b32.xlu0 %v1351, 2
      %v1357 = vpop.permute.xlu0 %1356
      %vm1358 = vcmp.lt.s32.totalorder %v468, 2
      %v1359 = vsel %vm1358, %v1355, %v1357
      %v1360 = vsel %vm1358, %v1357, %v1355
      %v1363 = vrot.slane %v1359, 4
      %v1364 = vsel %vm481, %v1360, %v1363
      %v1366 = vmul.f32 %v1348, %v1364
      %v1367 = vadd.f32 %v1346, %v1366
      %s1368 = scalar_lea.vmem %s1, 112
      %v1369 = vld [vmem:[%s1368] sm:$0xff]
      %1370 = vst [vmem:[#allocation1] ss:$2 sm:$0xff] %v1074
      %v1371 = vld.sshfl [vmem:[#allocation1] sm:$0xff pattern:$0x75316420]
      %v1372 = vld.sshfl [vmem:[#allocation1 + $0x8] sm:$0xff pattern:$0x75316420]
      %1375 = vrot.lane.b32.xlu0 %v1371, 1
      %v1376 = vpop.permute.xlu0 %1375
      %1377 = vrot.lane.b32.xlu0 %v1372, 1
      %v1378 = vpop.permute.xlu0 %1377
      %v1379 = vsel %vm539, %v1376, %v1378
      %v1380 = vsel %vm539, %v1378, %v1376
      %v1383 = vrot.slane %v1379, 4
      %v1384 = vsel %vm481, %v1380, %v1383
      %v1386 = vmul.f32 %v1369, %v1384
      %v1387 = vadd.f32 %v1367, %v1386
      %s1388 = scalar_lea.vmem %s1, 120
      %v1389 = vld [vmem:[%s1388] sm:$0xff]
      %v1390 = vmul.f32 %v1389, %v1074
      %v1391 = vadd.f32 %v1387, %v1390
      %s1392 = scalar_lea.vmem %s1, 128
      %v1393 = vld [vmem:[%s1392] sm:$0xff]
      %1394 = vst [vmem:[#allocation1] ss:$2 sm:$0xff] %v1074
      %v1395 = vld.sshfl [vmem:[#allocation1] sm:$0xff pattern:$0x75316420]
      %v1396 = vld.sshfl [vmem:[#allocation1 + $0x8] sm:$0xff pattern:$0x75316420]
      %1399 = vrot.lane.b32.xlu0 %v1395, 127
      %v1400 = vpop.permute.xlu0 %1399
      %1401 = vrot.lane.b32.xlu0 %v1396, 127
      %v1402 = vpop.permute.xlu0 %1401
      %v1403 = vsel %vm943, %v1400, %v1402
      %v1404 = vsel %vm943, %v1402, %v1400
      %v1407 = vrot.slane %v1404, 4
      %v1408 = vsel %vm481, %v1403, %v1407
      %v1410 = vmul.f32 %v1393, %v1408
      %v1411 = vadd.f32 %v1391, %v1410
      %s1412 = scalar_lea.vmem %s1, 136
      %v1413 = vld [vmem:[%s1412] sm:$0xff]
      %1414 = vst [vmem:[#allocation1] ss:$2 sm:$0xff] %v1074
      %v1415 = vld.sshfl [vmem:[#allocation1] sm:$0xff pattern:$0x75316420]
      %v1416 = vld.sshfl [vmem:[#allocation1 + $0x8] sm:$0xff pattern:$0x75316420]
      %1419 = vrot.lane.b32.xlu0 %v1415, 126
      %v1420 = vpop.permute.xlu0 %1419
      %1421 = vrot.lane.b32.xlu0 %v1416, 126
      %v1422 = vpop.permute.xlu0 %1421
      %vm1423 = vcmp.lt.s32.totalorder %v468, 126
      %v1424 = vsel %vm1423, %v1420, %v1422
      %v1425 = vsel %vm1423, %v1422, %v1420
      %v1428 = vrot.slane %v1425, 4
      %v1429 = vsel %vm481, %v1424, %v1428
      %v1431 = vmul.f32 %v1413, %v1429
      %v1432 = vadd.f32 %v1411, %v1431
      %s1433 = scalar_lea.vmem %s1, 144
      %v1434 = vld [vmem:[%s1433] sm:$0xff]
      %1435 = vst [vmem:[#allocation1] ss:$2 sm:$0xff] %v1074
      %v1436 = vld.sshfl [vmem:[#allocation1] sm:$0xff pattern:$0x75316420]
      %v1437 = vld.sshfl [vmem:[#allocation1 + $0x8] sm:$0xff pattern:$0x75316420]
      %1440 = vrot.lane.b32.xlu0 %v1436, 125
      %v1441 = vpop.permute.xlu0 %1440
      %1442 = vrot.lane.b32.xlu0 %v1437, 125
      %v1443 = vpop.permute.xlu0 %1442
      %vm1444 = vcmp.lt.s32.totalorder %v468, 125
      %v1445 = vsel %vm1444, %v1441, %v1443
      %v1446 = vsel %vm1444, %v1443, %v1441
      %v1449 = vrot.slane %v1446, 4
      %v1450 = vsel %vm481, %v1445, %v1449
      %v1452 = vmul.f32 %v1434, %v1450
      %v1453 = vadd.f32 %v1432, %v1452
      %s1454 = scalar_lea.vmem %s1, 152
      %v1455 = vld [vmem:[%s1454] sm:$0xff]
      %1456 = vst [vmem:[#allocation1] ss:$2 sm:$0xff] %v1074
      %v1457 = vld.sshfl [vmem:[#allocation1] sm:$0xff pattern:$0x75316420]
      %v1458 = vld.sshfl [vmem:[#allocation1 + $0x8] sm:$0xff pattern:$0x75316420]
      %1461 = vrot.lane.b32.xlu0 %v1457, 124
      %v1462 = vpop.permute.xlu0 %1461
      %1463 = vrot.lane.b32.xlu0 %v1458, 124
      %v1464 = vpop.permute.xlu0 %1463
      %vm1465 = vcmp.lt.s32.totalorder %v468, 124
      %v1466 = vsel %vm1465, %v1462, %v1464
      %v1467 = vsel %vm1465, %v1464, %v1462
      %v1470 = vrot.slane %v1467, 4
      %v1471 = vsel %vm481, %v1466, %v1470
      %v1473 = vmul.f32 %v1455, %v1471
      %v1474 = vadd.f32 %v1453, %v1473
      %s1475 = scalar_lea.vmem %s1, 160
      %v1476 = vld [vmem:[%s1475] sm:$0xff]
      %1477 = vst [vmem:[#allocation1] ss:$2 sm:$0xff] %v1074
      %v1478 = vld.sshfl [vmem:[#allocation1] sm:$0xff pattern:$0x75316420]
      %v1479 = vld.sshfl [vmem:[#allocation1 + $0x8] sm:$0xff pattern:$0x75316420]
      %1482 = vrot.lane.b32.xlu0 %v1478, 123
      %v1483 = vpop.permute.xlu0 %1482
      %1484 = vrot.lane.b32.xlu0 %v1479, 123
      %v1485 = vpop.permute.xlu0 %1484
      %vm1486 = vcmp.lt.s32.totalorder %v468, 123
      %v1487 = vsel %vm1486, %v1483, %v1485
      %v1488 = vsel %vm1486, %v1485, %v1483
      %v1491 = vrot.slane %v1488, 4
      %v1492 = vsel %vm481, %v1487, %v1491
      %v1494 = vmul.f32 %v1476, %v1492
      %v1495 = vadd.f32 %v1474, %v1494
      %s1496 = scalar_lea.vmem %s1, 168
      %v1497 = vld [vmem:[%s1496] sm:$0xff]
      %1498 = vst [vmem:[#allocation1] ss:$2 sm:$0xff] %v1074
      %v1499 = vld.sshfl [vmem:[#allocation1] sm:$0xff pattern:$0x75316420]
      %v1500 = vld.sshfl [vmem:[#allocation1 + $0x8] sm:$0xff pattern:$0x75316420]
      %1503 = vrot.lane.b32.xlu0 %v1499, 122
      %v1504 = vpop.permute.xlu0 %1503
      %1505 = vrot.lane.b32.xlu0 %v1500, 122
      %v1506 = vpop.permute.xlu0 %1505
      %vm1507 = vcmp.lt.s32.totalorder %v468, 122
      %v1508 = vsel %vm1507, %v1504, %v1506
      %v1509 = vsel %vm1507, %v1506, %v1504
      %v1512 = vrot.slane %v1509, 4
      %v1513 = vsel %vm481, %v1508, %v1512
      %v1515 = vmul.f32 %v1497, %v1513
      %v1516 = vadd.f32 %v1495, %v1515
      %s1517 = scalar_lea.vmem %s1, 176
      %v1518 = vld [vmem:[%s1517] sm:$0xff]
      %1519 = vst [vmem:[#allocation1] ss:$2 sm:$0xff] %v1074
      %v1520 = vld.sshfl [vmem:[#allocation1] sm:$0xff pattern:$0x75316420]
      %v1521 = vld.sshfl [vmem:[#allocation1 + $0x8] sm:$0xff pattern:$0x75316420]
      %1524 = vrot.lane.b32.xlu0 %v1520, 121
      %v1525 = vpop.permute.xlu0 %1524
      %1526 = vrot.lane.b32.xlu0 %v1521, 121
      %v1527 = vpop.permute.xlu0 %1526
      %vm1528 = vcmp.lt.s32.totalorder %v468, 121
      %v1529 = vsel %vm1528, %v1525, %v1527
      %v1530 = vsel %vm1528, %v1527, %v1525
      %v1533 = vrot.slane %v1530, 4
      %v1534 = vsel %vm481, %v1529, %v1533
      %v1536 = vmul.f32 %v1518, %v1534
      %v1537 = vadd.f32 %v1516, %v1536
      %s1538 = scalar_lea.vmem %s1, 184
      %v1539 = vld [vmem:[%s1538] sm:$0xff]
      %1540 = vst [vmem:[#allocation1] ss:$2 sm:$0xff] %v1074
      %v1541 = vld.sshfl [vmem:[#allocation1] sm:$0xff pattern:$0x75316420]
      %v1542 = vld.sshfl [vmem:[#allocation1 + $0x8] sm:$0xff pattern:$0x75316420]
      %1545 = vrot.lane.b32.xlu0 %v1541, 120
      %v1546 = vpop.permute.xlu0 %1545
      %1547 = vrot.lane.b32.xlu0 %v1542, 120
      %v1548 = vpop.permute.xlu0 %1547
      %vm1549 = vcmp.lt.s32.totalorder %v468, 120
      %v1550 = vsel %vm1549, %v1546, %v1548
      %v1551 = vsel %vm1549, %v1548, %v1546
      %v1554 = vrot.slane %v1551, 4
      %v1555 = vsel %vm481, %v1550, %v1554
      %v1557 = vmul.f32 %v1539, %v1555
      %v1558 = vadd.f32 %v1537, %v1557
      %s1559 = scalar_lea.vmem %s1, 192
      %v1560 = vld [vmem:[%s1559] sm:$0xff]
      %1561 = vst [vmem:[#allocation1] ss:$2 sm:$0xff] %v1074
      %v1562 = vld.sshfl [vmem:[#allocation1] sm:$0xff pattern:$0x75316420]
      %v1563 = vld.sshfl [vmem:[#allocation1 + $0x8] sm:$0xff pattern:$0x75316420]
      %1566 = vrot.lane.b32.xlu0 %v1562, 119
      %v1567 = vpop.permute.xlu0 %1566
      %1568 = vrot.lane.b32.xlu0 %v1563, 119
      %v1569 = vpop.permute.xlu0 %1568
      %vm1570 = vcmp.lt.s32.totalorder %v468, 119
      %v1571 = vsel %vm1570, %v1567, %v1569
      %v1572 = vsel %vm1570, %v1569, %v1567
      %v1575 = vrot.slane %v1572, 4
      %v1576 = vsel %vm481, %v1571, %v1575
      %v1578 = vmul.f32 %v1560, %v1576
      %v1579 = vadd.f32 %v1558, %v1578
      %s1580 = scalar_lea.vmem %s1, 200
      %v1581 = vld [vmem:[%s1580] sm:$0xff]
      %1582 = vst [vmem:[#allocation1] ss:$2 sm:$0xff] %v1074
      %v1583 = vld.sshfl [vmem:[#allocation1] sm:$0xff pattern:$0x75316420]
      %v1584 = vld.sshfl [vmem:[#allocation1 + $0x8] sm:$0xff pattern:$0x75316420]
      %1587 = vrot.lane.b32.xlu0 %v1583, 118
      %v1588 = vpop.permute.xlu0 %1587
      %1589 = vrot.lane.b32.xlu0 %v1584, 118
      %v1590 = vpop.permute.xlu0 %1589
      %vm1591 = vcmp.lt.s32.totalorder %v468, 118
      %v1592 = vsel %vm1591, %v1588, %v1590
      %v1593 = vsel %vm1591, %v1590, %v1588
      %v1596 = vrot.slane %v1593, 4
      %v1597 = vsel %vm481, %v1592, %v1596
      %v1599 = vmul.f32 %v1581, %v1597
      %v1600 = vadd.f32 %v1579, %v1599
      %s1601 = scalar_lea.vmem %s1, 208
      %v1602 = vld [vmem:[%s1601] sm:$0xff]
      %1603 = vst [vmem:[#allocation1] ss:$2 sm:$0xff] %v1074
      %v1604 = vld.sshfl [vmem:[#allocation1] sm:$0xff pattern:$0x75316420]
      %v1605 = vld.sshfl [vmem:[#allocation1 + $0x8] sm:$0xff pattern:$0x75316420]
      %1608 = vrot.lane.b32.xlu0 %v1604, 117
      %v1609 = vpop.permute.xlu0 %1608
      %1610 = vrot.lane.b32.xlu0 %v1605, 117
      %v1611 = vpop.permute.xlu0 %1610
      %vm1612 = vcmp.lt.s32.totalorder %v468, 117
      %v1613 = vsel %vm1612, %v1609, %v1611
      %v1614 = vsel %vm1612, %v1611, %v1609
      %v1617 = vrot.slane %v1614, 4
      %v1618 = vsel %vm481, %v1613, %v1617
      %v1620 = vmul.f32 %v1602, %v1618
      %v1621 = vadd.f32 %v1600, %v1620
      %s1622 = scalar_lea.vmem %s1, 216
      %v1623 = vld [vmem:[%s1622] sm:$0xff]
      %1624 = vst [vmem:[#allocation1] ss:$2 sm:$0xff] %v1074
      %v1625 = vld.sshfl [vmem:[#allocation1] sm:$0xff pattern:$0x75316420]
      %v1626 = vld.sshfl [vmem:[#allocation1 + $0x8] sm:$0xff pattern:$0x75316420]
      %1629 = vrot.lane.b32.xlu0 %v1625, 116
      %v1630 = vpop.permute.xlu0 %1629
      %1631 = vrot.lane.b32.xlu0 %v1626, 116
      %v1632 = vpop.permute.xlu0 %1631
      %vm1633 = vcmp.lt.s32.totalorder %v468, 116
      %v1634 = vsel %vm1633, %v1630, %v1632
      %v1635 = vsel %vm1633, %v1632, %v1630
      %v1638 = vrot.slane %v1635, 4
      %v1639 = vsel %vm481, %v1634, %v1638
      %v1641 = vmul.f32 %v1623, %v1639
      %v1642 = vadd.f32 %v1621, %v1641
      %s1643 = scalar_lea.vmem %s1, 224
      %v1644 = vld [vmem:[%s1643] sm:$0xff]
      %1645 = vst [vmem:[#allocation1] ss:$2 sm:$0xff] %v1074
      %v1646 = vld.sshfl [vmem:[#allocation1] sm:$0xff pattern:$0x75316420]
      %v1647 = vld.sshfl [vmem:[#allocation1 + $0x8] sm:$0xff pattern:$0x75316420]
      %1650 = vrot.lane.b32.xlu0 %v1646, 115
      %v1651 = vpop.permute.xlu0 %1650
      %1652 = vrot.lane.b32.xlu0 %v1647, 115
      %v1653 = vpop.permute.xlu0 %1652
      %vm1654 = vcmp.lt.s32.totalorder %v468, 115
      %v1655 = vsel %vm1654, %v1651, %v1653
      %v1656 = vsel %vm1654, %v1653, %v1651
      %v1659 = vrot.slane %v1656, 4
      %v1660 = vsel %vm481, %v1655, %v1659
      %v1662 = vmul.f32 %v1644, %v1660
      %v1663 = vadd.f32 %v1642, %v1662
      %s1664 = scalar_lea.vmem %s1, 232
      %v1665 = vld [vmem:[%s1664] sm:$0xff]
      %1666 = vst [vmem:[#allocation1] ss:$2 sm:$0xff] %v1074
      %v1667 = vld.sshfl [vmem:[#allocation1] sm:$0xff pattern:$0x75316420]
      %v1668 = vld.sshfl [vmem:[#allocation1 + $0x8] sm:$0xff pattern:$0x75316420]
      %1671 = vrot.lane.b32.xlu0 %v1667, 114
      %v1672 = vpop.permute.xlu0 %1671
      %1673 = vrot.lane.b32.xlu0 %v1668, 114
      %v1674 = vpop.permute.xlu0 %1673
      %vm1675 = vcmp.lt.s32.totalorder %v468, 114
      %v1676 = vsel %vm1675, %v1672, %v1674
      %v1677 = vsel %vm1675, %v1674, %v1672
      %v1680 = vrot.slane %v1677, 4
      %v1681 = vsel %vm481, %v1676, %v1680
      %v1683 = vmul.f32 %v1665, %v1681
      %v1684 = vadd.f32 %v1663, %v1683
      %s1685 = scalar_lea.vmem %s1, 240
      %v1686 = vld [vmem:[%s1685] sm:$0xff]
      %1687 = vst [vmem:[#allocation1] ss:$2 sm:$0xff] %v1074
      %v1688 = vld.sshfl [vmem:[#allocation1] sm:$0xff pattern:$0x75316420]
      %v1689 = vld.sshfl [vmem:[#allocation1 + $0x8] sm:$0xff pattern:$0x75316420]
      %1692 = vrot.lane.b32.xlu0 %v1688, 113
      %v1693 = vpop.permute.xlu0 %1692
      %1694 = vrot.lane.b32.xlu0 %v1689, 113
      %v1695 = vpop.permute.xlu0 %1694
      %v1696 = vsel %vm609, %v1693, %v1695
      %v1697 = vsel %vm609, %v1695, %v1693
      %v1700 = vrot.slane %v1697, 4
      %v1701 = vsel %vm481, %v1696, %v1700
      %v1703 = vmul.f32 %v1686, %v1701
      %v1704 = vadd.f32 %v1684, %v1703
      %1706 = vst [vmem:[#allocation1] ss:$2 sm:$0xff] %v1704
      %v1707 = vld.sshfl [vmem:[#allocation1] sm:$0xff pattern:$0x75316420]
      %v1708 = vld.sshfl [vmem:[#allocation1 + $0x8] sm:$0xff pattern:$0x75316420]
      %1711 = vrot.lane.b32.xlu0 %v1707, 17
      %v1712 = vpop.permute.xlu0 %1711
      %1713 = vrot.lane.b32.xlu0 %v1708, 17
      %v1714 = vpop.permute.xlu0 %1713
      %v1715 = vsel %vm469, %v1712, %v1714
      %v1716 = vsel %vm469, %v1714, %v1712
      %v1717 = vmul.f32 %v1716, %v472
      %v1718 = vmul.f32 %v1715, %v473
      %v1719 = vld [vmem:[%s5] sm:$0xff]
      %v1721 = vsel %vm477, %v1719, 0
      %v1724 = vsel %vm481, %v1717, 0
      %v1727 = vsel %vm481, %v1718, 0
      %1729 = vmatpush.msra.mxu0 0.0
      %1730 = vmatpush.msra.mxu0 0.0
      %1731 = vmatpush.msra.mxu0 0.0
      %1732 = vmatpush.msra.mxu0 0.0
      %1733 = vmatpush.msra.mxu0 0.0
      %1734 = vmatpush.msra.mxu0 0.0
      %1735 = vmatpush.msra.mxu0 0.0
      %1736 = vmatpush.msra.mxu0 0.0
      %1737 = vmatpush.msra.mxu0 0.0
      %1738 = vmatpush.msra.mxu0 0.0
      %1739 = vmatpush.msra.mxu0 0.0
      %1740 = vmatpush.msra.mxu0 0.0
      %1741 = vmatpush.msra.mxu0 0.0
      %1742 = vmatpush.msra.mxu0 0.0
      %1743 = vmatpush.msra.mxu0 0.0
      %1744 = vmatpush.msra.mxu0 %v1724
      %1745 = vmatmul.f32.gmra.mxu0 %v1721
      %v1746 = vpop.f32.mrf.mxu0
      %v1747 = vadd.f32 0.0, %v1746
      %1748 = vdwg.mxu0
      %1749 = vmatpush.msra.mxu0 0.0
      %1750 = vmatpush.msra.mxu0 0.0
      %1751 = vmatpush.msra.mxu0 0.0
      %1752 = vmatpush.msra.mxu0 0.0
      %1753 = vmatpush.msra.mxu0 0.0
      %1754 = vmatpush.msra.mxu0 0.0
      %1755 = vmatpush.msra.mxu0 0.0
      %1756 = vmatpush.msra.mxu0 0.0
      %1757 = vmatpush.msra.mxu0 0.0
      %1758 = vmatpush.msra.mxu0 0.0
      %1759 = vmatpush.msra.mxu0 0.0
      %1760 = vmatpush.msra.mxu0 0.0
      %1761 = vmatpush.msra.mxu0 0.0
      %1762 = vmatpush.msra.mxu0 0.0
      %1763 = vmatpush.msra.mxu0 0.0
      %1764 = vmatpush.msra.mxu0 %v1727
      %1765 = vmatmul.f32.gmra.mxu0 %v1721
      %v1766 = vpop.f32.mrf.mxu0
      %v1767 = vadd.f32 0.0, %v1766
      %1768 = vdwg.mxu0
      %v1769 = vadd.f32 %v1072, %v1747
      %v1770 = vadd.f32 %v1073, %v1767
      %1771 = vst [vmem:[#allocation1] ss:$2 sm:$0xff] %v1704
      %v1772 = vld.sshfl [vmem:[#allocation1] sm:$0xff pattern:$0x75316420]
      %v1773 = vld.sshfl [vmem:[#allocation1 + $0x8] sm:$0xff pattern:$0x75316420]
      %1776 = vrot.lane.b32.xlu0 %v1772, 1
      %v1777 = vpop.permute.xlu0 %1776
      %1778 = vrot.lane.b32.xlu0 %v1773, 1
      %v1779 = vpop.permute.xlu0 %1778
      %v1780 = vsel %vm539, %v1777, %v1779
      %v1781 = vsel %vm539, %v1779, %v1777
      %v1782 = vmul.f32 %v1781, %v543
      %v1783 = vmul.f32 %v1780, %v544
      %s1784 = scalar_lea.vmem %s5, 8
      %v1785 = vld [vmem:[%s1784] sm:$0xff]
      %v1787 = vsel %vm477, %v1785, 0
      %v1790 = vsel %vm481, %v1782, 0
      %v1793 = vsel %vm481, %v1783, 0
      %1795 = vmatpush.msra.mxu0 0.0
      %1796 = vmatpush.msra.mxu0 0.0
      %1797 = vmatpush.msra.mxu0 0.0
      %1798 = vmatpush.msra.mxu0 0.0
      %1799 = vmatpush.msra.mxu0 0.0
      %1800 = vmatpush.msra.mxu0 0.0
      %1801 = vmatpush.msra.mxu0 0.0
      %1802 = vmatpush.msra.mxu0 0.0
      %1803 = vmatpush.msra.mxu0 0.0
      %1804 = vmatpush.msra.mxu0 0.0
      %1805 = vmatpush.msra.mxu0 0.0
      %1806 = vmatpush.msra.mxu0 0.0
      %1807 = vmatpush.msra.mxu0 0.0
      %1808 = vmatpush.msra.mxu0 0.0
      %1809 = vmatpush.msra.mxu0 0.0
      %1810 = vmatpush.msra.mxu0 %v1790
      %1811 = vmatmul.f32.gmra.mxu0 %v1787
      %v1812 = vpop.f32.mrf.mxu0
      %v1813 = vadd.f32 0.0, %v1812
      %1814 = vdwg.mxu0
      %1815 = vmatpush.msra.mxu0 0.0
      %1816 = vmatpush.msra.mxu0 0.0
      %1817 = vmatpush.msra.mxu0 0.0
      %1818 = vmatpush.msra.mxu0 0.0
      %1819 = vmatpush.msra.mxu0 0.0
      %1820 = vmatpush.msra.mxu0 0.0
      %1821 = vmatpush.msra.mxu0 0.0
      %1822 = vmatpush.msra.mxu0 0.0
      %1823 = vmatpush.msra.mxu0 0.0
      %1824 = vmatpush.msra.mxu0 0.0
      %1825 = vmatpush.msra.mxu0 0.0
      %1826 = vmatpush.msra.mxu0 0.0
      %1827 = vmatpush.msra.mxu0 0.0
      %1828 = vmatpush.msra.mxu0 0.0
      %1829 = vmatpush.msra.mxu0 0.0
      %1830 = vmatpush.msra.mxu0 %v1793
      %1831 = vmatmul.f32.gmra.mxu0 %v1787
      %v1832 = vpop.f32.mrf.mxu0
      %v1833 = vadd.f32 0.0, %v1832
      %1834 = vdwg.mxu0
      %v1835 = vadd.f32 %v1769, %v1813
      %v1836 = vadd.f32 %v1770, %v1833
      %1837 = vst [vmem:[#allocation1] ss:$2 sm:$0xff] %v1704
      %v1838 = vld.sshfl [vmem:[#allocation1] sm:$0xff pattern:$0x75316420]
      %v1839 = vld.sshfl [vmem:[#allocation1 + $0x8] sm:$0xff pattern:$0x75316420]
      %1842 = vrot.lane.b32.xlu0 %v1838, 113
      %v1843 = vpop.permute.xlu0 %1842
      %1844 = vrot.lane.b32.xlu0 %v1839, 113
      %v1845 = vpop.permute.xlu0 %1844
      %v1846 = vsel %vm609, %v1843, %v1845
      %v1847 = vsel %vm609, %v1845, %v1843
      %v1848 = vmul.f32 %v1846, %v613
      %v1849 = vmul.f32 %v1847, %v614
      %s1850 = scalar_lea.vmem %s5, 16
      %v1851 = vld [vmem:[%s1850] sm:$0xff]
      %v1853 = vsel %vm477, %v1851, 0
      %v1856 = vsel %vm481, %v1848, 0
      %v1859 = vsel %vm481, %v1849, 0
      %1861 = vmatpush.msra.mxu0 0.0
      %1862 = vmatpush.msra.mxu0 0.0
      %1863 = vmatpush.msra.mxu0 0.0
      %1864 = vmatpush.msra.mxu0 0.0
      %1865 = vmatpush.msra.mxu0 0.0
      %1866 = vmatpush.msra.mxu0 0.0
      %1867 = vmatpush.msra.mxu0 0.0
      %1868 = vmatpush.msra.mxu0 0.0
      %1869 = vmatpush.msra.mxu0 0.0
      %1870 = vmatpush.msra.mxu0 0.0
      %1871 = vmatpush.msra.mxu0 0.0
      %1872 = vmatpush.msra.mxu0 0.0
      %1873 = vmatpush.msra.mxu0 0.0
      %1874 = vmatpush.msra.mxu0 0.0
      %1875 = vmatpush.msra.mxu0 0.0
      %1876 = vmatpush.msra.mxu0 %v1856
      %1877 = vmatmul.f32.gmra.mxu0 %v1853
      %v1878 = vpop.f32.mrf.mxu0
      %v1879 = vadd.f32 0.0, %v1878
      %1880 = vdwg.mxu0
      %1881 = vmatpush.msra.mxu0 0.0
      %1882 = vmatpush.msra.mxu0 0.0
      %1883 = vmatpush.msra.mxu0 0.0
      %1884 = vmatpush.msra.mxu0 0.0
      %1885 = vmatpush.msra.mxu0 0.0
      %1886 = vmatpush.msra.mxu0 0.0
      %1887 = vmatpush.msra.mxu0 0.0
      %1888 = vmatpush.msra.mxu0 0.0
      %1889 = vmatpush.msra.mxu0 0.0
      %1890 = vmatpush.msra.mxu0 0.0
      %1891 = vmatpush.msra.mxu0 0.0
      %1892 = vmatpush.msra.mxu0 0.0
      %1893 = vmatpush.msra.mxu0 0.0
      %1894 = vmatpush.msra.mxu0 0.0
      %1895 = vmatpush.msra.mxu0 0.0
      %1896 = vmatpush.msra.mxu0 %v1859
      %1897 = vmatmul.f32.gmra.mxu0 %v1853
      %v1898 = vpop.f32.mrf.mxu0
      %v1899 = vadd.f32 0.0, %v1898
      %1900 = vdwg.mxu0
      %v1901 = vadd.f32 %v1835, %v1879
      %v1902 = vadd.f32 %v1836, %v1899
      %1903 = vst [vmem:[#allocation1] ss:$2 sm:$0xff] %v1704
      %v1904 = vld.sshfl [vmem:[#allocation1] sm:$0xff pattern:$0x75316420]
      %v1905 = vld.sshfl [vmem:[#allocation1 + $0x8] sm:$0xff pattern:$0x75316420]
      %1908 = vrot.lane.b32.xlu0 %v1904, 16
      %v1909 = vpop.permute.xlu0 %1908
      %1910 = vrot.lane.b32.xlu0 %v1905, 16
      %v1911 = vpop.permute.xlu0 %1910
      %v1912 = vsel %vm679, %v1909, %v1911
      %v1913 = vsel %vm679, %v1911, %v1909
      %v1914 = vmul.f32 %v1913, %v683
      %v1915 = vmul.f32 %v1912, %v684
      %s1916 = scalar_lea.vmem %s5, 24
      %v1917 = vld [vmem:[%s1916] sm:$0xff]
      %v1919 = vsel %vm477, %v1917, 0
      %v1922 = vsel %vm481, %v1914, 0
      %v1925 = vsel %vm481, %v1915, 0
      %1927 = vmatpush.msra.mxu0 0.0
      %1928 = vmatpush.msra.mxu0 0.0
      %1929 = vmatpush.msra.mxu0 0.0
      %1930 = vmatpush.msra.mxu0 0.0
      %1931 = vmatpush.msra.mxu0 0.0
      %1932 = vmatpush.msra.mxu0 0.0
      %1933 = vmatpush.msra.mxu0 0.0
      %1934 = vmatpush.msra.mxu0 0.0
      %1935 = vmatpush.msra.mxu0 0.0
      %1936 = vmatpush.msra.mxu0 0.0
      %1937 = vmatpush.msra.mxu0 0.0
      %1938 = vmatpush.msra.mxu0 0.0
      %1939 = vmatpush.msra.mxu0 0.0
      %1940 = vmatpush.msra.mxu0 0.0
      %1941 = vmatpush.msra.mxu0 0.0
      %1942 = vmatpush.msra.mxu0 %v1922
      %1943 = vmatmul.f32.gmra.mxu0 %v1919
      %v1944 = vpop.f32.mrf.mxu0
      %v1945 = vadd.f32 0.0, %v1944
      %1946 = vdwg.mxu0
      %1947 = vmatpush.msra.mxu0 0.0
      %1948 = vmatpush.msra.mxu0 0.0
      %1949 = vmatpush.msra.mxu0 0.0
      %1950 = vmatpush.msra.mxu0 0.0
      %1951 = vmatpush.msra.mxu0 0.0
      %1952 = vmatpush.msra.mxu0 0.0
      %1953 = vmatpush.msra.mxu0 0.0
      %1954 = vmatpush.msra.mxu0 0.0
      %1955 = vmatpush.msra.mxu0 0.0
      %1956 = vmatpush.msra.mxu0 0.0
      %1957 = vmatpush.msra.mxu0 0.0
      %1958 = vmatpush.msra.mxu0 0.0
      %1959 = vmatpush.msra.mxu0 0.0
      %1960 = vmatpush.msra.mxu0 0.0
      %1961 = vmatpush.msra.mxu0 0.0
      %1962 = vmatpush.msra.mxu0 %v1925
      %1963 = vmatmul.f32.gmra.mxu0 %v1919
      %v1964 = vpop.f32.mrf.mxu0
      %v1965 = vadd.f32 0.0, %v1964
      %1966 = vdwg.mxu0
      %v1967 = vadd.f32 %v1901, %v1945
      %v1968 = vadd.f32 %v1902, %v1965
      %s1969 = scalar_lea.vmem %s5, 32
      %v1970 = vld [vmem:[%s1969] sm:$0xff]
      %1971 = vst [vmem:[#allocation1] ss:$2 sm:$0xff] %v1704
      %v1972 = vld.sshfl [vmem:[#allocation1] sm:$0xff pattern:$0x75316420]
      %v1973 = vld.sshfl [vmem:[#allocation1 + $0x8] sm:$0xff pattern:$0x75316420]
      %v1975 = vsel %vm477, %v1970, 0
      %v1977 = vsel %vm481, %v1972, 0
      %v1979 = vsel %vm481, %v1973, 0
      %1981 = vmatpush.msra.mxu0 0.0
      %1982 = vmatpush.msra.mxu0 0.0
      %1983 = vmatpush.msra.mxu0 0.0
      %1984 = vmatpush.msra.mxu0 0.0
      %1985 = vmatpush.msra.mxu0 0.0
      %1986 = vmatpush.msra.mxu0 0.0
      %1987 = vmatpush.msra.mxu0 0.0
      %1988 = vmatpush.msra.mxu0 0.0
      %1989 = vmatpush.msra.mxu0 0.0
      %1990 = vmatpush.msra.mxu0 0.0
      %1991 = vmatpush.msra.mxu0 0.0
      %1992 = vmatpush.msra.mxu0 0.0
      %1993 = vmatpush.msra.mxu0 0.0
      %1994 = vmatpush.msra.mxu0 0.0
      %1995 = vmatpush.msra.mxu0 0.0
      %1996 = vmatpush.msra.mxu0 %v1977
      %1997 = vmatmul.f32.gmra.mxu0 %v1975
      %v1998 = vpop.f32.mrf.mxu0
      %v1999 = vadd.f32 0.0, %v1998
      %2000 = vdwg.mxu0
      %2001 = vmatpush.msra.mxu0 0.0
      %2002 = vmatpush.msra.mxu0 0.0
      %2003 = vmatpush.msra.mxu0 0.0
      %2004 = vmatpush.msra.mxu0 0.0
      %2005 = vmatpush.msra.mxu0 0.0
      %2006 = vmatpush.msra.mxu0 0.0
      %2007 = vmatpush.msra.mxu0 0.0
      %2008 = vmatpush.msra.mxu0 0.0
      %2009 = vmatpush.msra.mxu0 0.0
      %2010 = vmatpush.msra.mxu0 0.0
      %2011 = vmatpush.msra.mxu0 0.0
      %2012 = vmatpush.msra.mxu0 0.0
      %2013 = vmatpush.msra.mxu0 0.0
      %2014 = vmatpush.msra.mxu0 0.0
      %2015 = vmatpush.msra.mxu0 0.0
      %2016 = vmatpush.msra.mxu0 %v1979
      %2017 = vmatmul.f32.gmra.mxu0 %v1975
      %v2018 = vpop.f32.mrf.mxu0
      %v2019 = vadd.f32 0.0, %v2018
      %2020 = vdwg.mxu0
      %v2021 = vadd.f32 %v1967, %v1999
      %v2022 = vadd.f32 %v1968, %v2019
      %2023 = vst [vmem:[#allocation1] ss:$2 sm:$0xff] %v1704
      %v2024 = vld.sshfl [vmem:[#allocation1] sm:$0xff pattern:$0x75316420]
      %v2025 = vld.sshfl [vmem:[#allocation1 + $0x8] sm:$0xff pattern:$0x75316420]
      %2028 = vrot.lane.b32.xlu0 %v2024, 112
      %v2029 = vpop.permute.xlu0 %2028
      %2030 = vrot.lane.b32.xlu0 %v2025, 112
      %v2031 = vpop.permute.xlu0 %2030
      %v2032 = vsel %vm803, %v2029, %v2031
      %v2033 = vsel %vm803, %v2031, %v2029
      %v2034 = vmul.f32 %v2032, %v807
      %v2035 = vmul.f32 %v2033, %v808
      %s2036 = scalar_lea.vmem %s5, 40
      %v2037 = vld [vmem:[%s2036] sm:$0xff]
      %v2039 = vsel %vm477, %v2037, 0
      %v2042 = vsel %vm481, %v2034, 0
      %v2045 = vsel %vm481, %v2035, 0
      %2047 = vmatpush.msra.mxu0 0.0
      %2048 = vmatpush.msra.mxu0 0.0
      %2049 = vmatpush.msra.mxu0 0.0
      %2050 = vmatpush.msra.mxu0 0.0
      %2051 = vmatpush.msra.mxu0 0.0
      %2052 = vmatpush.msra.mxu0 0.0
      %2053 = vmatpush.msra.mxu0 0.0
      %2054 = vmatpush.msra.mxu0 0.0
      %2055 = vmatpush.msra.mxu0 0.0
      %2056 = vmatpush.msra.mxu0 0.0
      %2057 = vmatpush.msra.mxu0 0.0
      %2058 = vmatpush.msra.mxu0 0.0
      %2059 = vmatpush.msra.mxu0 0.0
      %2060 = vmatpush.msra.mxu0 0.0
      %2061 = vmatpush.msra.mxu0 0.0
      %2062 = vmatpush.msra.mxu0 %v2042
      %2063 = vmatmul.f32.gmra.mxu0 %v2039
      %v2064 = vpop.f32.mrf.mxu0
      %v2065 = vadd.f32 0.0, %v2064
      %2066 = vdwg.mxu0
      %2067 = vmatpush.msra.mxu0 0.0
      %2068 = vmatpush.msra.mxu0 0.0
      %2069 = vmatpush.msra.mxu0 0.0
      %2070 = vmatpush.msra.mxu0 0.0
      %2071 = vmatpush.msra.mxu0 0.0
      %2072 = vmatpush.msra.mxu0 0.0
      %2073 = vmatpush.msra.mxu0 0.0
      %2074 = vmatpush.msra.mxu0 0.0
      %2075 = vmatpush.msra.mxu0 0.0
      %2076 = vmatpush.msra.mxu0 0.0
      %2077 = vmatpush.msra.mxu0 0.0
      %2078 = vmatpush.msra.mxu0 0.0
      %2079 = vmatpush.msra.mxu0 0.0
      %2080 = vmatpush.msra.mxu0 0.0
      %2081 = vmatpush.msra.mxu0 0.0
      %2082 = vmatpush.msra.mxu0 %v2045
      %2083 = vmatmul.f32.gmra.mxu0 %v2039
      %v2084 = vpop.f32.mrf.mxu0
      %v2085 = vadd.f32 0.0, %v2084
      %2086 = vdwg.mxu0
      %v2087 = vadd.f32 %v2021, %v2065
      %v2088 = vadd.f32 %v2022, %v2085
      %2089 = vst [vmem:[#allocation1] ss:$2 sm:$0xff] %v1704
      %v2090 = vld.sshfl [vmem:[#allocation1] sm:$0xff pattern:$0x75316420]
      %v2091 = vld.sshfl [vmem:[#allocation1 + $0x8] sm:$0xff pattern:$0x75316420]
      %2094 = vrot.lane.b32.xlu0 %v2090, 15
      %v2095 = vpop.permute.xlu0 %2094
      %2096 = vrot.lane.b32.xlu0 %v2091, 15
      %v2097 = vpop.permute.xlu0 %2096
      %v2098 = vsel %vm873, %v2095, %v2097
      %v2099 = vsel %vm873, %v2097, %v2095
      %v2100 = vmul.f32 %v2099, %v877
      %v2101 = vmul.f32 %v2098, %v878
      %s2102 = scalar_lea.vmem %s5, 48
      %v2103 = vld [vmem:[%s2102] sm:$0xff]
      %v2105 = vsel %vm477, %v2103, 0
      %v2108 = vsel %vm481, %v2100, 0
      %v2111 = vsel %vm481, %v2101, 0
      %2113 = vmatpush.msra.mxu0 0.0
      %2114 = vmatpush.msra.mxu0 0.0
      %2115 = vmatpush.msra.mxu0 0.0
      %2116 = vmatpush.msra.mxu0 0.0
      %2117 = vmatpush.msra.mxu0 0.0
      %2118 = vmatpush.msra.mxu0 0.0
      %2119 = vmatpush.msra.mxu0 0.0
      %2120 = vmatpush.msra.mxu0 0.0
      %2121 = vmatpush.msra.mxu0 0.0
      %2122 = vmatpush.msra.mxu0 0.0
      %2123 = vmatpush.msra.mxu0 0.0
      %2124 = vmatpush.msra.mxu0 0.0
      %2125 = vmatpush.msra.mxu0 0.0
      %2126 = vmatpush.msra.mxu0 0.0
      %2127 = vmatpush.msra.mxu0 0.0
      %2128 = vmatpush.msra.mxu0 %v2108
      %2129 = vmatmul.f32.gmra.mxu0 %v2105
      %v2130 = vpop.f32.mrf.mxu0
      %v2131 = vadd.f32 0.0, %v2130
      %2132 = vdwg.mxu0
      %2133 = vmatpush.msra.mxu0 0.0
      %2134 = vmatpush.msra.mxu0 0.0
      %2135 = vmatpush.msra.mxu0 0.0
      %2136 = vmatpush.msra.mxu0 0.0
      %2137 = vmatpush.msra.mxu0 0.0
      %2138 = vmatpush.msra.mxu0 0.0
      %2139 = vmatpush.msra.mxu0 0.0
      %2140 = vmatpush.msra.mxu0 0.0
      %2141 = vmatpush.msra.mxu0 0.0
      %2142 = vmatpush.msra.mxu0 0.0
      %2143 = vmatpush.msra.mxu0 0.0
      %2144 = vmatpush.msra.mxu0 0.0
      %2145 = vmatpush.msra.mxu0 0.0
      %2146 = vmatpush.msra.mxu0 0.0
      %2147 = vmatpush.msra.mxu0 0.0
      %2148 = vmatpush.msra.mxu0 %v2111
      %2149 = vmatmul.f32.gmra.mxu0 %v2105
      %v2150 = vpop.f32.mrf.mxu0
      %v2151 = vadd.f32 0.0, %v2150
      %2152 = vdwg.mxu0
      %v2153 = vadd.f32 %v2087, %v2131
      %v2154 = vadd.f32 %v2088, %v2151
      %2155 = vst [vmem:[#allocation1] ss:$2 sm:$0xff] %v1704
      %v2156 = vld.sshfl [vmem:[#allocation1] sm:$0xff pattern:$0x75316420]
      %v2157 = vld.sshfl [vmem:[#allocation1 + $0x8] sm:$0xff pattern:$0x75316420]
      %2160 = vrot.lane.b32.xlu0 %v2156, 127
      %v2161 = vpop.permute.xlu0 %2160
      %2162 = vrot.lane.b32.xlu0 %v2157, 127
      %v2163 = vpop.permute.xlu0 %2162
      %v2164 = vsel %vm943, %v2161, %v2163
      %v2165 = vsel %vm943, %v2163, %v2161
      %v2166 = vmul.f32 %v2164, %v947
      %v2167 = vmul.f32 %v2165, %v948
      %s2168 = scalar_lea.vmem %s5, 56
      %v2169 = vld [vmem:[%s2168] sm:$0xff]
      %v2171 = vsel %vm477, %v2169, 0
      %v2174 = vsel %vm481, %v2166, 0
      %v2177 = vsel %vm481, %v2167, 0
      %2179 = vmatpush.msra.mxu0 0.0
      %2180 = vmatpush.msra.mxu0 0.0
      %2181 = vmatpush.msra.mxu0 0.0
      %2182 = vmatpush.msra.mxu0 0.0
      %2183 = vmatpush.msra.mxu0 0.0
      %2184 = vmatpush.msra.mxu0 0.0
      %2185 = vmatpush.msra.mxu0 0.0
      %2186 = vmatpush.msra.mxu0 0.0
      %2187 = vmatpush.msra.mxu0 0.0
      %2188 = vmatpush.msra.mxu0 0.0
      %2189 = vmatpush.msra.mxu0 0.0
      %2190 = vmatpush.msra.mxu0 0.0
      %2191 = vmatpush.msra.mxu0 0.0
      %2192 = vmatpush.msra.mxu0 0.0
      %2193 = vmatpush.msra.mxu0 0.0
      %2194 = vmatpush.msra.mxu0 %v2174
      %2195 = vmatmul.f32.gmra.mxu0 %v2171
      %v2196 = vpop.f32.mrf.mxu0
      %v2197 = vadd.f32 0.0, %v2196
      %2198 = vdwg.mxu0
      %2199 = vmatpush.msra.mxu0 0.0
      %2200 = vmatpush.msra.mxu0 0.0
      %2201 = vmatpush.msra.mxu0 0.0
      %2202 = vmatpush.msra.mxu0 0.0
      %2203 = vmatpush.msra.mxu0 0.0
      %2204 = vmatpush.msra.mxu0 0.0
      %2205 = vmatpush.msra.mxu0 0.0
      %2206 = vmatpush.msra.mxu0 0.0
      %2207 = vmatpush.msra.mxu0 0.0
      %2208 = vmatpush.msra.mxu0 0.0
      %2209 = vmatpush.msra.mxu0 0.0
      %2210 = vmatpush.msra.mxu0 0.0
      %2211 = vmatpush.msra.mxu0 0.0
      %2212 = vmatpush.msra.mxu0 0.0
      %2213 = vmatpush.msra.mxu0 0.0
      %2214 = vmatpush.msra.mxu0 %v2177
      %2215 = vmatmul.f32.gmra.mxu0 %v2171
      %v2216 = vpop.f32.mrf.mxu0
      %v2217 = vadd.f32 0.0, %v2216
      %2218 = vdwg.mxu0
      %v2219 = vadd.f32 %v2153, %v2197
      %v2220 = vadd.f32 %v2154, %v2217
      %2221 = vst [vmem:[#allocation1] ss:$2 sm:$0xff] %v1704
      %v2222 = vld.sshfl [vmem:[#allocation1] sm:$0xff pattern:$0x75316420]
      %v2223 = vld.sshfl [vmem:[#allocation1 + $0x8] sm:$0xff pattern:$0x75316420]
      %2226 = vrot.lane.b32.xlu0 %v2222, 111
      %v2227 = vpop.permute.xlu0 %2226
      %2228 = vrot.lane.b32.xlu0 %v2223, 111
      %v2229 = vpop.permute.xlu0 %2228
      %v2230 = vsel %vm1013, %v2227, %v2229
      %v2231 = vsel %vm1013, %v2229, %v2227
      %v2232 = vmul.f32 %v2230, %v1017
      %v2233 = vmul.f32 %v2231, %v1018
      %s2234 = scalar_lea.vmem %s5, 64
      %v2235 = vld [vmem:[%s2234] sm:$0xff]
      %v2237 = vsel %vm477, %v2235, 0
      %v2240 = vsel %vm481, %v2232, 0
      %v2243 = vsel %vm481, %v2233, 0
      %2245 = vmatpush.msra.mxu0 0.0
      %2246 = vmatpush.msra.mxu0 0.0
      %2247 = vmatpush.msra.mxu0 0.0
      %2248 = vmatpush.msra.mxu0 0.0
      %2249 = vmatpush.msra.mxu0 0.0
      %2250 = vmatpush.msra.mxu0 0.0
      %2251 = vmatpush.msra.mxu0 0.0
      %2252 = vmatpush.msra.mxu0 0.0
      %2253 = vmatpush.msra.mxu0 0.0
      %2254 = vmatpush.msra.mxu0 0.0
      %2255 = vmatpush.msra.mxu0 0.0
      %2256 = vmatpush.msra.mxu0 0.0
      %2257 = vmatpush.msra.mxu0 0.0
      %2258 = vmatpush.msra.mxu0 0.0
      %2259 = vmatpush.msra.mxu0 0.0
      %2260 = vmatpush.msra.mxu0 %v2240
      %2261 = vmatmul.f32.gmra.mxu0 %v2237
      %v2262 = vpop.f32.mrf.mxu0
      %v2263 = vadd.f32 0.0, %v2262
      %2264 = vdwg.mxu0
      %2265 = vmatpush.msra.mxu0 0.0
      %2266 = vmatpush.msra.mxu0 0.0
      %2267 = vmatpush.msra.mxu0 0.0
      %2268 = vmatpush.msra.mxu0 0.0
      %2269 = vmatpush.msra.mxu0 0.0
      %2270 = vmatpush.msra.mxu0 0.0
      %2271 = vmatpush.msra.mxu0 0.0
      %2272 = vmatpush.msra.mxu0 0.0
      %2273 = vmatpush.msra.mxu0 0.0
      %2274 = vmatpush.msra.mxu0 0.0
      %2275 = vmatpush.msra.mxu0 0.0
      %2276 = vmatpush.msra.mxu0 0.0
      %2277 = vmatpush.msra.mxu0 0.0
      %2278 = vmatpush.msra.mxu0 0.0
      %2279 = vmatpush.msra.mxu0 0.0
      %2280 = vmatpush.msra.mxu0 %v2243
      %2281 = vmatmul.f32.gmra.mxu0 %v2237
      %v2282 = vpop.f32.mrf.mxu0
      %v2283 = vadd.f32 0.0, %v2282
      %2284 = vdwg.mxu0
      %v2285 = vadd.f32 %v2219, %v2263
      %v2286 = vadd.f32 %v2220, %v2283
      %v2287 = vmax.f32 %v2285, 0.0
      %v2288 = vmax.f32 %v2286, 0.0
      %2289 = vrot.lane.b32.xlu0 %v2287, 17
      %v2290 = vpop.permute.xlu0 %2289
      %2291 = vrot.lane.b32.xlu0 %v2288, 17
      %v2292 = vpop.permute.xlu0 %2291
      %v2293 = vsel %vm469, %v2290, %v2292
      %v2294 = vsel %vm469, %v2292, %v2290
      %v2295 = vld [vmem:[%s2] sm:$0xff]
      %v2296 = vld [vmem:[%s2 + $0x8] sm:$0xff]
      %v2297 = vmul.f32 %v2294, %v2295
      %v2298 = vmul.f32 %v2293, %v2296
      %v2299 = vld [vmem:[%s8] sm:$0xff]
      %vm2300 = vcmask 64512
      %v2302 = vsel %vm2300, %v2299, 0
      %2304 = vmatpush.msra.mxu0 0.0
      %2305 = vmatpush.msra.mxu0 0.0
      %2306 = vmatpush.msra.mxu0 0.0
      %2307 = vmatpush.msra.mxu0 0.0
      %2308 = vmatpush.msra.mxu0 0.0
      %2309 = vmatpush.msra.mxu0 0.0
      %2310 = vmatpush.msra.mxu0 0.0
      %2311 = vmatpush.msra.mxu0 0.0
      %2312 = vmatpush.msra.mxu0 0.0
      %2313 = vmatpush.msra.mxu0 0.0
      %2314 = vmatpush.msra.mxu0 0.0
      %2315 = vmatpush.msra.mxu0 0.0
      %2316 = vmatpush.msra.mxu0 0.0
      %2317 = vmatpush.msra.mxu0 0.0
      %2318 = vmatpush.msra.mxu0 0.0
      %2319 = vmatpush.msra.mxu0 %v2297
      %2320 = vmatmul.f32.gmra.mxu0 %v2302
      %v2321 = vpop.f32.mrf.mxu0
      %v2322 = vadd.f32 0.0, %v2321
      %2323 = vdwg.mxu0
      %2324 = vmatpush.msra.mxu0 0.0
      %2325 = vmatpush.msra.mxu0 0.0
      %2326 = vmatpush.msra.mxu0 0.0
      %2327 = vmatpush.msra.mxu0 0.0
      %2328 = vmatpush.msra.mxu0 0.0
      %2329 = vmatpush.msra.mxu0 0.0
      %2330 = vmatpush.msra.mxu0 0.0
      %2331 = vmatpush.msra.mxu0 0.0
      %2332 = vmatpush.msra.mxu0 0.0
      %2333 = vmatpush.msra.mxu0 0.0
      %2334 = vmatpush.msra.mxu0 0.0
      %2335 = vmatpush.msra.mxu0 0.0
      %2336 = vmatpush.msra.mxu0 0.0
      %2337 = vmatpush.msra.mxu0 0.0
      %2338 = vmatpush.msra.mxu0 0.0
      %2339 = vmatpush.msra.mxu0 %v2298
      %2340 = vmatmul.f32.gmra.mxu0 %v2302
      %v2341 = vpop.f32.mrf.mxu0
      %v2342 = vadd.f32 0.0, %v2341
      %2343 = vdwg.mxu0
      %v2344 = vadd.f32 %v449, %v2322
      %v2345 = vadd.f32 %v449, %v2342
      %2346 = vrot.lane.b32.xlu0 %v2287, 1
      %v2347 = vpop.permute.xlu0 %2346
      %2348 = vrot.lane.b32.xlu0 %v2288, 1
      %v2349 = vpop.permute.xlu0 %2348
      %v2350 = vsel %vm539, %v2347, %v2349
      %v2351 = vsel %vm539, %v2349, %v2347
      %v2352 = vld [vmem:[%s542] sm:$0xff]
      %v2353 = vld [vmem:[%s542 + $0x8] sm:$0xff]
      %v2354 = vmul.f32 %v2351, %v2352
      %v2355 = vmul.f32 %v2350, %v2353
      %s2356 = scalar_lea.vmem %s8, 8
      %v2357 = vld [vmem:[%s2356] sm:$0xff]
      %v2359 = vsel %vm2300, %v2357, 0
      %2361 = vmatpush.msra.mxu0 0.0
      %2362 = vmatpush.msra.mxu0 0.0
      %2363 = vmatpush.msra.mxu0 0.0
      %2364 = vmatpush.msra.mxu0 0.0
      %2365 = vmatpush.msra.mxu0 0.0
      %2366 = vmatpush.msra.mxu0 0.0
      %2367 = vmatpush.msra.mxu0 0.0
      %2368 = vmatpush.msra.mxu0 0.0
      %2369 = vmatpush.msra.mxu0 0.0
      %2370 = vmatpush.msra.mxu0 0.0
      %2371 = vmatpush.msra.mxu0 0.0
      %2372 = vmatpush.msra.mxu0 0.0
      %2373 = vmatpush.msra.mxu0 0.0
      %2374 = vmatpush.msra.mxu0 0.0
      %2375 = vmatpush.msra.mxu0 0.0
      %2376 = vmatpush.msra.mxu0 %v2354
      %2377 = vmatmul.f32.gmra.mxu0 %v2359
      %v2378 = vpop.f32.mrf.mxu0
      %v2379 = vadd.f32 0.0, %v2378
      %2380 = vdwg.mxu0
      %2381 = vmatpush.msra.mxu0 0.0
      %2382 = vmatpush.msra.mxu0 0.0
      %2383 = vmatpush.msra.mxu0 0.0
      %2384 = vmatpush.msra.mxu0 0.0
      %2385 = vmatpush.msra.mxu0 0.0
      %2386 = vmatpush.msra.mxu0 0.0
      %2387 = vmatpush.msra.mxu0 0.0
      %2388 = vmatpush.msra.mxu0 0.0
      %2389 = vmatpush.msra.mxu0 0.0
      %2390 = vmatpush.msra.mxu0 0.0
      %2391 = vmatpush.msra.mxu0 0.0
      %2392 = vmatpush.msra.mxu0 0.0
      %2393 = vmatpush.msra.mxu0 0.0
      %2394 = vmatpush.msra.mxu0 0.0
      %2395 = vmatpush.msra.mxu0 0.0
      %2396 = vmatpush.msra.mxu0 %v2355
      %2397 = vmatmul.f32.gmra.mxu0 %v2359
      %v2398 = vpop.f32.mrf.mxu0
      %v2399 = vadd.f32 0.0, %v2398
      %2400 = vdwg.mxu0
      %v2401 = vadd.f32 %v2344, %v2379
      %v2402 = vadd.f32 %v2345, %v2399
      %2403 = vrot.lane.b32.xlu0 %v2287, 113
      %v2404 = vpop.permute.xlu0 %2403
      %2405 = vrot.lane.b32.xlu0 %v2288, 113
      %v2406 = vpop.permute.xlu0 %2405
      %v2407 = vsel %vm609, %v2404, %v2406
      %v2408 = vsel %vm609, %v2406, %v2404
      %v2409 = vld [vmem:[%s612] sm:$0xff]
      %v2410 = vld [vmem:[%s612 + $0x8] sm:$0xff]
      %v2411 = vmul.f32 %v2407, %v2409
      %v2412 = vmul.f32 %v2408, %v2410
      %s2413 = scalar_lea.vmem %s8, 16
      %v2414 = vld [vmem:[%s2413] sm:$0xff]
      %v2416 = vsel %vm2300, %v2414, 0
      %2418 = vmatpush.msra.mxu0 0.0
      %2419 = vmatpush.msra.mxu0 0.0
      %2420 = vmatpush.msra.mxu0 0.0
      %2421 = vmatpush.msra.mxu0 0.0
      %2422 = vmatpush.msra.mxu0 0.0
      %2423 = vmatpush.msra.mxu0 0.0
      %2424 = vmatpush.msra.mxu0 0.0
      %2425 = vmatpush.msra.mxu0 0.0
      %2426 = vmatpush.msra.mxu0 0.0
      %2427 = vmatpush.msra.mxu0 0.0
      %2428 = vmatpush.msra.mxu0 0.0
      %2429 = vmatpush.msra.mxu0 0.0
      %2430 = vmatpush.msra.mxu0 0.0
      %2431 = vmatpush.msra.mxu0 0.0
      %2432 = vmatpush.msra.mxu0 0.0
      %2433 = vmatpush.msra.mxu0 %v2411
      %2434 = vmatmul.f32.gmra.mxu0 %v2416
      %v2435 = vpop.f32.mrf.mxu0
      %v2436 = vadd.f32 0.0, %v2435
      %2437 = vdwg.mxu0
      %2438 = vmatpush.msra.mxu0 0.0
      %2439 = vmatpush.msra.mxu0 0.0
      %2440 = vmatpush.msra.mxu0 0.0
      %2441 = vmatpush.msra.mxu0 0.0
      %2442 = vmatpush.msra.mxu0 0.0
      %2443 = vmatpush.msra.mxu0 0.0
      %2444 = vmatpush.msra.mxu0 0.0
      %2445 = vmatpush.msra.mxu0 0.0
      %2446 = vmatpush.msra.mxu0 0.0
      %2447 = vmatpush.msra.mxu0 0.0
      %2448 = vmatpush.msra.mxu0 0.0
      %2449 = vmatpush.msra.mxu0 0.0
      %2450 = vmatpush.msra.mxu0 0.0
      %2451 = vmatpush.msra.mxu0 0.0
      %2452 = vmatpush.msra.mxu0 0.0
      %2453 = vmatpush.msra.mxu0 %v2412
      %2454 = vmatmul.f32.gmra.mxu0 %v2416
      %v2455 = vpop.f32.mrf.mxu0
      %v2456 = vadd.f32 0.0, %v2455
      %2457 = vdwg.mxu0
      %v2458 = vadd.f32 %v2401, %v2436
      %v2459 = vadd.f32 %v2402, %v2456
      %2460 = vrot.lane.b32.xlu0 %v2287, 16
      %v2461 = vpop.permute.xlu0 %2460
      %2462 = vrot.lane.b32.xlu0 %v2288, 16
      %v2463 = vpop.permute.xlu0 %2462
      %v2464 = vsel %vm679, %v2461, %v2463
      %v2465 = vsel %vm679, %v2463, %v2461
      %v2466 = vld [vmem:[%s682] sm:$0xff]
      %v2467 = vld [vmem:[%s682 + $0x8] sm:$0xff]
      %v2468 = vmul.f32 %v2465, %v2466
      %v2469 = vmul.f32 %v2464, %v2467
      %s2470 = scalar_lea.vmem %s8, 24
      %v2471 = vld [vmem:[%s2470] sm:$0xff]
      %v2473 = vsel %vm2300, %v2471, 0
      %2475 = vmatpush.msra.mxu0 0.0
      %2476 = vmatpush.msra.mxu0 0.0
      %2477 = vmatpush.msra.mxu0 0.0
      %2478 = vmatpush.msra.mxu0 0.0
      %2479 = vmatpush.msra.mxu0 0.0
      %2480 = vmatpush.msra.mxu0 0.0
      %2481 = vmatpush.msra.mxu0 0.0
      %2482 = vmatpush.msra.mxu0 0.0
      %2483 = vmatpush.msra.mxu0 0.0
      %2484 = vmatpush.msra.mxu0 0.0
      %2485 = vmatpush.msra.mxu0 0.0
      %2486 = vmatpush.msra.mxu0 0.0
      %2487 = vmatpush.msra.mxu0 0.0
      %2488 = vmatpush.msra.mxu0 0.0
      %2489 = vmatpush.msra.mxu0 0.0
      %2490 = vmatpush.msra.mxu0 %v2468
      %2491 = vmatmul.f32.gmra.mxu0 %v2473
      %v2492 = vpop.f32.mrf.mxu0
      %v2493 = vadd.f32 0.0, %v2492
      %2494 = vdwg.mxu0
      %2495 = vmatpush.msra.mxu0 0.0
      %2496 = vmatpush.msra.mxu0 0.0
      %2497 = vmatpush.msra.mxu0 0.0
      %2498 = vmatpush.msra.mxu0 0.0
      %2499 = vmatpush.msra.mxu0 0.0
      %2500 = vmatpush.msra.mxu0 0.0
      %2501 = vmatpush.msra.mxu0 0.0
      %2502 = vmatpush.msra.mxu0 0.0
      %2503 = vmatpush.msra.mxu0 0.0
      %2504 = vmatpush.msra.mxu0 0.0
      %2505 = vmatpush.msra.mxu0 0.0
      %2506 = vmatpush.msra.mxu0 0.0
      %2507 = vmatpush.msra.mxu0 0.0
      %2508 = vmatpush.msra.mxu0 0.0
      %2509 = vmatpush.msra.mxu0 0.0
      %2510 = vmatpush.msra.mxu0 %v2469
      %2511 = vmatmul.f32.gmra.mxu0 %v2473
      %v2512 = vpop.f32.mrf.mxu0
      %v2513 = vadd.f32 0.0, %v2512
      %2514 = vdwg.mxu0
      %v2515 = vadd.f32 %v2458, %v2493
      %v2516 = vadd.f32 %v2459, %v2513
      %s2517 = scalar_lea.vmem %s8, 32
      %v2518 = vld [vmem:[%s2517] sm:$0xff]
      %v2520 = vsel %vm2300, %v2518, 0
      %2522 = vmatpush.msra.mxu0 0.0
      %2523 = vmatpush.msra.mxu0 0.0
      %2524 = vmatpush.msra.mxu0 0.0
      %2525 = vmatpush.msra.mxu0 0.0
      %2526 = vmatpush.msra.mxu0 0.0
      %2527 = vmatpush.msra.mxu0 0.0
      %2528 = vmatpush.msra.mxu0 0.0
      %2529 = vmatpush.msra.mxu0 0.0
      %2530 = vmatpush.msra.mxu0 0.0
      %2531 = vmatpush.msra.mxu0 0.0
      %2532 = vmatpush.msra.mxu0 0.0
      %2533 = vmatpush.msra.mxu0 0.0
      %2534 = vmatpush.msra.mxu0 0.0
      %2535 = vmatpush.msra.mxu0 0.0
      %2536 = vmatpush.msra.mxu0 0.0
      %2537 = vmatpush.msra.mxu0 %v2287
      %2538 = vmatmul.f32.gmra.mxu0 %v2520
      %v2539 = vpop.f32.mrf.mxu0
      %v2540 = vadd.f32 0.0, %v2539
      %2541 = vdwg.mxu0
      %2542 = vmatpush.msra.mxu0 0.0
      %2543 = vmatpush.msra.mxu0 0.0
      %2544 = vmatpush.msra.mxu0 0.0
      %2545 = vmatpush.msra.mxu0 0.0
      %2546 = vmatpush.msra.mxu0 0.0
      %2547 = vmatpush.msra.mxu0 0.0
      %2548 = vmatpush.msra.mxu0 0.0
      %2549 = vmatpush.msra.mxu0 0.0
      %2550 = vmatpush.msra.mxu0 0.0
      %2551 = vmatpush.msra.mxu0 0.0
      %2552 = vmatpush.msra.mxu0 0.0
      %2553 = vmatpush.msra.mxu0 0.0
      %2554 = vmatpush.msra.mxu0 0.0
      %2555 = vmatpush.msra.mxu0 0.0
      %2556 = vmatpush.msra.mxu0 0.0
      %2557 = vmatpush.msra.mxu0 %v2288
      %2558 = vmatmul.f32.gmra.mxu0 %v2520
      %v2559 = vpop.f32.mrf.mxu0
      %v2560 = vadd.f32 0.0, %v2559
      %2561 = vdwg.mxu0
      %v2562 = vadd.f32 %v2515, %v2540
      %v2563 = vadd.f32 %v2516, %v2560
      %2564 = vrot.lane.b32.xlu0 %v2287, 112
      %v2565 = vpop.permute.xlu0 %2564
      %2566 = vrot.lane.b32.xlu0 %v2288, 112
      %v2567 = vpop.permute.xlu0 %2566
      %v2568 = vsel %vm803, %v2565, %v2567
      %v2569 = vsel %vm803, %v2567, %v2565
      %v2570 = vld [vmem:[%s806] sm:$0xff]
      %v2571 = vld [vmem:[%s806 + $0x8] sm:$0xff]
      %v2572 = vmul.f32 %v2568, %v2570
      %v2573 = vmul.f32 %v2569, %v2571
      %s2574 = scalar_lea.vmem %s8, 40
      %v2575 = vld [vmem:[%s2574] sm:$0xff]
      %v2577 = vsel %vm2300, %v2575, 0
      %2579 = vmatpush.msra.mxu0 0.0
      %2580 = vmatpush.msra.mxu0 0.0
      %2581 = vmatpush.msra.mxu0 0.0
      %2582 = vmatpush.msra.mxu0 0.0
      %2583 = vmatpush.msra.mxu0 0.0
      %2584 = vmatpush.msra.mxu0 0.0
      %2585 = vmatpush.msra.mxu0 0.0
      %2586 = vmatpush.msra.mxu0 0.0
      %2587 = vmatpush.msra.mxu0 0.0
      %2588 = vmatpush.msra.mxu0 0.0
      %2589 = vmatpush.msra.mxu0 0.0
      %2590 = vmatpush.msra.mxu0 0.0
      %2591 = vmatpush.msra.mxu0 0.0
      %2592 = vmatpush.msra.mxu0 0.0
      %2593 = vmatpush.msra.mxu0 0.0
      %2594 = vmatpush.msra.mxu0 %v2572
      %2595 = vmatmul.f32.gmra.mxu0 %v2577
      %v2596 = vpop.f32.mrf.mxu0
      %v2597 = vadd.f32 0.0, %v2596
      %2598 = vdwg.mxu0
      %2599 = vmatpush.msra.mxu0 0.0
      %2600 = vmatpush.msra.mxu0 0.0
      %2601 = vmatpush.msra.mxu0 0.0
      %2602 = vmatpush.msra.mxu0 0.0
      %2603 = vmatpush.msra.mxu0 0.0
      %2604 = vmatpush.msra.mxu0 0.0
      %2605 = vmatpush.msra.mxu0 0.0
      %2606 = vmatpush.msra.mxu0 0.0
      %2607 = vmatpush.msra.mxu0 0.0
      %2608 = vmatpush.msra.mxu0 0.0
      %2609 = vmatpush.msra.mxu0 0.0
      %2610 = vmatpush.msra.mxu0 0.0
      %2611 = vmatpush.msra.mxu0 0.0
      %2612 = vmatpush.msra.mxu0 0.0
      %2613 = vmatpush.msra.mxu0 0.0
      %2614 = vmatpush.msra.mxu0 %v2573
      %2615 = vmatmul.f32.gmra.mxu0 %v2577
      %v2616 = vpop.f32.mrf.mxu0
      %v2617 = vadd.f32 0.0, %v2616
      %2618 = vdwg.mxu0
      %v2619 = vadd.f32 %v2562, %v2597
      %v2620 = vadd.f32 %v2563, %v2617
      %2621 = vrot.lane.b32.xlu0 %v2287, 15
      %v2622 = vpop.permute.xlu0 %2621
      %2623 = vrot.lane.b32.xlu0 %v2288, 15
      %v2624 = vpop.permute.xlu0 %2623
      %v2625 = vsel %vm873, %v2622, %v2624
      %v2626 = vsel %vm873, %v2624, %v2622
      %v2627 = vld [vmem:[%s876] sm:$0xff]
      %v2628 = vld [vmem:[%s876 + $0x8] sm:$0xff]
      %v2629 = vmul.f32 %v2626, %v2627
      %v2630 = vmul.f32 %v2625, %v2628
      %s2631 = scalar_lea.vmem %s8, 48
      %v2632 = vld [vmem:[%s2631] sm:$0xff]
      %v2634 = vsel %vm2300, %v2632, 0
      %2636 = vmatpush.msra.mxu0 0.0
      %2637 = vmatpush.msra.mxu0 0.0
      %2638 = vmatpush.msra.mxu0 0.0
      %2639 = vmatpush.msra.mxu0 0.0
      %2640 = vmatpush.msra.mxu0 0.0
      %2641 = vmatpush.msra.mxu0 0.0
      %2642 = vmatpush.msra.mxu0 0.0
      %2643 = vmatpush.msra.mxu0 0.0
      %2644 = vmatpush.msra.mxu0 0.0
      %2645 = vmatpush.msra.mxu0 0.0
      %2646 = vmatpush.msra.mxu0 0.0
      %2647 = vmatpush.msra.mxu0 0.0
      %2648 = vmatpush.msra.mxu0 0.0
      %2649 = vmatpush.msra.mxu0 0.0
      %2650 = vmatpush.msra.mxu0 0.0
      %2651 = vmatpush.msra.mxu0 %v2629
      %2652 = vmatmul.f32.gmra.mxu0 %v2634
      %v2653 = vpop.f32.mrf.mxu0
      %v2654 = vadd.f32 0.0, %v2653
      %2655 = vdwg.mxu0
      %2656 = vmatpush.msra.mxu0 0.0
      %2657 = vmatpush.msra.mxu0 0.0
      %2658 = vmatpush.msra.mxu0 0.0
      %2659 = vmatpush.msra.mxu0 0.0
      %2660 = vmatpush.msra.mxu0 0.0
      %2661 = vmatpush.msra.mxu0 0.0
      %2662 = vmatpush.msra.mxu0 0.0
      %2663 = vmatpush.msra.mxu0 0.0
      %2664 = vmatpush.msra.mxu0 0.0
      %2665 = vmatpush.msra.mxu0 0.0
      %2666 = vmatpush.msra.mxu0 0.0
      %2667 = vmatpush.msra.mxu0 0.0
      %2668 = vmatpush.msra.mxu0 0.0
      %2669 = vmatpush.msra.mxu0 0.0
      %2670 = vmatpush.msra.mxu0 0.0
      %2671 = vmatpush.msra.mxu0 %v2630
      %2672 = vmatmul.f32.gmra.mxu0 %v2634
      %v2673 = vpop.f32.mrf.mxu0
      %v2674 = vadd.f32 0.0, %v2673
      %2675 = vdwg.mxu0
      %v2676 = vadd.f32 %v2619, %v2654
      %v2677 = vadd.f32 %v2620, %v2674
      %2678 = vrot.lane.b32.xlu0 %v2287, 127
      %v2679 = vpop.permute.xlu0 %2678
      %2680 = vrot.lane.b32.xlu0 %v2288, 127
      %v2681 = vpop.permute.xlu0 %2680
      %v2682 = vsel %vm943, %v2679, %v2681
      %v2683 = vsel %vm943, %v2681, %v2679
      %v2684 = vld [vmem:[%s946] sm:$0xff]
      %v2685 = vld [vmem:[%s946 + $0x8] sm:$0xff]
      %v2686 = vmul.f32 %v2682, %v2684
      %v2687 = vmul.f32 %v2683, %v2685
      %s2688 = scalar_lea.vmem %s8, 56
      %v2689 = vld [vmem:[%s2688] sm:$0xff]
      %v2691 = vsel %vm2300, %v2689, 0
      %2693 = vmatpush.msra.mxu0 0.0
      %2694 = vmatpush.msra.mxu0 0.0
      %2695 = vmatpush.msra.mxu0 0.0
      %2696 = vmatpush.msra.mxu0 0.0
      %2697 = vmatpush.msra.mxu0 0.0
      %2698 = vmatpush.msra.mxu0 0.0
      %2699 = vmatpush.msra.mxu0 0.0
      %2700 = vmatpush.msra.mxu0 0.0
      %2701 = vmatpush.msra.mxu0 0.0
      %2702 = vmatpush.msra.mxu0 0.0
      %2703 = vmatpush.msra.mxu0 0.0
      %2704 = vmatpush.msra.mxu0 0.0
      %2705 = vmatpush.msra.mxu0 0.0
      %2706 = vmatpush.msra.mxu0 0.0
      %2707 = vmatpush.msra.mxu0 0.0
      %2708 = vmatpush.msra.mxu0 %v2686
      %2709 = vmatmul.f32.gmra.mxu0 %v2691
      %v2710 = vpop.f32.mrf.mxu0
      %v2711 = vadd.f32 0.0, %v2710
      %2712 = vdwg.mxu0
      %2713 = vmatpush.msra.mxu0 0.0
      %2714 = vmatpush.msra.mxu0 0.0
      %2715 = vmatpush.msra.mxu0 0.0
      %2716 = vmatpush.msra.mxu0 0.0
      %2717 = vmatpush.msra.mxu0 0.0
      %2718 = vmatpush.msra.mxu0 0.0
      %2719 = vmatpush.msra.mxu0 0.0
      %2720 = vmatpush.msra.mxu0 0.0
      %2721 = vmatpush.msra.mxu0 0.0
      %2722 = vmatpush.msra.mxu0 0.0
      %2723 = vmatpush.msra.mxu0 0.0
      %2724 = vmatpush.msra.mxu0 0.0
      %2725 = vmatpush.msra.mxu0 0.0
      %2726 = vmatpush.msra.mxu0 0.0
      %2727 = vmatpush.msra.mxu0 0.0
      %2728 = vmatpush.msra.mxu0 %v2687
      %2729 = vmatmul.f32.gmra.mxu0 %v2691
      %v2730 = vpop.f32.mrf.mxu0
      %v2731 = vadd.f32 0.0, %v2730
      %2732 = vdwg.mxu0
      %v2733 = vadd.f32 %v2676, %v2711
      %v2734 = vadd.f32 %v2677, %v2731
      %2735 = vrot.lane.b32.xlu0 %v2287, 111
      %v2736 = vpop.permute.xlu0 %2735
      %2737 = vrot.lane.b32.xlu0 %v2288, 111
      %v2738 = vpop.permute.xlu0 %2737
      %v2739 = vsel %vm1013, %v2736, %v2738
      %v2740 = vsel %vm1013, %v2738, %v2736
      %v2741 = vld [vmem:[%s1016] sm:$0xff]
      %v2742 = vld [vmem:[%s1016 + $0x8] sm:$0xff]
      %v2743 = vmul.f32 %v2739, %v2741
      %v2744 = vmul.f32 %v2740, %v2742
      %s2745 = scalar_lea.vmem %s8, 64
      %v2746 = vld [vmem:[%s2745] sm:$0xff]
      %v2748 = vsel %vm2300, %v2746, 0
      %2750 = vmatpush.msra.mxu0 0.0
      %2751 = vmatpush.msra.mxu0 0.0
      %2752 = vmatpush.msra.mxu0 0.0
      %2753 = vmatpush.msra.mxu0 0.0
      %2754 = vmatpush.msra.mxu0 0.0
      %2755 = vmatpush.msra.mxu0 0.0
      %2756 = vmatpush.msra.mxu0 0.0
      %2757 = vmatpush.msra.mxu0 0.0
      %2758 = vmatpush.msra.mxu0 0.0
      %2759 = vmatpush.msra.mxu0 0.0
      %2760 = vmatpush.msra.mxu0 0.0
      %2761 = vmatpush.msra.mxu0 0.0
      %2762 = vmatpush.msra.mxu0 0.0
      %2763 = vmatpush.msra.mxu0 0.0
      %2764 = vmatpush.msra.mxu0 0.0
      %2765 = vmatpush.msra.mxu0 %v2743
      %2766 = vmatmul.f32.gmra.mxu0 %v2748
      %v2767 = vpop.f32.mrf.mxu0
      %v2768 = vadd.f32 0.0, %v2767
      %2769 = vdwg.mxu0
      %2770 = vmatpush.msra.mxu0 0.0
      %2771 = vmatpush.msra.mxu0 0.0
      %2772 = vmatpush.msra.mxu0 0.0
      %2773 = vmatpush.msra.mxu0 0.0
      %2774 = vmatpush.msra.mxu0 0.0
      %2775 = vmatpush.msra.mxu0 0.0
      %2776 = vmatpush.msra.mxu0 0.0
      %2777 = vmatpush.msra.mxu0 0.0
      %2778 = vmatpush.msra.mxu0 0.0
      %2779 = vmatpush.msra.mxu0 0.0
      %2780 = vmatpush.msra.mxu0 0.0
      %2781 = vmatpush.msra.mxu0 0.0
      %2782 = vmatpush.msra.mxu0 0.0
      %2783 = vmatpush.msra.mxu0 0.0
      %2784 = vmatpush.msra.mxu0 0.0
      %2785 = vmatpush.msra.mxu0 %v2744
      %2786 = vmatmul.f32.gmra.mxu0 %v2748
      %v2787 = vpop.f32.mrf.mxu0
      %v2788 = vadd.f32 0.0, %v2787
      %2789 = vdwg.mxu0
      %v2790 = vadd.f32 %v2733, %v2768
      %v2791 = vadd.f32 %v2734, %v2788
      %v2792 = vmax.f32 %v2790, 0.0
      %v2793 = vmax.f32 %v2791, 0.0
      %2794 = vrot.lane.b32.xlu0 %v2792, 17
      %v2795 = vpop.permute.xlu0 %2794
      %2796 = vrot.lane.b32.xlu0 %v2793, 17
      %v2797 = vpop.permute.xlu0 %2796
      %v2798 = vsel %vm469, %v2795, %v2797
      %v2799 = vsel %vm469, %v2797, %v2795
      %v2800 = vmul.f32 %v2799, %v2295
      %v2801 = vmul.f32 %v2798, %v2296
      %v2802 = vld [vmem:[%s10] sm:$0xf]
      %v2804 = vsel %vm2300, %v2802, 0
      %2806 = vmatpush.msra.mxu0 0.0
      %2807 = vmatpush.msra.mxu0 0.0
      %2808 = vmatpush.msra.mxu0 0.0
      %2809 = vmatpush.msra.mxu0 0.0
      %2810 = vmatpush.msra.mxu0 0.0
      %2811 = vmatpush.msra.mxu0 0.0
      %2812 = vmatpush.msra.mxu0 0.0
      %2813 = vmatpush.msra.mxu0 0.0
      %2814 = vmatpush.msra.mxu0 0.0
      %2815 = vmatpush.msra.mxu0 0.0
      %2816 = vmatpush.msra.mxu0 0.0
      %2817 = vmatpush.msra.mxu0 0.0
      %2818 = vmatpush.msra.mxu0 0.0
      %2819 = vmatpush.msra.mxu0 0.0
      %2820 = vmatpush.msra.mxu0 0.0
      %2821 = vmatpush.msra.mxu0 %v2800
      %2822 = vmatmul.f32.gmra.mxu0 %v2804
      %v2823 = vpop.f32.mrf.mxu0
      %v2824 = vadd.f32 0.0, %v2823
      %2825 = vdwg.mxu0
      %2826 = vmatpush.msra.mxu0 0.0
      %2827 = vmatpush.msra.mxu0 0.0
      %2828 = vmatpush.msra.mxu0 0.0
      %2829 = vmatpush.msra.mxu0 0.0
      %2830 = vmatpush.msra.mxu0 0.0
      %2831 = vmatpush.msra.mxu0 0.0
      %2832 = vmatpush.msra.mxu0 0.0
      %2833 = vmatpush.msra.mxu0 0.0
      %2834 = vmatpush.msra.mxu0 0.0
      %2835 = vmatpush.msra.mxu0 0.0
      %2836 = vmatpush.msra.mxu0 0.0
      %2837 = vmatpush.msra.mxu0 0.0
      %2838 = vmatpush.msra.mxu0 0.0
      %2839 = vmatpush.msra.mxu0 0.0
      %2840 = vmatpush.msra.mxu0 0.0
      %2841 = vmatpush.msra.mxu0 %v2801
      %2842 = vmatmul.f32.gmra.mxu0 %v2804
      %v2843 = vpop.f32.mrf.mxu0
      %v2844 = vadd.f32 0.0, %v2843
      %2845 = vdwg.mxu0
      %v2846 = vadd.f32 %v455, %v2824
      %v2847 = vadd.f32 %v455, %v2844
      %2848 = vrot.lane.b32.xlu0 %v2792, 1
      %v2849 = vpop.permute.xlu0 %2848
      %2850 = vrot.lane.b32.xlu0 %v2793, 1
      %v2851 = vpop.permute.xlu0 %2850
      %v2852 = vsel %vm539, %v2849, %v2851
      %v2853 = vsel %vm539, %v2851, %v2849
      %v2854 = vmul.f32 %v2853, %v2352
      %v2855 = vmul.f32 %v2852, %v2353
      %s2856 = scalar_lea.vmem %s10, 4
      %v2857 = vld [vmem:[%s2856] sm:$0xf]
      %v2859 = vsel %vm2300, %v2857, 0
      %2861 = vmatpush.msra.mxu0 0.0
      %2862 = vmatpush.msra.mxu0 0.0
      %2863 = vmatpush.msra.mxu0 0.0
      %2864 = vmatpush.msra.mxu0 0.0
      %2865 = vmatpush.msra.mxu0 0.0
      %2866 = vmatpush.msra.mxu0 0.0
      %2867 = vmatpush.msra.mxu0 0.0
      %2868 = vmatpush.msra.mxu0 0.0
      %2869 = vmatpush.msra.mxu0 0.0
      %2870 = vmatpush.msra.mxu0 0.0
      %2871 = vmatpush.msra.mxu0 0.0
      %2872 = vmatpush.msra.mxu0 0.0
      %2873 = vmatpush.msra.mxu0 0.0
      %2874 = vmatpush.msra.mxu0 0.0
      %2875 = vmatpush.msra.mxu0 0.0
      %2876 = vmatpush.msra.mxu0 %v2854
      %2877 = vmatmul.f32.gmra.mxu0 %v2859
      %v2878 = vpop.f32.mrf.mxu0
      %v2879 = vadd.f32 0.0, %v2878
      %2880 = vdwg.mxu0
      %2881 = vmatpush.msra.mxu0 0.0
      %2882 = vmatpush.msra.mxu0 0.0
      %2883 = vmatpush.msra.mxu0 0.0
      %2884 = vmatpush.msra.mxu0 0.0
      %2885 = vmatpush.msra.mxu0 0.0
      %2886 = vmatpush.msra.mxu0 0.0
      %2887 = vmatpush.msra.mxu0 0.0
      %2888 = vmatpush.msra.mxu0 0.0
      %2889 = vmatpush.msra.mxu0 0.0
      %2890 = vmatpush.msra.mxu0 0.0
      %2891 = vmatpush.msra.mxu0 0.0
      %2892 = vmatpush.msra.mxu0 0.0
      %2893 = vmatpush.msra.mxu0 0.0
      %2894 = vmatpush.msra.mxu0 0.0
      %2895 = vmatpush.msra.mxu0 0.0
      %2896 = vmatpush.msra.mxu0 %v2855
      %2897 = vmatmul.f32.gmra.mxu0 %v2859
      %v2898 = vpop.f32.mrf.mxu0
      %v2899 = vadd.f32 0.0, %v2898
      %2900 = vdwg.mxu0
      %v2901 = vadd.f32 %v2846, %v2879
      %v2902 = vadd.f32 %v2847, %v2899
      %2903 = vrot.lane.b32.xlu0 %v2792, 113
      %v2904 = vpop.permute.xlu0 %2903
      %2905 = vrot.lane.b32.xlu0 %v2793, 113
      %v2906 = vpop.permute.xlu0 %2905
      %v2907 = vsel %vm609, %v2904, %v2906
      %v2908 = vsel %vm609, %v2906, %v2904
      %v2909 = vmul.f32 %v2907, %v2409
      %v2910 = vmul.f32 %v2908, %v2410
      %s2911 = scalar_lea.vmem %s10, 8
      %v2912 = vld [vmem:[%s2911] sm:$0xf]
      %v2914 = vsel %vm2300, %v2912, 0
      %2916 = vmatpush.msra.mxu0 0.0
      %2917 = vmatpush.msra.mxu0 0.0
      %2918 = vmatpush.msra.mxu0 0.0
      %2919 = vmatpush.msra.mxu0 0.0
      %2920 = vmatpush.msra.mxu0 0.0
      %2921 = vmatpush.msra.mxu0 0.0
      %2922 = vmatpush.msra.mxu0 0.0
      %2923 = vmatpush.msra.mxu0 0.0
      %2924 = vmatpush.msra.mxu0 0.0
      %2925 = vmatpush.msra.mxu0 0.0
      %2926 = vmatpush.msra.mxu0 0.0
      %2927 = vmatpush.msra.mxu0 0.0
      %2928 = vmatpush.msra.mxu0 0.0
      %2929 = vmatpush.msra.mxu0 0.0
      %2930 = vmatpush.msra.mxu0 0.0
      %2931 = vmatpush.msra.mxu0 %v2909
      %2932 = vmatmul.f32.gmra.mxu0 %v2914
      %v2933 = vpop.f32.mrf.mxu0
      %v2934 = vadd.f32 0.0, %v2933
      %2935 = vdwg.mxu0
      %2936 = vmatpush.msra.mxu0 0.0
      %2937 = vmatpush.msra.mxu0 0.0
      %2938 = vmatpush.msra.mxu0 0.0
      %2939 = vmatpush.msra.mxu0 0.0
      %2940 = vmatpush.msra.mxu0 0.0
      %2941 = vmatpush.msra.mxu0 0.0
      %2942 = vmatpush.msra.mxu0 0.0
      %2943 = vmatpush.msra.mxu0 0.0
      %2944 = vmatpush.msra.mxu0 0.0
      %2945 = vmatpush.msra.mxu0 0.0
      %2946 = vmatpush.msra.mxu0 0.0
      %2947 = vmatpush.msra.mxu0 0.0
      %2948 = vmatpush.msra.mxu0 0.0
      %2949 = vmatpush.msra.mxu0 0.0
      %2950 = vmatpush.msra.mxu0 0.0
      %2951 = vmatpush.msra.mxu0 %v2910
      %2952 = vmatmul.f32.gmra.mxu0 %v2914
      %v2953 = vpop.f32.mrf.mxu0
      %v2954 = vadd.f32 0.0, %v2953
      %2955 = vdwg.mxu0
      %v2956 = vadd.f32 %v2901, %v2934
      %v2957 = vadd.f32 %v2902, %v2954
      %2958 = vrot.lane.b32.xlu0 %v2792, 16
      %v2959 = vpop.permute.xlu0 %2958
      %2960 = vrot.lane.b32.xlu0 %v2793, 16
      %v2961 = vpop.permute.xlu0 %2960
      %v2962 = vsel %vm679, %v2959, %v2961
      %v2963 = vsel %vm679, %v2961, %v2959
      %v2964 = vmul.f32 %v2963, %v2466
      %v2965 = vmul.f32 %v2962, %v2467
      %s2966 = scalar_lea.vmem %s10, 12
      %v2967 = vld [vmem:[%s2966] sm:$0xf]
      %v2969 = vsel %vm2300, %v2967, 0
      %2971 = vmatpush.msra.mxu0 0.0
      %2972 = vmatpush.msra.mxu0 0.0
      %2973 = vmatpush.msra.mxu0 0.0
      %2974 = vmatpush.msra.mxu0 0.0
      %2975 = vmatpush.msra.mxu0 0.0
      %2976 = vmatpush.msra.mxu0 0.0
      %2977 = vmatpush.msra.mxu0 0.0
      %2978 = vmatpush.msra.mxu0 0.0
      %2979 = vmatpush.msra.mxu0 0.0
      %2980 = vmatpush.msra.mxu0 0.0
      %2981 = vmatpush.msra.mxu0 0.0
      %2982 = vmatpush.msra.mxu0 0.0
      %2983 = vmatpush.msra.mxu0 0.0
      %2984 = vmatpush.msra.mxu0 0.0
      %2985 = vmatpush.msra.mxu0 0.0
      %2986 = vmatpush.msra.mxu0 %v2964
      %2987 = vmatmul.f32.gmra.mxu0 %v2969
      %v2988 = vpop.f32.mrf.mxu0
      %v2989 = vadd.f32 0.0, %v2988
      %2990 = vdwg.mxu0
      %2991 = vmatpush.msra.mxu0 0.0
      %2992 = vmatpush.msra.mxu0 0.0
      %2993 = vmatpush.msra.mxu0 0.0
      %2994 = vmatpush.msra.mxu0 0.0
      %2995 = vmatpush.msra.mxu0 0.0
      %2996 = vmatpush.msra.mxu0 0.0
      %2997 = vmatpush.msra.mxu0 0.0
      %2998 = vmatpush.msra.mxu0 0.0
      %2999 = vmatpush.msra.mxu0 0.0
      %3000 = vmatpush.msra.mxu0 0.0
      %3001 = vmatpush.msra.mxu0 0.0
      %3002 = vmatpush.msra.mxu0 0.0
      %3003 = vmatpush.msra.mxu0 0.0
      %3004 = vmatpush.msra.mxu0 0.0
      %3005 = vmatpush.msra.mxu0 0.0
      %3006 = vmatpush.msra.mxu0 %v2965
      %3007 = vmatmul.f32.gmra.mxu0 %v2969
      %v3008 = vpop.f32.mrf.mxu0
      %v3009 = vadd.f32 0.0, %v3008
      %3010 = vdwg.mxu0
      %v3011 = vadd.f32 %v2956, %v2989
      %v3012 = vadd.f32 %v2957, %v3009
      %s3013 = scalar_lea.vmem %s10, 16
      %v3014 = vld [vmem:[%s3013] sm:$0xf]
      %v3016 = vsel %vm2300, %v3014, 0
      %3018 = vmatpush.msra.mxu0 0.0
      %3019 = vmatpush.msra.mxu0 0.0
      %3020 = vmatpush.msra.mxu0 0.0
      %3021 = vmatpush.msra.mxu0 0.0
      %3022 = vmatpush.msra.mxu0 0.0
      %3023 = vmatpush.msra.mxu0 0.0
      %3024 = vmatpush.msra.mxu0 0.0
      %3025 = vmatpush.msra.mxu0 0.0
      %3026 = vmatpush.msra.mxu0 0.0
      %3027 = vmatpush.msra.mxu0 0.0
      %3028 = vmatpush.msra.mxu0 0.0
      %3029 = vmatpush.msra.mxu0 0.0
      %3030 = vmatpush.msra.mxu0 0.0
      %3031 = vmatpush.msra.mxu0 0.0
      %3032 = vmatpush.msra.mxu0 0.0
      %3033 = vmatpush.msra.mxu0 %v2792
      %3034 = vmatmul.f32.gmra.mxu0 %v3016
      %v3035 = vpop.f32.mrf.mxu0
      %v3036 = vadd.f32 0.0, %v3035
      %3037 = vdwg.mxu0
      %3038 = vmatpush.msra.mxu0 0.0
      %3039 = vmatpush.msra.mxu0 0.0
      %3040 = vmatpush.msra.mxu0 0.0
      %3041 = vmatpush.msra.mxu0 0.0
      %3042 = vmatpush.msra.mxu0 0.0
      %3043 = vmatpush.msra.mxu0 0.0
      %3044 = vmatpush.msra.mxu0 0.0
      %3045 = vmatpush.msra.mxu0 0.0
      %3046 = vmatpush.msra.mxu0 0.0
      %3047 = vmatpush.msra.mxu0 0.0
      %3048 = vmatpush.msra.mxu0 0.0
      %3049 = vmatpush.msra.mxu0 0.0
      %3050 = vmatpush.msra.mxu0 0.0
      %3051 = vmatpush.msra.mxu0 0.0
      %3052 = vmatpush.msra.mxu0 0.0
      %3053 = vmatpush.msra.mxu0 %v2793
      %3054 = vmatmul.f32.gmra.mxu0 %v3016
      %v3055 = vpop.f32.mrf.mxu0
      %v3056 = vadd.f32 0.0, %v3055
      %3057 = vdwg.mxu0
      %v3058 = vadd.f32 %v3011, %v3036
      %v3059 = vadd.f32 %v3012, %v3056
      %3060 = vrot.lane.b32.xlu0 %v2792, 112
      %v3061 = vpop.permute.xlu0 %3060
      %3062 = vrot.lane.b32.xlu0 %v2793, 112
      %v3063 = vpop.permute.xlu0 %3062
      %v3064 = vsel %vm803, %v3061, %v3063
      %v3065 = vsel %vm803, %v3063, %v3061
      %v3066 = vmul.f32 %v3064, %v2570
      %v3067 = vmul.f32 %v3065, %v2571
      %s3068 = scalar_lea.vmem %s10, 20
      %v3069 = vld [vmem:[%s3068] sm:$0xf]
      %v3071 = vsel %vm2300, %v3069, 0
      %3073 = vmatpush.msra.mxu0 0.0
      %3074 = vmatpush.msra.mxu0 0.0
      %3075 = vmatpush.msra.mxu0 0.0
      %3076 = vmatpush.msra.mxu0 0.0
      %3077 = vmatpush.msra.mxu0 0.0
      %3078 = vmatpush.msra.mxu0 0.0
      %3079 = vmatpush.msra.mxu0 0.0
      %3080 = vmatpush.msra.mxu0 0.0
      %3081 = vmatpush.msra.mxu0 0.0
      %3082 = vmatpush.msra.mxu0 0.0
      %3083 = vmatpush.msra.mxu0 0.0
      %3084 = vmatpush.msra.mxu0 0.0
      %3085 = vmatpush.msra.mxu0 0.0
      %3086 = vmatpush.msra.mxu0 0.0
      %3087 = vmatpush.msra.mxu0 0.0
      %3088 = vmatpush.msra.mxu0 %v3066
      %3089 = vmatmul.f32.gmra.mxu0 %v3071
      %v3090 = vpop.f32.mrf.mxu0
      %v3091 = vadd.f32 0.0, %v3090
      %3092 = vdwg.mxu0
      %3093 = vmatpush.msra.mxu0 0.0
      %3094 = vmatpush.msra.mxu0 0.0
      %3095 = vmatpush.msra.mxu0 0.0
      %3096 = vmatpush.msra.mxu0 0.0
      %3097 = vmatpush.msra.mxu0 0.0
      %3098 = vmatpush.msra.mxu0 0.0
      %3099 = vmatpush.msra.mxu0 0.0
      %3100 = vmatpush.msra.mxu0 0.0
      %3101 = vmatpush.msra.mxu0 0.0
      %3102 = vmatpush.msra.mxu0 0.0
      %3103 = vmatpush.msra.mxu0 0.0
      %3104 = vmatpush.msra.mxu0 0.0
      %3105 = vmatpush.msra.mxu0 0.0
      %3106 = vmatpush.msra.mxu0 0.0
      %3107 = vmatpush.msra.mxu0 0.0
      %3108 = vmatpush.msra.mxu0 %v3067
      %3109 = vmatmul.f32.gmra.mxu0 %v3071
      %v3110 = vpop.f32.mrf.mxu0
      %v3111 = vadd.f32 0.0, %v3110
      %3112 = vdwg.mxu0
      %v3113 = vadd.f32 %v3058, %v3091
      %v3114 = vadd.f32 %v3059, %v3111
      %3115 = vrot.lane.b32.xlu0 %v2792, 15
      %v3116 = vpop.permute.xlu0 %3115
      %3117 = vrot.lane.b32.xlu0 %v2793, 15
      %v3118 = vpop.permute.xlu0 %3117
      %v3119 = vsel %vm873, %v3116, %v3118
      %v3120 = vsel %vm873, %v3118, %v3116
      %v3121 = vmul.f32 %v3120, %v2627
      %v3122 = vmul.f32 %v3119, %v2628
      %s3123 = scalar_lea.vmem %s10, 24
      %v3124 = vld [vmem:[%s3123] sm:$0xf]
      %v3126 = vsel %vm2300, %v3124, 0
      %3128 = vmatpush.msra.mxu0 0.0
      %3129 = vmatpush.msra.mxu0 0.0
      %3130 = vmatpush.msra.mxu0 0.0
      %3131 = vmatpush.msra.mxu0 0.0
      %3132 = vmatpush.msra.mxu0 0.0
      %3133 = vmatpush.msra.mxu0 0.0
      %3134 = vmatpush.msra.mxu0 0.0
      %3135 = vmatpush.msra.mxu0 0.0
      %3136 = vmatpush.msra.mxu0 0.0
      %3137 = vmatpush.msra.mxu0 0.0
      %3138 = vmatpush.msra.mxu0 0.0
      %3139 = vmatpush.msra.mxu0 0.0
      %3140 = vmatpush.msra.mxu0 0.0
      %3141 = vmatpush.msra.mxu0 0.0
      %3142 = vmatpush.msra.mxu0 0.0
      %3143 = vmatpush.msra.mxu0 %v3121
      %3144 = vmatmul.f32.gmra.mxu0 %v3126
      %v3145 = vpop.f32.mrf.mxu0
      %v3146 = vadd.f32 0.0, %v3145
      %3147 = vdwg.mxu0
      %3148 = vmatpush.msra.mxu0 0.0
      %3149 = vmatpush.msra.mxu0 0.0
      %3150 = vmatpush.msra.mxu0 0.0
      %3151 = vmatpush.msra.mxu0 0.0
      %3152 = vmatpush.msra.mxu0 0.0
      %3153 = vmatpush.msra.mxu0 0.0
      %3154 = vmatpush.msra.mxu0 0.0
      %3155 = vmatpush.msra.mxu0 0.0
      %3156 = vmatpush.msra.mxu0 0.0
      %3157 = vmatpush.msra.mxu0 0.0
      %3158 = vmatpush.msra.mxu0 0.0
      %3159 = vmatpush.msra.mxu0 0.0
      %3160 = vmatpush.msra.mxu0 0.0
      %3161 = vmatpush.msra.mxu0 0.0
      %3162 = vmatpush.msra.mxu0 0.0
      %3163 = vmatpush.msra.mxu0 %v3122
      %3164 = vmatmul.f32.gmra.mxu0 %v3126
      %v3165 = vpop.f32.mrf.mxu0
      %v3166 = vadd.f32 0.0, %v3165
      %3167 = vdwg.mxu0
      %v3168 = vadd.f32 %v3113, %v3146
      %v3169 = vadd.f32 %v3114, %v3166
      %3170 = vrot.lane.b32.xlu0 %v2792, 127
      %v3171 = vpop.permute.xlu0 %3170
      %3172 = vrot.lane.b32.xlu0 %v2793, 127
      %v3173 = vpop.permute.xlu0 %3172
      %v3174 = vsel %vm943, %v3171, %v3173
      %v3175 = vsel %vm943, %v3173, %v3171
      %v3176 = vmul.f32 %v3174, %v2684
      %v3177 = vmul.f32 %v3175, %v2685
      %s3178 = scalar_lea.vmem %s10, 28
      %v3179 = vld [vmem:[%s3178] sm:$0xf]
      %v3181 = vsel %vm2300, %v3179, 0
      %3183 = vmatpush.msra.mxu0 0.0
      %3184 = vmatpush.msra.mxu0 0.0
      %3185 = vmatpush.msra.mxu0 0.0
      %3186 = vmatpush.msra.mxu0 0.0
      %3187 = vmatpush.msra.mxu0 0.0
      %3188 = vmatpush.msra.mxu0 0.0
      %3189 = vmatpush.msra.mxu0 0.0
      %3190 = vmatpush.msra.mxu0 0.0
      %3191 = vmatpush.msra.mxu0 0.0
      %3192 = vmatpush.msra.mxu0 0.0
      %3193 = vmatpush.msra.mxu0 0.0
      %3194 = vmatpush.msra.mxu0 0.0
      %3195 = vmatpush.msra.mxu0 0.0
      %3196 = vmatpush.msra.mxu0 0.0
      %3197 = vmatpush.msra.mxu0 0.0
      %3198 = vmatpush.msra.mxu0 %v3176
      %3199 = vmatmul.f32.gmra.mxu0 %v3181
      %v3200 = vpop.f32.mrf.mxu0
      %v3201 = vadd.f32 0.0, %v3200
      %3202 = vdwg.mxu0
      %3203 = vmatpush.msra.mxu0 0.0
      %3204 = vmatpush.msra.mxu0 0.0
      %3205 = vmatpush.msra.mxu0 0.0
      %3206 = vmatpush.msra.mxu0 0.0
      %3207 = vmatpush.msra.mxu0 0.0
      %3208 = vmatpush.msra.mxu0 0.0
      %3209 = vmatpush.msra.mxu0 0.0
      %3210 = vmatpush.msra.mxu0 0.0
      %3211 = vmatpush.msra.mxu0 0.0
      %3212 = vmatpush.msra.mxu0 0.0
      %3213 = vmatpush.msra.mxu0 0.0
      %3214 = vmatpush.msra.mxu0 0.0
      %3215 = vmatpush.msra.mxu0 0.0
      %3216 = vmatpush.msra.mxu0 0.0
      %3217 = vmatpush.msra.mxu0 0.0
      %3218 = vmatpush.msra.mxu0 %v3177
      %3219 = vmatmul.f32.gmra.mxu0 %v3181
      %v3220 = vpop.f32.mrf.mxu0
      %v3221 = vadd.f32 0.0, %v3220
      %3222 = vdwg.mxu0
      %v3223 = vadd.f32 %v3168, %v3201
      %v3224 = vadd.f32 %v3169, %v3221
      %3225 = vrot.lane.b32.xlu0 %v2792, 111
      %v3226 = vpop.permute.xlu0 %3225
      %3227 = vrot.lane.b32.xlu0 %v2793, 111
      %v3228 = vpop.permute.xlu0 %3227
      %v3229 = vsel %vm1013, %v3226, %v3228
      %v3230 = vsel %vm1013, %v3228, %v3226
      %v3231 = vmul.f32 %v3229, %v2741
      %v3232 = vmul.f32 %v3230, %v2742
      %s3233 = scalar_lea.vmem %s10, 32
      %v3234 = vld [vmem:[%s3233] sm:$0xf]
      %v3236 = vsel %vm2300, %v3234, 0
      %3238 = vmatpush.msra.mxu0 0.0
      %3239 = vmatpush.msra.mxu0 0.0
      %3240 = vmatpush.msra.mxu0 0.0
      %3241 = vmatpush.msra.mxu0 0.0
      %3242 = vmatpush.msra.mxu0 0.0
      %3243 = vmatpush.msra.mxu0 0.0
      %3244 = vmatpush.msra.mxu0 0.0
      %3245 = vmatpush.msra.mxu0 0.0
      %3246 = vmatpush.msra.mxu0 0.0
      %3247 = vmatpush.msra.mxu0 0.0
      %3248 = vmatpush.msra.mxu0 0.0
      %3249 = vmatpush.msra.mxu0 0.0
      %3250 = vmatpush.msra.mxu0 0.0
      %3251 = vmatpush.msra.mxu0 0.0
      %3252 = vmatpush.msra.mxu0 0.0
      %3253 = vmatpush.msra.mxu0 %v3231
      %3254 = vmatmul.f32.gmra.mxu0 %v3236
      %v3255 = vpop.f32.mrf.mxu0
      %v3256 = vadd.f32 0.0, %v3255
      %3257 = vdwg.mxu0
      %3258 = vmatpush.msra.mxu0 0.0
      %3259 = vmatpush.msra.mxu0 0.0
      %3260 = vmatpush.msra.mxu0 0.0
      %3261 = vmatpush.msra.mxu0 0.0
      %3262 = vmatpush.msra.mxu0 0.0
      %3263 = vmatpush.msra.mxu0 0.0
      %3264 = vmatpush.msra.mxu0 0.0
      %3265 = vmatpush.msra.mxu0 0.0
      %3266 = vmatpush.msra.mxu0 0.0
      %3267 = vmatpush.msra.mxu0 0.0
      %3268 = vmatpush.msra.mxu0 0.0
      %3269 = vmatpush.msra.mxu0 0.0
      %3270 = vmatpush.msra.mxu0 0.0
      %3271 = vmatpush.msra.mxu0 0.0
      %3272 = vmatpush.msra.mxu0 0.0
      %3273 = vmatpush.msra.mxu0 %v3232
      %3274 = vmatmul.f32.gmra.mxu0 %v3236
      %v3275 = vpop.f32.mrf.mxu0
      %v3276 = vadd.f32 0.0, %v3275
      %3277 = vdwg.mxu0
      %v3278 = vadd.f32 %v3223, %v3256
      %v3279 = vadd.f32 %v3224, %v3276
      %v3282 = vrot.slane %v3279, 4
      %v3283 = vsel %vm481, %v3278, %v3282
      %v3285 = vsub.f32 %v1704, %v3283
      %3287 = vst [vmem:[#allocation1] ss:$2 sm:$0xff] %v3285
      %v3288 = vld.sshfl [vmem:[#allocation1] sm:$0xff pattern:$0x75316420]
      %v3289 = vld.sshfl [vmem:[#allocation1 + $0x8] sm:$0xff pattern:$0x75316420]
      %3292 = vrot.lane.b32.xlu0 %v3288, 15
      %v3293 = vpop.permute.xlu0 %3292
      %3294 = vrot.lane.b32.xlu0 %v3289, 15
      %v3295 = vpop.permute.xlu0 %3294
      %v3296 = vsel %vm873, %v3293, %v3295
      %v3297 = vsel %vm873, %v3295, %v3293
      %v3300 = vrot.slane %v3296, 4
      %v3301 = vsel %vm481, %v3297, %v3300
      %v3303 = vmul.f32 %v1075, %v3301
      %v3304 = vadd.f32 %v438, %v3303
      %3305 = vst [vmem:[#allocation1] ss:$2 sm:$0xff] %v3285
      %v3306 = vld.sshfl [vmem:[#allocation1] sm:$0xff pattern:$0x75316420]
      %v3307 = vld.sshfl [vmem:[#allocation1 + $0x8] sm:$0xff pattern:$0x75316420]
      %3310 = vrot.lane.b32.xlu0 %v3306, 14
      %v3311 = vpop.permute.xlu0 %3310
      %3312 = vrot.lane.b32.xlu0 %v3307, 14
      %v3313 = vpop.permute.xlu0 %3312
      %v3314 = vsel %vm1106, %v3311, %v3313
      %v3315 = vsel %vm1106, %v3313, %v3311
      %v3318 = vrot.slane %v3314, 4
      %v3319 = vsel %vm481, %v3315, %v3318
      %v3321 = vmul.f32 %v1096, %v3319
      %v3322 = vadd.f32 %v3304, %v3321
      %3323 = vst [vmem:[#allocation1] ss:$2 sm:$0xff] %v3285
      %v3324 = vld.sshfl [vmem:[#allocation1] sm:$0xff pattern:$0x75316420]
      %v3325 = vld.sshfl [vmem:[#allocation1 + $0x8] sm:$0xff pattern:$0x75316420]
      %3328 = vrot.lane.b32.xlu0 %v3324, 13
      %v3329 = vpop.permute.xlu0 %3328
      %3330 = vrot.lane.b32.xlu0 %v3325, 13
      %v3331 = vpop.permute.xlu0 %3330
      %v3332 = vsel %vm1127, %v3329, %v3331
      %v3333 = vsel %vm1127, %v3331, %v3329
      %v3336 = vrot.slane %v3332, 4
      %v3337 = vsel %vm481, %v3333, %v3336
      %v3339 = vmul.f32 %v1117, %v3337
      %v3340 = vadd.f32 %v3322, %v3339
      %3341 = vst [vmem:[#allocation1] ss:$2 sm:$0xff] %v3285
      %v3342 = vld.sshfl [vmem:[#allocation1] sm:$0xff pattern:$0x75316420]
      %v3343 = vld.sshfl [vmem:[#allocation1 + $0x8] sm:$0xff pattern:$0x75316420]
      %3346 = vrot.lane.b32.xlu0 %v3342, 12
      %v3347 = vpop.permute.xlu0 %3346
      %3348 = vrot.lane.b32.xlu0 %v3343, 12
      %v3349 = vpop.permute.xlu0 %3348
      %v3350 = vsel %vm1148, %v3347, %v3349
      %v3351 = vsel %vm1148, %v3349, %v3347
      %v3354 = vrot.slane %v3350, 4
      %v3355 = vsel %vm481, %v3351, %v3354
      %v3357 = vmul.f32 %v1138, %v3355
      %v3358 = vadd.f32 %v3340, %v3357
      %3359 = vst [vmem:[#allocation1] ss:$2 sm:$0xff] %v3285
      %v3360 = vld.sshfl [vmem:[#allocation1] sm:$0xff pattern:$0x75316420]
      %v3361 = vld.sshfl [vmem:[#allocation1 + $0x8] sm:$0xff pattern:$0x75316420]
      %3364 = vrot.lane.b32.xlu0 %v3360, 11
      %v3365 = vpop.permute.xlu0 %3364
      %3366 = vrot.lane.b32.xlu0 %v3361, 11
      %v3367 = vpop.permute.xlu0 %3366
      %v3368 = vsel %vm1169, %v3365, %v3367
      %v3369 = vsel %vm1169, %v3367, %v3365
      %v3372 = vrot.slane %v3368, 4
      %v3373 = vsel %vm481, %v3369, %v3372
      %v3375 = vmul.f32 %v1159, %v3373
      %v3376 = vadd.f32 %v3358, %v3375
      %3377 = vst [vmem:[#allocation1] ss:$2 sm:$0xff] %v3285
      %v3378 = vld.sshfl [vmem:[#allocation1] sm:$0xff pattern:$0x75316420]
      %v3379 = vld.sshfl [vmem:[#allocation1 + $0x8] sm:$0xff pattern:$0x75316420]
      %3382 = vrot.lane.b32.xlu0 %v3378, 10
      %v3383 = vpop.permute.xlu0 %3382
      %3384 = vrot.lane.b32.xlu0 %v3379, 10
      %v3385 = vpop.permute.xlu0 %3384
      %v3386 = vsel %vm1190, %v3383, %v3385
      %v3387 = vsel %vm1190, %v3385, %v3383
      %v3390 = vrot.slane %v3386, 4
      %v3391 = vsel %vm481, %v3387, %v3390
      %v3393 = vmul.f32 %v1180, %v3391
      %v3394 = vadd.f32 %v3376, %v3393
      %3395 = vst [vmem:[#allocation1] ss:$2 sm:$0xff] %v3285
      %v3396 = vld.sshfl [vmem:[#allocation1] sm:$0xff pattern:$0x75316420]
      %v3397 = vld.sshfl [vmem:[#allocation1 + $0x8] sm:$0xff pattern:$0x75316420]
      %3400 = vrot.lane.b32.xlu0 %v3396, 9
      %v3401 = vpop.permute.xlu0 %3400
      %3402 = vrot.lane.b32.xlu0 %v3397, 9
      %v3403 = vpop.permute.xlu0 %3402
      %v3404 = vsel %vm1211, %v3401, %v3403
      %v3405 = vsel %vm1211, %v3403, %v3401
      %v3408 = vrot.slane %v3404, 4
      %v3409 = vsel %vm481, %v3405, %v3408
      %v3411 = vmul.f32 %v1201, %v3409
      %v3412 = vadd.f32 %v3394, %v3411
      %3413 = vst [vmem:[#allocation1] ss:$2 sm:$0xff] %v3285
      %v3414 = vld.sshfl [vmem:[#allocation1] sm:$0xff pattern:$0x75316420]
      %v3415 = vld.sshfl [vmem:[#allocation1 + $0x8] sm:$0xff pattern:$0x75316420]
      %3418 = vrot.lane.b32.xlu0 %v3414, 8
      %v3419 = vpop.permute.xlu0 %3418
      %3420 = vrot.lane.b32.xlu0 %v3415, 8
      %v3421 = vpop.permute.xlu0 %3420
      %v3422 = vsel %vm1232, %v3419, %v3421
      %v3423 = vsel %vm1232, %v3421, %v3419
      %v3426 = vrot.slane %v3422, 4
      %v3427 = vsel %vm481, %v3423, %v3426
      %v3429 = vmul.f32 %v1222, %v3427
      %v3430 = vadd.f32 %v3412, %v3429
      %3431 = vst [vmem:[#allocation1] ss:$2 sm:$0xff] %v3285
      %v3432 = vld.sshfl [vmem:[#allocation1] sm:$0xff pattern:$0x75316420]
      %v3433 = vld.sshfl [vmem:[#allocation1 + $0x8] sm:$0xff pattern:$0x75316420]
      %3436 = vrot.lane.b32.xlu0 %v3432, 7
      %v3437 = vpop.permute.xlu0 %3436
      %3438 = vrot.lane.b32.xlu0 %v3433, 7
      %v3439 = vpop.permute.xlu0 %3438
      %v3440 = vsel %vm1253, %v3437, %v3439
      %v3441 = vsel %vm1253, %v3439, %v3437
      %v3444 = vrot.slane %v3440, 4
      %v3445 = vsel %vm481, %v3441, %v3444
      %v3447 = vmul.f32 %v1243, %v3445
      %v3448 = vadd.f32 %v3430, %v3447
      %3449 = vst [vmem:[#allocation1] ss:$2 sm:$0xff] %v3285
      %v3450 = vld.sshfl [vmem:[#allocation1] sm:$0xff pattern:$0x75316420]
      %v3451 = vld.sshfl [vmem:[#allocation1 + $0x8] sm:$0xff pattern:$0x75316420]
      %3454 = vrot.lane.b32.xlu0 %v3450, 6
      %v3455 = vpop.permute.xlu0 %3454
      %3456 = vrot.lane.b32.xlu0 %v3451, 6
      %v3457 = vpop.permute.xlu0 %3456
      %v3458 = vsel %vm1274, %v3455, %v3457
      %v3459 = vsel %vm1274, %v3457, %v3455
      %v3462 = vrot.slane %v3458, 4
      %v3463 = vsel %vm481, %v3459, %v3462
      %v3465 = vmul.f32 %v1264, %v3463
      %v3466 = vadd.f32 %v3448, %v3465
      %3467 = vst [vmem:[#allocation1] ss:$2 sm:$0xff] %v3285
      %v3468 = vld.sshfl [vmem:[#allocation1] sm:$0xff pattern:$0x75316420]
      %v3469 = vld.sshfl [vmem:[#allocation1 + $0x8] sm:$0xff pattern:$0x75316420]
      %3472 = vrot.lane.b32.xlu0 %v3468, 5
      %v3473 = vpop.permute.xlu0 %3472
      %3474 = vrot.lane.b32.xlu0 %v3469, 5
      %v3475 = vpop.permute.xlu0 %3474
      %v3476 = vsel %vm1295, %v3473, %v3475
      %v3477 = vsel %vm1295, %v3475, %v3473
      %v3480 = vrot.slane %v3476, 4
      %v3481 = vsel %vm481, %v3477, %v3480
      %v3483 = vmul.f32 %v1285, %v3481
      %v3484 = vadd.f32 %v3466, %v3483
      %3485 = vst [vmem:[#allocation1] ss:$2 sm:$0xff] %v3285
      %v3486 = vld.sshfl [vmem:[#allocation1] sm:$0xff pattern:$0x75316420]
      %v3487 = vld.sshfl [vmem:[#allocation1 + $0x8] sm:$0xff pattern:$0x75316420]
      %3490 = vrot.lane.b32.xlu0 %v3486, 4
      %v3491 = vpop.permute.xlu0 %3490
      %3492 = vrot.lane.b32.xlu0 %v3487, 4
      %v3493 = vpop.permute.xlu0 %3492
      %v3494 = vsel %vm1316, %v3491, %v3493
      %v3495 = vsel %vm1316, %v3493, %v3491
      %v3498 = vrot.slane %v3494, 4
      %v3499 = vsel %vm481, %v3495, %v3498
      %v3501 = vmul.f32 %v1306, %v3499
      %v3502 = vadd.f32 %v3484, %v3501
      %3503 = vst [vmem:[#allocation1] ss:$2 sm:$0xff] %v3285
      %v3504 = vld.sshfl [vmem:[#allocation1] sm:$0xff pattern:$0x75316420]
      %v3505 = vld.sshfl [vmem:[#allocation1 + $0x8] sm:$0xff pattern:$0x75316420]
      %3508 = vrot.lane.b32.xlu0 %v3504, 3
      %v3509 = vpop.permute.xlu0 %3508
      %3510 = vrot.lane.b32.xlu0 %v3505, 3
      %v3511 = vpop.permute.xlu0 %3510
      %v3512 = vsel %vm1337, %v3509, %v3511
      %v3513 = vsel %vm1337, %v3511, %v3509
      %v3516 = vrot.slane %v3512, 4
      %v3517 = vsel %vm481, %v3513, %v3516
      %v3519 = vmul.f32 %v1327, %v3517
      %v3520 = vadd.f32 %v3502, %v3519
      %3521 = vst [vmem:[#allocation1] ss:$2 sm:$0xff] %v3285
      %v3522 = vld.sshfl [vmem:[#allocation1] sm:$0xff pattern:$0x75316420]
      %v3523 = vld.sshfl [vmem:[#allocation1 + $0x8] sm:$0xff pattern:$0x75316420]
      %3526 = vrot.lane.b32.xlu0 %v3522, 2
      %v3527 = vpop.permute.xlu0 %3526
      %3528 = vrot.lane.b32.xlu0 %v3523, 2
      %v3529 = vpop.permute.xlu0 %3528
      %v3530 = vsel %vm1358, %v3527, %v3529
      %v3531 = vsel %vm1358, %v3529, %v3527
      %v3534 = vrot.slane %v3530, 4
      %v3535 = vsel %vm481, %v3531, %v3534
      %v3537 = vmul.f32 %v1348, %v3535
      %v3538 = vadd.f32 %v3520, %v3537
      %3539 = vst [vmem:[#allocation1] ss:$2 sm:$0xff] %v3285
      %v3540 = vld.sshfl [vmem:[#allocation1] sm:$0xff pattern:$0x75316420]
      %v3541 = vld.sshfl [vmem:[#allocation1 + $0x8] sm:$0xff pattern:$0x75316420]
      %3544 = vrot.lane.b32.xlu0 %v3540, 1
      %v3545 = vpop.permute.xlu0 %3544
      %3546 = vrot.lane.b32.xlu0 %v3541, 1
      %v3547 = vpop.permute.xlu0 %3546
      %v3548 = vsel %vm539, %v3545, %v3547
      %v3549 = vsel %vm539, %v3547, %v3545
      %v3552 = vrot.slane %v3548, 4
      %v3553 = vsel %vm481, %v3549, %v3552
      %v3555 = vmul.f32 %v1369, %v3553
      %v3556 = vadd.f32 %v3538, %v3555
      %v3557 = vmul.f32 %v1389, %v3285
      %v3558 = vadd.f32 %v3556, %v3557
      %3559 = vst [vmem:[#allocation1] ss:$2 sm:$0xff] %v3285
      %v3560 = vld.sshfl [vmem:[#allocation1] sm:$0xff pattern:$0x75316420]
      %v3561 = vld.sshfl [vmem:[#allocation1 + $0x8] sm:$0xff pattern:$0x75316420]
      %3564 = vrot.lane.b32.xlu0 %v3560, 127
      %v3565 = vpop.permute.xlu0 %3564
      %3566 = vrot.lane.b32.xlu0 %v3561, 127
      %v3567 = vpop.permute.xlu0 %3566
      %v3568 = vsel %vm943, %v3565, %v3567
      %v3569 = vsel %vm943, %v3567, %v3565
      %v3572 = vrot.slane %v3569, 4
      %v3573 = vsel %vm481, %v3568, %v3572
      %v3575 = vmul.f32 %v1393, %v3573
      %v3576 = vadd.f32 %v3558, %v3575
      %3577 = vst [vmem:[#allocation1] ss:$2 sm:$0xff] %v3285
      %v3578 = vld.sshfl [vmem:[#allocation1] sm:$0xff pattern:$0x75316420]
      %v3579 = vld.sshfl [vmem:[#allocation1 + $0x8] sm:$0xff pattern:$0x75316420]
      %3582 = vrot.lane.b32.xlu0 %v3578, 126
      %v3583 = vpop.permute.xlu0 %3582
      %3584 = vrot.lane.b32.xlu0 %v3579, 126
      %v3585 = vpop.permute.xlu0 %3584
      %v3586 = vsel %vm1423, %v3583, %v3585
      %v3587 = vsel %vm1423, %v3585, %v3583
      %v3590 = vrot.slane %v3587, 4
      %v3591 = vsel %vm481, %v3586, %v3590
      %v3593 = vmul.f32 %v1413, %v3591
      %v3594 = vadd.f32 %v3576, %v3593
      %3595 = vst [vmem:[#allocation1] ss:$2 sm:$0xff] %v3285
      %v3596 = vld.sshfl [vmem:[#allocation1] sm:$0xff pattern:$0x75316420]
      %v3597 = vld.sshfl [vmem:[#allocation1 + $0x8] sm:$0xff pattern:$0x75316420]
      %3600 = vrot.lane.b32.xlu0 %v3596, 125
      %v3601 = vpop.permute.xlu0 %3600
      %3602 = vrot.lane.b32.xlu0 %v3597, 125
      %v3603 = vpop.permute.xlu0 %3602
      %v3604 = vsel %vm1444, %v3601, %v3603
      %v3605 = vsel %vm1444, %v3603, %v3601
      %v3608 = vrot.slane %v3605, 4
      %v3609 = vsel %vm481, %v3604, %v3608
      %v3611 = vmul.f32 %v1434, %v3609
      %v3612 = vadd.f32 %v3594, %v3611
      %3613 = vst [vmem:[#allocation1] ss:$2 sm:$0xff] %v3285
      %v3614 = vld.sshfl [vmem:[#allocation1] sm:$0xff pattern:$0x75316420]
      %v3615 = vld.sshfl [vmem:[#allocation1 + $0x8] sm:$0xff pattern:$0x75316420]
      %3618 = vrot.lane.b32.xlu0 %v3614, 124
      %v3619 = vpop.permute.xlu0 %3618
      %3620 = vrot.lane.b32.xlu0 %v3615, 124
      %v3621 = vpop.permute.xlu0 %3620
      %v3622 = vsel %vm1465, %v3619, %v3621
      %v3623 = vsel %vm1465, %v3621, %v3619
      %v3626 = vrot.slane %v3623, 4
      %v3627 = vsel %vm481, %v3622, %v3626
      %v3629 = vmul.f32 %v1455, %v3627
      %v3630 = vadd.f32 %v3612, %v3629
      %3631 = vst [vmem:[#allocation1] ss:$2 sm:$0xff] %v3285
      %v3632 = vld.sshfl [vmem:[#allocation1] sm:$0xff pattern:$0x75316420]
      %v3633 = vld.sshfl [vmem:[#allocation1 + $0x8] sm:$0xff pattern:$0x75316420]
      %3636 = vrot.lane.b32.xlu0 %v3632, 123
      %v3637 = vpop.permute.xlu0 %3636
      %3638 = vrot.lane.b32.xlu0 %v3633, 123
      %v3639 = vpop.permute.xlu0 %3638
      %v3640 = vsel %vm1486, %v3637, %v3639
      %v3641 = vsel %vm1486, %v3639, %v3637
      %v3644 = vrot.slane %v3641, 4
      %v3645 = vsel %vm481, %v3640, %v3644
      %v3647 = vmul.f32 %v1476, %v3645
      %v3648 = vadd.f32 %v3630, %v3647
      %3649 = vst [vmem:[#allocation1] ss:$2 sm:$0xff] %v3285
      %v3650 = vld.sshfl [vmem:[#allocation1] sm:$0xff pattern:$0x75316420]
      %v3651 = vld.sshfl [vmem:[#allocation1 + $0x8] sm:$0xff pattern:$0x75316420]
      %3654 = vrot.lane.b32.xlu0 %v3650, 122
      %v3655 = vpop.permute.xlu0 %3654
      %3656 = vrot.lane.b32.xlu0 %v3651, 122
      %v3657 = vpop.permute.xlu0 %3656
      %v3658 = vsel %vm1507, %v3655, %v3657
      %v3659 = vsel %vm1507, %v3657, %v3655
      %v3662 = vrot.slane %v3659, 4
      %v3663 = vsel %vm481, %v3658, %v3662
      %v3665 = vmul.f32 %v1497, %v3663
      %v3666 = vadd.f32 %v3648, %v3665
      %3667 = vst [vmem:[#allocation1] ss:$2 sm:$0xff] %v3285
      %v3668 = vld.sshfl [vmem:[#allocation1] sm:$0xff pattern:$0x75316420]
      %v3669 = vld.sshfl [vmem:[#allocation1 + $0x8] sm:$0xff pattern:$0x75316420]
      %3672 = vrot.lane.b32.xlu0 %v3668, 121
      %v3673 = vpop.permute.xlu0 %3672
      %3674 = vrot.lane.b32.xlu0 %v3669, 121
      %v3675 = vpop.permute.xlu0 %3674
      %v3676 = vsel %vm1528, %v3673, %v3675
      %v3677 = vsel %vm1528, %v3675, %v3673
      %v3680 = vrot.slane %v3677, 4
      %v3681 = vsel %vm481, %v3676, %v3680
      %v3683 = vmul.f32 %v1518, %v3681
      %v3684 = vadd.f32 %v3666, %v3683
      %3685 = vst [vmem:[#allocation1] ss:$2 sm:$0xff] %v3285
      %v3686 = vld.sshfl [vmem:[#allocation1] sm:$0xff pattern:$0x75316420]
      %v3687 = vld.sshfl [vmem:[#allocation1 + $0x8] sm:$0xff pattern:$0x75316420]
      %3690 = vrot.lane.b32.xlu0 %v3686, 120
      %v3691 = vpop.permute.xlu0 %3690
      %3692 = vrot.lane.b32.xlu0 %v3687, 120
      %v3693 = vpop.permute.xlu0 %3692
      %v3694 = vsel %vm1549, %v3691, %v3693
      %v3695 = vsel %vm1549, %v3693, %v3691
      %v3698 = vrot.slane %v3695, 4
      %v3699 = vsel %vm481, %v3694, %v3698
      %v3701 = vmul.f32 %v1539, %v3699
      %v3702 = vadd.f32 %v3684, %v3701
      %3703 = vst [vmem:[#allocation1] ss:$2 sm:$0xff] %v3285
      %v3704 = vld.sshfl [vmem:[#allocation1] sm:$0xff pattern:$0x75316420]
      %v3705 = vld.sshfl [vmem:[#allocation1 + $0x8] sm:$0xff pattern:$0x75316420]
      %3708 = vrot.lane.b32.xlu0 %v3704, 119
      %v3709 = vpop.permute.xlu0 %3708
      %3710 = vrot.lane.b32.xlu0 %v3705, 119
      %v3711 = vpop.permute.xlu0 %3710
      %v3712 = vsel %vm1570, %v3709, %v3711
      %v3713 = vsel %vm1570, %v3711, %v3709
      %v3716 = vrot.slane %v3713, 4
      %v3717 = vsel %vm481, %v3712, %v3716
      %v3719 = vmul.f32 %v1560, %v3717
      %v3720 = vadd.f32 %v3702, %v3719
      %3721 = vst [vmem:[#allocation1] ss:$2 sm:$0xff] %v3285
      %v3722 = vld.sshfl [vmem:[#allocation1] sm:$0xff pattern:$0x75316420]
      %v3723 = vld.sshfl [vmem:[#allocation1 + $0x8] sm:$0xff pattern:$0x75316420]
      %3726 = vrot.lane.b32.xlu0 %v3722, 118
      %v3727 = vpop.permute.xlu0 %3726
      %3728 = vrot.lane.b32.xlu0 %v3723, 118
      %v3729 = vpop.permute.xlu0 %3728
      %v3730 = vsel %vm1591, %v3727, %v3729
      %v3731 = vsel %vm1591, %v3729, %v3727
      %v3734 = vrot.slane %v3731, 4
      %v3735 = vsel %vm481, %v3730, %v3734
      %v3737 = vmul.f32 %v1581, %v3735
      %v3738 = vadd.f32 %v3720, %v3737
      %3739 = vst [vmem:[#allocation1] ss:$2 sm:$0xff] %v3285
      %v3740 = vld.sshfl [vmem:[#allocation1] sm:$0xff pattern:$0x75316420]
      %v3741 = vld.sshfl [vmem:[#allocation1 + $0x8] sm:$0xff pattern:$0x75316420]
      %3744 = vrot.lane.b32.xlu0 %v3740, 117
      %v3745 = vpop.permute.xlu0 %3744
      %3746 = vrot.lane.b32.xlu0 %v3741, 117
      %v3747 = vpop.permute.xlu0 %3746
      %v3748 = vsel %vm1612, %v3745, %v3747
      %v3749 = vsel %vm1612, %v3747, %v3745
      %v3752 = vrot.slane %v3749, 4
      %v3753 = vsel %vm481, %v3748, %v3752
      %v3755 = vmul.f32 %v1602, %v3753
      %v3756 = vadd.f32 %v3738, %v3755
      %3757 = vst [vmem:[#allocation1] ss:$2 sm:$0xff] %v3285
      %v3758 = vld.sshfl [vmem:[#allocation1] sm:$0xff pattern:$0x75316420]
      %v3759 = vld.sshfl [vmem:[#allocation1 + $0x8] sm:$0xff pattern:$0x75316420]
      %3762 = vrot.lane.b32.xlu0 %v3758, 116
      %v3763 = vpop.permute.xlu0 %3762
      %3764 = vrot.lane.b32.xlu0 %v3759, 116
      %v3765 = vpop.permute.xlu0 %3764
      %v3766 = vsel %vm1633, %v3763, %v3765
      %v3767 = vsel %vm1633, %v3765, %v3763
      %v3770 = vrot.slane %v3767, 4
      %v3771 = vsel %vm481, %v3766, %v3770
      %v3773 = vmul.f32 %v1623, %v3771
      %v3774 = vadd.f32 %v3756, %v3773
      %3775 = vst [vmem:[#allocation1] ss:$2 sm:$0xff] %v3285
      %v3776 = vld.sshfl [vmem:[#allocation1] sm:$0xff pattern:$0x75316420]
      %v3777 = vld.sshfl [vmem:[#allocation1 + $0x8] sm:$0xff pattern:$0x75316420]
      %3780 = vrot.lane.b32.xlu0 %v3776, 115
      %v3781 = vpop.permute.xlu0 %3780
      %3782 = vrot.lane.b32.xlu0 %v3777, 115
      %v3783 = vpop.permute.xlu0 %3782
      %v3784 = vsel %vm1654, %v3781, %v3783
      %v3785 = vsel %vm1654, %v3783, %v3781
      %v3788 = vrot.slane %v3785, 4
      %v3789 = vsel %vm481, %v3784, %v3788
      %v3791 = vmul.f32 %v1644, %v3789
      %v3792 = vadd.f32 %v3774, %v3791
      %3793 = vst [vmem:[#allocation1] ss:$2 sm:$0xff] %v3285
      %v3794 = vld.sshfl [vmem:[#allocation1] sm:$0xff pattern:$0x75316420]
      %v3795 = vld.sshfl [vmem:[#allocation1 + $0x8] sm:$0xff pattern:$0x75316420]
      %3798 = vrot.lane.b32.xlu0 %v3794, 114
      %v3799 = vpop.permute.xlu0 %3798
      %3800 = vrot.lane.b32.xlu0 %v3795, 114
      %v3801 = vpop.permute.xlu0 %3800
      %v3802 = vsel %vm1675, %v3799, %v3801
      %v3803 = vsel %vm1675, %v3801, %v3799
      %v3806 = vrot.slane %v3803, 4
      %v3807 = vsel %vm481, %v3802, %v3806
      %v3809 = vmul.f32 %v1665, %v3807
      %v3810 = vadd.f32 %v3792, %v3809
      %3811 = vst [vmem:[#allocation1] ss:$2 sm:$0xff] %v3285
      %v3812 = vld.sshfl [vmem:[#allocation1] sm:$0xff pattern:$0x75316420]
      %v3813 = vld.sshfl [vmem:[#allocation1 + $0x8] sm:$0xff pattern:$0x75316420]
      %3816 = vrot.lane.b32.xlu0 %v3812, 113
      %v3817 = vpop.permute.xlu0 %3816
      %3818 = vrot.lane.b32.xlu0 %v3813, 113
      %v3819 = vpop.permute.xlu0 %3818
      %v3820 = vsel %vm609, %v3817, %v3819
      %v3821 = vsel %vm609, %v3819, %v3817
      %v3824 = vrot.slane %v3821, 4
      %v3825 = vsel %vm481, %v3820, %v3824
      %v3827 = vmul.f32 %v1686, %v3825
      %v3828 = vadd.f32 %v3810, %v3827
      %3830 = vst [vmem:[#allocation1] ss:$2 sm:$0xff] %v3828
      %v3831 = vld.sshfl [vmem:[#allocation1] sm:$0xff pattern:$0x75316420]
      %v3832 = vld.sshfl [vmem:[#allocation1 + $0x8] sm:$0xff pattern:$0x75316420]
      %3835 = vrot.lane.b32.xlu0 %v3831, 17
      %v3836 = vpop.permute.xlu0 %3835
      %3837 = vrot.lane.b32.xlu0 %v3832, 17
      %v3838 = vpop.permute.xlu0 %3837
      %v3839 = vsel %vm469, %v3836, %v3838
      %v3840 = vsel %vm469, %v3838, %v3836
      %v3841 = vmul.f32 %v3840, %v472
      %v3842 = vmul.f32 %v3839, %v473
      %v3844 = vsel %vm481, %v3841, 0
      %v3847 = vsel %vm481, %v3842, 0
      %3849 = vmatpush.msra.mxu0 0.0
      %3850 = vmatpush.msra.mxu0 0.0
      %3851 = vmatpush.msra.mxu0 0.0
      %3852 = vmatpush.msra.mxu0 0.0
      %3853 = vmatpush.msra.mxu0 0.0
      %3854 = vmatpush.msra.mxu0 0.0
      %3855 = vmatpush.msra.mxu0 0.0
      %3856 = vmatpush.msra.mxu0 0.0
      %3857 = vmatpush.msra.mxu0 0.0
      %3858 = vmatpush.msra.mxu0 0.0
      %3859 = vmatpush.msra.mxu0 0.0
      %3860 = vmatpush.msra.mxu0 0.0
      %3861 = vmatpush.msra.mxu0 0.0
      %3862 = vmatpush.msra.mxu0 0.0
      %3863 = vmatpush.msra.mxu0 0.0
      %3864 = vmatpush.msra.mxu0 %v3844
      %3865 = vmatmul.f32.gmra.mxu0 %v1721
      %v3866 = vpop.f32.mrf.mxu0
      %v3867 = vadd.f32 0.0, %v3866
      %3868 = vdwg.mxu0
      %3869 = vmatpush.msra.mxu0 0.0
      %3870 = vmatpush.msra.mxu0 0.0
      %3871 = vmatpush.msra.mxu0 0.0
      %3872 = vmatpush.msra.mxu0 0.0
      %3873 = vmatpush.msra.mxu0 0.0
      %3874 = vmatpush.msra.mxu0 0.0
      %3875 = vmatpush.msra.mxu0 0.0
      %3876 = vmatpush.msra.mxu0 0.0
      %3877 = vmatpush.msra.mxu0 0.0
      %3878 = vmatpush.msra.mxu0 0.0
      %3879 = vmatpush.msra.mxu0 0.0
      %3880 = vmatpush.msra.mxu0 0.0
      %3881 = vmatpush.msra.mxu0 0.0
      %3882 = vmatpush.msra.mxu0 0.0
      %3883 = vmatpush.msra.mxu0 0.0
      %3884 = vmatpush.msra.mxu0 %v3847
      %3885 = vmatmul.f32.gmra.mxu0 %v1721
      %v3886 = vpop.f32.mrf.mxu0
      %v3887 = vadd.f32 0.0, %v3886
      %3888 = vdwg.mxu0
      %v3889 = vadd.f32 %v1072, %v3867
      %v3890 = vadd.f32 %v1073, %v3887
      %3891 = vst [vmem:[#allocation1] ss:$2 sm:$0xff] %v3828
      %v3892 = vld.sshfl [vmem:[#allocation1] sm:$0xff pattern:$0x75316420]
      %v3893 = vld.sshfl [vmem:[#allocation1 + $0x8] sm:$0xff pattern:$0x75316420]
      %3896 = vrot.lane.b32.xlu0 %v3892, 1
      %v3897 = vpop.permute.xlu0 %3896
      %3898 = vrot.lane.b32.xlu0 %v3893, 1
      %v3899 = vpop.permute.xlu0 %3898
      %v3900 = vsel %vm539, %v3897, %v3899
      %v3901 = vsel %vm539, %v3899, %v3897
      %v3902 = vmul.f32 %v3901, %v543
      %v3903 = vmul.f32 %v3900, %v544
      %v3905 = vsel %vm481, %v3902, 0
      %v3908 = vsel %vm481, %v3903, 0
      %3910 = vmatpush.msra.mxu0 0.0
      %3911 = vmatpush.msra.mxu0 0.0
      %3912 = vmatpush.msra.mxu0 0.0
      %3913 = vmatpush.msra.mxu0 0.0
      %3914 = vmatpush.msra.mxu0 0.0
      %3915 = vmatpush.msra.mxu0 0.0
      %3916 = vmatpush.msra.mxu0 0.0
      %3917 = vmatpush.msra.mxu0 0.0
      %3918 = vmatpush.msra.mxu0 0.0
      %3919 = vmatpush.msra.mxu0 0.0
      %3920 = vmatpush.msra.mxu0 0.0
      %3921 = vmatpush.msra.mxu0 0.0
      %3922 = vmatpush.msra.mxu0 0.0
      %3923 = vmatpush.msra.mxu0 0.0
      %3924 = vmatpush.msra.mxu0 0.0
      %3925 = vmatpush.msra.mxu0 %v3905
      %3926 = vmatmul.f32.gmra.mxu0 %v1787
      %v3927 = vpop.f32.mrf.mxu0
      %v3928 = vadd.f32 0.0, %v3927
      %3929 = vdwg.mxu0
      %3930 = vmatpush.msra.mxu0 0.0
      %3931 = vmatpush.msra.mxu0 0.0
      %3932 = vmatpush.msra.mxu0 0.0
      %3933 = vmatpush.msra.mxu0 0.0
      %3934 = vmatpush.msra.mxu0 0.0
      %3935 = vmatpush.msra.mxu0 0.0
      %3936 = vmatpush.msra.mxu0 0.0
      %3937 = vmatpush.msra.mxu0 0.0
      %3938 = vmatpush.msra.mxu0 0.0
      %3939 = vmatpush.msra.mxu0 0.0
      %3940 = vmatpush.msra.mxu0 0.0
      %3941 = vmatpush.msra.mxu0 0.0
      %3942 = vmatpush.msra.mxu0 0.0
      %3943 = vmatpush.msra.mxu0 0.0
      %3944 = vmatpush.msra.mxu0 0.0
      %3945 = vmatpush.msra.mxu0 %v3908
      %3946 = vmatmul.f32.gmra.mxu0 %v1787
      %v3947 = vpop.f32.mrf.mxu0
      %v3948 = vadd.f32 0.0, %v3947
      %3949 = vdwg.mxu0
      %v3950 = vadd.f32 %v3889, %v3928
      %v3951 = vadd.f32 %v3890, %v3948
      %3952 = vst [vmem:[#allocation1] ss:$2 sm:$0xff] %v3828
      %v3953 = vld.sshfl [vmem:[#allocation1] sm:$0xff pattern:$0x75316420]
      %v3954 = vld.sshfl [vmem:[#allocation1 + $0x8] sm:$0xff pattern:$0x75316420]
      %3957 = vrot.lane.b32.xlu0 %v3953, 113
      %v3958 = vpop.permute.xlu0 %3957
      %3959 = vrot.lane.b32.xlu0 %v3954, 113
      %v3960 = vpop.permute.xlu0 %3959
      %v3961 = vsel %vm609, %v3958, %v3960
      %v3962 = vsel %vm609, %v3960, %v3958
      %v3963 = vmul.f32 %v3961, %v613
      %v3964 = vmul.f32 %v3962, %v614
      %v3966 = vsel %vm481, %v3963, 0
      %v3969 = vsel %vm481, %v3964, 0
      %3971 = vmatpush.msra.mxu0 0.0
      %3972 = vmatpush.msra.mxu0 0.0
      %3973 = vmatpush.msra.mxu0 0.0
      %3974 = vmatpush.msra.mxu0 0.0
      %3975 = vmatpush.msra.mxu0 0.0
      %3976 = vmatpush.msra.mxu0 0.0
      %3977 = vmatpush.msra.mxu0 0.0
      %3978 = vmatpush.msra.mxu0 0.0
      %3979 = vmatpush.msra.mxu0 0.0
      %3980 = vmatpush.msra.mxu0 0.0
      %3981 = vmatpush.msra.mxu0 0.0
      %3982 = vmatpush.msra.mxu0 0.0
      %3983 = vmatpush.msra.mxu0 0.0
      %3984 = vmatpush.msra.mxu0 0.0
      %3985 = vmatpush.msra.mxu0 0.0
      %3986 = vmatpush.msra.mxu0 %v3966
      %3987 = vmatmul.f32.gmra.mxu0 %v1853
      %v3988 = vpop.f32.mrf.mxu0
      %v3989 = vadd.f32 0.0, %v3988
      %3990 = vdwg.mxu0
      %3991 = vmatpush.msra.mxu0 0.0
      %3992 = vmatpush.msra.mxu0 0.0
      %3993 = vmatpush.msra.mxu0 0.0
      %3994 = vmatpush.msra.mxu0 0.0
      %3995 = vmatpush.msra.mxu0 0.0
      %3996 = vmatpush.msra.mxu0 0.0
      %3997 = vmatpush.msra.mxu0 0.0
      %3998 = vmatpush.msra.mxu0 0.0
      %3999 = vmatpush.msra.mxu0 0.0
      %4000 = vmatpush.msra.mxu0 0.0
      %4001 = vmatpush.msra.mxu0 0.0
      %4002 = vmatpush.msra.mxu0 0.0
      %4003 = vmatpush.msra.mxu0 0.0
      %4004 = vmatpush.msra.mxu0 0.0
      %4005 = vmatpush.msra.mxu0 0.0
      %4006 = vmatpush.msra.mxu0 %v3969
      %4007 = vmatmul.f32.gmra.mxu0 %v1853
      %v4008 = vpop.f32.mrf.mxu0
      %v4009 = vadd.f32 0.0, %v4008
      %4010 = vdwg.mxu0
      %v4011 = vadd.f32 %v3950, %v3989
      %v4012 = vadd.f32 %v3951, %v4009
      %4013 = vst [vmem:[#allocation1] ss:$2 sm:$0xff] %v3828
      %v4014 = vld.sshfl [vmem:[#allocation1] sm:$0xff pattern:$0x75316420]
      %v4015 = vld.sshfl [vmem:[#allocation1 + $0x8] sm:$0xff pattern:$0x75316420]
      %4018 = vrot.lane.b32.xlu0 %v4014, 16
      %v4019 = vpop.permute.xlu0 %4018
      %4020 = vrot.lane.b32.xlu0 %v4015, 16
      %v4021 = vpop.permute.xlu0 %4020
      %v4022 = vsel %vm679, %v4019, %v4021
      %v4023 = vsel %vm679, %v4021, %v4019
      %v4024 = vmul.f32 %v4023, %v683
      %v4025 = vmul.f32 %v4022, %v684
      %v4027 = vsel %vm481, %v4024, 0
      %v4030 = vsel %vm481, %v4025, 0
      %4032 = vmatpush.msra.mxu0 0.0
      %4033 = vmatpush.msra.mxu0 0.0
      %4034 = vmatpush.msra.mxu0 0.0
      %4035 = vmatpush.msra.mxu0 0.0
      %4036 = vmatpush.msra.mxu0 0.0
      %4037 = vmatpush.msra.mxu0 0.0
      %4038 = vmatpush.msra.mxu0 0.0
      %4039 = vmatpush.msra.mxu0 0.0
      %4040 = vmatpush.msra.mxu0 0.0
      %4041 = vmatpush.msra.mxu0 0.0
      %4042 = vmatpush.msra.mxu0 0.0
      %4043 = vmatpush.msra.mxu0 0.0
      %4044 = vmatpush.msra.mxu0 0.0
      %4045 = vmatpush.msra.mxu0 0.0
      %4046 = vmatpush.msra.mxu0 0.0
      %4047 = vmatpush.msra.mxu0 %v4027
      %4048 = vmatmul.f32.gmra.mxu0 %v1919
      %v4049 = vpop.f32.mrf.mxu0
      %v4050 = vadd.f32 0.0, %v4049
      %4051 = vdwg.mxu0
      %4052 = vmatpush.msra.mxu0 0.0
      %4053 = vmatpush.msra.mxu0 0.0
      %4054 = vmatpush.msra.mxu0 0.0
      %4055 = vmatpush.msra.mxu0 0.0
      %4056 = vmatpush.msra.mxu0 0.0
      %4057 = vmatpush.msra.mxu0 0.0
      %4058 = vmatpush.msra.mxu0 0.0
      %4059 = vmatpush.msra.mxu0 0.0
      %4060 = vmatpush.msra.mxu0 0.0
      %4061 = vmatpush.msra.mxu0 0.0
      %4062 = vmatpush.msra.mxu0 0.0
      %4063 = vmatpush.msra.mxu0 0.0
      %4064 = vmatpush.msra.mxu0 0.0
      %4065 = vmatpush.msra.mxu0 0.0
      %4066 = vmatpush.msra.mxu0 0.0
      %4067 = vmatpush.msra.mxu0 %v4030
      %4068 = vmatmul.f32.gmra.mxu0 %v1919
      %v4069 = vpop.f32.mrf.mxu0
      %v4070 = vadd.f32 0.0, %v4069
      %4071 = vdwg.mxu0
      %v4072 = vadd.f32 %v4011, %v4050
      %v4073 = vadd.f32 %v4012, %v4070
      %4074 = vst [vmem:[#allocation1] ss:$2 sm:$0xff] %v3828
      %v4075 = vld.sshfl [vmem:[#allocation1] sm:$0xff pattern:$0x75316420]
      %v4076 = vld.sshfl [vmem:[#allocation1 + $0x8] sm:$0xff pattern:$0x75316420]
      %v4077 = vsel %vm481, %v4075, 0
      %v4079 = vsel %vm481, %v4076, 0
      %4081 = vmatpush.msra.mxu0 0.0
      %4082 = vmatpush.msra.mxu0 0.0
      %4083 = vmatpush.msra.mxu0 0.0
      %4084 = vmatpush.msra.mxu0 0.0
      %4085 = vmatpush.msra.mxu0 0.0
      %4086 = vmatpush.msra.mxu0 0.0
      %4087 = vmatpush.msra.mxu0 0.0
      %4088 = vmatpush.msra.mxu0 0.0
      %4089 = vmatpush.msra.mxu0 0.0
      %4090 = vmatpush.msra.mxu0 0.0
      %4091 = vmatpush.msra.mxu0 0.0
      %4092 = vmatpush.msra.mxu0 0.0
      %4093 = vmatpush.msra.mxu0 0.0
      %4094 = vmatpush.msra.mxu0 0.0
      %4095 = vmatpush.msra.mxu0 0.0
      %4096 = vmatpush.msra.mxu0 %v4077
      %4097 = vmatmul.f32.gmra.mxu0 %v1975
      %v4098 = vpop.f32.mrf.mxu0
      %v4099 = vadd.f32 0.0, %v4098
      %4100 = vdwg.mxu0
      %4101 = vmatpush.msra.mxu0 0.0
      %4102 = vmatpush.msra.mxu0 0.0
      %4103 = vmatpush.msra.mxu0 0.0
      %4104 = vmatpush.msra.mxu0 0.0
      %4105 = vmatpush.msra.mxu0 0.0
      %4106 = vmatpush.msra.mxu0 0.0
      %4107 = vmatpush.msra.mxu0 0.0
      %4108 = vmatpush.msra.mxu0 0.0
      %4109 = vmatpush.msra.mxu0 0.0
      %4110 = vmatpush.msra.mxu0 0.0
      %4111 = vmatpush.msra.mxu0 0.0
      %4112 = vmatpush.msra.mxu0 0.0
      %4113 = vmatpush.msra.mxu0 0.0
      %4114 = vmatpush.msra.mxu0 0.0
      %4115 = vmatpush.msra.mxu0 0.0
      %4116 = vmatpush.msra.mxu0 %v4079
      %4117 = vmatmul.f32.gmra.mxu0 %v1975
      %v4118 = vpop.f32.mrf.mxu0
      %v4119 = vadd.f32 0.0, %v4118
      %4120 = vdwg.mxu0
      %v4121 = vadd.f32 %v4072, %v4099
      %v4122 = vadd.f32 %v4073, %v4119
      %4123 = vst [vmem:[#allocation1] ss:$2 sm:$0xff] %v3828
      %v4124 = vld.sshfl [vmem:[#allocation1] sm:$0xff pattern:$0x75316420]
      %v4125 = vld.sshfl [vmem:[#allocation1 + $0x8] sm:$0xff pattern:$0x75316420]
      %4128 = vrot.lane.b32.xlu0 %v4124, 112
      %v4129 = vpop.permute.xlu0 %4128
      %4130 = vrot.lane.b32.xlu0 %v4125, 112
      %v4131 = vpop.permute.xlu0 %4130
      %v4132 = vsel %vm803, %v4129, %v4131
      %v4133 = vsel %vm803, %v4131, %v4129
      %v4134 = vmul.f32 %v4132, %v807
      %v4135 = vmul.f32 %v4133, %v808
      %v4137 = vsel %vm481, %v4134, 0
      %v4140 = vsel %vm481, %v4135, 0
      %4142 = vmatpush.msra.mxu0 0.0
      %4143 = vmatpush.msra.mxu0 0.0
      %4144 = vmatpush.msra.mxu0 0.0
      %4145 = vmatpush.msra.mxu0 0.0
      %4146 = vmatpush.msra.mxu0 0.0
      %4147 = vmatpush.msra.mxu0 0.0
      %4148 = vmatpush.msra.mxu0 0.0
      %4149 = vmatpush.msra.mxu0 0.0
      %4150 = vmatpush.msra.mxu0 0.0
      %4151 = vmatpush.msra.mxu0 0.0
      %4152 = vmatpush.msra.mxu0 0.0
      %4153 = vmatpush.msra.mxu0 0.0
      %4154 = vmatpush.msra.mxu0 0.0
      %4155 = vmatpush.msra.mxu0 0.0
      %4156 = vmatpush.msra.mxu0 0.0
      %4157 = vmatpush.msra.mxu0 %v4137
      %4158 = vmatmul.f32.gmra.mxu0 %v2039
      %v4159 = vpop.f32.mrf.mxu0
      %v4160 = vadd.f32 0.0, %v4159
      %4161 = vdwg.mxu0
      %4162 = vmatpush.msra.mxu0 0.0
      %4163 = vmatpush.msra.mxu0 0.0
      %4164 = vmatpush.msra.mxu0 0.0
      %4165 = vmatpush.msra.mxu0 0.0
      %4166 = vmatpush.msra.mxu0 0.0
      %4167 = vmatpush.msra.mxu0 0.0
      %4168 = vmatpush.msra.mxu0 0.0
      %4169 = vmatpush.msra.mxu0 0.0
      %4170 = vmatpush.msra.mxu0 0.0
      %4171 = vmatpush.msra.mxu0 0.0
      %4172 = vmatpush.msra.mxu0 0.0
      %4173 = vmatpush.msra.mxu0 0.0
      %4174 = vmatpush.msra.mxu0 0.0
      %4175 = vmatpush.msra.mxu0 0.0
      %4176 = vmatpush.msra.mxu0 0.0
      %4177 = vmatpush.msra.mxu0 %v4140
      %4178 = vmatmul.f32.gmra.mxu0 %v2039
      %v4179 = vpop.f32.mrf.mxu0
      %v4180 = vadd.f32 0.0, %v4179
      %4181 = vdwg.mxu0
      %v4182 = vadd.f32 %v4121, %v4160
      %v4183 = vadd.f32 %v4122, %v4180
      %4184 = vst [vmem:[#allocation1] ss:$2 sm:$0xff] %v3828
      %v4185 = vld.sshfl [vmem:[#allocation1] sm:$0xff pattern:$0x75316420]
      %v4186 = vld.sshfl [vmem:[#allocation1 + $0x8] sm:$0xff pattern:$0x75316420]
      %4189 = vrot.lane.b32.xlu0 %v4185, 15
      %v4190 = vpop.permute.xlu0 %4189
      %4191 = vrot.lane.b32.xlu0 %v4186, 15
      %v4192 = vpop.permute.xlu0 %4191
      %v4193 = vsel %vm873, %v4190, %v4192
      %v4194 = vsel %vm873, %v4192, %v4190
      %v4195 = vmul.f32 %v4194, %v877
      %v4196 = vmul.f32 %v4193, %v878
      %v4198 = vsel %vm481, %v4195, 0
      %v4201 = vsel %vm481, %v4196, 0
      %4203 = vmatpush.msra.mxu0 0.0
      %4204 = vmatpush.msra.mxu0 0.0
      %4205 = vmatpush.msra.mxu0 0.0
      %4206 = vmatpush.msra.mxu0 0.0
      %4207 = vmatpush.msra.mxu0 0.0
      %4208 = vmatpush.msra.mxu0 0.0
      %4209 = vmatpush.msra.mxu0 0.0
      %4210 = vmatpush.msra.mxu0 0.0
      %4211 = vmatpush.msra.mxu0 0.0
      %4212 = vmatpush.msra.mxu0 0.0
      %4213 = vmatpush.msra.mxu0 0.0
      %4214 = vmatpush.msra.mxu0 0.0
      %4215 = vmatpush.msra.mxu0 0.0
      %4216 = vmatpush.msra.mxu0 0.0
      %4217 = vmatpush.msra.mxu0 0.0
      %4218 = vmatpush.msra.mxu0 %v4198
      %4219 = vmatmul.f32.gmra.mxu0 %v2105
      %v4220 = vpop.f32.mrf.mxu0
      %v4221 = vadd.f32 0.0, %v4220
      %4222 = vdwg.mxu0
      %4223 = vmatpush.msra.mxu0 0.0
      %4224 = vmatpush.msra.mxu0 0.0
      %4225 = vmatpush.msra.mxu0 0.0
      %4226 = vmatpush.msra.mxu0 0.0
      %4227 = vmatpush.msra.mxu0 0.0
      %4228 = vmatpush.msra.mxu0 0.0
      %4229 = vmatpush.msra.mxu0 0.0
      %4230 = vmatpush.msra.mxu0 0.0
      %4231 = vmatpush.msra.mxu0 0.0
      %4232 = vmatpush.msra.mxu0 0.0
      %4233 = vmatpush.msra.mxu0 0.0
      %4234 = vmatpush.msra.mxu0 0.0
      %4235 = vmatpush.msra.mxu0 0.0
      %4236 = vmatpush.msra.mxu0 0.0
      %4237 = vmatpush.msra.mxu0 0.0
      %4238 = vmatpush.msra.mxu0 %v4201
      %4239 = vmatmul.f32.gmra.mxu0 %v2105
      %v4240 = vpop.f32.mrf.mxu0
      %v4241 = vadd.f32 0.0, %v4240
      %4242 = vdwg.mxu0
      %v4243 = vadd.f32 %v4182, %v4221
      %v4244 = vadd.f32 %v4183, %v4241
      %4245 = vst [vmem:[#allocation1] ss:$2 sm:$0xff] %v3828
      %v4246 = vld.sshfl [vmem:[#allocation1] sm:$0xff pattern:$0x75316420]
      %v4247 = vld.sshfl [vmem:[#allocation1 + $0x8] sm:$0xff pattern:$0x75316420]
      %4250 = vrot.lane.b32.xlu0 %v4246, 127
      %v4251 = vpop.permute.xlu0 %4250
      %4252 = vrot.lane.b32.xlu0 %v4247, 127
      %v4253 = vpop.permute.xlu0 %4252
      %v4254 = vsel %vm943, %v4251, %v4253
      %v4255 = vsel %vm943, %v4253, %v4251
      %v4256 = vmul.f32 %v4254, %v947
      %v4257 = vmul.f32 %v4255, %v948
      %v4259 = vsel %vm481, %v4256, 0
      %v4262 = vsel %vm481, %v4257, 0
      %4264 = vmatpush.msra.mxu0 0.0
      %4265 = vmatpush.msra.mxu0 0.0
      %4266 = vmatpush.msra.mxu0 0.0
      %4267 = vmatpush.msra.mxu0 0.0
      %4268 = vmatpush.msra.mxu0 0.0
      %4269 = vmatpush.msra.mxu0 0.0
      %4270 = vmatpush.msra.mxu0 0.0
      %4271 = vmatpush.msra.mxu0 0.0
      %4272 = vmatpush.msra.mxu0 0.0
      %4273 = vmatpush.msra.mxu0 0.0
      %4274 = vmatpush.msra.mxu0 0.0
      %4275 = vmatpush.msra.mxu0 0.0
      %4276 = vmatpush.msra.mxu0 0.0
      %4277 = vmatpush.msra.mxu0 0.0
      %4278 = vmatpush.msra.mxu0 0.0
      %4279 = vmatpush.msra.mxu0 %v4259
      %4280 = vmatmul.f32.gmra.mxu0 %v2171
      %v4281 = vpop.f32.mrf.mxu0
      %v4282 = vadd.f32 0.0, %v4281
      %4283 = vdwg.mxu0
      %4284 = vmatpush.msra.mxu0 0.0
      %4285 = vmatpush.msra.mxu0 0.0
      %4286 = vmatpush.msra.mxu0 0.0
      %4287 = vmatpush.msra.mxu0 0.0
      %4288 = vmatpush.msra.mxu0 0.0
      %4289 = vmatpush.msra.mxu0 0.0
      %4290 = vmatpush.msra.mxu0 0.0
      %4291 = vmatpush.msra.mxu0 0.0
      %4292 = vmatpush.msra.mxu0 0.0
      %4293 = vmatpush.msra.mxu0 0.0
      %4294 = vmatpush.msra.mxu0 0.0
      %4295 = vmatpush.msra.mxu0 0.0
      %4296 = vmatpush.msra.mxu0 0.0
      %4297 = vmatpush.msra.mxu0 0.0
      %4298 = vmatpush.msra.mxu0 0.0
      %4299 = vmatpush.msra.mxu0 %v4262
      %4300 = vmatmul.f32.gmra.mxu0 %v2171
      %v4301 = vpop.f32.mrf.mxu0
      %v4302 = vadd.f32 0.0, %v4301
      %4303 = vdwg.mxu0
      %v4304 = vadd.f32 %v4243, %v4282
      %v4305 = vadd.f32 %v4244, %v4302
      %4306 = vst [vmem:[#allocation1] ss:$2 sm:$0xff] %v3828
      %v4307 = vld.sshfl [vmem:[#allocation1] sm:$0xff pattern:$0x75316420]
      %v4308 = vld.sshfl [vmem:[#allocation1 + $0x8] sm:$0xff pattern:$0x75316420]
      %4311 = vrot.lane.b32.xlu0 %v4307, 111
      %v4312 = vpop.permute.xlu0 %4311
      %4313 = vrot.lane.b32.xlu0 %v4308, 111
      %v4314 = vpop.permute.xlu0 %4313
      %v4315 = vsel %vm1013, %v4312, %v4314
      %v4316 = vsel %vm1013, %v4314, %v4312
      %v4317 = vmul.f32 %v4315, %v1017
      %v4318 = vmul.f32 %v4316, %v1018
      %v4320 = vsel %vm481, %v4317, 0
      %v4323 = vsel %vm481, %v4318, 0
      %4325 = vmatpush.msra.mxu0 0.0
      %4326 = vmatpush.msra.mxu0 0.0
      %4327 = vmatpush.msra.mxu0 0.0
      %4328 = vmatpush.msra.mxu0 0.0
      %4329 = vmatpush.msra.mxu0 0.0
      %4330 = vmatpush.msra.mxu0 0.0
      %4331 = vmatpush.msra.mxu0 0.0
      %4332 = vmatpush.msra.mxu0 0.0
      %4333 = vmatpush.msra.mxu0 0.0
      %4334 = vmatpush.msra.mxu0 0.0
      %4335 = vmatpush.msra.mxu0 0.0
      %4336 = vmatpush.msra.mxu0 0.0
      %4337 = vmatpush.msra.mxu0 0.0
      %4338 = vmatpush.msra.mxu0 0.0
      %4339 = vmatpush.msra.mxu0 0.0
      %4340 = vmatpush.msra.mxu0 %v4320
      %4341 = vmatmul.f32.gmra.mxu0 %v2237
      %v4342 = vpop.f32.mrf.mxu0
      %v4343 = vadd.f32 0.0, %v4342
      %4344 = vdwg.mxu0
      %4345 = vmatpush.msra.mxu0 0.0
      %4346 = vmatpush.msra.mxu0 0.0
      %4347 = vmatpush.msra.mxu0 0.0
      %4348 = vmatpush.msra.mxu0 0.0
      %4349 = vmatpush.msra.mxu0 0.0
      %4350 = vmatpush.msra.mxu0 0.0
      %4351 = vmatpush.msra.mxu0 0.0
      %4352 = vmatpush.msra.mxu0 0.0
      %4353 = vmatpush.msra.mxu0 0.0
      %4354 = vmatpush.msra.mxu0 0.0
      %4355 = vmatpush.msra.mxu0 0.0
      %4356 = vmatpush.msra.mxu0 0.0
      %4357 = vmatpush.msra.mxu0 0.0
      %4358 = vmatpush.msra.mxu0 0.0
      %4359 = vmatpush.msra.mxu0 0.0
      %4360 = vmatpush.msra.mxu0 %v4323
      %4361 = vmatmul.f32.gmra.mxu0 %v2237
      %v4362 = vpop.f32.mrf.mxu0
      %v4363 = vadd.f32 0.0, %v4362
      %4364 = vdwg.mxu0
      %v4365 = vadd.f32 %v4304, %v4343
      %v4366 = vadd.f32 %v4305, %v4363
      %v4367 = vmax.f32 %v4365, 0.0
      %v4368 = vmax.f32 %v4366, 0.0
      %4369 = vrot.lane.b32.xlu0 %v4367, 17
      %v4370 = vpop.permute.xlu0 %4369
      %4371 = vrot.lane.b32.xlu0 %v4368, 17
      %v4372 = vpop.permute.xlu0 %4371
      %v4373 = vsel %vm469, %v4370, %v4372
      %v4374 = vsel %vm469, %v4372, %v4370
      %v4375 = vmul.f32 %v4374, %v2295
      %v4376 = vmul.f32 %v4373, %v2296
      %4377 = vmatpush.msra.mxu0 0.0
      %4378 = vmatpush.msra.mxu0 0.0
      %4379 = vmatpush.msra.mxu0 0.0
      %4380 = vmatpush.msra.mxu0 0.0
      %4381 = vmatpush.msra.mxu0 0.0
      %4382 = vmatpush.msra.mxu0 0.0
      %4383 = vmatpush.msra.mxu0 0.0
      %4384 = vmatpush.msra.mxu0 0.0
      %4385 = vmatpush.msra.mxu0 0.0
      %4386 = vmatpush.msra.mxu0 0.0
      %4387 = vmatpush.msra.mxu0 0.0
      %4388 = vmatpush.msra.mxu0 0.0
      %4389 = vmatpush.msra.mxu0 0.0
      %4390 = vmatpush.msra.mxu0 0.0
      %4391 = vmatpush.msra.mxu0 0.0
      %4392 = vmatpush.msra.mxu0 %v4375
      %4393 = vmatmul.f32.gmra.mxu0 %v2302
      %v4394 = vpop.f32.mrf.mxu0
      %v4395 = vadd.f32 0.0, %v4394
      %4396 = vdwg.mxu0
      %4397 = vmatpush.msra.mxu0 0.0
      %4398 = vmatpush.msra.mxu0 0.0
      %4399 = vmatpush.msra.mxu0 0.0
      %4400 = vmatpush.msra.mxu0 0.0
      %4401 = vmatpush.msra.mxu0 0.0
      %4402 = vmatpush.msra.mxu0 0.0
      %4403 = vmatpush.msra.mxu0 0.0
      %4404 = vmatpush.msra.mxu0 0.0
      %4405 = vmatpush.msra.mxu0 0.0
      %4406 = vmatpush.msra.mxu0 0.0
      %4407 = vmatpush.msra.mxu0 0.0
      %4408 = vmatpush.msra.mxu0 0.0
      %4409 = vmatpush.msra.mxu0 0.0
      %4410 = vmatpush.msra.mxu0 0.0
      %4411 = vmatpush.msra.mxu0 0.0
      %4412 = vmatpush.msra.mxu0 %v4376
      %4413 = vmatmul.f32.gmra.mxu0 %v2302
      %v4414 = vpop.f32.mrf.mxu0
      %v4415 = vadd.f32 0.0, %v4414
      %4416 = vdwg.mxu0
      %v4417 = vadd.f32 %v449, %v4395
      %v4418 = vadd.f32 %v449, %v4415
      %4419 = vrot.lane.b32.xlu0 %v4367, 1
      %v4420 = vpop.permute.xlu0 %4419
      %4421 = vrot.lane.b32.xlu0 %v4368, 1
      %v4422 = vpop.permute.xlu0 %4421
      %v4423 = vsel %vm539, %v4420, %v4422
      %v4424 = vsel %vm539, %v4422, %v4420
      %v4425 = vmul.f32 %v4424, %v2352
      %v4426 = vmul.f32 %v4423, %v2353
      %4427 = vmatpush.msra.mxu0 0.0
      %4428 = vmatpush.msra.mxu0 0.0
      %4429 = vmatpush.msra.mxu0 0.0
      %4430 = vmatpush.msra.mxu0 0.0
      %4431 = vmatpush.msra.mxu0 0.0
      %4432 = vmatpush.msra.mxu0 0.0
      %4433 = vmatpush.msra.mxu0 0.0
      %4434 = vmatpush.msra.mxu0 0.0
      %4435 = vmatpush.msra.mxu0 0.0
      %4436 = vmatpush.msra.mxu0 0.0
      %4437 = vmatpush.msra.mxu0 0.0
      %4438 = vmatpush.msra.mxu0 0.0
      %4439 = vmatpush.msra.mxu0 0.0
      %4440 = vmatpush.msra.mxu0 0.0
      %4441 = vmatpush.msra.mxu0 0.0
      %4442 = vmatpush.msra.mxu0 %v4425
      %4443 = vmatmul.f32.gmra.mxu0 %v2359
      %v4444 = vpop.f32.mrf.mxu0
      %v4445 = vadd.f32 0.0, %v4444
      %4446 = vdwg.mxu0
      %4447 = vmatpush.msra.mxu0 0.0
      %4448 = vmatpush.msra.mxu0 0.0
      %4449 = vmatpush.msra.mxu0 0.0
      %4450 = vmatpush.msra.mxu0 0.0
      %4451 = vmatpush.msra.mxu0 0.0
      %4452 = vmatpush.msra.mxu0 0.0
      %4453 = vmatpush.msra.mxu0 0.0
      %4454 = vmatpush.msra.mxu0 0.0
      %4455 = vmatpush.msra.mxu0 0.0
      %4456 = vmatpush.msra.mxu0 0.0
      %4457 = vmatpush.msra.mxu0 0.0
      %4458 = vmatpush.msra.mxu0 0.0
      %4459 = vmatpush.msra.mxu0 0.0
      %4460 = vmatpush.msra.mxu0 0.0
      %4461 = vmatpush.msra.mxu0 0.0
      %4462 = vmatpush.msra.mxu0 %v4426
      %4463 = vmatmul.f32.gmra.mxu0 %v2359
      %v4464 = vpop.f32.mrf.mxu0
      %v4465 = vadd.f32 0.0, %v4464
      %4466 = vdwg.mxu0
      %v4467 = vadd.f32 %v4417, %v4445
      %v4468 = vadd.f32 %v4418, %v4465
      %4469 = vrot.lane.b32.xlu0 %v4367, 113
      %v4470 = vpop.permute.xlu0 %4469
      %4471 = vrot.lane.b32.xlu0 %v4368, 113
      %v4472 = vpop.permute.xlu0 %4471
      %v4473 = vsel %vm609, %v4470, %v4472
      %v4474 = vsel %vm609, %v4472, %v4470
      %v4475 = vmul.f32 %v4473, %v2409
      %v4476 = vmul.f32 %v4474, %v2410
      %4477 = vmatpush.msra.mxu0 0.0
      %4478 = vmatpush.msra.mxu0 0.0
      %4479 = vmatpush.msra.mxu0 0.0
      %4480 = vmatpush.msra.mxu0 0.0
      %4481 = vmatpush.msra.mxu0 0.0
      %4482 = vmatpush.msra.mxu0 0.0
      %4483 = vmatpush.msra.mxu0 0.0
      %4484 = vmatpush.msra.mxu0 0.0
      %4485 = vmatpush.msra.mxu0 0.0
      %4486 = vmatpush.msra.mxu0 0.0
      %4487 = vmatpush.msra.mxu0 0.0
      %4488 = vmatpush.msra.mxu0 0.0
      %4489 = vmatpush.msra.mxu0 0.0
      %4490 = vmatpush.msra.mxu0 0.0
      %4491 = vmatpush.msra.mxu0 0.0
      %4492 = vmatpush.msra.mxu0 %v4475
      %4493 = vmatmul.f32.gmra.mxu0 %v2416
      %v4494 = vpop.f32.mrf.mxu0
      %v4495 = vadd.f32 0.0, %v4494
      %4496 = vdwg.mxu0
      %4497 = vmatpush.msra.mxu0 0.0
      %4498 = vmatpush.msra.mxu0 0.0
      %4499 = vmatpush.msra.mxu0 0.0
      %4500 = vmatpush.msra.mxu0 0.0
      %4501 = vmatpush.msra.mxu0 0.0
      %4502 = vmatpush.msra.mxu0 0.0
      %4503 = vmatpush.msra.mxu0 0.0
      %4504 = vmatpush.msra.mxu0 0.0
      %4505 = vmatpush.msra.mxu0 0.0
      %4506 = vmatpush.msra.mxu0 0.0
      %4507 = vmatpush.msra.mxu0 0.0
      %4508 = vmatpush.msra.mxu0 0.0
      %4509 = vmatpush.msra.mxu0 0.0
      %4510 = vmatpush.msra.mxu0 0.0
      %4511 = vmatpush.msra.mxu0 0.0
      %4512 = vmatpush.msra.mxu0 %v4476
      %4513 = vmatmul.f32.gmra.mxu0 %v2416
      %v4514 = vpop.f32.mrf.mxu0
      %v4515 = vadd.f32 0.0, %v4514
      %4516 = vdwg.mxu0
      %v4517 = vadd.f32 %v4467, %v4495
      %v4518 = vadd.f32 %v4468, %v4515
      %4519 = vrot.lane.b32.xlu0 %v4367, 16
      %v4520 = vpop.permute.xlu0 %4519
      %4521 = vrot.lane.b32.xlu0 %v4368, 16
      %v4522 = vpop.permute.xlu0 %4521
      %v4523 = vsel %vm679, %v4520, %v4522
      %v4524 = vsel %vm679, %v4522, %v4520
      %v4525 = vmul.f32 %v4524, %v2466
      %v4526 = vmul.f32 %v4523, %v2467
      %4527 = vmatpush.msra.mxu0 0.0
      %4528 = vmatpush.msra.mxu0 0.0
      %4529 = vmatpush.msra.mxu0 0.0
      %4530 = vmatpush.msra.mxu0 0.0
      %4531 = vmatpush.msra.mxu0 0.0
      %4532 = vmatpush.msra.mxu0 0.0
      %4533 = vmatpush.msra.mxu0 0.0
      %4534 = vmatpush.msra.mxu0 0.0
      %4535 = vmatpush.msra.mxu0 0.0
      %4536 = vmatpush.msra.mxu0 0.0
      %4537 = vmatpush.msra.mxu0 0.0
      %4538 = vmatpush.msra.mxu0 0.0
      %4539 = vmatpush.msra.mxu0 0.0
      %4540 = vmatpush.msra.mxu0 0.0
      %4541 = vmatpush.msra.mxu0 0.0
      %4542 = vmatpush.msra.mxu0 %v4525
      %4543 = vmatmul.f32.gmra.mxu0 %v2473
      %v4544 = vpop.f32.mrf.mxu0
      %v4545 = vadd.f32 0.0, %v4544
      %4546 = vdwg.mxu0
      %4547 = vmatpush.msra.mxu0 0.0
      %4548 = vmatpush.msra.mxu0 0.0
      %4549 = vmatpush.msra.mxu0 0.0
      %4550 = vmatpush.msra.mxu0 0.0
      %4551 = vmatpush.msra.mxu0 0.0
      %4552 = vmatpush.msra.mxu0 0.0
      %4553 = vmatpush.msra.mxu0 0.0
      %4554 = vmatpush.msra.mxu0 0.0
      %4555 = vmatpush.msra.mxu0 0.0
      %4556 = vmatpush.msra.mxu0 0.0
      %4557 = vmatpush.msra.mxu0 0.0
      %4558 = vmatpush.msra.mxu0 0.0
      %4559 = vmatpush.msra.mxu0 0.0
      %4560 = vmatpush.msra.mxu0 0.0
      %4561 = vmatpush.msra.mxu0 0.0
      %4562 = vmatpush.msra.mxu0 %v4526
      %4563 = vmatmul.f32.gmra.mxu0 %v2473
      %v4564 = vpop.f32.mrf.mxu0
      %v4565 = vadd.f32 0.0, %v4564
      %4566 = vdwg.mxu0
      %v4567 = vadd.f32 %v4517, %v4545
      %v4568 = vadd.f32 %v4518, %v4565
      %4569 = vmatpush.msra.mxu0 0.0
      %4570 = vmatpush.msra.mxu0 0.0
      %4571 = vmatpush.msra.mxu0 0.0
      %4572 = vmatpush.msra.mxu0 0.0
      %4573 = vmatpush.msra.mxu0 0.0
      %4574 = vmatpush.msra.mxu0 0.0
      %4575 = vmatpush.msra.mxu0 0.0
      %4576 = vmatpush.msra.mxu0 0.0
      %4577 = vmatpush.msra.mxu0 0.0
      %4578 = vmatpush.msra.mxu0 0.0
      %4579 = vmatpush.msra.mxu0 0.0
      %4580 = vmatpush.msra.mxu0 0.0
      %4581 = vmatpush.msra.mxu0 0.0
      %4582 = vmatpush.msra.mxu0 0.0
      %4583 = vmatpush.msra.mxu0 0.0
      %4584 = vmatpush.msra.mxu0 %v4367
      %4585 = vmatmul.f32.gmra.mxu0 %v2520
      %v4586 = vpop.f32.mrf.mxu0
      %v4587 = vadd.f32 0.0, %v4586
      %4588 = vdwg.mxu0
      %4589 = vmatpush.msra.mxu0 0.0
      %4590 = vmatpush.msra.mxu0 0.0
      %4591 = vmatpush.msra.mxu0 0.0
      %4592 = vmatpush.msra.mxu0 0.0
      %4593 = vmatpush.msra.mxu0 0.0
      %4594 = vmatpush.msra.mxu0 0.0
      %4595 = vmatpush.msra.mxu0 0.0
      %4596 = vmatpush.msra.mxu0 0.0
      %4597 = vmatpush.msra.mxu0 0.0
      %4598 = vmatpush.msra.mxu0 0.0
      %4599 = vmatpush.msra.mxu0 0.0
      %4600 = vmatpush.msra.mxu0 0.0
      %4601 = vmatpush.msra.mxu0 0.0
      %4602 = vmatpush.msra.mxu0 0.0
      %4603 = vmatpush.msra.mxu0 0.0
      %4604 = vmatpush.msra.mxu0 %v4368
      %4605 = vmatmul.f32.gmra.mxu0 %v2520
      %v4606 = vpop.f32.mrf.mxu0
      %v4607 = vadd.f32 0.0, %v4606
      %4608 = vdwg.mxu0
      %v4609 = vadd.f32 %v4567, %v4587
      %v4610 = vadd.f32 %v4568, %v4607
      %4611 = vrot.lane.b32.xlu0 %v4367, 112
      %v4612 = vpop.permute.xlu0 %4611
      %4613 = vrot.lane.b32.xlu0 %v4368, 112
      %v4614 = vpop.permute.xlu0 %4613
      %v4615 = vsel %vm803, %v4612, %v4614
      %v4616 = vsel %vm803, %v4614, %v4612
      %v4617 = vmul.f32 %v4615, %v2570
      %v4618 = vmul.f32 %v4616, %v2571
      %4619 = vmatpush.msra.mxu0 0.0
      %4620 = vmatpush.msra.mxu0 0.0
      %4621 = vmatpush.msra.mxu0 0.0
      %4622 = vmatpush.msra.mxu0 0.0
      %4623 = vmatpush.msra.mxu0 0.0
      %4624 = vmatpush.msra.mxu0 0.0
      %4625 = vmatpush.msra.mxu0 0.0
      %4626 = vmatpush.msra.mxu0 0.0
      %4627 = vmatpush.msra.mxu0 0.0
      %4628 = vmatpush.msra.mxu0 0.0
      %4629 = vmatpush.msra.mxu0 0.0
      %4630 = vmatpush.msra.mxu0 0.0
      %4631 = vmatpush.msra.mxu0 0.0
      %4632 = vmatpush.msra.mxu0 0.0
      %4633 = vmatpush.msra.mxu0 0.0
      %4634 = vmatpush.msra.mxu0 %v4617
      %4635 = vmatmul.f32.gmra.mxu0 %v2577
      %v4636 = vpop.f32.mrf.mxu0
      %v4637 = vadd.f32 0.0, %v4636
      %4638 = vdwg.mxu0
      %4639 = vmatpush.msra.mxu0 0.0
      %4640 = vmatpush.msra.mxu0 0.0
      %4641 = vmatpush.msra.mxu0 0.0
      %4642 = vmatpush.msra.mxu0 0.0
      %4643 = vmatpush.msra.mxu0 0.0
      %4644 = vmatpush.msra.mxu0 0.0
      %4645 = vmatpush.msra.mxu0 0.0
      %4646 = vmatpush.msra.mxu0 0.0
      %4647 = vmatpush.msra.mxu0 0.0
      %4648 = vmatpush.msra.mxu0 0.0
      %4649 = vmatpush.msra.mxu0 0.0
      %4650 = vmatpush.msra.mxu0 0.0
      %4651 = vmatpush.msra.mxu0 0.0
      %4652 = vmatpush.msra.mxu0 0.0
      %4653 = vmatpush.msra.mxu0 0.0
      %4654 = vmatpush.msra.mxu0 %v4618
      %4655 = vmatmul.f32.gmra.mxu0 %v2577
      %v4656 = vpop.f32.mrf.mxu0
      %v4657 = vadd.f32 0.0, %v4656
      %4658 = vdwg.mxu0
      %v4659 = vadd.f32 %v4609, %v4637
      %v4660 = vadd.f32 %v4610, %v4657
      %4661 = vrot.lane.b32.xlu0 %v4367, 15
      %v4662 = vpop.permute.xlu0 %4661
      %4663 = vrot.lane.b32.xlu0 %v4368, 15
      %v4664 = vpop.permute.xlu0 %4663
      %v4665 = vsel %vm873, %v4662, %v4664
      %v4666 = vsel %vm873, %v4664, %v4662
      %v4667 = vmul.f32 %v4666, %v2627
      %v4668 = vmul.f32 %v4665, %v2628
      %4669 = vmatpush.msra.mxu0 0.0
      %4670 = vmatpush.msra.mxu0 0.0
      %4671 = vmatpush.msra.mxu0 0.0
      %4672 = vmatpush.msra.mxu0 0.0
      %4673 = vmatpush.msra.mxu0 0.0
      %4674 = vmatpush.msra.mxu0 0.0
      %4675 = vmatpush.msra.mxu0 0.0
      %4676 = vmatpush.msra.mxu0 0.0
      %4677 = vmatpush.msra.mxu0 0.0
      %4678 = vmatpush.msra.mxu0 0.0
      %4679 = vmatpush.msra.mxu0 0.0
      %4680 = vmatpush.msra.mxu0 0.0
      %4681 = vmatpush.msra.mxu0 0.0
      %4682 = vmatpush.msra.mxu0 0.0
      %4683 = vmatpush.msra.mxu0 0.0
      %4684 = vmatpush.msra.mxu0 %v4667
      %4685 = vmatmul.f32.gmra.mxu0 %v2634
      %v4686 = vpop.f32.mrf.mxu0
      %v4687 = vadd.f32 0.0, %v4686
      %4688 = vdwg.mxu0
      %4689 = vmatpush.msra.mxu0 0.0
      %4690 = vmatpush.msra.mxu0 0.0
      %4691 = vmatpush.msra.mxu0 0.0
      %4692 = vmatpush.msra.mxu0 0.0
      %4693 = vmatpush.msra.mxu0 0.0
      %4694 = vmatpush.msra.mxu0 0.0
      %4695 = vmatpush.msra.mxu0 0.0
      %4696 = vmatpush.msra.mxu0 0.0
      %4697 = vmatpush.msra.mxu0 0.0
      %4698 = vmatpush.msra.mxu0 0.0
      %4699 = vmatpush.msra.mxu0 0.0
      %4700 = vmatpush.msra.mxu0 0.0
      %4701 = vmatpush.msra.mxu0 0.0
      %4702 = vmatpush.msra.mxu0 0.0
      %4703 = vmatpush.msra.mxu0 0.0
      %4704 = vmatpush.msra.mxu0 %v4668
      %4705 = vmatmul.f32.gmra.mxu0 %v2634
      %v4706 = vpop.f32.mrf.mxu0
      %v4707 = vadd.f32 0.0, %v4706
      %4708 = vdwg.mxu0
      %v4709 = vadd.f32 %v4659, %v4687
      %v4710 = vadd.f32 %v4660, %v4707
      %4711 = vrot.lane.b32.xlu0 %v4367, 127
      %v4712 = vpop.permute.xlu0 %4711
      %4713 = vrot.lane.b32.xlu0 %v4368, 127
      %v4714 = vpop.permute.xlu0 %4713
      %v4715 = vsel %vm943, %v4712, %v4714
      %v4716 = vsel %vm943, %v4714, %v4712
      %v4717 = vmul.f32 %v4715, %v2684
      %v4718 = vmul.f32 %v4716, %v2685
      %4719 = vmatpush.msra.mxu0 0.0
      %4720 = vmatpush.msra.mxu0 0.0
      %4721 = vmatpush.msra.mxu0 0.0
      %4722 = vmatpush.msra.mxu0 0.0
      %4723 = vmatpush.msra.mxu0 0.0
      %4724 = vmatpush.msra.mxu0 0.0
      %4725 = vmatpush.msra.mxu0 0.0
      %4726 = vmatpush.msra.mxu0 0.0
      %4727 = vmatpush.msra.mxu0 0.0
      %4728 = vmatpush.msra.mxu0 0.0
      %4729 = vmatpush.msra.mxu0 0.0
      %4730 = vmatpush.msra.mxu0 0.0
      %4731 = vmatpush.msra.mxu0 0.0
      %4732 = vmatpush.msra.mxu0 0.0
      %4733 = vmatpush.msra.mxu0 0.0
      %4734 = vmatpush.msra.mxu0 %v4717
      %4735 = vmatmul.f32.gmra.mxu0 %v2691
      %v4736 = vpop.f32.mrf.mxu0
      %v4737 = vadd.f32 0.0, %v4736
      %4738 = vdwg.mxu0
      %4739 = vmatpush.msra.mxu0 0.0
      %4740 = vmatpush.msra.mxu0 0.0
      %4741 = vmatpush.msra.mxu0 0.0
      %4742 = vmatpush.msra.mxu0 0.0
      %4743 = vmatpush.msra.mxu0 0.0
      %4744 = vmatpush.msra.mxu0 0.0
      %4745 = vmatpush.msra.mxu0 0.0
      %4746 = vmatpush.msra.mxu0 0.0
      %4747 = vmatpush.msra.mxu0 0.0
      %4748 = vmatpush.msra.mxu0 0.0
      %4749 = vmatpush.msra.mxu0 0.0
      %4750 = vmatpush.msra.mxu0 0.0
      %4751 = vmatpush.msra.mxu0 0.0
      %4752 = vmatpush.msra.mxu0 0.0
      %4753 = vmatpush.msra.mxu0 0.0
      %4754 = vmatpush.msra.mxu0 %v4718
      %4755 = vmatmul.f32.gmra.mxu0 %v2691
      %v4756 = vpop.f32.mrf.mxu0
      %v4757 = vadd.f32 0.0, %v4756
      %4758 = vdwg.mxu0
      %v4759 = vadd.f32 %v4709, %v4737
      %v4760 = vadd.f32 %v4710, %v4757
      %4761 = vrot.lane.b32.xlu0 %v4367, 111
      %v4762 = vpop.permute.xlu0 %4761
      %4763 = vrot.lane.b32.xlu0 %v4368, 111
      %v4764 = vpop.permute.xlu0 %4763
      %v4765 = vsel %vm1013, %v4762, %v4764
      %v4766 = vsel %vm1013, %v4764, %v4762
      %v4767 = vmul.f32 %v4765, %v2741
      %v4768 = vmul.f32 %v4766, %v2742
      %4769 = vmatpush.msra.mxu0 0.0
      %4770 = vmatpush.msra.mxu0 0.0
      %4771 = vmatpush.msra.mxu0 0.0
      %4772 = vmatpush.msra.mxu0 0.0
      %4773 = vmatpush.msra.mxu0 0.0
      %4774 = vmatpush.msra.mxu0 0.0
      %4775 = vmatpush.msra.mxu0 0.0
      %4776 = vmatpush.msra.mxu0 0.0
      %4777 = vmatpush.msra.mxu0 0.0
      %4778 = vmatpush.msra.mxu0 0.0
      %4779 = vmatpush.msra.mxu0 0.0
      %4780 = vmatpush.msra.mxu0 0.0
      %4781 = vmatpush.msra.mxu0 0.0
      %4782 = vmatpush.msra.mxu0 0.0
      %4783 = vmatpush.msra.mxu0 0.0
      %4784 = vmatpush.msra.mxu0 %v4767
      %4785 = vmatmul.f32.gmra.mxu0 %v2748
      %v4786 = vpop.f32.mrf.mxu0
      %v4787 = vadd.f32 0.0, %v4786
      %4788 = vdwg.mxu0
      %4789 = vmatpush.msra.mxu0 0.0
      %4790 = vmatpush.msra.mxu0 0.0
      %4791 = vmatpush.msra.mxu0 0.0
      %4792 = vmatpush.msra.mxu0 0.0
      %4793 = vmatpush.msra.mxu0 0.0
      %4794 = vmatpush.msra.mxu0 0.0
      %4795 = vmatpush.msra.mxu0 0.0
      %4796 = vmatpush.msra.mxu0 0.0
      %4797 = vmatpush.msra.mxu0 0.0
      %4798 = vmatpush.msra.mxu0 0.0
      %4799 = vmatpush.msra.mxu0 0.0
      %4800 = vmatpush.msra.mxu0 0.0
      %4801 = vmatpush.msra.mxu0 0.0
      %4802 = vmatpush.msra.mxu0 0.0
      %4803 = vmatpush.msra.mxu0 0.0
      %4804 = vmatpush.msra.mxu0 %v4768
      %4805 = vmatmul.f32.gmra.mxu0 %v2748
      %v4806 = vpop.f32.mrf.mxu0
      %v4807 = vadd.f32 0.0, %v4806
      %4808 = vdwg.mxu0
      %v4809 = vadd.f32 %v4759, %v4787
      %v4810 = vadd.f32 %v4760, %v4807
      %v4811 = vmax.f32 %v4809, 0.0
      %v4812 = vmax.f32 %v4810, 0.0
      %4813 = vrot.lane.b32.xlu0 %v4811, 17
      %v4814 = vpop.permute.xlu0 %4813
      %4815 = vrot.lane.b32.xlu0 %v4812, 17
      %v4816 = vpop.permute.xlu0 %4815
      %v4817 = vsel %vm469, %v4814, %v4816
      %v4818 = vsel %vm469, %v4816, %v4814
      %v4819 = vmul.f32 %v4818, %v2295
      %v4820 = vmul.f32 %v4817, %v2296
      %4821 = vmatpush.msra.mxu0 0.0
      %4822 = vmatpush.msra.mxu0 0.0
      %4823 = vmatpush.msra.mxu0 0.0
      %4824 = vmatpush.msra.mxu0 0.0
      %4825 = vmatpush.msra.mxu0 0.0
      %4826 = vmatpush.msra.mxu0 0.0
      %4827 = vmatpush.msra.mxu0 0.0
      %4828 = vmatpush.msra.mxu0 0.0
      %4829 = vmatpush.msra.mxu0 0.0
      %4830 = vmatpush.msra.mxu0 0.0
      %4831 = vmatpush.msra.mxu0 0.0
      %4832 = vmatpush.msra.mxu0 0.0
      %4833 = vmatpush.msra.mxu0 0.0
      %4834 = vmatpush.msra.mxu0 0.0
      %4835 = vmatpush.msra.mxu0 0.0
      %4836 = vmatpush.msra.mxu0 %v4819
      %4837 = vmatmul.f32.gmra.mxu0 %v2804
      %v4838 = vpop.f32.mrf.mxu0
      %v4839 = vadd.f32 0.0, %v4838
      %4840 = vdwg.mxu0
      %4841 = vmatpush.msra.mxu0 0.0
      %4842 = vmatpush.msra.mxu0 0.0
      %4843 = vmatpush.msra.mxu0 0.0
      %4844 = vmatpush.msra.mxu0 0.0
      %4845 = vmatpush.msra.mxu0 0.0
      %4846 = vmatpush.msra.mxu0 0.0
      %4847 = vmatpush.msra.mxu0 0.0
      %4848 = vmatpush.msra.mxu0 0.0
      %4849 = vmatpush.msra.mxu0 0.0
      %4850 = vmatpush.msra.mxu0 0.0
      %4851 = vmatpush.msra.mxu0 0.0
      %4852 = vmatpush.msra.mxu0 0.0
      %4853 = vmatpush.msra.mxu0 0.0
      %4854 = vmatpush.msra.mxu0 0.0
      %4855 = vmatpush.msra.mxu0 0.0
      %4856 = vmatpush.msra.mxu0 %v4820
      %4857 = vmatmul.f32.gmra.mxu0 %v2804
      %v4858 = vpop.f32.mrf.mxu0
      %v4859 = vadd.f32 0.0, %v4858
      %4860 = vdwg.mxu0
      %v4861 = vadd.f32 %v455, %v4839
      %v4862 = vadd.f32 %v455, %v4859
      %4863 = vrot.lane.b32.xlu0 %v4811, 1
      %v4864 = vpop.permute.xlu0 %4863
      %4865 = vrot.lane.b32.xlu0 %v4812, 1
      %v4866 = vpop.permute.xlu0 %4865
      %v4867 = vsel %vm539, %v4864, %v4866
      %v4868 = vsel %vm539, %v4866, %v4864
      %v4869 = vmul.f32 %v4868, %v2352
      %v4870 = vmul.f32 %v4867, %v2353
      %4871 = vmatpush.msra.mxu0 0.0
      %4872 = vmatpush.msra.mxu0 0.0
      %4873 = vmatpush.msra.mxu0 0.0
      %4874 = vmatpush.msra.mxu0 0.0
      %4875 = vmatpush.msra.mxu0 0.0
      %4876 = vmatpush.msra.mxu0 0.0
      %4877 = vmatpush.msra.mxu0 0.0
      %4878 = vmatpush.msra.mxu0 0.0
      %4879 = vmatpush.msra.mxu0 0.0
      %4880 = vmatpush.msra.mxu0 0.0
      %4881 = vmatpush.msra.mxu0 0.0
      %4882 = vmatpush.msra.mxu0 0.0
      %4883 = vmatpush.msra.mxu0 0.0
      %4884 = vmatpush.msra.mxu0 0.0
      %4885 = vmatpush.msra.mxu0 0.0
      %4886 = vmatpush.msra.mxu0 %v4869
      %4887 = vmatmul.f32.gmra.mxu0 %v2859
      %v4888 = vpop.f32.mrf.mxu0
      %v4889 = vadd.f32 0.0, %v4888
      %4890 = vdwg.mxu0
      %4891 = vmatpush.msra.mxu0 0.0
      %4892 = vmatpush.msra.mxu0 0.0
      %4893 = vmatpush.msra.mxu0 0.0
      %4894 = vmatpush.msra.mxu0 0.0
      %4895 = vmatpush.msra.mxu0 0.0
      %4896 = vmatpush.msra.mxu0 0.0
      %4897 = vmatpush.msra.mxu0 0.0
      %4898 = vmatpush.msra.mxu0 0.0
      %4899 = vmatpush.msra.mxu0 0.0
      %4900 = vmatpush.msra.mxu0 0.0
      %4901 = vmatpush.msra.mxu0 0.0
      %4902 = vmatpush.msra.mxu0 0.0
      %4903 = vmatpush.msra.mxu0 0.0
      %4904 = vmatpush.msra.mxu0 0.0
      %4905 = vmatpush.msra.mxu0 0.0
      %4906 = vmatpush.msra.mxu0 %v4870
      %4907 = vmatmul.f32.gmra.mxu0 %v2859
      %v4908 = vpop.f32.mrf.mxu0
      %v4909 = vadd.f32 0.0, %v4908
      %4910 = vdwg.mxu0
      %v4911 = vadd.f32 %v4861, %v4889
      %v4912 = vadd.f32 %v4862, %v4909
      %4913 = vrot.lane.b32.xlu0 %v4811, 113
      %v4914 = vpop.permute.xlu0 %4913
      %4915 = vrot.lane.b32.xlu0 %v4812, 113
      %v4916 = vpop.permute.xlu0 %4915
      %v4917 = vsel %vm609, %v4914, %v4916
      %v4918 = vsel %vm609, %v4916, %v4914
      %v4919 = vmul.f32 %v4917, %v2409
      %v4920 = vmul.f32 %v4918, %v2410
      %4921 = vmatpush.msra.mxu0 0.0
      %4922 = vmatpush.msra.mxu0 0.0
      %4923 = vmatpush.msra.mxu0 0.0
      %4924 = vmatpush.msra.mxu0 0.0
      %4925 = vmatpush.msra.mxu0 0.0
      %4926 = vmatpush.msra.mxu0 0.0
      %4927 = vmatpush.msra.mxu0 0.0
      %4928 = vmatpush.msra.mxu0 0.0
      %4929 = vmatpush.msra.mxu0 0.0
      %4930 = vmatpush.msra.mxu0 0.0
      %4931 = vmatpush.msra.mxu0 0.0
      %4932 = vmatpush.msra.mxu0 0.0
      %4933 = vmatpush.msra.mxu0 0.0
      %4934 = vmatpush.msra.mxu0 0.0
      %4935 = vmatpush.msra.mxu0 0.0
      %4936 = vmatpush.msra.mxu0 %v4919
      %4937 = vmatmul.f32.gmra.mxu0 %v2914
      %v4938 = vpop.f32.mrf.mxu0
      %v4939 = vadd.f32 0.0, %v4938
      %4940 = vdwg.mxu0
      %4941 = vmatpush.msra.mxu0 0.0
      %4942 = vmatpush.msra.mxu0 0.0
      %4943 = vmatpush.msra.mxu0 0.0
      %4944 = vmatpush.msra.mxu0 0.0
      %4945 = vmatpush.msra.mxu0 0.0
      %4946 = vmatpush.msra.mxu0 0.0
      %4947 = vmatpush.msra.mxu0 0.0
      %4948 = vmatpush.msra.mxu0 0.0
      %4949 = vmatpush.msra.mxu0 0.0
      %4950 = vmatpush.msra.mxu0 0.0
      %4951 = vmatpush.msra.mxu0 0.0
      %4952 = vmatpush.msra.mxu0 0.0
      %4953 = vmatpush.msra.mxu0 0.0
      %4954 = vmatpush.msra.mxu0 0.0
      %4955 = vmatpush.msra.mxu0 0.0
      %4956 = vmatpush.msra.mxu0 %v4920
      %4957 = vmatmul.f32.gmra.mxu0 %v2914
      %v4958 = vpop.f32.mrf.mxu0
      %v4959 = vadd.f32 0.0, %v4958
      %4960 = vdwg.mxu0
      %v4961 = vadd.f32 %v4911, %v4939
      %v4962 = vadd.f32 %v4912, %v4959
      %4963 = vrot.lane.b32.xlu0 %v4811, 16
      %v4964 = vpop.permute.xlu0 %4963
      %4965 = vrot.lane.b32.xlu0 %v4812, 16
      %v4966 = vpop.permute.xlu0 %4965
      %v4967 = vsel %vm679, %v4964, %v4966
      %v4968 = vsel %vm679, %v4966, %v4964
      %v4969 = vmul.f32 %v4968, %v2466
      %v4970 = vmul.f32 %v4967, %v2467
      %4971 = vmatpush.msra.mxu0 0.0
      %4972 = vmatpush.msra.mxu0 0.0
      %4973 = vmatpush.msra.mxu0 0.0
      %4974 = vmatpush.msra.mxu0 0.0
      %4975 = vmatpush.msra.mxu0 0.0
      %4976 = vmatpush.msra.mxu0 0.0
      %4977 = vmatpush.msra.mxu0 0.0
      %4978 = vmatpush.msra.mxu0 0.0
      %4979 = vmatpush.msra.mxu0 0.0
      %4980 = vmatpush.msra.mxu0 0.0
      %4981 = vmatpush.msra.mxu0 0.0
      %4982 = vmatpush.msra.mxu0 0.0
      %4983 = vmatpush.msra.mxu0 0.0
      %4984 = vmatpush.msra.mxu0 0.0
      %4985 = vmatpush.msra.mxu0 0.0
      %4986 = vmatpush.msra.mxu0 %v4969
      %4987 = vmatmul.f32.gmra.mxu0 %v2969
      %v4988 = vpop.f32.mrf.mxu0
      %v4989 = vadd.f32 0.0, %v4988
      %4990 = vdwg.mxu0
      %4991 = vmatpush.msra.mxu0 0.0
      %4992 = vmatpush.msra.mxu0 0.0
      %4993 = vmatpush.msra.mxu0 0.0
      %4994 = vmatpush.msra.mxu0 0.0
      %4995 = vmatpush.msra.mxu0 0.0
      %4996 = vmatpush.msra.mxu0 0.0
      %4997 = vmatpush.msra.mxu0 0.0
      %4998 = vmatpush.msra.mxu0 0.0
      %4999 = vmatpush.msra.mxu0 0.0
      %5000 = vmatpush.msra.mxu0 0.0
      %5001 = vmatpush.msra.mxu0 0.0
      %5002 = vmatpush.msra.mxu0 0.0
      %5003 = vmatpush.msra.mxu0 0.0
      %5004 = vmatpush.msra.mxu0 0.0
      %5005 = vmatpush.msra.mxu0 0.0
      %5006 = vmatpush.msra.mxu0 %v4970
      %5007 = vmatmul.f32.gmra.mxu0 %v2969
      %v5008 = vpop.f32.mrf.mxu0
      %v5009 = vadd.f32 0.0, %v5008
      %5010 = vdwg.mxu0
      %v5011 = vadd.f32 %v4961, %v4989
      %v5012 = vadd.f32 %v4962, %v5009
      %5013 = vmatpush.msra.mxu0 0.0
      %5014 = vmatpush.msra.mxu0 0.0
      %5015 = vmatpush.msra.mxu0 0.0
      %5016 = vmatpush.msra.mxu0 0.0
      %5017 = vmatpush.msra.mxu0 0.0
      %5018 = vmatpush.msra.mxu0 0.0
      %5019 = vmatpush.msra.mxu0 0.0
      %5020 = vmatpush.msra.mxu0 0.0
      %5021 = vmatpush.msra.mxu0 0.0
      %5022 = vmatpush.msra.mxu0 0.0
      %5023 = vmatpush.msra.mxu0 0.0
      %5024 = vmatpush.msra.mxu0 0.0
      %5025 = vmatpush.msra.mxu0 0.0
      %5026 = vmatpush.msra.mxu0 0.0
      %5027 = vmatpush.msra.mxu0 0.0
      %5028 = vmatpush.msra.mxu0 %v4811
      %5029 = vmatmul.f32.gmra.mxu0 %v3016
      %v5030 = vpop.f32.mrf.mxu0
      %v5031 = vadd.f32 0.0, %v5030
      %5032 = vdwg.mxu0
      %5033 = vmatpush.msra.mxu0 0.0
      %5034 = vmatpush.msra.mxu0 0.0
      %5035 = vmatpush.msra.mxu0 0.0
      %5036 = vmatpush.msra.mxu0 0.0
      %5037 = vmatpush.msra.mxu0 0.0
      %5038 = vmatpush.msra.mxu0 0.0
      %5039 = vmatpush.msra.mxu0 0.0
      %5040 = vmatpush.msra.mxu0 0.0
      %5041 = vmatpush.msra.mxu0 0.0
      %5042 = vmatpush.msra.mxu0 0.0
      %5043 = vmatpush.msra.mxu0 0.0
      %5044 = vmatpush.msra.mxu0 0.0
      %5045 = vmatpush.msra.mxu0 0.0
      %5046 = vmatpush.msra.mxu0 0.0
      %5047 = vmatpush.msra.mxu0 0.0
      %5048 = vmatpush.msra.mxu0 %v4812
      %5049 = vmatmul.f32.gmra.mxu0 %v3016
      %v5050 = vpop.f32.mrf.mxu0
      %v5051 = vadd.f32 0.0, %v5050
      %5052 = vdwg.mxu0
      %v5053 = vadd.f32 %v5011, %v5031
      %v5054 = vadd.f32 %v5012, %v5051
      %5055 = vrot.lane.b32.xlu0 %v4811, 112
      %v5056 = vpop.permute.xlu0 %5055
      %5057 = vrot.lane.b32.xlu0 %v4812, 112
      %v5058 = vpop.permute.xlu0 %5057
      %v5059 = vsel %vm803, %v5056, %v5058
      %v5060 = vsel %vm803, %v5058, %v5056
      %v5061 = vmul.f32 %v5059, %v2570
      %v5062 = vmul.f32 %v5060, %v2571
      %5063 = vmatpush.msra.mxu0 0.0
      %5064 = vmatpush.msra.mxu0 0.0
      %5065 = vmatpush.msra.mxu0 0.0
      %5066 = vmatpush.msra.mxu0 0.0
      %5067 = vmatpush.msra.mxu0 0.0
      %5068 = vmatpush.msra.mxu0 0.0
      %5069 = vmatpush.msra.mxu0 0.0
      %5070 = vmatpush.msra.mxu0 0.0
      %5071 = vmatpush.msra.mxu0 0.0
      %5072 = vmatpush.msra.mxu0 0.0
      %5073 = vmatpush.msra.mxu0 0.0
      %5074 = vmatpush.msra.mxu0 0.0
      %5075 = vmatpush.msra.mxu0 0.0
      %5076 = vmatpush.msra.mxu0 0.0
      %5077 = vmatpush.msra.mxu0 0.0
      %5078 = vmatpush.msra.mxu0 %v5061
      %5079 = vmatmul.f32.gmra.mxu0 %v3071
      %v5080 = vpop.f32.mrf.mxu0
      %v5081 = vadd.f32 0.0, %v5080
      %5082 = vdwg.mxu0
      %5083 = vmatpush.msra.mxu0 0.0
      %5084 = vmatpush.msra.mxu0 0.0
      %5085 = vmatpush.msra.mxu0 0.0
      %5086 = vmatpush.msra.mxu0 0.0
      %5087 = vmatpush.msra.mxu0 0.0
      %5088 = vmatpush.msra.mxu0 0.0
      %5089 = vmatpush.msra.mxu0 0.0
      %5090 = vmatpush.msra.mxu0 0.0
      %5091 = vmatpush.msra.mxu0 0.0
      %5092 = vmatpush.msra.mxu0 0.0
      %5093 = vmatpush.msra.mxu0 0.0
      %5094 = vmatpush.msra.mxu0 0.0
      %5095 = vmatpush.msra.mxu0 0.0
      %5096 = vmatpush.msra.mxu0 0.0
      %5097 = vmatpush.msra.mxu0 0.0
      %5098 = vmatpush.msra.mxu0 %v5062
      %5099 = vmatmul.f32.gmra.mxu0 %v3071
      %v5100 = vpop.f32.mrf.mxu0
      %v5101 = vadd.f32 0.0, %v5100
      %5102 = vdwg.mxu0
      %v5103 = vadd.f32 %v5053, %v5081
      %v5104 = vadd.f32 %v5054, %v5101
      %5105 = vrot.lane.b32.xlu0 %v4811, 15
      %v5106 = vpop.permute.xlu0 %5105
      %5107 = vrot.lane.b32.xlu0 %v4812, 15
      %v5108 = vpop.permute.xlu0 %5107
      %v5109 = vsel %vm873, %v5106, %v5108
      %v5110 = vsel %vm873, %v5108, %v5106
      %v5111 = vmul.f32 %v5110, %v2627
      %v5112 = vmul.f32 %v5109, %v2628
      %5113 = vmatpush.msra.mxu0 0.0
      %5114 = vmatpush.msra.mxu0 0.0
      %5115 = vmatpush.msra.mxu0 0.0
      %5116 = vmatpush.msra.mxu0 0.0
      %5117 = vmatpush.msra.mxu0 0.0
      %5118 = vmatpush.msra.mxu0 0.0
      %5119 = vmatpush.msra.mxu0 0.0
      %5120 = vmatpush.msra.mxu0 0.0
      %5121 = vmatpush.msra.mxu0 0.0
      %5122 = vmatpush.msra.mxu0 0.0
      %5123 = vmatpush.msra.mxu0 0.0
      %5124 = vmatpush.msra.mxu0 0.0
      %5125 = vmatpush.msra.mxu0 0.0
      %5126 = vmatpush.msra.mxu0 0.0
      %5127 = vmatpush.msra.mxu0 0.0
      %5128 = vmatpush.msra.mxu0 %v5111
      %5129 = vmatmul.f32.gmra.mxu0 %v3126
      %v5130 = vpop.f32.mrf.mxu0
      %v5131 = vadd.f32 0.0, %v5130
      %5132 = vdwg.mxu0
      %5133 = vmatpush.msra.mxu0 0.0
      %5134 = vmatpush.msra.mxu0 0.0
      %5135 = vmatpush.msra.mxu0 0.0
      %5136 = vmatpush.msra.mxu0 0.0
      %5137 = vmatpush.msra.mxu0 0.0
      %5138 = vmatpush.msra.mxu0 0.0
      %5139 = vmatpush.msra.mxu0 0.0
      %5140 = vmatpush.msra.mxu0 0.0
      %5141 = vmatpush.msra.mxu0 0.0
      %5142 = vmatpush.msra.mxu0 0.0
      %5143 = vmatpush.msra.mxu0 0.0
      %5144 = vmatpush.msra.mxu0 0.0
      %5145 = vmatpush.msra.mxu0 0.0
      %5146 = vmatpush.msra.mxu0 0.0
      %5147 = vmatpush.msra.mxu0 0.0
      %5148 = vmatpush.msra.mxu0 %v5112
      %5149 = vmatmul.f32.gmra.mxu0 %v3126
      %v5150 = vpop.f32.mrf.mxu0
      %v5151 = vadd.f32 0.0, %v5150
      %5152 = vdwg.mxu0
      %v5153 = vadd.f32 %v5103, %v5131
      %v5154 = vadd.f32 %v5104, %v5151
      %5155 = vrot.lane.b32.xlu0 %v4811, 127
      %v5156 = vpop.permute.xlu0 %5155
      %5157 = vrot.lane.b32.xlu0 %v4812, 127
      %v5158 = vpop.permute.xlu0 %5157
      %v5159 = vsel %vm943, %v5156, %v5158
      %v5160 = vsel %vm943, %v5158, %v5156
      %v5161 = vmul.f32 %v5159, %v2684
      %v5162 = vmul.f32 %v5160, %v2685
      %5163 = vmatpush.msra.mxu0 0.0
      %5164 = vmatpush.msra.mxu0 0.0
      %5165 = vmatpush.msra.mxu0 0.0
      %5166 = vmatpush.msra.mxu0 0.0
      %5167 = vmatpush.msra.mxu0 0.0
      %5168 = vmatpush.msra.mxu0 0.0
      %5169 = vmatpush.msra.mxu0 0.0
      %5170 = vmatpush.msra.mxu0 0.0
      %5171 = vmatpush.msra.mxu0 0.0
      %5172 = vmatpush.msra.mxu0 0.0
      %5173 = vmatpush.msra.mxu0 0.0
      %5174 = vmatpush.msra.mxu0 0.0
      %5175 = vmatpush.msra.mxu0 0.0
      %5176 = vmatpush.msra.mxu0 0.0
      %5177 = vmatpush.msra.mxu0 0.0
      %5178 = vmatpush.msra.mxu0 %v5161
      %5179 = vmatmul.f32.gmra.mxu0 %v3181
      %v5180 = vpop.f32.mrf.mxu0
      %v5181 = vadd.f32 0.0, %v5180
      %5182 = vdwg.mxu0
      %5183 = vmatpush.msra.mxu0 0.0
      %5184 = vmatpush.msra.mxu0 0.0
      %5185 = vmatpush.msra.mxu0 0.0
      %5186 = vmatpush.msra.mxu0 0.0
      %5187 = vmatpush.msra.mxu0 0.0
      %5188 = vmatpush.msra.mxu0 0.0
      %5189 = vmatpush.msra.mxu0 0.0
      %5190 = vmatpush.msra.mxu0 0.0
      %5191 = vmatpush.msra.mxu0 0.0
      %5192 = vmatpush.msra.mxu0 0.0
      %5193 = vmatpush.msra.mxu0 0.0
      %5194 = vmatpush.msra.mxu0 0.0
      %5195 = vmatpush.msra.mxu0 0.0
      %5196 = vmatpush.msra.mxu0 0.0
      %5197 = vmatpush.msra.mxu0 0.0
      %5198 = vmatpush.msra.mxu0 %v5162
      %5199 = vmatmul.f32.gmra.mxu0 %v3181
      %v5200 = vpop.f32.mrf.mxu0
      %v5201 = vadd.f32 0.0, %v5200
      %5202 = vdwg.mxu0
      %v5203 = vadd.f32 %v5153, %v5181
      %v5204 = vadd.f32 %v5154, %v5201
      %5205 = vrot.lane.b32.xlu0 %v4811, 111
      %v5206 = vpop.permute.xlu0 %5205
      %5207 = vrot.lane.b32.xlu0 %v4812, 111
      %v5208 = vpop.permute.xlu0 %5207
      %v5209 = vsel %vm1013, %v5206, %v5208
      %v5210 = vsel %vm1013, %v5208, %v5206
      %v5211 = vmul.f32 %v5209, %v2741
      %v5212 = vmul.f32 %v5210, %v2742
      %5213 = vmatpush.msra.mxu0 0.0
      %5214 = vmatpush.msra.mxu0 0.0
      %5215 = vmatpush.msra.mxu0 0.0
      %5216 = vmatpush.msra.mxu0 0.0
      %5217 = vmatpush.msra.mxu0 0.0
      %5218 = vmatpush.msra.mxu0 0.0
      %5219 = vmatpush.msra.mxu0 0.0
      %5220 = vmatpush.msra.mxu0 0.0
      %5221 = vmatpush.msra.mxu0 0.0
      %5222 = vmatpush.msra.mxu0 0.0
      %5223 = vmatpush.msra.mxu0 0.0
      %5224 = vmatpush.msra.mxu0 0.0
      %5225 = vmatpush.msra.mxu0 0.0
      %5226 = vmatpush.msra.mxu0 0.0
      %5227 = vmatpush.msra.mxu0 0.0
      %5228 = vmatpush.msra.mxu0 %v5211
      %5229 = vmatmul.f32.gmra.mxu0 %v3236
      %v5230 = vpop.f32.mrf.mxu0
      %v5231 = vadd.f32 0.0, %v5230
      %5232 = vdwg.mxu0
      %5233 = vmatpush.msra.mxu0 0.0
      %5234 = vmatpush.msra.mxu0 0.0
      %5235 = vmatpush.msra.mxu0 0.0
      %5236 = vmatpush.msra.mxu0 0.0
      %5237 = vmatpush.msra.mxu0 0.0
      %5238 = vmatpush.msra.mxu0 0.0
      %5239 = vmatpush.msra.mxu0 0.0
      %5240 = vmatpush.msra.mxu0 0.0
      %5241 = vmatpush.msra.mxu0 0.0
      %5242 = vmatpush.msra.mxu0 0.0
      %5243 = vmatpush.msra.mxu0 0.0
      %5244 = vmatpush.msra.mxu0 0.0
      %5245 = vmatpush.msra.mxu0 0.0
      %5246 = vmatpush.msra.mxu0 0.0
      %5247 = vmatpush.msra.mxu0 0.0
      %5248 = vmatpush.msra.mxu0 %v5212
      %5249 = vmatmul.f32.gmra.mxu0 %v3236
      %v5250 = vpop.f32.mrf.mxu0
      %v5251 = vadd.f32 0.0, %v5250
      %5252 = vdwg.mxu0
      %v5253 = vadd.f32 %v5203, %v5231
      %v5254 = vadd.f32 %v5204, %v5251
      %v5257 = vrot.slane %v5254, 4
      %v5258 = vsel %vm481, %v5253, %v5257
      %v5260 = vsub.f32 %v3828, %v5258
      %5262 = vst [vmem:[#allocation1] ss:$2 sm:$0xff] %v5260
      %v5263 = vld.sshfl [vmem:[#allocation1] sm:$0xff pattern:$0x75316420]
      %v5264 = vld.sshfl [vmem:[#allocation1 + $0x8] sm:$0xff pattern:$0x75316420]
      %5267 = vrot.lane.b32.xlu0 %v5263, 15
      %v5268 = vpop.permute.xlu0 %5267
      %5269 = vrot.lane.b32.xlu0 %v5264, 15
      %v5270 = vpop.permute.xlu0 %5269
      %v5271 = vsel %vm873, %v5268, %v5270
      %v5272 = vsel %vm873, %v5270, %v5268
      %v5275 = vrot.slane %v5271, 4
      %v5276 = vsel %vm481, %v5272, %v5275
      %v5278 = vmul.f32 %v1075, %v5276
      %v5279 = vadd.f32 %v438, %v5278
      %5280 = vst [vmem:[#allocation1] ss:$2 sm:$0xff] %v5260
      %v5281 = vld.sshfl [vmem:[#allocation1] sm:$0xff pattern:$0x75316420]
      %v5282 = vld.sshfl [vmem:[#allocation1 + $0x8] sm:$0xff pattern:$0x75316420]
      %5285 = vrot.lane.b32.xlu0 %v5281, 14
      %v5286 = vpop.permute.xlu0 %5285
      %5287 = vrot.lane.b32.xlu0 %v5282, 14
      %v5288 = vpop.permute.xlu0 %5287
      %v5289 = vsel %vm1106, %v5286, %v5288
      %v5290 = vsel %vm1106, %v5288, %v5286
      %v5293 = vrot.slane %v5289, 4
      %v5294 = vsel %vm481, %v5290, %v5293
      %v5296 = vmul.f32 %v1096, %v5294
      %v5297 = vadd.f32 %v5279, %v5296
      %5298 = vst [vmem:[#allocation1] ss:$2 sm:$0xff] %v5260
      %v5299 = vld.sshfl [vmem:[#allocation1] sm:$0xff pattern:$0x75316420]
      %v5300 = vld.sshfl [vmem:[#allocation1 + $0x8] sm:$0xff pattern:$0x75316420]
      %5303 = vrot.lane.b32.xlu0 %v5299, 13
      %v5304 = vpop.permute.xlu0 %5303
      %5305 = vrot.lane.b32.xlu0 %v5300, 13
      %v5306 = vpop.permute.xlu0 %5305
      %v5307 = vsel %vm1127, %v5304, %v5306
      %v5308 = vsel %vm1127, %v5306, %v5304
      %v5311 = vrot.slane %v5307, 4
      %v5312 = vsel %vm481, %v5308, %v5311
      %v5314 = vmul.f32 %v1117, %v5312
      %v5315 = vadd.f32 %v5297, %v5314
      %5316 = vst [vmem:[#allocation1] ss:$2 sm:$0xff] %v5260
      %v5317 = vld.sshfl [vmem:[#allocation1] sm:$0xff pattern:$0x75316420]
      %v5318 = vld.sshfl [vmem:[#allocation1 + $0x8] sm:$0xff pattern:$0x75316420]
      %5321 = vrot.lane.b32.xlu0 %v5317, 12
      %v5322 = vpop.permute.xlu0 %5321
      %5323 = vrot.lane.b32.xlu0 %v5318, 12
      %v5324 = vpop.permute.xlu0 %5323
      %v5325 = vsel %vm1148, %v5322, %v5324
      %v5326 = vsel %vm1148, %v5324, %v5322
      %v5329 = vrot.slane %v5325, 4
      %v5330 = vsel %vm481, %v5326, %v5329
      %v5332 = vmul.f32 %v1138, %v5330
      %v5333 = vadd.f32 %v5315, %v5332
      %5334 = vst [vmem:[#allocation1] ss:$2 sm:$0xff] %v5260
      %v5335 = vld.sshfl [vmem:[#allocation1] sm:$0xff pattern:$0x75316420]
      %v5336 = vld.sshfl [vmem:[#allocation1 + $0x8] sm:$0xff pattern:$0x75316420]
      %5339 = vrot.lane.b32.xlu0 %v5335, 11
      %v5340 = vpop.permute.xlu0 %5339
      %5341 = vrot.lane.b32.xlu0 %v5336, 11
      %v5342 = vpop.permute.xlu0 %5341
      %v5343 = vsel %vm1169, %v5340, %v5342
      %v5344 = vsel %vm1169, %v5342, %v5340
      %v5347 = vrot.slane %v5343, 4
      %v5348 = vsel %vm481, %v5344, %v5347
      %v5350 = vmul.f32 %v1159, %v5348
      %v5351 = vadd.f32 %v5333, %v5350
      %5352 = vst [vmem:[#allocation1] ss:$2 sm:$0xff] %v5260
      %v5353 = vld.sshfl [vmem:[#allocation1] sm:$0xff pattern:$0x75316420]
      %v5354 = vld.sshfl [vmem:[#allocation1 + $0x8] sm:$0xff pattern:$0x75316420]
      %5357 = vrot.lane.b32.xlu0 %v5353, 10
      %v5358 = vpop.permute.xlu0 %5357
      %5359 = vrot.lane.b32.xlu0 %v5354, 10
      %v5360 = vpop.permute.xlu0 %5359
      %v5361 = vsel %vm1190, %v5358, %v5360
      %v5362 = vsel %vm1190, %v5360, %v5358
      %v5365 = vrot.slane %v5361, 4
      %v5366 = vsel %vm481, %v5362, %v5365
      %v5368 = vmul.f32 %v1180, %v5366
      %v5369 = vadd.f32 %v5351, %v5368
      %5370 = vst [vmem:[#allocation1] ss:$2 sm:$0xff] %v5260
      %v5371 = vld.sshfl [vmem:[#allocation1] sm:$0xff pattern:$0x75316420]
      %v5372 = vld.sshfl [vmem:[#allocation1 + $0x8] sm:$0xff pattern:$0x75316420]
      %5375 = vrot.lane.b32.xlu0 %v5371, 9
      %v5376 = vpop.permute.xlu0 %5375
      %5377 = vrot.lane.b32.xlu0 %v5372, 9
      %v5378 = vpop.permute.xlu0 %5377
      %v5379 = vsel %vm1211, %v5376, %v5378
      %v5380 = vsel %vm1211, %v5378, %v5376
      %v5383 = vrot.slane %v5379, 4
      %v5384 = vsel %vm481, %v5380, %v5383
      %v5386 = vmul.f32 %v1201, %v5384
      %v5387 = vadd.f32 %v5369, %v5386
      %5388 = vst [vmem:[#allocation1] ss:$2 sm:$0xff] %v5260
      %v5389 = vld.sshfl [vmem:[#allocation1] sm:$0xff pattern:$0x75316420]
      %v5390 = vld.sshfl [vmem:[#allocation1 + $0x8] sm:$0xff pattern:$0x75316420]
      %5393 = vrot.lane.b32.xlu0 %v5389, 8
      %v5394 = vpop.permute.xlu0 %5393
      %5395 = vrot.lane.b32.xlu0 %v5390, 8
      %v5396 = vpop.permute.xlu0 %5395
      %v5397 = vsel %vm1232, %v5394, %v5396
      %v5398 = vsel %vm1232, %v5396, %v5394
      %v5401 = vrot.slane %v5397, 4
      %v5402 = vsel %vm481, %v5398, %v5401
      %v5404 = vmul.f32 %v1222, %v5402
      %v5405 = vadd.f32 %v5387, %v5404
      %5406 = vst [vmem:[#allocation1] ss:$2 sm:$0xff] %v5260
      %v5407 = vld.sshfl [vmem:[#allocation1] sm:$0xff pattern:$0x75316420]
      %v5408 = vld.sshfl [vmem:[#allocation1 + $0x8] sm:$0xff pattern:$0x75316420]
      %5411 = vrot.lane.b32.xlu0 %v5407, 7
      %v5412 = vpop.permute.xlu0 %5411
      %5413 = vrot.lane.b32.xlu0 %v5408, 7
      %v5414 = vpop.permute.xlu0 %5413
      %v5415 = vsel %vm1253, %v5412, %v5414
      %v5416 = vsel %vm1253, %v5414, %v5412
      %v5419 = vrot.slane %v5415, 4
      %v5420 = vsel %vm481, %v5416, %v5419
      %v5422 = vmul.f32 %v1243, %v5420
      %v5423 = vadd.f32 %v5405, %v5422
      %5424 = vst [vmem:[#allocation1] ss:$2 sm:$0xff] %v5260
      %v5425 = vld.sshfl [vmem:[#allocation1] sm:$0xff pattern:$0x75316420]
      %v5426 = vld.sshfl [vmem:[#allocation1 + $0x8] sm:$0xff pattern:$0x75316420]
      %5429 = vrot.lane.b32.xlu0 %v5425, 6
      %v5430 = vpop.permute.xlu0 %5429
      %5431 = vrot.lane.b32.xlu0 %v5426, 6
      %v5432 = vpop.permute.xlu0 %5431
      %v5433 = vsel %vm1274, %v5430, %v5432
      %v5434 = vsel %vm1274, %v5432, %v5430
      %v5437 = vrot.slane %v5433, 4
      %v5438 = vsel %vm481, %v5434, %v5437
      %v5440 = vmul.f32 %v1264, %v5438
      %v5441 = vadd.f32 %v5423, %v5440
      %5442 = vst [vmem:[#allocation1] ss:$2 sm:$0xff] %v5260
      %v5443 = vld.sshfl [vmem:[#allocation1] sm:$0xff pattern:$0x75316420]
      %v5444 = vld.sshfl [vmem:[#allocation1 + $0x8] sm:$0xff pattern:$0x75316420]
      %5447 = vrot.lane.b32.xlu0 %v5443, 5
      %v5448 = vpop.permute.xlu0 %5447
      %5449 = vrot.lane.b32.xlu0 %v5444, 5
      %v5450 = vpop.permute.xlu0 %5449
      %v5451 = vsel %vm1295, %v5448, %v5450
      %v5452 = vsel %vm1295, %v5450, %v5448
      %v5455 = vrot.slane %v5451, 4
      %v5456 = vsel %vm481, %v5452, %v5455
      %v5458 = vmul.f32 %v1285, %v5456
      %v5459 = vadd.f32 %v5441, %v5458
      %5460 = vst [vmem:[#allocation1] ss:$2 sm:$0xff] %v5260
      %v5461 = vld.sshfl [vmem:[#allocation1] sm:$0xff pattern:$0x75316420]
      %v5462 = vld.sshfl [vmem:[#allocation1 + $0x8] sm:$0xff pattern:$0x75316420]
      %5465 = vrot.lane.b32.xlu0 %v5461, 4
      %v5466 = vpop.permute.xlu0 %5465
      %5467 = vrot.lane.b32.xlu0 %v5462, 4
      %v5468 = vpop.permute.xlu0 %5467
      %v5469 = vsel %vm1316, %v5466, %v5468
      %v5470 = vsel %vm1316, %v5468, %v5466
      %v5473 = vrot.slane %v5469, 4
      %v5474 = vsel %vm481, %v5470, %v5473
      %v5476 = vmul.f32 %v1306, %v5474
      %v5477 = vadd.f32 %v5459, %v5476
      %5478 = vst [vmem:[#allocation1] ss:$2 sm:$0xff] %v5260
      %v5479 = vld.sshfl [vmem:[#allocation1] sm:$0xff pattern:$0x75316420]
      %v5480 = vld.sshfl [vmem:[#allocation1 + $0x8] sm:$0xff pattern:$0x75316420]
      %5483 = vrot.lane.b32.xlu0 %v5479, 3
      %v5484 = vpop.permute.xlu0 %5483
      %5485 = vrot.lane.b32.xlu0 %v5480, 3
      %v5486 = vpop.permute.xlu0 %5485
      %v5487 = vsel %vm1337, %v5484, %v5486
      %v5488 = vsel %vm1337, %v5486, %v5484
      %v5491 = vrot.slane %v5487, 4
      %v5492 = vsel %vm481, %v5488, %v5491
      %v5494 = vmul.f32 %v1327, %v5492
      %v5495 = vadd.f32 %v5477, %v5494
      %5496 = vst [vmem:[#allocation1] ss:$2 sm:$0xff] %v5260
      %v5497 = vld.sshfl [vmem:[#allocation1] sm:$0xff pattern:$0x75316420]
      %v5498 = vld.sshfl [vmem:[#allocation1 + $0x8] sm:$0xff pattern:$0x75316420]
      %5501 = vrot.lane.b32.xlu0 %v5497, 2
      %v5502 = vpop.permute.xlu0 %5501
      %5503 = vrot.lane.b32.xlu0 %v5498, 2
      %v5504 = vpop.permute.xlu0 %5503
      %v5505 = vsel %vm1358, %v5502, %v5504
      %v5506 = vsel %vm1358, %v5504, %v5502
      %v5509 = vrot.slane %v5505, 4
      %v5510 = vsel %vm481, %v5506, %v5509
      %v5512 = vmul.f32 %v1348, %v5510
      %v5513 = vadd.f32 %v5495, %v5512
      %5514 = vst [vmem:[#allocation1] ss:$2 sm:$0xff] %v5260
      %v5515 = vld.sshfl [vmem:[#allocation1] sm:$0xff pattern:$0x75316420]
      %v5516 = vld.sshfl [vmem:[#allocation1 + $0x8] sm:$0xff pattern:$0x75316420]
      %5519 = vrot.lane.b32.xlu0 %v5515, 1
      %v5520 = vpop.permute.xlu0 %5519
      %5521 = vrot.lane.b32.xlu0 %v5516, 1
      %v5522 = vpop.permute.xlu0 %5521
      %v5523 = vsel %vm539, %v5520, %v5522
      %v5524 = vsel %vm539, %v5522, %v5520
      %v5527 = vrot.slane %v5523, 4
      %v5528 = vsel %vm481, %v5524, %v5527
      %v5530 = vmul.f32 %v1369, %v5528
      %v5531 = vadd.f32 %v5513, %v5530
      %v5532 = vmul.f32 %v1389, %v5260
      %v5533 = vadd.f32 %v5531, %v5532
      %5534 = vst [vmem:[#allocation1] ss:$2 sm:$0xff] %v5260
      %v5535 = vld.sshfl [vmem:[#allocation1] sm:$0xff pattern:$0x75316420]
      %v5536 = vld.sshfl [vmem:[#allocation1 + $0x8] sm:$0xff pattern:$0x75316420]
      %5539 = vrot.lane.b32.xlu0 %v5535, 127
      %v5540 = vpop.permute.xlu0 %5539
      %5541 = vrot.lane.b32.xlu0 %v5536, 127
      %v5542 = vpop.permute.xlu0 %5541
      %v5543 = vsel %vm943, %v5540, %v5542
      %v5544 = vsel %vm943, %v5542, %v5540
      %v5547 = vrot.slane %v5544, 4
      %v5548 = vsel %vm481, %v5543, %v5547
      %v5550 = vmul.f32 %v1393, %v5548
      %v5551 = vadd.f32 %v5533, %v5550
      %5552 = vst [vmem:[#allocation1] ss:$2 sm:$0xff] %v5260
      %v5553 = vld.sshfl [vmem:[#allocation1] sm:$0xff pattern:$0x75316420]
      %v5554 = vld.sshfl [vmem:[#allocation1 + $0x8] sm:$0xff pattern:$0x75316420]
      %5557 = vrot.lane.b32.xlu0 %v5553, 126
      %v5558 = vpop.permute.xlu0 %5557
      %5559 = vrot.lane.b32.xlu0 %v5554, 126
      %v5560 = vpop.permute.xlu0 %5559
      %v5561 = vsel %vm1423, %v5558, %v5560
      %v5562 = vsel %vm1423, %v5560, %v5558
      %v5565 = vrot.slane %v5562, 4
      %v5566 = vsel %vm481, %v5561, %v5565
      %v5568 = vmul.f32 %v1413, %v5566
      %v5569 = vadd.f32 %v5551, %v5568
      %5570 = vst [vmem:[#allocation1] ss:$2 sm:$0xff] %v5260
      %v5571 = vld.sshfl [vmem:[#allocation1] sm:$0xff pattern:$0x75316420]
      %v5572 = vld.sshfl [vmem:[#allocation1 + $0x8] sm:$0xff pattern:$0x75316420]
      %5575 = vrot.lane.b32.xlu0 %v5571, 125
      %v5576 = vpop.permute.xlu0 %5575
      %5577 = vrot.lane.b32.xlu0 %v5572, 125
      %v5578 = vpop.permute.xlu0 %5577
      %v5579 = vsel %vm1444, %v5576, %v5578
      %v5580 = vsel %vm1444, %v5578, %v5576
      %v5583 = vrot.slane %v5580, 4
      %v5584 = vsel %vm481, %v5579, %v5583
      %v5586 = vmul.f32 %v1434, %v5584
      %v5587 = vadd.f32 %v5569, %v5586
      %5588 = vst [vmem:[#allocation1] ss:$2 sm:$0xff] %v5260
      %v5589 = vld.sshfl [vmem:[#allocation1] sm:$0xff pattern:$0x75316420]
      %v5590 = vld.sshfl [vmem:[#allocation1 + $0x8] sm:$0xff pattern:$0x75316420]
      %5593 = vrot.lane.b32.xlu0 %v5589, 124
      %v5594 = vpop.permute.xlu0 %5593
      %5595 = vrot.lane.b32.xlu0 %v5590, 124
      %v5596 = vpop.permute.xlu0 %5595
      %v5597 = vsel %vm1465, %v5594, %v5596
      %v5598 = vsel %vm1465, %v5596, %v5594
      %v5601 = vrot.slane %v5598, 4
      %v5602 = vsel %vm481, %v5597, %v5601
      %v5604 = vmul.f32 %v1455, %v5602
      %v5605 = vadd.f32 %v5587, %v5604
      %5606 = vst [vmem:[#allocation1] ss:$2 sm:$0xff] %v5260
      %v5607 = vld.sshfl [vmem:[#allocation1] sm:$0xff pattern:$0x75316420]
      %v5608 = vld.sshfl [vmem:[#allocation1 + $0x8] sm:$0xff pattern:$0x75316420]
      %5611 = vrot.lane.b32.xlu0 %v5607, 123
      %v5612 = vpop.permute.xlu0 %5611
      %5613 = vrot.lane.b32.xlu0 %v5608, 123
      %v5614 = vpop.permute.xlu0 %5613
      %v5615 = vsel %vm1486, %v5612, %v5614
      %v5616 = vsel %vm1486, %v5614, %v5612
      %v5619 = vrot.slane %v5616, 4
      %v5620 = vsel %vm481, %v5615, %v5619
      %v5622 = vmul.f32 %v1476, %v5620
      %v5623 = vadd.f32 %v5605, %v5622
      %5624 = vst [vmem:[#allocation1] ss:$2 sm:$0xff] %v5260
      %v5625 = vld.sshfl [vmem:[#allocation1] sm:$0xff pattern:$0x75316420]
      %v5626 = vld.sshfl [vmem:[#allocation1 + $0x8] sm:$0xff pattern:$0x75316420]
      %5629 = vrot.lane.b32.xlu0 %v5625, 122
      %v5630 = vpop.permute.xlu0 %5629
      %5631 = vrot.lane.b32.xlu0 %v5626, 122
      %v5632 = vpop.permute.xlu0 %5631
      %v5633 = vsel %vm1507, %v5630, %v5632
      %v5634 = vsel %vm1507, %v5632, %v5630
      %v5637 = vrot.slane %v5634, 4
      %v5638 = vsel %vm481, %v5633, %v5637
      %v5640 = vmul.f32 %v1497, %v5638
      %v5641 = vadd.f32 %v5623, %v5640
      %5642 = vst [vmem:[#allocation1] ss:$2 sm:$0xff] %v5260
      %v5643 = vld.sshfl [vmem:[#allocation1] sm:$0xff pattern:$0x75316420]
      %v5644 = vld.sshfl [vmem:[#allocation1 + $0x8] sm:$0xff pattern:$0x75316420]
      %5647 = vrot.lane.b32.xlu0 %v5643, 121
      %v5648 = vpop.permute.xlu0 %5647
      %5649 = vrot.lane.b32.xlu0 %v5644, 121
      %v5650 = vpop.permute.xlu0 %5649
      %v5651 = vsel %vm1528, %v5648, %v5650
      %v5652 = vsel %vm1528, %v5650, %v5648
      %v5655 = vrot.slane %v5652, 4
      %v5656 = vsel %vm481, %v5651, %v5655
      %v5658 = vmul.f32 %v1518, %v5656
      %v5659 = vadd.f32 %v5641, %v5658
      %5660 = vst [vmem:[#allocation1] ss:$2 sm:$0xff] %v5260
      %v5661 = vld.sshfl [vmem:[#allocation1] sm:$0xff pattern:$0x75316420]
      %v5662 = vld.sshfl [vmem:[#allocation1 + $0x8] sm:$0xff pattern:$0x75316420]
      %5665 = vrot.lane.b32.xlu0 %v5661, 120
      %v5666 = vpop.permute.xlu0 %5665
      %5667 = vrot.lane.b32.xlu0 %v5662, 120
      %v5668 = vpop.permute.xlu0 %5667
      %v5669 = vsel %vm1549, %v5666, %v5668
      %v5670 = vsel %vm1549, %v5668, %v5666
      %v5673 = vrot.slane %v5670, 4
      %v5674 = vsel %vm481, %v5669, %v5673
      %v5676 = vmul.f32 %v1539, %v5674
      %v5677 = vadd.f32 %v5659, %v5676
      %5678 = vst [vmem:[#allocation1] ss:$2 sm:$0xff] %v5260
      %v5679 = vld.sshfl [vmem:[#allocation1] sm:$0xff pattern:$0x75316420]
      %v5680 = vld.sshfl [vmem:[#allocation1 + $0x8] sm:$0xff pattern:$0x75316420]
      %5683 = vrot.lane.b32.xlu0 %v5679, 119
      %v5684 = vpop.permute.xlu0 %5683
      %5685 = vrot.lane.b32.xlu0 %v5680, 119
      %v5686 = vpop.permute.xlu0 %5685
      %v5687 = vsel %vm1570, %v5684, %v5686
      %v5688 = vsel %vm1570, %v5686, %v5684
      %v5691 = vrot.slane %v5688, 4
      %v5692 = vsel %vm481, %v5687, %v5691
      %v5694 = vmul.f32 %v1560, %v5692
      %v5695 = vadd.f32 %v5677, %v5694
      %5696 = vst [vmem:[#allocation1] ss:$2 sm:$0xff] %v5260
      %v5697 = vld.sshfl [vmem:[#allocation1] sm:$0xff pattern:$0x75316420]
      %v5698 = vld.sshfl [vmem:[#allocation1 + $0x8] sm:$0xff pattern:$0x75316420]
      %5701 = vrot.lane.b32.xlu0 %v5697, 118
      %v5702 = vpop.permute.xlu0 %5701
      %5703 = vrot.lane.b32.xlu0 %v5698, 118
      %v5704 = vpop.permute.xlu0 %5703
      %v5705 = vsel %vm1591, %v5702, %v5704
      %v5706 = vsel %vm1591, %v5704, %v5702
      %v5709 = vrot.slane %v5706, 4
      %v5710 = vsel %vm481, %v5705, %v5709
      %v5712 = vmul.f32 %v1581, %v5710
      %v5713 = vadd.f32 %v5695, %v5712
      %5714 = vst [vmem:[#allocation1] ss:$2 sm:$0xff] %v5260
      %v5715 = vld.sshfl [vmem:[#allocation1] sm:$0xff pattern:$0x75316420]
      %v5716 = vld.sshfl [vmem:[#allocation1 + $0x8] sm:$0xff pattern:$0x75316420]
      %5719 = vrot.lane.b32.xlu0 %v5715, 117
      %v5720 = vpop.permute.xlu0 %5719
      %5721 = vrot.lane.b32.xlu0 %v5716, 117
      %v5722 = vpop.permute.xlu0 %5721
      %v5723 = vsel %vm1612, %v5720, %v5722
      %v5724 = vsel %vm1612, %v5722, %v5720
      %v5727 = vrot.slane %v5724, 4
      %v5728 = vsel %vm481, %v5723, %v5727
      %v5730 = vmul.f32 %v1602, %v5728
      %v5731 = vadd.f32 %v5713, %v5730
      %5732 = vst [vmem:[#allocation1] ss:$2 sm:$0xff] %v5260
      %v5733 = vld.sshfl [vmem:[#allocation1] sm:$0xff pattern:$0x75316420]
      %v5734 = vld.sshfl [vmem:[#allocation1 + $0x8] sm:$0xff pattern:$0x75316420]
      %5737 = vrot.lane.b32.xlu0 %v5733, 116
      %v5738 = vpop.permute.xlu0 %5737
      %5739 = vrot.lane.b32.xlu0 %v5734, 116
      %v5740 = vpop.permute.xlu0 %5739
      %v5741 = vsel %vm1633, %v5738, %v5740
      %v5742 = vsel %vm1633, %v5740, %v5738
      %v5745 = vrot.slane %v5742, 4
      %v5746 = vsel %vm481, %v5741, %v5745
      %v5748 = vmul.f32 %v1623, %v5746
      %v5749 = vadd.f32 %v5731, %v5748
      %5750 = vst [vmem:[#allocation1] ss:$2 sm:$0xff] %v5260
      %v5751 = vld.sshfl [vmem:[#allocation1] sm:$0xff pattern:$0x75316420]
      %v5752 = vld.sshfl [vmem:[#allocation1 + $0x8] sm:$0xff pattern:$0x75316420]
      %5755 = vrot.lane.b32.xlu0 %v5751, 115
      %v5756 = vpop.permute.xlu0 %5755
      %5757 = vrot.lane.b32.xlu0 %v5752, 115
      %v5758 = vpop.permute.xlu0 %5757
      %v5759 = vsel %vm1654, %v5756, %v5758
      %v5760 = vsel %vm1654, %v5758, %v5756
      %v5763 = vrot.slane %v5760, 4
      %v5764 = vsel %vm481, %v5759, %v5763
      %v5766 = vmul.f32 %v1644, %v5764
      %v5767 = vadd.f32 %v5749, %v5766
      %5768 = vst [vmem:[#allocation1] ss:$2 sm:$0xff] %v5260
      %v5769 = vld.sshfl [vmem:[#allocation1] sm:$0xff pattern:$0x75316420]
      %v5770 = vld.sshfl [vmem:[#allocation1 + $0x8] sm:$0xff pattern:$0x75316420]
      %5773 = vrot.lane.b32.xlu0 %v5769, 114
      %v5774 = vpop.permute.xlu0 %5773
      %5775 = vrot.lane.b32.xlu0 %v5770, 114
      %v5776 = vpop.permute.xlu0 %5775
      %v5777 = vsel %vm1675, %v5774, %v5776
      %v5778 = vsel %vm1675, %v5776, %v5774
      %v5781 = vrot.slane %v5778, 4
      %v5782 = vsel %vm481, %v5777, %v5781
      %v5784 = vmul.f32 %v1665, %v5782
      %v5785 = vadd.f32 %v5767, %v5784
      %5786 = vst [vmem:[#allocation1] ss:$2 sm:$0xff] %v5260
      %v5787 = vld.sshfl [vmem:[#allocation1] sm:$0xff pattern:$0x75316420]
      %v5788 = vld.sshfl [vmem:[#allocation1 + $0x8] sm:$0xff pattern:$0x75316420]
      %5791 = vrot.lane.b32.xlu0 %v5787, 113
      %v5792 = vpop.permute.xlu0 %5791
      %5793 = vrot.lane.b32.xlu0 %v5788, 113
      %v5794 = vpop.permute.xlu0 %5793
      %v5795 = vsel %vm609, %v5792, %v5794
      %v5796 = vsel %vm609, %v5794, %v5792
      %v5799 = vrot.slane %v5796, 4
      %v5800 = vsel %vm481, %v5795, %v5799
      %v5802 = vmul.f32 %v1686, %v5800
      %v5803 = vadd.f32 %v5785, %v5802
      %5805 = vst [vmem:[#allocation1] ss:$2 sm:$0xff] %v5803
      %v5806 = vld.sshfl [vmem:[#allocation1] sm:$0xff pattern:$0x75316420]
      %v5807 = vld.sshfl [vmem:[#allocation1 + $0x8] sm:$0xff pattern:$0x75316420]
      %5810 = vrot.lane.b32.xlu0 %v5806, 17
      %v5811 = vpop.permute.xlu0 %5810
      %5812 = vrot.lane.b32.xlu0 %v5807, 17
      %v5813 = vpop.permute.xlu0 %5812
      %v5814 = vsel %vm469, %v5811, %v5813
      %v5815 = vsel %vm469, %v5813, %v5811
      %v5816 = vmul.f32 %v5815, %v472
      %v5817 = vmul.f32 %v5814, %v473
      %v5819 = vsel %vm481, %v5816, 0
      %v5822 = vsel %vm481, %v5817, 0
      %5824 = vmatpush.msra.mxu0 0.0
      %5825 = vmatpush.msra.mxu0 0.0
      %5826 = vmatpush.msra.mxu0 0.0
      %5827 = vmatpush.msra.mxu0 0.0
      %5828 = vmatpush.msra.mxu0 0.0
      %5829 = vmatpush.msra.mxu0 0.0
      %5830 = vmatpush.msra.mxu0 0.0
      %5831 = vmatpush.msra.mxu0 0.0
      %5832 = vmatpush.msra.mxu0 0.0
      %5833 = vmatpush.msra.mxu0 0.0
      %5834 = vmatpush.msra.mxu0 0.0
      %5835 = vmatpush.msra.mxu0 0.0
      %5836 = vmatpush.msra.mxu0 0.0
      %5837 = vmatpush.msra.mxu0 0.0
      %5838 = vmatpush.msra.mxu0 0.0
      %5839 = vmatpush.msra.mxu0 %v5819
      %5840 = vmatmul.f32.gmra.mxu0 %v1721
      %v5841 = vpop.f32.mrf.mxu0
      %v5842 = vadd.f32 0.0, %v5841
      %5843 = vdwg.mxu0
      %5844 = vmatpush.msra.mxu0 0.0
      %5845 = vmatpush.msra.mxu0 0.0
      %5846 = vmatpush.msra.mxu0 0.0
      %5847 = vmatpush.msra.mxu0 0.0
      %5848 = vmatpush.msra.mxu0 0.0
      %5849 = vmatpush.msra.mxu0 0.0
      %5850 = vmatpush.msra.mxu0 0.0
      %5851 = vmatpush.msra.mxu0 0.0
      %5852 = vmatpush.msra.mxu0 0.0
      %5853 = vmatpush.msra.mxu0 0.0
      %5854 = vmatpush.msra.mxu0 0.0
      %5855 = vmatpush.msra.mxu0 0.0
      %5856 = vmatpush.msra.mxu0 0.0
      %5857 = vmatpush.msra.mxu0 0.0
      %5858 = vmatpush.msra.mxu0 0.0
      %5859 = vmatpush.msra.mxu0 %v5822
      %5860 = vmatmul.f32.gmra.mxu0 %v1721
      %v5861 = vpop.f32.mrf.mxu0
      %v5862 = vadd.f32 0.0, %v5861
      %5863 = vdwg.mxu0
      %v5864 = vadd.f32 %v1072, %v5842
      %v5865 = vadd.f32 %v1073, %v5862
      %5866 = vst [vmem:[#allocation1] ss:$2 sm:$0xff] %v5803
      %v5867 = vld.sshfl [vmem:[#allocation1] sm:$0xff pattern:$0x75316420]
      %v5868 = vld.sshfl [vmem:[#allocation1 + $0x8] sm:$0xff pattern:$0x75316420]
      %5871 = vrot.lane.b32.xlu0 %v5867, 1
      %v5872 = vpop.permute.xlu0 %5871
      %5873 = vrot.lane.b32.xlu0 %v5868, 1
      %v5874 = vpop.permute.xlu0 %5873
      %v5875 = vsel %vm539, %v5872, %v5874
      %v5876 = vsel %vm539, %v5874, %v5872
      %v5877 = vmul.f32 %v5876, %v543
      %v5878 = vmul.f32 %v5875, %v544
      %v5880 = vsel %vm481, %v5877, 0
      %v5883 = vsel %vm481, %v5878, 0
      %5885 = vmatpush.msra.mxu0 0.0
      %5886 = vmatpush.msra.mxu0 0.0
      %5887 = vmatpush.msra.mxu0 0.0
      %5888 = vmatpush.msra.mxu0 0.0
      %5889 = vmatpush.msra.mxu0 0.0
      %5890 = vmatpush.msra.mxu0 0.0
      %5891 = vmatpush.msra.mxu0 0.0
      %5892 = vmatpush.msra.mxu0 0.0
      %5893 = vmatpush.msra.mxu0 0.0
      %5894 = vmatpush.msra.mxu0 0.0
      %5895 = vmatpush.msra.mxu0 0.0
      %5896 = vmatpush.msra.mxu0 0.0
      %5897 = vmatpush.msra.mxu0 0.0
      %5898 = vmatpush.msra.mxu0 0.0
      %5899 = vmatpush.msra.mxu0 0.0
      %5900 = vmatpush.msra.mxu0 %v5880
      %5901 = vmatmul.f32.gmra.mxu0 %v1787
      %v5902 = vpop.f32.mrf.mxu0
      %v5903 = vadd.f32 0.0, %v5902
      %5904 = vdwg.mxu0
      %5905 = vmatpush.msra.mxu0 0.0
      %5906 = vmatpush.msra.mxu0 0.0
      %5907 = vmatpush.msra.mxu0 0.0
      %5908 = vmatpush.msra.mxu0 0.0
      %5909 = vmatpush.msra.mxu0 0.0
      %5910 = vmatpush.msra.mxu0 0.0
      %5911 = vmatpush.msra.mxu0 0.0
      %5912 = vmatpush.msra.mxu0 0.0
      %5913 = vmatpush.msra.mxu0 0.0
      %5914 = vmatpush.msra.mxu0 0.0
      %5915 = vmatpush.msra.mxu0 0.0
      %5916 = vmatpush.msra.mxu0 0.0
      %5917 = vmatpush.msra.mxu0 0.0
      %5918 = vmatpush.msra.mxu0 0.0
      %5919 = vmatpush.msra.mxu0 0.0
      %5920 = vmatpush.msra.mxu0 %v5883
      %5921 = vmatmul.f32.gmra.mxu0 %v1787
      %v5922 = vpop.f32.mrf.mxu0
      %v5923 = vadd.f32 0.0, %v5922
      %5924 = vdwg.mxu0
      %v5925 = vadd.f32 %v5864, %v5903
      %v5926 = vadd.f32 %v5865, %v5923
      %5927 = vst [vmem:[#allocation1] ss:$2 sm:$0xff] %v5803
      %v5928 = vld.sshfl [vmem:[#allocation1] sm:$0xff pattern:$0x75316420]
      %v5929 = vld.sshfl [vmem:[#allocation1 + $0x8] sm:$0xff pattern:$0x75316420]
      %5932 = vrot.lane.b32.xlu0 %v5928, 113
      %v5933 = vpop.permute.xlu0 %5932
      %5934 = vrot.lane.b32.xlu0 %v5929, 113
      %v5935 = vpop.permute.xlu0 %5934
      %v5936 = vsel %vm609, %v5933, %v5935
      %v5937 = vsel %vm609, %v5935, %v5933
      %v5938 = vmul.f32 %v5936, %v613
      %v5939 = vmul.f32 %v5937, %v614
      %v5941 = vsel %vm481, %v5938, 0
      %v5944 = vsel %vm481, %v5939, 0
      %5946 = vmatpush.msra.mxu0 0.0
      %5947 = vmatpush.msra.mxu0 0.0
      %5948 = vmatpush.msra.mxu0 0.0
      %5949 = vmatpush.msra.mxu0 0.0
      %5950 = vmatpush.msra.mxu0 0.0
      %5951 = vmatpush.msra.mxu0 0.0
      %5952 = vmatpush.msra.mxu0 0.0
      %5953 = vmatpush.msra.mxu0 0.0
      %5954 = vmatpush.msra.mxu0 0.0
      %5955 = vmatpush.msra.mxu0 0.0
      %5956 = vmatpush.msra.mxu0 0.0
      %5957 = vmatpush.msra.mxu0 0.0
      %5958 = vmatpush.msra.mxu0 0.0
      %5959 = vmatpush.msra.mxu0 0.0
      %5960 = vmatpush.msra.mxu0 0.0
      %5961 = vmatpush.msra.mxu0 %v5941
      %5962 = vmatmul.f32.gmra.mxu0 %v1853
      %v5963 = vpop.f32.mrf.mxu0
      %v5964 = vadd.f32 0.0, %v5963
      %5965 = vdwg.mxu0
      %5966 = vmatpush.msra.mxu0 0.0
      %5967 = vmatpush.msra.mxu0 0.0
      %5968 = vmatpush.msra.mxu0 0.0
      %5969 = vmatpush.msra.mxu0 0.0
      %5970 = vmatpush.msra.mxu0 0.0
      %5971 = vmatpush.msra.mxu0 0.0
      %5972 = vmatpush.msra.mxu0 0.0
      %5973 = vmatpush.msra.mxu0 0.0
      %5974 = vmatpush.msra.mxu0 0.0
      %5975 = vmatpush.msra.mxu0 0.0
      %5976 = vmatpush.msra.mxu0 0.0
      %5977 = vmatpush.msra.mxu0 0.0
      %5978 = vmatpush.msra.mxu0 0.0
      %5979 = vmatpush.msra.mxu0 0.0
      %5980 = vmatpush.msra.mxu0 0.0
      %5981 = vmatpush.msra.mxu0 %v5944
      %5982 = vmatmul.f32.gmra.mxu0 %v1853
      %v5983 = vpop.f32.mrf.mxu0
      %v5984 = vadd.f32 0.0, %v5983
      %5985 = vdwg.mxu0
      %v5986 = vadd.f32 %v5925, %v5964
      %v5987 = vadd.f32 %v5926, %v5984
      %5988 = vst [vmem:[#allocation1] ss:$2 sm:$0xff] %v5803
      %v5989 = vld.sshfl [vmem:[#allocation1] sm:$0xff pattern:$0x75316420]
      %v5990 = vld.sshfl [vmem:[#allocation1 + $0x8] sm:$0xff pattern:$0x75316420]
      %5993 = vrot.lane.b32.xlu0 %v5989, 16
      %v5994 = vpop.permute.xlu0 %5993
      %5995 = vrot.lane.b32.xlu0 %v5990, 16
      %v5996 = vpop.permute.xlu0 %5995
      %v5997 = vsel %vm679, %v5994, %v5996
      %v5998 = vsel %vm679, %v5996, %v5994
      %v5999 = vmul.f32 %v5998, %v683
      %v6000 = vmul.f32 %v5997, %v684
      %v6002 = vsel %vm481, %v5999, 0
      %v6005 = vsel %vm481, %v6000, 0
      %6007 = vmatpush.msra.mxu0 0.0
      %6008 = vmatpush.msra.mxu0 0.0
      %6009 = vmatpush.msra.mxu0 0.0
      %6010 = vmatpush.msra.mxu0 0.0
      %6011 = vmatpush.msra.mxu0 0.0
      %6012 = vmatpush.msra.mxu0 0.0
      %6013 = vmatpush.msra.mxu0 0.0
      %6014 = vmatpush.msra.mxu0 0.0
      %6015 = vmatpush.msra.mxu0 0.0
      %6016 = vmatpush.msra.mxu0 0.0
      %6017 = vmatpush.msra.mxu0 0.0
      %6018 = vmatpush.msra.mxu0 0.0
      %6019 = vmatpush.msra.mxu0 0.0
      %6020 = vmatpush.msra.mxu0 0.0
      %6021 = vmatpush.msra.mxu0 0.0
      %6022 = vmatpush.msra.mxu0 %v6002
      %6023 = vmatmul.f32.gmra.mxu0 %v1919
      %v6024 = vpop.f32.mrf.mxu0
      %v6025 = vadd.f32 0.0, %v6024
      %6026 = vdwg.mxu0
      %6027 = vmatpush.msra.mxu0 0.0
      %6028 = vmatpush.msra.mxu0 0.0
      %6029 = vmatpush.msra.mxu0 0.0
      %6030 = vmatpush.msra.mxu0 0.0
      %6031 = vmatpush.msra.mxu0 0.0
      %6032 = vmatpush.msra.mxu0 0.0
      %6033 = vmatpush.msra.mxu0 0.0
      %6034 = vmatpush.msra.mxu0 0.0
      %6035 = vmatpush.msra.mxu0 0.0
      %6036 = vmatpush.msra.mxu0 0.0
      %6037 = vmatpush.msra.mxu0 0.0
      %6038 = vmatpush.msra.mxu0 0.0
      %6039 = vmatpush.msra.mxu0 0.0
      %6040 = vmatpush.msra.mxu0 0.0
      %6041 = vmatpush.msra.mxu0 0.0
      %6042 = vmatpush.msra.mxu0 %v6005
      %6043 = vmatmul.f32.gmra.mxu0 %v1919
      %v6044 = vpop.f32.mrf.mxu0
      %v6045 = vadd.f32 0.0, %v6044
      %6046 = vdwg.mxu0
      %v6047 = vadd.f32 %v5986, %v6025
      %v6048 = vadd.f32 %v5987, %v6045
      %6049 = vst [vmem:[#allocation1] ss:$2 sm:$0xff] %v5803
      %v6050 = vld.sshfl [vmem:[#allocation1] sm:$0xff pattern:$0x75316420]
      %v6051 = vld.sshfl [vmem:[#allocation1 + $0x8] sm:$0xff pattern:$0x75316420]
      %v6052 = vsel %vm481, %v6050, 0
      %v6054 = vsel %vm481, %v6051, 0
      %6056 = vmatpush.msra.mxu0 0.0
      %6057 = vmatpush.msra.mxu0 0.0
      %6058 = vmatpush.msra.mxu0 0.0
      %6059 = vmatpush.msra.mxu0 0.0
      %6060 = vmatpush.msra.mxu0 0.0
      %6061 = vmatpush.msra.mxu0 0.0
      %6062 = vmatpush.msra.mxu0 0.0
      %6063 = vmatpush.msra.mxu0 0.0
      %6064 = vmatpush.msra.mxu0 0.0
      %6065 = vmatpush.msra.mxu0 0.0
      %6066 = vmatpush.msra.mxu0 0.0
      %6067 = vmatpush.msra.mxu0 0.0
      %6068 = vmatpush.msra.mxu0 0.0
      %6069 = vmatpush.msra.mxu0 0.0
      %6070 = vmatpush.msra.mxu0 0.0
      %6071 = vmatpush.msra.mxu0 %v6052
      %6072 = vmatmul.f32.gmra.mxu0 %v1975
      %v6073 = vpop.f32.mrf.mxu0
      %v6074 = vadd.f32 0.0, %v6073
      %6075 = vdwg.mxu0
      %6076 = vmatpush.msra.mxu0 0.0
      %6077 = vmatpush.msra.mxu0 0.0
      %6078 = vmatpush.msra.mxu0 0.0
      %6079 = vmatpush.msra.mxu0 0.0
      %6080 = vmatpush.msra.mxu0 0.0
      %6081 = vmatpush.msra.mxu0 0.0
      %6082 = vmatpush.msra.mxu0 0.0
      %6083 = vmatpush.msra.mxu0 0.0
      %6084 = vmatpush.msra.mxu0 0.0
      %6085 = vmatpush.msra.mxu0 0.0
      %6086 = vmatpush.msra.mxu0 0.0
      %6087 = vmatpush.msra.mxu0 0.0
      %6088 = vmatpush.msra.mxu0 0.0
      %6089 = vmatpush.msra.mxu0 0.0
      %6090 = vmatpush.msra.mxu0 0.0
      %6091 = vmatpush.msra.mxu0 %v6054
      %6092 = vmatmul.f32.gmra.mxu0 %v1975
      %v6093 = vpop.f32.mrf.mxu0
      %v6094 = vadd.f32 0.0, %v6093
      %6095 = vdwg.mxu0
      %v6096 = vadd.f32 %v6047, %v6074
      %v6097 = vadd.f32 %v6048, %v6094
      %6098 = vst [vmem:[#allocation1] ss:$2 sm:$0xff] %v5803
      %v6099 = vld.sshfl [vmem:[#allocation1] sm:$0xff pattern:$0x75316420]
      %v6100 = vld.sshfl [vmem:[#allocation1 + $0x8] sm:$0xff pattern:$0x75316420]
      %6103 = vrot.lane.b32.xlu0 %v6099, 112
      %v6104 = vpop.permute.xlu0 %6103
      %6105 = vrot.lane.b32.xlu0 %v6100, 112
      %v6106 = vpop.permute.xlu0 %6105
      %v6107 = vsel %vm803, %v6104, %v6106
      %v6108 = vsel %vm803, %v6106, %v6104
      %v6109 = vmul.f32 %v6107, %v807
      %v6110 = vmul.f32 %v6108, %v808
      %v6112 = vsel %vm481, %v6109, 0
      %v6115 = vsel %vm481, %v6110, 0
      %6117 = vmatpush.msra.mxu0 0.0
      %6118 = vmatpush.msra.mxu0 0.0
      %6119 = vmatpush.msra.mxu0 0.0
      %6120 = vmatpush.msra.mxu0 0.0
      %6121 = vmatpush.msra.mxu0 0.0
      %6122 = vmatpush.msra.mxu0 0.0
      %6123 = vmatpush.msra.mxu0 0.0
      %6124 = vmatpush.msra.mxu0 0.0
      %6125 = vmatpush.msra.mxu0 0.0
      %6126 = vmatpush.msra.mxu0 0.0
      %6127 = vmatpush.msra.mxu0 0.0
      %6128 = vmatpush.msra.mxu0 0.0
      %6129 = vmatpush.msra.mxu0 0.0
      %6130 = vmatpush.msra.mxu0 0.0
      %6131 = vmatpush.msra.mxu0 0.0
      %6132 = vmatpush.msra.mxu0 %v6112
      %6133 = vmatmul.f32.gmra.mxu0 %v2039
      %v6134 = vpop.f32.mrf.mxu0
      %v6135 = vadd.f32 0.0, %v6134
      %6136 = vdwg.mxu0
      %6137 = vmatpush.msra.mxu0 0.0
      %6138 = vmatpush.msra.mxu0 0.0
      %6139 = vmatpush.msra.mxu0 0.0
      %6140 = vmatpush.msra.mxu0 0.0
      %6141 = vmatpush.msra.mxu0 0.0
      %6142 = vmatpush.msra.mxu0 0.0
      %6143 = vmatpush.msra.mxu0 0.0
      %6144 = vmatpush.msra.mxu0 0.0
      %6145 = vmatpush.msra.mxu0 0.0
      %6146 = vmatpush.msra.mxu0 0.0
      %6147 = vmatpush.msra.mxu0 0.0
      %6148 = vmatpush.msra.mxu0 0.0
      %6149 = vmatpush.msra.mxu0 0.0
      %6150 = vmatpush.msra.mxu0 0.0
      %6151 = vmatpush.msra.mxu0 0.0
      %6152 = vmatpush.msra.mxu0 %v6115
      %6153 = vmatmul.f32.gmra.mxu0 %v2039
      %v6154 = vpop.f32.mrf.mxu0
      %v6155 = vadd.f32 0.0, %v6154
      %6156 = vdwg.mxu0
      %v6157 = vadd.f32 %v6096, %v6135
      %v6158 = vadd.f32 %v6097, %v6155
      %6159 = vst [vmem:[#allocation1] ss:$2 sm:$0xff] %v5803
      %v6160 = vld.sshfl [vmem:[#allocation1] sm:$0xff pattern:$0x75316420]
      %v6161 = vld.sshfl [vmem:[#allocation1 + $0x8] sm:$0xff pattern:$0x75316420]
      %6164 = vrot.lane.b32.xlu0 %v6160, 15
      %v6165 = vpop.permute.xlu0 %6164
      %6166 = vrot.lane.b32.xlu0 %v6161, 15
      %v6167 = vpop.permute.xlu0 %6166
      %v6168 = vsel %vm873, %v6165, %v6167
      %v6169 = vsel %vm873, %v6167, %v6165
      %v6170 = vmul.f32 %v6169, %v877
      %v6171 = vmul.f32 %v6168, %v878
      %v6173 = vsel %vm481, %v6170, 0
      %v6176 = vsel %vm481, %v6171, 0
      %6178 = vmatpush.msra.mxu0 0.0
      %6179 = vmatpush.msra.mxu0 0.0
      %6180 = vmatpush.msra.mxu0 0.0
      %6181 = vmatpush.msra.mxu0 0.0
      %6182 = vmatpush.msra.mxu0 0.0
      %6183 = vmatpush.msra.mxu0 0.0
      %6184 = vmatpush.msra.mxu0 0.0
      %6185 = vmatpush.msra.mxu0 0.0
      %6186 = vmatpush.msra.mxu0 0.0
      %6187 = vmatpush.msra.mxu0 0.0
      %6188 = vmatpush.msra.mxu0 0.0
      %6189 = vmatpush.msra.mxu0 0.0
      %6190 = vmatpush.msra.mxu0 0.0
      %6191 = vmatpush.msra.mxu0 0.0
      %6192 = vmatpush.msra.mxu0 0.0
      %6193 = vmatpush.msra.mxu0 %v6173
      %6194 = vmatmul.f32.gmra.mxu0 %v2105
      %v6195 = vpop.f32.mrf.mxu0
      %v6196 = vadd.f32 0.0, %v6195
      %6197 = vdwg.mxu0
      %6198 = vmatpush.msra.mxu0 0.0
      %6199 = vmatpush.msra.mxu0 0.0
      %6200 = vmatpush.msra.mxu0 0.0
      %6201 = vmatpush.msra.mxu0 0.0
      %6202 = vmatpush.msra.mxu0 0.0
      %6203 = vmatpush.msra.mxu0 0.0
      %6204 = vmatpush.msra.mxu0 0.0
      %6205 = vmatpush.msra.mxu0 0.0
      %6206 = vmatpush.msra.mxu0 0.0
      %6207 = vmatpush.msra.mxu0 0.0
      %6208 = vmatpush.msra.mxu0 0.0
      %6209 = vmatpush.msra.mxu0 0.0
      %6210 = vmatpush.msra.mxu0 0.0
      %6211 = vmatpush.msra.mxu0 0.0
      %6212 = vmatpush.msra.mxu0 0.0
      %6213 = vmatpush.msra.mxu0 %v6176
      %6214 = vmatmul.f32.gmra.mxu0 %v2105
      %v6215 = vpop.f32.mrf.mxu0
      %v6216 = vadd.f32 0.0, %v6215
      %6217 = vdwg.mxu0
      %v6218 = vadd.f32 %v6157, %v6196
      %v6219 = vadd.f32 %v6158, %v6216
      %6220 = vst [vmem:[#allocation1] ss:$2 sm:$0xff] %v5803
      %v6221 = vld.sshfl [vmem:[#allocation1] sm:$0xff pattern:$0x75316420]
      %v6222 = vld.sshfl [vmem:[#allocation1 + $0x8] sm:$0xff pattern:$0x75316420]
      %6225 = vrot.lane.b32.xlu0 %v6221, 127
      %v6226 = vpop.permute.xlu0 %6225
      %6227 = vrot.lane.b32.xlu0 %v6222, 127
      %v6228 = vpop.permute.xlu0 %6227
      %v6229 = vsel %vm943, %v6226, %v6228
      %v6230 = vsel %vm943, %v6228, %v6226
      %v6231 = vmul.f32 %v6229, %v947
      %v6232 = vmul.f32 %v6230, %v948
      %v6234 = vsel %vm481, %v6231, 0
      %v6237 = vsel %vm481, %v6232, 0
      %6239 = vmatpush.msra.mxu0 0.0
      %6240 = vmatpush.msra.mxu0 0.0
      %6241 = vmatpush.msra.mxu0 0.0
      %6242 = vmatpush.msra.mxu0 0.0
      %6243 = vmatpush.msra.mxu0 0.0
      %6244 = vmatpush.msra.mxu0 0.0
      %6245 = vmatpush.msra.mxu0 0.0
      %6246 = vmatpush.msra.mxu0 0.0
      %6247 = vmatpush.msra.mxu0 0.0
      %6248 = vmatpush.msra.mxu0 0.0
      %6249 = vmatpush.msra.mxu0 0.0
      %6250 = vmatpush.msra.mxu0 0.0
      %6251 = vmatpush.msra.mxu0 0.0
      %6252 = vmatpush.msra.mxu0 0.0
      %6253 = vmatpush.msra.mxu0 0.0
      %6254 = vmatpush.msra.mxu0 %v6234
      %6255 = vmatmul.f32.gmra.mxu0 %v2171
      %v6256 = vpop.f32.mrf.mxu0
      %v6257 = vadd.f32 0.0, %v6256
      %6258 = vdwg.mxu0
      %6259 = vmatpush.msra.mxu0 0.0
      %6260 = vmatpush.msra.mxu0 0.0
      %6261 = vmatpush.msra.mxu0 0.0
      %6262 = vmatpush.msra.mxu0 0.0
      %6263 = vmatpush.msra.mxu0 0.0
      %6264 = vmatpush.msra.mxu0 0.0
      %6265 = vmatpush.msra.mxu0 0.0
      %6266 = vmatpush.msra.mxu0 0.0
      %6267 = vmatpush.msra.mxu0 0.0
      %6268 = vmatpush.msra.mxu0 0.0
      %6269 = vmatpush.msra.mxu0 0.0
      %6270 = vmatpush.msra.mxu0 0.0
      %6271 = vmatpush.msra.mxu0 0.0
      %6272 = vmatpush.msra.mxu0 0.0
      %6273 = vmatpush.msra.mxu0 0.0
      %6274 = vmatpush.msra.mxu0 %v6237
      %6275 = vmatmul.f32.gmra.mxu0 %v2171
      %v6276 = vpop.f32.mrf.mxu0
      %v6277 = vadd.f32 0.0, %v6276
      %6278 = vdwg.mxu0
      %v6279 = vadd.f32 %v6218, %v6257
      %v6280 = vadd.f32 %v6219, %v6277
      %6281 = vst [vmem:[#allocation1] ss:$2 sm:$0xff] %v5803
      %v6282 = vld.sshfl [vmem:[#allocation1] sm:$0xff pattern:$0x75316420]
      %v6283 = vld.sshfl [vmem:[#allocation1 + $0x8] sm:$0xff pattern:$0x75316420]
      %6286 = vrot.lane.b32.xlu0 %v6282, 111
      %v6287 = vpop.permute.xlu0 %6286
      %6288 = vrot.lane.b32.xlu0 %v6283, 111
      %v6289 = vpop.permute.xlu0 %6288
      %v6290 = vsel %vm1013, %v6287, %v6289
      %v6291 = vsel %vm1013, %v6289, %v6287
      %v6292 = vmul.f32 %v6290, %v1017
      %v6293 = vmul.f32 %v6291, %v1018
      %v6295 = vsel %vm481, %v6292, 0
      %v6298 = vsel %vm481, %v6293, 0
      %6300 = vmatpush.msra.mxu0 0.0
      %6301 = vmatpush.msra.mxu0 0.0
      %6302 = vmatpush.msra.mxu0 0.0
      %6303 = vmatpush.msra.mxu0 0.0
      %6304 = vmatpush.msra.mxu0 0.0
      %6305 = vmatpush.msra.mxu0 0.0
      %6306 = vmatpush.msra.mxu0 0.0
      %6307 = vmatpush.msra.mxu0 0.0
      %6308 = vmatpush.msra.mxu0 0.0
      %6309 = vmatpush.msra.mxu0 0.0
      %6310 = vmatpush.msra.mxu0 0.0
      %6311 = vmatpush.msra.mxu0 0.0
      %6312 = vmatpush.msra.mxu0 0.0
      %6313 = vmatpush.msra.mxu0 0.0
      %6314 = vmatpush.msra.mxu0 0.0
      %6315 = vmatpush.msra.mxu0 %v6295
      %6316 = vmatmul.f32.gmra.mxu0 %v2237
      %v6317 = vpop.f32.mrf.mxu0
      %v6318 = vadd.f32 0.0, %v6317
      %6319 = vdwg.mxu0
      %6320 = vmatpush.msra.mxu0 0.0
      %6321 = vmatpush.msra.mxu0 0.0
      %6322 = vmatpush.msra.mxu0 0.0
      %6323 = vmatpush.msra.mxu0 0.0
      %6324 = vmatpush.msra.mxu0 0.0
      %6325 = vmatpush.msra.mxu0 0.0
      %6326 = vmatpush.msra.mxu0 0.0
      %6327 = vmatpush.msra.mxu0 0.0
      %6328 = vmatpush.msra.mxu0 0.0
      %6329 = vmatpush.msra.mxu0 0.0
      %6330 = vmatpush.msra.mxu0 0.0
      %6331 = vmatpush.msra.mxu0 0.0
      %6332 = vmatpush.msra.mxu0 0.0
      %6333 = vmatpush.msra.mxu0 0.0
      %6334 = vmatpush.msra.mxu0 0.0
      %6335 = vmatpush.msra.mxu0 %v6298
      %6336 = vmatmul.f32.gmra.mxu0 %v2237
      %v6337 = vpop.f32.mrf.mxu0
      %v6338 = vadd.f32 0.0, %v6337
      %6339 = vdwg.mxu0
      %v6340 = vadd.f32 %v6279, %v6318
      %v6341 = vadd.f32 %v6280, %v6338
      %v6342 = vmax.f32 %v6340, 0.0
      %v6343 = vmax.f32 %v6341, 0.0
      %6344 = vrot.lane.b32.xlu0 %v6342, 17
      %v6345 = vpop.permute.xlu0 %6344
      %6346 = vrot.lane.b32.xlu0 %v6343, 17
      %v6347 = vpop.permute.xlu0 %6346
      %v6348 = vsel %vm469, %v6345, %v6347
      %v6349 = vsel %vm469, %v6347, %v6345
      %v6350 = vmul.f32 %v6349, %v2295
      %v6351 = vmul.f32 %v6348, %v2296
      %6352 = vmatpush.msra.mxu0 0.0
      %6353 = vmatpush.msra.mxu0 0.0
      %6354 = vmatpush.msra.mxu0 0.0
      %6355 = vmatpush.msra.mxu0 0.0
      %6356 = vmatpush.msra.mxu0 0.0
      %6357 = vmatpush.msra.mxu0 0.0
      %6358 = vmatpush.msra.mxu0 0.0
      %6359 = vmatpush.msra.mxu0 0.0
      %6360 = vmatpush.msra.mxu0 0.0
      %6361 = vmatpush.msra.mxu0 0.0
      %6362 = vmatpush.msra.mxu0 0.0
      %6363 = vmatpush.msra.mxu0 0.0
      %6364 = vmatpush.msra.mxu0 0.0
      %6365 = vmatpush.msra.mxu0 0.0
      %6366 = vmatpush.msra.mxu0 0.0
      %6367 = vmatpush.msra.mxu0 %v6350
      %6368 = vmatmul.f32.gmra.mxu0 %v2302
      %v6369 = vpop.f32.mrf.mxu0
      %v6370 = vadd.f32 0.0, %v6369
      %6371 = vdwg.mxu0
      %6372 = vmatpush.msra.mxu0 0.0
      %6373 = vmatpush.msra.mxu0 0.0
      %6374 = vmatpush.msra.mxu0 0.0
      %6375 = vmatpush.msra.mxu0 0.0
      %6376 = vmatpush.msra.mxu0 0.0
      %6377 = vmatpush.msra.mxu0 0.0
      %6378 = vmatpush.msra.mxu0 0.0
      %6379 = vmatpush.msra.mxu0 0.0
      %6380 = vmatpush.msra.mxu0 0.0
      %6381 = vmatpush.msra.mxu0 0.0
      %6382 = vmatpush.msra.mxu0 0.0
      %6383 = vmatpush.msra.mxu0 0.0
      %6384 = vmatpush.msra.mxu0 0.0
      %6385 = vmatpush.msra.mxu0 0.0
      %6386 = vmatpush.msra.mxu0 0.0
      %6387 = vmatpush.msra.mxu0 %v6351
      %6388 = vmatmul.f32.gmra.mxu0 %v2302
      %v6389 = vpop.f32.mrf.mxu0
      %v6390 = vadd.f32 0.0, %v6389
      %6391 = vdwg.mxu0
      %v6392 = vadd.f32 %v449, %v6370
      %v6393 = vadd.f32 %v449, %v6390
      %6394 = vrot.lane.b32.xlu0 %v6342, 1
      %v6395 = vpop.permute.xlu0 %6394
      %6396 = vrot.lane.b32.xlu0 %v6343, 1
      %v6397 = vpop.permute.xlu0 %6396
      %v6398 = vsel %vm539, %v6395, %v6397
      %v6399 = vsel %vm539, %v6397, %v6395
      %v6400 = vmul.f32 %v6399, %v2352
      %v6401 = vmul.f32 %v6398, %v2353
      %6402 = vmatpush.msra.mxu0 0.0
      %6403 = vmatpush.msra.mxu0 0.0
      %6404 = vmatpush.msra.mxu0 0.0
      %6405 = vmatpush.msra.mxu0 0.0
      %6406 = vmatpush.msra.mxu0 0.0
      %6407 = vmatpush.msra.mxu0 0.0
      %6408 = vmatpush.msra.mxu0 0.0
      %6409 = vmatpush.msra.mxu0 0.0
      %6410 = vmatpush.msra.mxu0 0.0
      %6411 = vmatpush.msra.mxu0 0.0
      %6412 = vmatpush.msra.mxu0 0.0
      %6413 = vmatpush.msra.mxu0 0.0
      %6414 = vmatpush.msra.mxu0 0.0
      %6415 = vmatpush.msra.mxu0 0.0
      %6416 = vmatpush.msra.mxu0 0.0
      %6417 = vmatpush.msra.mxu0 %v6400
      %6418 = vmatmul.f32.gmra.mxu0 %v2359
      %v6419 = vpop.f32.mrf.mxu0
      %v6420 = vadd.f32 0.0, %v6419
      %6421 = vdwg.mxu0
      %6422 = vmatpush.msra.mxu0 0.0
      %6423 = vmatpush.msra.mxu0 0.0
      %6424 = vmatpush.msra.mxu0 0.0
      %6425 = vmatpush.msra.mxu0 0.0
      %6426 = vmatpush.msra.mxu0 0.0
      %6427 = vmatpush.msra.mxu0 0.0
      %6428 = vmatpush.msra.mxu0 0.0
      %6429 = vmatpush.msra.mxu0 0.0
      %6430 = vmatpush.msra.mxu0 0.0
      %6431 = vmatpush.msra.mxu0 0.0
      %6432 = vmatpush.msra.mxu0 0.0
      %6433 = vmatpush.msra.mxu0 0.0
      %6434 = vmatpush.msra.mxu0 0.0
      %6435 = vmatpush.msra.mxu0 0.0
      %6436 = vmatpush.msra.mxu0 0.0
      %6437 = vmatpush.msra.mxu0 %v6401
      %6438 = vmatmul.f32.gmra.mxu0 %v2359
      %v6439 = vpop.f32.mrf.mxu0
      %v6440 = vadd.f32 0.0, %v6439
      %6441 = vdwg.mxu0
      %v6442 = vadd.f32 %v6392, %v6420
      %v6443 = vadd.f32 %v6393, %v6440
      %6444 = vrot.lane.b32.xlu0 %v6342, 113
      %v6445 = vpop.permute.xlu0 %6444
      %6446 = vrot.lane.b32.xlu0 %v6343, 113
      %v6447 = vpop.permute.xlu0 %6446
      %v6448 = vsel %vm609, %v6445, %v6447
      %v6449 = vsel %vm609, %v6447, %v6445
      %v6450 = vmul.f32 %v6448, %v2409
      %v6451 = vmul.f32 %v6449, %v2410
      %6452 = vmatpush.msra.mxu0 0.0
      %6453 = vmatpush.msra.mxu0 0.0
      %6454 = vmatpush.msra.mxu0 0.0
      %6455 = vmatpush.msra.mxu0 0.0
      %6456 = vmatpush.msra.mxu0 0.0
      %6457 = vmatpush.msra.mxu0 0.0
      %6458 = vmatpush.msra.mxu0 0.0
      %6459 = vmatpush.msra.mxu0 0.0
      %6460 = vmatpush.msra.mxu0 0.0
      %6461 = vmatpush.msra.mxu0 0.0
      %6462 = vmatpush.msra.mxu0 0.0
      %6463 = vmatpush.msra.mxu0 0.0
      %6464 = vmatpush.msra.mxu0 0.0
      %6465 = vmatpush.msra.mxu0 0.0
      %6466 = vmatpush.msra.mxu0 0.0
      %6467 = vmatpush.msra.mxu0 %v6450
      %6468 = vmatmul.f32.gmra.mxu0 %v2416
      %v6469 = vpop.f32.mrf.mxu0
      %v6470 = vadd.f32 0.0, %v6469
      %6471 = vdwg.mxu0
      %6472 = vmatpush.msra.mxu0 0.0
      %6473 = vmatpush.msra.mxu0 0.0
      %6474 = vmatpush.msra.mxu0 0.0
      %6475 = vmatpush.msra.mxu0 0.0
      %6476 = vmatpush.msra.mxu0 0.0
      %6477 = vmatpush.msra.mxu0 0.0
      %6478 = vmatpush.msra.mxu0 0.0
      %6479 = vmatpush.msra.mxu0 0.0
      %6480 = vmatpush.msra.mxu0 0.0
      %6481 = vmatpush.msra.mxu0 0.0
      %6482 = vmatpush.msra.mxu0 0.0
      %6483 = vmatpush.msra.mxu0 0.0
      %6484 = vmatpush.msra.mxu0 0.0
      %6485 = vmatpush.msra.mxu0 0.0
      %6486 = vmatpush.msra.mxu0 0.0
      %6487 = vmatpush.msra.mxu0 %v6451
      %6488 = vmatmul.f32.gmra.mxu0 %v2416
      %v6489 = vpop.f32.mrf.mxu0
      %v6490 = vadd.f32 0.0, %v6489
      %6491 = vdwg.mxu0
      %v6492 = vadd.f32 %v6442, %v6470
      %v6493 = vadd.f32 %v6443, %v6490
      %6494 = vrot.lane.b32.xlu0 %v6342, 16
      %v6495 = vpop.permute.xlu0 %6494
      %6496 = vrot.lane.b32.xlu0 %v6343, 16
      %v6497 = vpop.permute.xlu0 %6496
      %v6498 = vsel %vm679, %v6495, %v6497
      %v6499 = vsel %vm679, %v6497, %v6495
      %v6500 = vmul.f32 %v6499, %v2466
      %v6501 = vmul.f32 %v6498, %v2467
      %6502 = vmatpush.msra.mxu0 0.0
      %6503 = vmatpush.msra.mxu0 0.0
      %6504 = vmatpush.msra.mxu0 0.0
      %6505 = vmatpush.msra.mxu0 0.0
      %6506 = vmatpush.msra.mxu0 0.0
      %6507 = vmatpush.msra.mxu0 0.0
      %6508 = vmatpush.msra.mxu0 0.0
      %6509 = vmatpush.msra.mxu0 0.0
      %6510 = vmatpush.msra.mxu0 0.0
      %6511 = vmatpush.msra.mxu0 0.0
      %6512 = vmatpush.msra.mxu0 0.0
      %6513 = vmatpush.msra.mxu0 0.0
      %6514 = vmatpush.msra.mxu0 0.0
      %6515 = vmatpush.msra.mxu0 0.0
      %6516 = vmatpush.msra.mxu0 0.0
      %6517 = vmatpush.msra.mxu0 %v6500
      %6518 = vmatmul.f32.gmra.mxu0 %v2473
      %v6519 = vpop.f32.mrf.mxu0
      %v6520 = vadd.f32 0.0, %v6519
      %6521 = vdwg.mxu0
      %6522 = vmatpush.msra.mxu0 0.0
      %6523 = vmatpush.msra.mxu0 0.0
      %6524 = vmatpush.msra.mxu0 0.0
      %6525 = vmatpush.msra.mxu0 0.0
      %6526 = vmatpush.msra.mxu0 0.0
      %6527 = vmatpush.msra.mxu0 0.0
      %6528 = vmatpush.msra.mxu0 0.0
      %6529 = vmatpush.msra.mxu0 0.0
      %6530 = vmatpush.msra.mxu0 0.0
      %6531 = vmatpush.msra.mxu0 0.0
      %6532 = vmatpush.msra.mxu0 0.0
      %6533 = vmatpush.msra.mxu0 0.0
      %6534 = vmatpush.msra.mxu0 0.0
      %6535 = vmatpush.msra.mxu0 0.0
      %6536 = vmatpush.msra.mxu0 0.0
      %6537 = vmatpush.msra.mxu0 %v6501
      %6538 = vmatmul.f32.gmra.mxu0 %v2473
      %v6539 = vpop.f32.mrf.mxu0
      %v6540 = vadd.f32 0.0, %v6539
      %6541 = vdwg.mxu0
      %v6542 = vadd.f32 %v6492, %v6520
      %v6543 = vadd.f32 %v6493, %v6540
      %6544 = vmatpush.msra.mxu0 0.0
      %6545 = vmatpush.msra.mxu0 0.0
      %6546 = vmatpush.msra.mxu0 0.0
      %6547 = vmatpush.msra.mxu0 0.0
      %6548 = vmatpush.msra.mxu0 0.0
      %6549 = vmatpush.msra.mxu0 0.0
      %6550 = vmatpush.msra.mxu0 0.0
      %6551 = vmatpush.msra.mxu0 0.0
      %6552 = vmatpush.msra.mxu0 0.0
      %6553 = vmatpush.msra.mxu0 0.0
      %6554 = vmatpush.msra.mxu0 0.0
      %6555 = vmatpush.msra.mxu0 0.0
      %6556 = vmatpush.msra.mxu0 0.0
      %6557 = vmatpush.msra.mxu0 0.0
      %6558 = vmatpush.msra.mxu0 0.0
      %6559 = vmatpush.msra.mxu0 %v6342
      %6560 = vmatmul.f32.gmra.mxu0 %v2520
      %v6561 = vpop.f32.mrf.mxu0
      %v6562 = vadd.f32 0.0, %v6561
      %6563 = vdwg.mxu0
      %6564 = vmatpush.msra.mxu0 0.0
      %6565 = vmatpush.msra.mxu0 0.0
      %6566 = vmatpush.msra.mxu0 0.0
      %6567 = vmatpush.msra.mxu0 0.0
      %6568 = vmatpush.msra.mxu0 0.0
      %6569 = vmatpush.msra.mxu0 0.0
      %6570 = vmatpush.msra.mxu0 0.0
      %6571 = vmatpush.msra.mxu0 0.0
      %6572 = vmatpush.msra.mxu0 0.0
      %6573 = vmatpush.msra.mxu0 0.0
      %6574 = vmatpush.msra.mxu0 0.0
      %6575 = vmatpush.msra.mxu0 0.0
      %6576 = vmatpush.msra.mxu0 0.0
      %6577 = vmatpush.msra.mxu0 0.0
      %6578 = vmatpush.msra.mxu0 0.0
      %6579 = vmatpush.msra.mxu0 %v6343
      %6580 = vmatmul.f32.gmra.mxu0 %v2520
      %v6581 = vpop.f32.mrf.mxu0
      %v6582 = vadd.f32 0.0, %v6581
      %6583 = vdwg.mxu0
      %v6584 = vadd.f32 %v6542, %v6562
      %v6585 = vadd.f32 %v6543, %v6582
      %6586 = vrot.lane.b32.xlu0 %v6342, 112
      %v6587 = vpop.permute.xlu0 %6586
      %6588 = vrot.lane.b32.xlu0 %v6343, 112
      %v6589 = vpop.permute.xlu0 %6588
      %v6590 = vsel %vm803, %v6587, %v6589
      %v6591 = vsel %vm803, %v6589, %v6587
      %v6592 = vmul.f32 %v6590, %v2570
      %v6593 = vmul.f32 %v6591, %v2571
      %6594 = vmatpush.msra.mxu0 0.0
      %6595 = vmatpush.msra.mxu0 0.0
      %6596 = vmatpush.msra.mxu0 0.0
      %6597 = vmatpush.msra.mxu0 0.0
      %6598 = vmatpush.msra.mxu0 0.0
      %6599 = vmatpush.msra.mxu0 0.0
      %6600 = vmatpush.msra.mxu0 0.0
      %6601 = vmatpush.msra.mxu0 0.0
      %6602 = vmatpush.msra.mxu0 0.0
      %6603 = vmatpush.msra.mxu0 0.0
      %6604 = vmatpush.msra.mxu0 0.0
      %6605 = vmatpush.msra.mxu0 0.0
      %6606 = vmatpush.msra.mxu0 0.0
      %6607 = vmatpush.msra.mxu0 0.0
      %6608 = vmatpush.msra.mxu0 0.0
      %6609 = vmatpush.msra.mxu0 %v6592
      %6610 = vmatmul.f32.gmra.mxu0 %v2577
      %v6611 = vpop.f32.mrf.mxu0
      %v6612 = vadd.f32 0.0, %v6611
      %6613 = vdwg.mxu0
      %6614 = vmatpush.msra.mxu0 0.0
      %6615 = vmatpush.msra.mxu0 0.0
      %6616 = vmatpush.msra.mxu0 0.0
      %6617 = vmatpush.msra.mxu0 0.0
      %6618 = vmatpush.msra.mxu0 0.0
      %6619 = vmatpush.msra.mxu0 0.0
      %6620 = vmatpush.msra.mxu0 0.0
      %6621 = vmatpush.msra.mxu0 0.0
      %6622 = vmatpush.msra.mxu0 0.0
      %6623 = vmatpush.msra.mxu0 0.0
      %6624 = vmatpush.msra.mxu0 0.0
      %6625 = vmatpush.msra.mxu0 0.0
      %6626 = vmatpush.msra.mxu0 0.0
      %6627 = vmatpush.msra.mxu0 0.0
      %6628 = vmatpush.msra.mxu0 0.0
      %6629 = vmatpush.msra.mxu0 %v6593
      %6630 = vmatmul.f32.gmra.mxu0 %v2577
      %v6631 = vpop.f32.mrf.mxu0
      %v6632 = vadd.f32 0.0, %v6631
      %6633 = vdwg.mxu0
      %v6634 = vadd.f32 %v6584, %v6612
      %v6635 = vadd.f32 %v6585, %v6632
      %6636 = vrot.lane.b32.xlu0 %v6342, 15
      %v6637 = vpop.permute.xlu0 %6636
      %6638 = vrot.lane.b32.xlu0 %v6343, 15
      %v6639 = vpop.permute.xlu0 %6638
      %v6640 = vsel %vm873, %v6637, %v6639
      %v6641 = vsel %vm873, %v6639, %v6637
      %v6642 = vmul.f32 %v6641, %v2627
      %v6643 = vmul.f32 %v6640, %v2628
      %6644 = vmatpush.msra.mxu0 0.0
      %6645 = vmatpush.msra.mxu0 0.0
      %6646 = vmatpush.msra.mxu0 0.0
      %6647 = vmatpush.msra.mxu0 0.0
      %6648 = vmatpush.msra.mxu0 0.0
      %6649 = vmatpush.msra.mxu0 0.0
      %6650 = vmatpush.msra.mxu0 0.0
      %6651 = vmatpush.msra.mxu0 0.0
      %6652 = vmatpush.msra.mxu0 0.0
      %6653 = vmatpush.msra.mxu0 0.0
      %6654 = vmatpush.msra.mxu0 0.0
      %6655 = vmatpush.msra.mxu0 0.0
      %6656 = vmatpush.msra.mxu0 0.0
      %6657 = vmatpush.msra.mxu0 0.0
      %6658 = vmatpush.msra.mxu0 0.0
      %6659 = vmatpush.msra.mxu0 %v6642
      %6660 = vmatmul.f32.gmra.mxu0 %v2634
      %v6661 = vpop.f32.mrf.mxu0
      %v6662 = vadd.f32 0.0, %v6661
      %6663 = vdwg.mxu0
      %6664 = vmatpush.msra.mxu0 0.0
      %6665 = vmatpush.msra.mxu0 0.0
      %6666 = vmatpush.msra.mxu0 0.0
      %6667 = vmatpush.msra.mxu0 0.0
      %6668 = vmatpush.msra.mxu0 0.0
      %6669 = vmatpush.msra.mxu0 0.0
      %6670 = vmatpush.msra.mxu0 0.0
      %6671 = vmatpush.msra.mxu0 0.0
      %6672 = vmatpush.msra.mxu0 0.0
      %6673 = vmatpush.msra.mxu0 0.0
      %6674 = vmatpush.msra.mxu0 0.0
      %6675 = vmatpush.msra.mxu0 0.0
      %6676 = vmatpush.msra.mxu0 0.0
      %6677 = vmatpush.msra.mxu0 0.0
      %6678 = vmatpush.msra.mxu0 0.0
      %6679 = vmatpush.msra.mxu0 %v6643
      %6680 = vmatmul.f32.gmra.mxu0 %v2634
      %v6681 = vpop.f32.mrf.mxu0
      %v6682 = vadd.f32 0.0, %v6681
      %6683 = vdwg.mxu0
      %v6684 = vadd.f32 %v6634, %v6662
      %v6685 = vadd.f32 %v6635, %v6682
      %6686 = vrot.lane.b32.xlu0 %v6342, 127
      %v6687 = vpop.permute.xlu0 %6686
      %6688 = vrot.lane.b32.xlu0 %v6343, 127
      %v6689 = vpop.permute.xlu0 %6688
      %v6690 = vsel %vm943, %v6687, %v6689
      %v6691 = vsel %vm943, %v6689, %v6687
      %v6692 = vmul.f32 %v6690, %v2684
      %v6693 = vmul.f32 %v6691, %v2685
      %6694 = vmatpush.msra.mxu0 0.0
      %6695 = vmatpush.msra.mxu0 0.0
      %6696 = vmatpush.msra.mxu0 0.0
      %6697 = vmatpush.msra.mxu0 0.0
      %6698 = vmatpush.msra.mxu0 0.0
      %6699 = vmatpush.msra.mxu0 0.0
      %6700 = vmatpush.msra.mxu0 0.0
      %6701 = vmatpush.msra.mxu0 0.0
      %6702 = vmatpush.msra.mxu0 0.0
      %6703 = vmatpush.msra.mxu0 0.0
      %6704 = vmatpush.msra.mxu0 0.0
      %6705 = vmatpush.msra.mxu0 0.0
      %6706 = vmatpush.msra.mxu0 0.0
      %6707 = vmatpush.msra.mxu0 0.0
      %6708 = vmatpush.msra.mxu0 0.0
      %6709 = vmatpush.msra.mxu0 %v6692
      %6710 = vmatmul.f32.gmra.mxu0 %v2691
      %v6711 = vpop.f32.mrf.mxu0
      %v6712 = vadd.f32 0.0, %v6711
      %6713 = vdwg.mxu0
      %6714 = vmatpush.msra.mxu0 0.0
      %6715 = vmatpush.msra.mxu0 0.0
      %6716 = vmatpush.msra.mxu0 0.0
      %6717 = vmatpush.msra.mxu0 0.0
      %6718 = vmatpush.msra.mxu0 0.0
      %6719 = vmatpush.msra.mxu0 0.0
      %6720 = vmatpush.msra.mxu0 0.0
      %6721 = vmatpush.msra.mxu0 0.0
      %6722 = vmatpush.msra.mxu0 0.0
      %6723 = vmatpush.msra.mxu0 0.0
      %6724 = vmatpush.msra.mxu0 0.0
      %6725 = vmatpush.msra.mxu0 0.0
      %6726 = vmatpush.msra.mxu0 0.0
      %6727 = vmatpush.msra.mxu0 0.0
      %6728 = vmatpush.msra.mxu0 0.0
      %6729 = vmatpush.msra.mxu0 %v6693
      %6730 = vmatmul.f32.gmra.mxu0 %v2691
      %v6731 = vpop.f32.mrf.mxu0
      %v6732 = vadd.f32 0.0, %v6731
      %6733 = vdwg.mxu0
      %v6734 = vadd.f32 %v6684, %v6712
      %v6735 = vadd.f32 %v6685, %v6732
      %6736 = vrot.lane.b32.xlu0 %v6342, 111
      %v6737 = vpop.permute.xlu0 %6736
      %6738 = vrot.lane.b32.xlu0 %v6343, 111
      %v6739 = vpop.permute.xlu0 %6738
      %v6740 = vsel %vm1013, %v6737, %v6739
      %v6741 = vsel %vm1013, %v6739, %v6737
      %v6742 = vmul.f32 %v6740, %v2741
      %v6743 = vmul.f32 %v6741, %v2742
      %6744 = vmatpush.msra.mxu0 0.0
      %6745 = vmatpush.msra.mxu0 0.0
      %6746 = vmatpush.msra.mxu0 0.0
      %6747 = vmatpush.msra.mxu0 0.0
      %6748 = vmatpush.msra.mxu0 0.0
      %6749 = vmatpush.msra.mxu0 0.0
      %6750 = vmatpush.msra.mxu0 0.0
      %6751 = vmatpush.msra.mxu0 0.0
      %6752 = vmatpush.msra.mxu0 0.0
      %6753 = vmatpush.msra.mxu0 0.0
      %6754 = vmatpush.msra.mxu0 0.0
      %6755 = vmatpush.msra.mxu0 0.0
      %6756 = vmatpush.msra.mxu0 0.0
      %6757 = vmatpush.msra.mxu0 0.0
      %6758 = vmatpush.msra.mxu0 0.0
      %6759 = vmatpush.msra.mxu0 %v6742
      %6760 = vmatmul.f32.gmra.mxu0 %v2748
      %v6761 = vpop.f32.mrf.mxu0
      %v6762 = vadd.f32 0.0, %v6761
      %6763 = vdwg.mxu0
      %6764 = vmatpush.msra.mxu0 0.0
      %6765 = vmatpush.msra.mxu0 0.0
      %6766 = vmatpush.msra.mxu0 0.0
      %6767 = vmatpush.msra.mxu0 0.0
      %6768 = vmatpush.msra.mxu0 0.0
      %6769 = vmatpush.msra.mxu0 0.0
      %6770 = vmatpush.msra.mxu0 0.0
      %6771 = vmatpush.msra.mxu0 0.0
      %6772 = vmatpush.msra.mxu0 0.0
      %6773 = vmatpush.msra.mxu0 0.0
      %6774 = vmatpush.msra.mxu0 0.0
      %6775 = vmatpush.msra.mxu0 0.0
      %6776 = vmatpush.msra.mxu0 0.0
      %6777 = vmatpush.msra.mxu0 0.0
      %6778 = vmatpush.msra.mxu0 0.0
      %6779 = vmatpush.msra.mxu0 %v6743
      %6780 = vmatmul.f32.gmra.mxu0 %v2748
      %v6781 = vpop.f32.mrf.mxu0
      %v6782 = vadd.f32 0.0, %v6781
      %6783 = vdwg.mxu0
      %v6784 = vadd.f32 %v6734, %v6762
      %v6785 = vadd.f32 %v6735, %v6782
      %v6786 = vmax.f32 %v6784, 0.0
      %v6787 = vmax.f32 %v6785, 0.0
      %6788 = vrot.lane.b32.xlu0 %v6786, 17
      %v6789 = vpop.permute.xlu0 %6788
      %6790 = vrot.lane.b32.xlu0 %v6787, 17
      %v6791 = vpop.permute.xlu0 %6790
      %v6792 = vsel %vm469, %v6789, %v6791
      %v6793 = vsel %vm469, %v6791, %v6789
      %v6794 = vmul.f32 %v6793, %v2295
      %v6795 = vmul.f32 %v6792, %v2296
      %6796 = vmatpush.msra.mxu0 0.0
      %6797 = vmatpush.msra.mxu0 0.0
      %6798 = vmatpush.msra.mxu0 0.0
      %6799 = vmatpush.msra.mxu0 0.0
      %6800 = vmatpush.msra.mxu0 0.0
      %6801 = vmatpush.msra.mxu0 0.0
      %6802 = vmatpush.msra.mxu0 0.0
      %6803 = vmatpush.msra.mxu0 0.0
      %6804 = vmatpush.msra.mxu0 0.0
      %6805 = vmatpush.msra.mxu0 0.0
      %6806 = vmatpush.msra.mxu0 0.0
      %6807 = vmatpush.msra.mxu0 0.0
      %6808 = vmatpush.msra.mxu0 0.0
      %6809 = vmatpush.msra.mxu0 0.0
      %6810 = vmatpush.msra.mxu0 0.0
      %6811 = vmatpush.msra.mxu0 %v6794
      %6812 = vmatmul.f32.gmra.mxu0 %v2804
      %v6813 = vpop.f32.mrf.mxu0
      %v6814 = vadd.f32 0.0, %v6813
      %6815 = vdwg.mxu0
      %6816 = vmatpush.msra.mxu0 0.0
      %6817 = vmatpush.msra.mxu0 0.0
      %6818 = vmatpush.msra.mxu0 0.0
      %6819 = vmatpush.msra.mxu0 0.0
      %6820 = vmatpush.msra.mxu0 0.0
      %6821 = vmatpush.msra.mxu0 0.0
      %6822 = vmatpush.msra.mxu0 0.0
      %6823 = vmatpush.msra.mxu0 0.0
      %6824 = vmatpush.msra.mxu0 0.0
      %6825 = vmatpush.msra.mxu0 0.0
      %6826 = vmatpush.msra.mxu0 0.0
      %6827 = vmatpush.msra.mxu0 0.0
      %6828 = vmatpush.msra.mxu0 0.0
      %6829 = vmatpush.msra.mxu0 0.0
      %6830 = vmatpush.msra.mxu0 0.0
      %6831 = vmatpush.msra.mxu0 %v6795
      %6832 = vmatmul.f32.gmra.mxu0 %v2804
      %v6833 = vpop.f32.mrf.mxu0
      %v6834 = vadd.f32 0.0, %v6833
      %6835 = vdwg.mxu0
      %v6836 = vadd.f32 %v455, %v6814
      %v6837 = vadd.f32 %v455, %v6834
      %6838 = vrot.lane.b32.xlu0 %v6786, 1
      %v6839 = vpop.permute.xlu0 %6838
      %6840 = vrot.lane.b32.xlu0 %v6787, 1
      %v6841 = vpop.permute.xlu0 %6840
      %v6842 = vsel %vm539, %v6839, %v6841
      %v6843 = vsel %vm539, %v6841, %v6839
      %v6844 = vmul.f32 %v6843, %v2352
      %v6845 = vmul.f32 %v6842, %v2353
      %6846 = vmatpush.msra.mxu0 0.0
      %6847 = vmatpush.msra.mxu0 0.0
      %6848 = vmatpush.msra.mxu0 0.0
      %6849 = vmatpush.msra.mxu0 0.0
      %6850 = vmatpush.msra.mxu0 0.0
      %6851 = vmatpush.msra.mxu0 0.0
      %6852 = vmatpush.msra.mxu0 0.0
      %6853 = vmatpush.msra.mxu0 0.0
      %6854 = vmatpush.msra.mxu0 0.0
      %6855 = vmatpush.msra.mxu0 0.0
      %6856 = vmatpush.msra.mxu0 0.0
      %6857 = vmatpush.msra.mxu0 0.0
      %6858 = vmatpush.msra.mxu0 0.0
      %6859 = vmatpush.msra.mxu0 0.0
      %6860 = vmatpush.msra.mxu0 0.0
      %6861 = vmatpush.msra.mxu0 %v6844
      %6862 = vmatmul.f32.gmra.mxu0 %v2859
      %v6863 = vpop.f32.mrf.mxu0
      %v6864 = vadd.f32 0.0, %v6863
      %6865 = vdwg.mxu0
      %6866 = vmatpush.msra.mxu0 0.0
      %6867 = vmatpush.msra.mxu0 0.0
      %6868 = vmatpush.msra.mxu0 0.0
      %6869 = vmatpush.msra.mxu0 0.0
      %6870 = vmatpush.msra.mxu0 0.0
      %6871 = vmatpush.msra.mxu0 0.0
      %6872 = vmatpush.msra.mxu0 0.0
      %6873 = vmatpush.msra.mxu0 0.0
      %6874 = vmatpush.msra.mxu0 0.0
      %6875 = vmatpush.msra.mxu0 0.0
      %6876 = vmatpush.msra.mxu0 0.0
      %6877 = vmatpush.msra.mxu0 0.0
      %6878 = vmatpush.msra.mxu0 0.0
      %6879 = vmatpush.msra.mxu0 0.0
      %6880 = vmatpush.msra.mxu0 0.0
      %6881 = vmatpush.msra.mxu0 %v6845
      %6882 = vmatmul.f32.gmra.mxu0 %v2859
      %v6883 = vpop.f32.mrf.mxu0
      %v6884 = vadd.f32 0.0, %v6883
      %6885 = vdwg.mxu0
      %v6886 = vadd.f32 %v6836, %v6864
      %v6887 = vadd.f32 %v6837, %v6884
      %6888 = vrot.lane.b32.xlu0 %v6786, 113
      %v6889 = vpop.permute.xlu0 %6888
      %6890 = vrot.lane.b32.xlu0 %v6787, 113
      %v6891 = vpop.permute.xlu0 %6890
      %v6892 = vsel %vm609, %v6889, %v6891
      %v6893 = vsel %vm609, %v6891, %v6889
      %v6894 = vmul.f32 %v6892, %v2409
      %v6895 = vmul.f32 %v6893, %v2410
      %6896 = vmatpush.msra.mxu0 0.0
      %6897 = vmatpush.msra.mxu0 0.0
      %6898 = vmatpush.msra.mxu0 0.0
      %6899 = vmatpush.msra.mxu0 0.0
      %6900 = vmatpush.msra.mxu0 0.0
      %6901 = vmatpush.msra.mxu0 0.0
      %6902 = vmatpush.msra.mxu0 0.0
      %6903 = vmatpush.msra.mxu0 0.0
      %6904 = vmatpush.msra.mxu0 0.0
      %6905 = vmatpush.msra.mxu0 0.0
      %6906 = vmatpush.msra.mxu0 0.0
      %6907 = vmatpush.msra.mxu0 0.0
      %6908 = vmatpush.msra.mxu0 0.0
      %6909 = vmatpush.msra.mxu0 0.0
      %6910 = vmatpush.msra.mxu0 0.0
      %6911 = vmatpush.msra.mxu0 %v6894
      %6912 = vmatmul.f32.gmra.mxu0 %v2914
      %v6913 = vpop.f32.mrf.mxu0
      %v6914 = vadd.f32 0.0, %v6913
      %6915 = vdwg.mxu0
      %6916 = vmatpush.msra.mxu0 0.0
      %6917 = vmatpush.msra.mxu0 0.0
      %6918 = vmatpush.msra.mxu0 0.0
      %6919 = vmatpush.msra.mxu0 0.0
      %6920 = vmatpush.msra.mxu0 0.0
      %6921 = vmatpush.msra.mxu0 0.0
      %6922 = vmatpush.msra.mxu0 0.0
      %6923 = vmatpush.msra.mxu0 0.0
      %6924 = vmatpush.msra.mxu0 0.0
      %6925 = vmatpush.msra.mxu0 0.0
      %6926 = vmatpush.msra.mxu0 0.0
      %6927 = vmatpush.msra.mxu0 0.0
      %6928 = vmatpush.msra.mxu0 0.0
      %6929 = vmatpush.msra.mxu0 0.0
      %6930 = vmatpush.msra.mxu0 0.0
      %6931 = vmatpush.msra.mxu0 %v6895
      %6932 = vmatmul.f32.gmra.mxu0 %v2914
      %v6933 = vpop.f32.mrf.mxu0
      %v6934 = vadd.f32 0.0, %v6933
      %6935 = vdwg.mxu0
      %v6936 = vadd.f32 %v6886, %v6914
      %v6937 = vadd.f32 %v6887, %v6934
      %6938 = vrot.lane.b32.xlu0 %v6786, 16
      %v6939 = vpop.permute.xlu0 %6938
      %6940 = vrot.lane.b32.xlu0 %v6787, 16
      %v6941 = vpop.permute.xlu0 %6940
      %v6942 = vsel %vm679, %v6939, %v6941
      %v6943 = vsel %vm679, %v6941, %v6939
      %v6944 = vmul.f32 %v6943, %v2466
      %v6945 = vmul.f32 %v6942, %v2467
      %6946 = vmatpush.msra.mxu0 0.0
      %6947 = vmatpush.msra.mxu0 0.0
      %6948 = vmatpush.msra.mxu0 0.0
      %6949 = vmatpush.msra.mxu0 0.0
      %6950 = vmatpush.msra.mxu0 0.0
      %6951 = vmatpush.msra.mxu0 0.0
      %6952 = vmatpush.msra.mxu0 0.0
      %6953 = vmatpush.msra.mxu0 0.0
      %6954 = vmatpush.msra.mxu0 0.0
      %6955 = vmatpush.msra.mxu0 0.0
      %6956 = vmatpush.msra.mxu0 0.0
      %6957 = vmatpush.msra.mxu0 0.0
      %6958 = vmatpush.msra.mxu0 0.0
      %6959 = vmatpush.msra.mxu0 0.0
      %6960 = vmatpush.msra.mxu0 0.0
      %6961 = vmatpush.msra.mxu0 %v6944
      %6962 = vmatmul.f32.gmra.mxu0 %v2969
      %v6963 = vpop.f32.mrf.mxu0
      %v6964 = vadd.f32 0.0, %v6963
      %6965 = vdwg.mxu0
      %6966 = vmatpush.msra.mxu0 0.0
      %6967 = vmatpush.msra.mxu0 0.0
      %6968 = vmatpush.msra.mxu0 0.0
      %6969 = vmatpush.msra.mxu0 0.0
      %6970 = vmatpush.msra.mxu0 0.0
      %6971 = vmatpush.msra.mxu0 0.0
      %6972 = vmatpush.msra.mxu0 0.0
      %6973 = vmatpush.msra.mxu0 0.0
      %6974 = vmatpush.msra.mxu0 0.0
      %6975 = vmatpush.msra.mxu0 0.0
      %6976 = vmatpush.msra.mxu0 0.0
      %6977 = vmatpush.msra.mxu0 0.0
      %6978 = vmatpush.msra.mxu0 0.0
      %6979 = vmatpush.msra.mxu0 0.0
      %6980 = vmatpush.msra.mxu0 0.0
      %6981 = vmatpush.msra.mxu0 %v6945
      %6982 = vmatmul.f32.gmra.mxu0 %v2969
      %v6983 = vpop.f32.mrf.mxu0
      %v6984 = vadd.f32 0.0, %v6983
      %6985 = vdwg.mxu0
      %v6986 = vadd.f32 %v6936, %v6964
      %v6987 = vadd.f32 %v6937, %v6984
      %6988 = vmatpush.msra.mxu0 0.0
      %6989 = vmatpush.msra.mxu0 0.0
      %6990 = vmatpush.msra.mxu0 0.0
      %6991 = vmatpush.msra.mxu0 0.0
      %6992 = vmatpush.msra.mxu0 0.0
      %6993 = vmatpush.msra.mxu0 0.0
      %6994 = vmatpush.msra.mxu0 0.0
      %6995 = vmatpush.msra.mxu0 0.0
      %6996 = vmatpush.msra.mxu0 0.0
      %6997 = vmatpush.msra.mxu0 0.0
      %6998 = vmatpush.msra.mxu0 0.0
      %6999 = vmatpush.msra.mxu0 0.0
      %7000 = vmatpush.msra.mxu0 0.0
      %7001 = vmatpush.msra.mxu0 0.0
      %7002 = vmatpush.msra.mxu0 0.0
      %7003 = vmatpush.msra.mxu0 %v6786
      %7004 = vmatmul.f32.gmra.mxu0 %v3016
      %v7005 = vpop.f32.mrf.mxu0
      %v7006 = vadd.f32 0.0, %v7005
      %7007 = vdwg.mxu0
      %7008 = vmatpush.msra.mxu0 0.0
      %7009 = vmatpush.msra.mxu0 0.0
      %7010 = vmatpush.msra.mxu0 0.0
      %7011 = vmatpush.msra.mxu0 0.0
      %7012 = vmatpush.msra.mxu0 0.0
      %7013 = vmatpush.msra.mxu0 0.0
      %7014 = vmatpush.msra.mxu0 0.0
      %7015 = vmatpush.msra.mxu0 0.0
      %7016 = vmatpush.msra.mxu0 0.0
      %7017 = vmatpush.msra.mxu0 0.0
      %7018 = vmatpush.msra.mxu0 0.0
      %7019 = vmatpush.msra.mxu0 0.0
      %7020 = vmatpush.msra.mxu0 0.0
      %7021 = vmatpush.msra.mxu0 0.0
      %7022 = vmatpush.msra.mxu0 0.0
      %7023 = vmatpush.msra.mxu0 %v6787
      %7024 = vmatmul.f32.gmra.mxu0 %v3016
      %v7025 = vpop.f32.mrf.mxu0
      %v7026 = vadd.f32 0.0, %v7025
      %7027 = vdwg.mxu0
      %v7028 = vadd.f32 %v6986, %v7006
      %v7029 = vadd.f32 %v6987, %v7026
      %7030 = vrot.lane.b32.xlu0 %v6786, 112
      %v7031 = vpop.permute.xlu0 %7030
      %7032 = vrot.lane.b32.xlu0 %v6787, 112
      %v7033 = vpop.permute.xlu0 %7032
      %v7034 = vsel %vm803, %v7031, %v7033
      %v7035 = vsel %vm803, %v7033, %v7031
      %v7036 = vmul.f32 %v7034, %v2570
      %v7037 = vmul.f32 %v7035, %v2571
      %7038 = vmatpush.msra.mxu0 0.0
      %7039 = vmatpush.msra.mxu0 0.0
      %7040 = vmatpush.msra.mxu0 0.0
      %7041 = vmatpush.msra.mxu0 0.0
      %7042 = vmatpush.msra.mxu0 0.0
      %7043 = vmatpush.msra.mxu0 0.0
      %7044 = vmatpush.msra.mxu0 0.0
      %7045 = vmatpush.msra.mxu0 0.0
      %7046 = vmatpush.msra.mxu0 0.0
      %7047 = vmatpush.msra.mxu0 0.0
      %7048 = vmatpush.msra.mxu0 0.0
      %7049 = vmatpush.msra.mxu0 0.0
      %7050 = vmatpush.msra.mxu0 0.0
      %7051 = vmatpush.msra.mxu0 0.0
      %7052 = vmatpush.msra.mxu0 0.0
      %7053 = vmatpush.msra.mxu0 %v7036
      %7054 = vmatmul.f32.gmra.mxu0 %v3071
      %v7055 = vpop.f32.mrf.mxu0
      %v7056 = vadd.f32 0.0, %v7055
      %7057 = vdwg.mxu0
      %7058 = vmatpush.msra.mxu0 0.0
      %7059 = vmatpush.msra.mxu0 0.0
      %7060 = vmatpush.msra.mxu0 0.0
      %7061 = vmatpush.msra.mxu0 0.0
      %7062 = vmatpush.msra.mxu0 0.0
      %7063 = vmatpush.msra.mxu0 0.0
      %7064 = vmatpush.msra.mxu0 0.0
      %7065 = vmatpush.msra.mxu0 0.0
      %7066 = vmatpush.msra.mxu0 0.0
      %7067 = vmatpush.msra.mxu0 0.0
      %7068 = vmatpush.msra.mxu0 0.0
      %7069 = vmatpush.msra.mxu0 0.0
      %7070 = vmatpush.msra.mxu0 0.0
      %7071 = vmatpush.msra.mxu0 0.0
      %7072 = vmatpush.msra.mxu0 0.0
      %7073 = vmatpush.msra.mxu0 %v7037
      %7074 = vmatmul.f32.gmra.mxu0 %v3071
      %v7075 = vpop.f32.mrf.mxu0
      %v7076 = vadd.f32 0.0, %v7075
      %7077 = vdwg.mxu0
      %v7078 = vadd.f32 %v7028, %v7056
      %v7079 = vadd.f32 %v7029, %v7076
      %7080 = vrot.lane.b32.xlu0 %v6786, 15
      %v7081 = vpop.permute.xlu0 %7080
      %7082 = vrot.lane.b32.xlu0 %v6787, 15
      %v7083 = vpop.permute.xlu0 %7082
      %v7084 = vsel %vm873, %v7081, %v7083
      %v7085 = vsel %vm873, %v7083, %v7081
      %v7086 = vmul.f32 %v7085, %v2627
      %v7087 = vmul.f32 %v7084, %v2628
      %7088 = vmatpush.msra.mxu0 0.0
      %7089 = vmatpush.msra.mxu0 0.0
      %7090 = vmatpush.msra.mxu0 0.0
      %7091 = vmatpush.msra.mxu0 0.0
      %7092 = vmatpush.msra.mxu0 0.0
      %7093 = vmatpush.msra.mxu0 0.0
      %7094 = vmatpush.msra.mxu0 0.0
      %7095 = vmatpush.msra.mxu0 0.0
      %7096 = vmatpush.msra.mxu0 0.0
      %7097 = vmatpush.msra.mxu0 0.0
      %7098 = vmatpush.msra.mxu0 0.0
      %7099 = vmatpush.msra.mxu0 0.0
      %7100 = vmatpush.msra.mxu0 0.0
      %7101 = vmatpush.msra.mxu0 0.0
      %7102 = vmatpush.msra.mxu0 0.0
      %7103 = vmatpush.msra.mxu0 %v7086
      %7104 = vmatmul.f32.gmra.mxu0 %v3126
      %v7105 = vpop.f32.mrf.mxu0
      %v7106 = vadd.f32 0.0, %v7105
      %7107 = vdwg.mxu0
      %7108 = vmatpush.msra.mxu0 0.0
      %7109 = vmatpush.msra.mxu0 0.0
      %7110 = vmatpush.msra.mxu0 0.0
      %7111 = vmatpush.msra.mxu0 0.0
      %7112 = vmatpush.msra.mxu0 0.0
      %7113 = vmatpush.msra.mxu0 0.0
      %7114 = vmatpush.msra.mxu0 0.0
      %7115 = vmatpush.msra.mxu0 0.0
      %7116 = vmatpush.msra.mxu0 0.0
      %7117 = vmatpush.msra.mxu0 0.0
      %7118 = vmatpush.msra.mxu0 0.0
      %7119 = vmatpush.msra.mxu0 0.0
      %7120 = vmatpush.msra.mxu0 0.0
      %7121 = vmatpush.msra.mxu0 0.0
      %7122 = vmatpush.msra.mxu0 0.0
      %7123 = vmatpush.msra.mxu0 %v7087
      %7124 = vmatmul.f32.gmra.mxu0 %v3126
      %v7125 = vpop.f32.mrf.mxu0
      %v7126 = vadd.f32 0.0, %v7125
      %7127 = vdwg.mxu0
      %v7128 = vadd.f32 %v7078, %v7106
      %v7129 = vadd.f32 %v7079, %v7126
      %7130 = vrot.lane.b32.xlu0 %v6786, 127
      %v7131 = vpop.permute.xlu0 %7130
      %7132 = vrot.lane.b32.xlu0 %v6787, 127
      %v7133 = vpop.permute.xlu0 %7132
      %v7134 = vsel %vm943, %v7131, %v7133
      %v7135 = vsel %vm943, %v7133, %v7131
      %v7136 = vmul.f32 %v7134, %v2684
      %v7137 = vmul.f32 %v7135, %v2685
      %7138 = vmatpush.msra.mxu0 0.0
      %7139 = vmatpush.msra.mxu0 0.0
      %7140 = vmatpush.msra.mxu0 0.0
      %7141 = vmatpush.msra.mxu0 0.0
      %7142 = vmatpush.msra.mxu0 0.0
      %7143 = vmatpush.msra.mxu0 0.0
      %7144 = vmatpush.msra.mxu0 0.0
      %7145 = vmatpush.msra.mxu0 0.0
      %7146 = vmatpush.msra.mxu0 0.0
      %7147 = vmatpush.msra.mxu0 0.0
      %7148 = vmatpush.msra.mxu0 0.0
      %7149 = vmatpush.msra.mxu0 0.0
      %7150 = vmatpush.msra.mxu0 0.0
      %7151 = vmatpush.msra.mxu0 0.0
      %7152 = vmatpush.msra.mxu0 0.0
      %7153 = vmatpush.msra.mxu0 %v7136
      %7154 = vmatmul.f32.gmra.mxu0 %v3181
      %v7155 = vpop.f32.mrf.mxu0
      %v7156 = vadd.f32 0.0, %v7155
      %7157 = vdwg.mxu0
      %7158 = vmatpush.msra.mxu0 0.0
      %7159 = vmatpush.msra.mxu0 0.0
      %7160 = vmatpush.msra.mxu0 0.0
      %7161 = vmatpush.msra.mxu0 0.0
      %7162 = vmatpush.msra.mxu0 0.0
      %7163 = vmatpush.msra.mxu0 0.0
      %7164 = vmatpush.msra.mxu0 0.0
      %7165 = vmatpush.msra.mxu0 0.0
      %7166 = vmatpush.msra.mxu0 0.0
      %7167 = vmatpush.msra.mxu0 0.0
      %7168 = vmatpush.msra.mxu0 0.0
      %7169 = vmatpush.msra.mxu0 0.0
      %7170 = vmatpush.msra.mxu0 0.0
      %7171 = vmatpush.msra.mxu0 0.0
      %7172 = vmatpush.msra.mxu0 0.0
      %7173 = vmatpush.msra.mxu0 %v7137
      %7174 = vmatmul.f32.gmra.mxu0 %v3181
      %v7175 = vpop.f32.mrf.mxu0
      %v7176 = vadd.f32 0.0, %v7175
      %7177 = vdwg.mxu0
      %v7178 = vadd.f32 %v7128, %v7156
      %v7179 = vadd.f32 %v7129, %v7176
      %7180 = vrot.lane.b32.xlu0 %v6786, 111
      %v7181 = vpop.permute.xlu0 %7180
      %7182 = vrot.lane.b32.xlu0 %v6787, 111
      %v7183 = vpop.permute.xlu0 %7182
      %v7184 = vsel %vm1013, %v7181, %v7183
      %v7185 = vsel %vm1013, %v7183, %v7181
      %v7186 = vmul.f32 %v7184, %v2741
      %v7187 = vmul.f32 %v7185, %v2742
      %7188 = vmatpush.msra.mxu0 0.0
      %7189 = vmatpush.msra.mxu0 0.0
      %7190 = vmatpush.msra.mxu0 0.0
      %7191 = vmatpush.msra.mxu0 0.0
      %7192 = vmatpush.msra.mxu0 0.0
      %7193 = vmatpush.msra.mxu0 0.0
      %7194 = vmatpush.msra.mxu0 0.0
      %7195 = vmatpush.msra.mxu0 0.0
      %7196 = vmatpush.msra.mxu0 0.0
      %7197 = vmatpush.msra.mxu0 0.0
      %7198 = vmatpush.msra.mxu0 0.0
      %7199 = vmatpush.msra.mxu0 0.0
      %7200 = vmatpush.msra.mxu0 0.0
      %7201 = vmatpush.msra.mxu0 0.0
      %7202 = vmatpush.msra.mxu0 0.0
      %7203 = vmatpush.msra.mxu0 %v7186
      %7204 = vmatmul.f32.gmra.mxu0 %v3236
      %v7205 = vpop.f32.mrf.mxu0
      %v7206 = vadd.f32 0.0, %v7205
      %7207 = vdwg.mxu0
      %7208 = vmatpush.msra.mxu0 0.0
      %7209 = vmatpush.msra.mxu0 0.0
      %7210 = vmatpush.msra.mxu0 0.0
      %7211 = vmatpush.msra.mxu0 0.0
      %7212 = vmatpush.msra.mxu0 0.0
      %7213 = vmatpush.msra.mxu0 0.0
      %7214 = vmatpush.msra.mxu0 0.0
      %7215 = vmatpush.msra.mxu0 0.0
      %7216 = vmatpush.msra.mxu0 0.0
      %7217 = vmatpush.msra.mxu0 0.0
      %7218 = vmatpush.msra.mxu0 0.0
      %7219 = vmatpush.msra.mxu0 0.0
      %7220 = vmatpush.msra.mxu0 0.0
      %7221 = vmatpush.msra.mxu0 0.0
      %7222 = vmatpush.msra.mxu0 0.0
      %7223 = vmatpush.msra.mxu0 %v7187
      %7224 = vmatmul.f32.gmra.mxu0 %v3236
      %v7225 = vpop.f32.mrf.mxu0
      %v7226 = vadd.f32 0.0, %v7225
      %7227 = vdwg.mxu0
      %v7228 = vadd.f32 %v7178, %v7206
      %v7229 = vadd.f32 %v7179, %v7226
      %v7232 = vrot.slane %v7229, 4
      %v7233 = vsel %vm481, %v7228, %v7232
      %v7235 = vsub.f32 %v5803, %v7233
      %7236 = vst [vmem:[%s434] sm:$0xff] %v7235
      %p7237 = scmp.lt.s32.totalorder %s24, 1
      %s7238 = scalar_select %p7237, %s24, 1
      %s7239 = smul.addr %s7238, 2
      %s7240 = smul.addr %s7239, 4
      %s7241 = scalar_lea.vmem %s12, %s7240
      // Predicated region
      $region69: #{seis_proxgd_forward.1} parent=67 // pred_check
        %p7242 = pneg %p304
      $region70: #{seis_proxgd_forward.1} parent=67 // pred_check_branch
        %7244 = sbr.rel (%p7242) target = $region72
      $region71: #{seis_proxgd_forward.1} parent=67 // pred_region
        _
      $region72: #{seis_proxgd_forward.1} parent=67 // pred_fallthru
        _
    $region68: #{seis_proxgd_forward.1} parent=5 // pred_fallthru
      _
    %p7245 = scmp.le.s32.totalorder 2, %s19
    // Predicated region
    $region73: #{seis_proxgd_forward.1} parent=5 // pred_check
      %p7246 = pneg %p7245
    $region74: #{seis_proxgd_forward.1} parent=5 // pred_check_branch
      %7248 = sbr.rel (%p7246) target = $region76
    $region75: #{seis_proxgd_forward.1} parent=5 // pred_region
      %s7249 = ssub.s32 %s19, 2
      // Predicated region
      $region77: #{seis_proxgd_forward.1} parent=75 // pred_check
        %p7250 = pneg %p310
      $region78: #{seis_proxgd_forward.1} parent=75 // pred_check_branch
        %7252 = sbr.rel (%p7250) target = $region80
      $region79: #{seis_proxgd_forward.1} parent=75 // pred_region
        %p7253 = scmp.lt.s32.totalorder %s25, 1
        %s7254 = scalar_select %p7253, %s25, 1
        %s7255 = smul.addr %s7254, 2
        %s7256 = smul.addr %s7255, 4
        %s7257 = scalar_lea.vmem %s12, %s7256
      $region80: #{seis_proxgd_forward.1} parent=75 // pred_fallthru
        _
    $region76: #{seis_proxgd_forward.1} parent=5 // pred_fallthru
      _
  $region6: #{seis_proxgd_forward.1} parent=0 // loop_footer
    %s23 = sadd.s32 1, %s19
  $region7: #{seis_proxgd_forward.1} parent=0 // loop_footer_branch
    %18 = sbr.rel target = $region3
  $region8: #{seis_proxgd_forward.1} parent=0 // loop_exit
    _

</llo_original>
